<compile_context>
chip_gen: v6e
topology: v6e:2x2x1
jax: 0.10.0
libtpu: 0.0.40
codegen_flags: <defaults>
</compile_context>

<pallas_src>
import jax
import jax.numpy as jnp
from jax import lax
from jax.experimental import pallas as pl
from jax.experimental.pallas import tpu as pltpu

# ----------------------------- model config (small, synthetic) ---------------
B = 2              # batch
C = 3              # image channels
IMG = 32           # image size (H = W)
PATCH = 16         # patch size (patch16 model, small image -> 2x2 patches)
D = 32             # embed dim
DEPTH = 2          # number of transformer blocks
HEADS = 4          # attention heads
HEAD_DIM = D // HEADS
MLP_HIDDEN = 4 * D # mlp_ratio = 4
NUM_CLASSES = 10   # cfg.DATA.NUMBER_CLASSES
C_PAD = 128        # lane-dense padded logits width (sliced back to NUM_CLASSES)
MLP_NUM = 1        # cfg.MODEL.MLP_NUM  (head: [D]*MLP_NUM + [NUM_CLASSES])
N_PATCH = (IMG // PATCH) ** 2
N_TOK = N_PATCH + 1  # + cls token
CPP = C * PATCH * PATCH
LN_EPS = 1e-6
SCALE = HEAD_DIM ** -0.5
W_DTYPE = jnp.bfloat16   # matmul weight/operand dtype (f32 accumulation)


# ----------------------------- in-kernel helpers ------------------------------
def _mm(a, w):
    """MXU matmul: operands in the weight dtype (bf16), f32 accumulation."""
    return jnp.dot(a.astype(w.dtype), w, preferred_element_type=jnp.float32)


def _layernorm(x, g, b):
    mu = jnp.mean(x, axis=-1, keepdims=True)
    var = jnp.mean((x - mu) ** 2, axis=-1, keepdims=True)
    return (x - mu) * lax.rsqrt(var + LN_EPS) * g + b


# ----------------------------- fused forward kernel ---------------------------
def _fused_vit_kernel(
    xp_ref,                           # (1, N_TOK, CPP) zero-padded patches (row 0 dummy)
    pe_w_ref, pe_b_ref,               # (CPP, D) bf16, (1, D)
    cls_ref, pos_ref,                 # (1, D), (N_TOK, D)
    ln1_g_ref, ln1_b_ref,             # (DEPTH, 1, D) x2
    qkv_w_ref, qkv_b_ref,             # (DEPTH, D, 3D) bf16, (DEPTH, 1, 3D)
    proj_w_ref, proj_b_ref,           # (DEPTH, D, D) bf16, (DEPTH, 1, D)
    ln2_g_ref, ln2_b_ref,             # (DEPTH, 1, D) x2
    fc1_w_ref, fc1_b_ref,             # (DEPTH, D, MLP_HIDDEN) bf16, (DEPTH, 1, MLP_HIDDEN)
    fc2_w_ref, fc2_b_ref,             # (DEPTH, MLP_HIDDEN, D) bf16, (DEPTH, 1, D)
    prompt_ref, tdt_ref,              # (1, D), (D, D) bf16
    dec_w_ref,                        # (DEPTH, D, D) bf16  (w1 @ w2 pre-folded, bias-free)
    norm_g_ref, norm_b_ref,           # (1, D) x2
    head_h_w_ref, head_h_b_ref,       # (MLP_NUM, D, D) bf16, (MLP_NUM, 1, D)
    head_out_w_ref, head_out_b_ref,   # (D, C_PAD) bf16, (1, C_PAD)
    out_ref,                          # (1, 1, C_PAD)
):
    # ---- patch embed (Conv2d k=s=PATCH == matmul) + cls token + pos embed ----
    tok_all = _mm(xp_ref[0], pe_w_ref[...]) + pe_b_ref[...]        # (N_TOK, D)
    row = lax.broadcasted_iota(jnp.int32, (N_TOK, D), 0)
    x0 = jnp.where(row == 0, cls_ref[...], tok_all) + pos_ref[...]  # (N_TOK, D)

    def attention(h, i, td):
        """MHSA with all heads in-register; per-head proj folded (no concat)."""
        qkv = _mm(h, qkv_w_ref[i]) + qkv_b_ref[i]                  # (N_TOK, 3D) f32
        pw = proj_w_ref[i]                                         # (D, D) bf16
        acc = jnp.zeros((N_TOK, D), jnp.float32)
        for hd in range(HEADS):
            lo, hi = hd * HEAD_DIM, (hd + 1) * HEAD_DIM
            q = qkv[:, lo:hi]
            k = qkv[:, D + lo:D + hi]
            v = qkv[:, 2 * D + lo:2 * D + hi]
            if td is not None:
                v = v + td[:, lo:hi]                               # TOAST top-down steer
            s = lax.dot_general(q, k, (((1,), (1,)), ((), ())),
                                preferred_element_type=jnp.float32) * SCALE
            s = s - jnp.max(s, axis=-1, keepdims=True)
            p = jnp.exp(s)
            l = jnp.sum(p, axis=-1, keepdims=True)
            o = jnp.dot(p, v, preferred_element_type=jnp.float32)
            o = o * pl.reciprocal(l, approx=True)                  # normalize after PV
            # concat(o_h) @ Wp == sum_h o_h @ Wp[lo:hi, :]  (exact)
            acc = acc + _mm(o, pw[lo:hi, :])
        return acc + proj_b_ref[i]

    def block(x, i, td):
        h = _layernorm(x, ln1_g_ref[i], ln1_b_ref[i])
        x = x + attention(h, i, td)                                # drop_path = identity (eval)
        h2 = _layernorm(x, ln2_g_ref[i], ln2_b_ref[i])
        # TODO(synk): PyTorch nn.GELU default is exact erf-GELU; tanh approx used here.
        m = jax.nn.gelu(_mm(h2, fc1_w_ref[i]) + fc1_b_ref[i], approximate=True)
        return x + _mm(m, fc2_w_ref[i]) + fc2_b_ref[i]

    # ---- first (bottom-up) feedforward pass ----
    x = x0
    for i in range(DEPTH):
        x = block(x, i, None)

    # ---- prompt-based token selection + top-down transform ----
    xn = x * lax.rsqrt(jnp.maximum(jnp.sum(x * x, axis=-1, keepdims=True), 1e-24))
    pr = prompt_ref[...]
    prn = pr * lax.rsqrt(jnp.maximum(jnp.sum(pr * pr, axis=-1, keepdims=True), 1e-24))
    cos = jnp.sum(xn * prn, axis=-1, keepdims=True)                # (N_TOK, 1)
    td = _mm(x * jnp.clip(cos, 0.0, 1.0), tdt_ref[...])

    # ---- feedback pass through folded decoders (top block -> bottom block) ----
    # TODO(synk): TOAST decoder may contain extra norm/activation; modeled as the
    # two bias-free linears (exactly foldable into one matrix).
    tds = [None] * DEPTH
    for i in range(DEPTH - 1, -1, -1):
        td = _mm(td, dec_w_ref[i])
        tds[i] = td

    # ---- second feedforward pass with top-down input ----
    x = x0
    for i in range(DEPTH):
        x = block(x, i, tds[i])

    x = _layernorm(x, norm_g_ref[...], norm_b_ref[...])
    feat = x[0:1, :]                                               # cls token feature

    # ---- MLP head:  [D]*MLP_NUM (ReLU) + num_classes (lane-padded to 128) ----
    h = feat
    for j in range(MLP_NUM):
        h = jnp.maximum(_mm(h, head_h_w_ref[j]) + head_h_b_ref[j], 0.0)  # dropout = identity
    logits = _mm(h, head_out_w_ref[...]) + head_out_b_ref[...]     # (1, C_PAD)
    out_ref[0] = logits.astype(out_ref.dtype)                      # lane-dense 128-wide store


# ----------------------------- wrapper ----------------------------------------
def _bcast_spec(arr):
    """Full-array block, same block for every grid step (weights stay VMEM-resident)."""
    nd = arr.ndim
    return pl.BlockSpec(arr.shape, lambda b, _nd=nd: (0,) * _nd)


@jax.jit
def topdown_vit_forward(x_img, flat_params):
    """Forward of Topdown_ViTClass:  (logits, visualizations)."""
    Bb = x_img.shape[0]
    Hp = Wp = IMG // PATCH
    # Patch extraction (plain-JAX glue): NCHW -> (B, N_PATCH, C*P*P), plus a
    # dummy zero row at token 0 (replaced in-kernel by the cls token).
    xp = x_img.reshape(Bb, C, Hp, PATCH, Wp, PATCH)
    xp = xp.transpose(0, 2, 4, 1, 3, 5).reshape(Bb, N_PATCH, CPP)
    xp = jnp.concatenate([jnp.zeros((Bb, 1, CPP), xp.dtype), xp], axis=1)  # (B, N_TOK, CPP)

    in_specs = [pl.BlockSpec((1, N_TOK, CPP), lambda b: (b, 0, 0))]
    in_specs += [_bcast_spec(a) for a in flat_params]

    out = pl.pallas_call(
        _fused_vit_kernel,
        out_shape=jax.ShapeDtypeStruct((Bb, 1, C_PAD), jnp.float32),
        grid=(Bb,),
        in_specs=in_specs,
        out_specs=pl.BlockSpec((1, 1, C_PAD), lambda b: (b, 0, 0)),
        compiler_params=pltpu.CompilerParams(dimension_semantics=("parallel",)),
    )(xp, *flat_params)

    logits = out.reshape(Bb, C_PAD)[:, :NUM_CLASSES]
    visualizations = None  # vis=False path of the encoder
    return logits, visualizations


# ----------------------------- deterministic param init ----------------------
def init_params(key):
    keys = iter(jax.random.split(key, 64))

    def nrm(shape, scale=0.02):
        return (scale * jax.random.normal(next(keys), shape)).astype(jnp.float32)

    params = {
        "pe_w": nrm((CPP, D)),
        "pe_b": jnp.zeros((D,), jnp.float32),
        "cls": nrm((1, 1, D)),
        "pos": nrm((1, N_TOK, D)),
        "prompt": nrm((1, D)),
        "tdt": jnp.eye(D, dtype=jnp.float32),          # top_down_transform
        "norm_g": jnp.ones((D,), jnp.float32),
        "norm_b": jnp.zeros((D,), jnp.float32),
        "blocks": [],
        "decoders": [],
    }
    for _ in range(DEPTH):
        params["blocks"].append({
            "ln1_g": jnp.ones((D,), jnp.float32), "ln1_b": jnp.zeros((D,), jnp.float32),
            "qkv_w": nrm((D, 3 * D)), "qkv_b": jnp.zeros((3 * D,), jnp.float32),
            "proj_w": nrm((D, D)), "proj_b": jnp.zeros((D,), jnp.float32),
            "ln2_g": jnp.ones((D,), jnp.float32), "ln2_b": jnp.zeros((D,), jnp.float32),
            "fc1_w": nrm((D, MLP_HIDDEN)), "fc1_b": jnp.zeros((MLP_HIDDEN,), jnp.float32),
            "fc2_w": nrm((MLP_HIDDEN, D)), "fc2_b": jnp.zeros((D,), jnp.float32),
        })
        params["decoders"].append({"w1": nrm((D, D)), "w2": nrm((D, D))})
    params["head_hidden"] = [
        {"w": nrm((D, D)), "b": jnp.zeros((D,), jnp.float32)} for _ in range(MLP_NUM)
    ]
    params["head_out_w"] = nrm((D, NUM_CLASSES))
    params["head_out_b"] = jnp.zeros((NUM_CLASSES,), jnp.float32)
    return params


def prepare_params(p):
    """One-time (outside the hot path): stack per-depth params, cast matmul
    weights to bf16, fold each bias-free decoder pair, lane-pad the head."""
    f32 = jnp.float32

    def stack(k):
        return jnp.stack([blk[k] for blk in p["blocks"]])

    dec_folded = jnp.stack([d["w1"] @ d["w2"] for d in p["decoders"]])  # exact fold
    head_out_w = jnp.zeros((D, C_PAD), f32).at[:, :NUM_CLASSES].set(p["head_out_w"])
    head_out_b = jnp.zeros((1, C_PAD), f32).at[0, :NUM_CLASSES].set(p["head_out_b"])

    return (
        p["pe_w"].astype(W_DTYPE),
        p["pe_b"].reshape(1, D).astype(f32),
        p["cls"].reshape(1, D).astype(f32),
        p["pos"].reshape(N_TOK, D).astype(f32),
        stack("ln1_g").reshape(DEPTH, 1, D).astype(f32),
        stack("ln1_b").reshape(DEPTH, 1, D).astype(f32),
        stack("qkv_w").astype(W_DTYPE),
        stack("qkv_b").reshape(DEPTH, 1, 3 * D).astype(f32),
        stack("proj_w").astype(W_DTYPE),
        stack("proj_b").reshape(DEPTH, 1, D).astype(f32),
        stack("ln2_g").reshape(DEPTH, 1, D).astype(f32),
        stack("ln2_b").reshape(DEPTH, 1, D).astype(f32),
        stack("fc1_w").astype(W_DTYPE),
        stack("fc1_b").reshape(DEPTH, 1, MLP_HIDDEN).astype(f32),
        stack("fc2_w").astype(W_DTYPE),
        stack("fc2_b").reshape(DEPTH, 1, D).astype(f32),
        p["prompt"].reshape(1, D).astype(f32),
        p["tdt"].astype(W_DTYPE),
        dec_folded.astype(W_DTYPE),
        p["norm_g"].reshape(1, D).astype(f32),
        p["norm_b"].reshape(1, D).astype(f32),
        jnp.stack([l["w"] for l in p["head_hidden"]]).astype(W_DTYPE),
        jnp.stack([l["b"] for l in p["head_hidden"]]).reshape(MLP_NUM, 1, D).astype(f32),
        head_out_w.astype(W_DTYPE),
        head_out_b,
    )


# ----------------------------- main -------------------------------------------
if __name__ == "__main__":
    key = jax.random.PRNGKey(0)
    k_param, k_x = jax.random.split(key)
    params = init_params(k_param)
    flat_params = prepare_params(params)     # cast/stack/fold once, outside jit-hot path
    x = jax.random.normal(k_x, (B, C, IMG, IMG), dtype=jnp.float32)   # NCHW, like PyTorch

    logits, vis = topdown_vit_forward(x, flat_params)
    logits = jax.block_until_ready(logits)

    assert logits.shape == (B, NUM_CLASSES), logits.shape
    assert bool(jnp.all(jnp.isfinite(logits)))
    print("KERNEL_OK")
</pallas_src>

<mosaic_0001>
module attributes {stable_mosaic.version = 11 : i64} {
  func.func @_fused_vit_kernel(%arg0: i32, %arg1: memref<1x5x768xf32, #tpu.memory_space<vmem>>, %arg2: memref<768x32xbf16, #tpu.memory_space<vmem>>, %arg3: memref<1x32xf32, #tpu.memory_space<vmem>>, %arg4: memref<1x32xf32, #tpu.memory_space<vmem>>, %arg5: memref<5x32xf32, #tpu.memory_space<vmem>>, %arg6: memref<2x1x32xf32, #tpu.memory_space<vmem>>, %arg7: memref<2x1x32xf32, #tpu.memory_space<vmem>>, %arg8: memref<2x32x96xbf16, #tpu.memory_space<vmem>>, %arg9: memref<2x1x96xf32, #tpu.memory_space<vmem>>, %arg10: memref<2x32x32xbf16, #tpu.memory_space<vmem>>, %arg11: memref<2x1x32xf32, #tpu.memory_space<vmem>>, %arg12: memref<2x1x32xf32, #tpu.memory_space<vmem>>, %arg13: memref<2x1x32xf32, #tpu.memory_space<vmem>>, %arg14: memref<2x32x128xbf16, #tpu.memory_space<vmem>>, %arg15: memref<2x1x128xf32, #tpu.memory_space<vmem>>, %arg16: memref<2x128x32xbf16, #tpu.memory_space<vmem>>, %arg17: memref<2x1x32xf32, #tpu.memory_space<vmem>>, %arg18: memref<1x32xf32, #tpu.memory_space<vmem>>, %arg19: memref<32x32xbf16, #tpu.memory_space<vmem>>, %arg20: memref<2x32x32xbf16, #tpu.memory_space<vmem>>, %arg21: memref<1x32xf32, #tpu.memory_space<vmem>>, %arg22: memref<1x32xf32, #tpu.memory_space<vmem>>, %arg23: memref<1x32x32xbf16, #tpu.memory_space<vmem>>, %arg24: memref<1x1x32xf32, #tpu.memory_space<vmem>>, %arg25: memref<32x128xbf16, #tpu.memory_space<vmem>>, %arg26: memref<1x128xf32, #tpu.memory_space<vmem>>, %arg27: memref<1x1x128xf32, #tpu.memory_space<vmem>>) attributes {dimension_semantics = [#tpu.dimension_semantics<parallel>], iteration_bounds = array<i64: 2>, scalar_prefetch = 0 : i64, scratch_operands = 0 : i64, tpu.core_type = #tpu.core_type<tc>, window_params = [{transform_indices = @transform_0, window_bounds = array<i64: 1, 5, 768>}, {pipeline_mode = #tpu.pipeline_mode<synchronous>, transform_indices = @transform_1, window_bounds = array<i64: 768, 32>}, {pipeline_mode = #tpu.pipeline_mode<synchronous>, transform_indices = @transform_2, window_bounds = array<i64: 1, 32>}, {pipeline_mode = #tpu.pipeline_mode<synchronous>, transform_indices = @transform_3, window_bounds = array<i64: 1, 32>}, {pipeline_mode = #tpu.pipeline_mode<synchronous>, transform_indices = @transform_4, window_bounds = array<i64: 5, 32>}, {pipeline_mode = #tpu.pipeline_mode<synchronous>, transform_indices = @transform_5, window_bounds = array<i64: 2, 1, 32>}, {pipeline_mode = #tpu.pipeline_mode<synchronous>, transform_indices = @transform_6, window_bounds = array<i64: 2, 1, 32>}, {pipeline_mode = #tpu.pipeline_mode<synchronous>, transform_indices = @transform_7, window_bounds = array<i64: 2, 32, 96>}, {pipeline_mode = #tpu.pipeline_mode<synchronous>, transform_indices = @transform_8, window_bounds = array<i64: 2, 1, 96>}, {pipeline_mode = #tpu.pipeline_mode<synchronous>, transform_indices = @transform_9, window_bounds = array<i64: 2, 32, 32>}, {pipeline_mode = #tpu.pipeline_mode<synchronous>, transform_indices = @transform_10, window_bounds = array<i64: 2, 1, 32>}, {pipeline_mode = #tpu.pipeline_mode<synchronous>, transform_indices = @transform_11, window_bounds = array<i64: 2, 1, 32>}, {pipeline_mode = #tpu.pipeline_mode<synchronous>, transform_indices = @transform_12, window_bounds = array<i64: 2, 1, 32>}, {pipeline_mode = #tpu.pipeline_mode<synchronous>, transform_indices = @transform_13, window_bounds = array<i64: 2, 32, 128>}, {pipeline_mode = #tpu.pipeline_mode<synchronous>, transform_indices = @transform_14, window_bounds = array<i64: 2, 1, 128>}, {pipeline_mode = #tpu.pipeline_mode<synchronous>, transform_indices = @transform_15, window_bounds = array<i64: 2, 128, 32>}, {pipeline_mode = #tpu.pipeline_mode<synchronous>, transform_indices = @transform_16, window_bounds = array<i64: 2, 1, 32>}, {pipeline_mode = #tpu.pipeline_mode<synchronous>, transform_indices = @transform_17, window_bounds = array<i64: 1, 32>}, {pipeline_mode = #tpu.pipeline_mode<synchronous>, transform_indices = @transform_18, window_bounds = array<i64: 32, 32>}, {pipeline_mode = #tpu.pipeline_mode<synchronous>, transform_indices = @transform_19, window_bounds = array<i64: 2, 32, 32>}, {pipeline_mode = #tpu.pipeline_mode<synchronous>, transform_indices = @transform_20, window_bounds = array<i64: 1, 32>}, {pipeline_mode = #tpu.pipeline_mode<synchronous>, transform_indices = @transform_21, window_bounds = array<i64: 1, 32>}, {pipeline_mode = #tpu.pipeline_mode<synchronous>, transform_indices = @transform_22, window_bounds = array<i64: 1, 32, 32>}, {pipeline_mode = #tpu.pipeline_mode<synchronous>, transform_indices = @transform_23, window_bounds = array<i64: 1, 1, 32>}, {pipeline_mode = #tpu.pipeline_mode<synchronous>, transform_indices = @transform_24, window_bounds = array<i64: 32, 128>}, {pipeline_mode = #tpu.pipeline_mode<synchronous>, transform_indices = @transform_25, window_bounds = array<i64: 1, 128>}, {transform_indices = @transform_26, window_bounds = array<i64: 1, 1, 128>}]} {
    %c0 = arith.constant 0 : index
    %c0_0 = arith.constant 0 : index
    %c0_1 = arith.constant 0 : index
    %0 = vector.load %arg1[%c0, %c0_0, %c0_1] : memref<1x5x768xf32, #tpu.memory_space<vmem>>, vector<1x5x768xf32>
    %1 = vector.shape_cast %0 : vector<1x5x768xf32> to vector<5x768xf32>
    %c0_2 = arith.constant 0 : index
    %c0_3 = arith.constant 0 : index
    %2 = vector.load %arg2[%c0_2, %c0_3] : memref<768x32xbf16, #tpu.memory_space<vmem>>, vector<768x32xbf16>
    %3 = arith.truncf %1 : vector<5x768xf32> to vector<5x768xbf16>
    %cst = arith.constant dense<0.000000e+00> : vector<5x32xf32>
    %4 = tpu.matmul %3, %2, %cst {dimension_numbers = #tpu.dot_dimension_numbers<[1], [0], [0], [1], [0, 0, 1, 1], [], []>} : vector<5x768xbf16>, vector<768x32xbf16>, vector<5x32xf32> -> vector<5x32xf32>
    %c0_4 = arith.constant 0 : index
    %c0_5 = arith.constant 0 : index
    %5 = vector.load %arg3[%c0_4, %c0_5] : memref<1x32xf32, #tpu.memory_space<vmem>>, vector<1x32xf32>
    %6 = vector.broadcast %5 : vector<1x32xf32> to vector<5x32xf32>
    %7 = arith.addf %4, %6 : vector<5x32xf32>
    %8 = tpu.iota {dimensions = array<i32: 0>} : vector<5x32xi32>
    %c0_i32 = arith.constant 0 : i32
    %9 = vector.broadcast %c0_i32 : i32 to vector<5x32xi32>
    %10 = arith.cmpi eq, %8, %9 : vector<5x32xi32>
    %c0_6 = arith.constant 0 : index
    %c0_7 = arith.constant 0 : index
    %11 = vector.load %arg4[%c0_6, %c0_7] : memref<1x32xf32, #tpu.memory_space<vmem>>, vector<1x32xf32>
    %12 = vector.shape_cast %11 : vector<1x32xf32> to vector<1x32xf32>
    %13 = vector.broadcast %12 : vector<1x32xf32> to vector<5x32xf32>
    %14 = arith.select %10, %13, %7 : vector<5x32xi1>, vector<5x32xf32>
    %c0_8 = arith.constant 0 : index
    %c0_9 = arith.constant 0 : index
    %15 = vector.load %arg5[%c0_8, %c0_9] : memref<5x32xf32, #tpu.memory_space<vmem>>, vector<5x32xf32>
    %16 = arith.addf %14, %15 : vector<5x32xf32>
    %c0_10 = arith.constant 0 : index
    %c0_11 = arith.constant 0 : index
    %c0_12 = arith.constant 0 : index
    %17 = vector.load %arg6[%c0_10, %c0_11, %c0_12] : memref<2x1x32xf32, #tpu.memory_space<vmem>>, vector<1x1x32xf32>
    %18 = vector.shape_cast %17 : vector<1x1x32xf32> to vector<1x32xf32>
    %c0_13 = arith.constant 0 : index
    %c0_14 = arith.constant 0 : index
    %c0_15 = arith.constant 0 : index
    %19 = vector.load %arg7[%c0_13, %c0_14, %c0_15] : memref<2x1x32xf32, #tpu.memory_space<vmem>>, vector<1x1x32xf32>
    %20 = vector.shape_cast %19 : vector<1x1x32xf32> to vector<1x32xf32>
    %cst_16 = arith.constant dense<0.000000e+00> : vector<5xf32>
    %21 = vector.multi_reduction <add>, %16, %cst_16 [1] : vector<5x32xf32> to vector<5xf32>
    %22 = vector.shape_cast %21 : vector<5xf32> to vector<5x1xf32>
    %cst_17 = arith.constant 3.200000e+01 : f32
    %23 = vector.broadcast %cst_17 : f32 to vector<5x1xf32>
    %24 = arith.divf %22, %23 : vector<5x1xf32>
    %25 = vector.broadcast %24 : vector<5x1xf32> to vector<5x32xf32>
    %26 = arith.subf %16, %25 : vector<5x32xf32>
    %27 = arith.mulf %26, %26 : vector<5x32xf32>
    %cst_18 = arith.constant dense<0.000000e+00> : vector<5xf32>
    %28 = vector.multi_reduction <add>, %27, %cst_18 [1] : vector<5x32xf32> to vector<5xf32>
    %29 = vector.shape_cast %28 : vector<5xf32> to vector<5x1xf32>
    %cst_19 = arith.constant 3.200000e+01 : f32
    %30 = vector.broadcast %cst_19 : f32 to vector<5x1xf32>
    %31 = arith.divf %29, %30 : vector<5x1xf32>
    %32 = vector.broadcast %24 : vector<5x1xf32> to vector<5x32xf32>
    %33 = arith.subf %16, %32 : vector<5x32xf32>
    %cst_20 = arith.constant 9.99999997E-7 : f32
    %34 = vector.broadcast %cst_20 : f32 to vector<5x1xf32>
    %35 = arith.addf %31, %34 : vector<5x1xf32>
    %36 = math.rsqrt %35 : vector<5x1xf32>
    %37 = vector.broadcast %36 : vector<5x1xf32> to vector<5x32xf32>
    %38 = arith.mulf %33, %37 : vector<5x32xf32>
    %39 = vector.broadcast %18 : vector<1x32xf32> to vector<5x32xf32>
    %40 = arith.mulf %38, %39 : vector<5x32xf32>
    %41 = vector.broadcast %20 : vector<1x32xf32> to vector<5x32xf32>
    %42 = arith.addf %40, %41 : vector<5x32xf32>
    %c0_21 = arith.constant 0 : index
    %c0_22 = arith.constant 0 : index
    %c0_23 = arith.constant 0 : index
    %43 = vector.load %arg8[%c0_21, %c0_22, %c0_23] : memref<2x32x96xbf16, #tpu.memory_space<vmem>>, vector<1x32x96xbf16>
    %44 = vector.shape_cast %43 : vector<1x32x96xbf16> to vector<32x96xbf16>
    %45 = arith.truncf %42 : vector<5x32xf32> to vector<5x32xbf16>
    %cst_24 = arith.constant dense<0.000000e+00> : vector<5x96xf32>
    %46 = tpu.matmul %45, %44, %cst_24 {dimension_numbers = #tpu.dot_dimension_numbers<[1], [0], [0], [1], [0, 0, 1, 1], [], []>} : vector<5x32xbf16>, vector<32x96xbf16>, vector<5x96xf32> -> vector<5x96xf32>
    %c0_25 = arith.constant 0 : index
    %c0_26 = arith.constant 0 : index
    %c0_27 = arith.constant 0 : index
    %47 = vector.load %arg9[%c0_25, %c0_26, %c0_27] : memref<2x1x96xf32, #tpu.memory_space<vmem>>, vector<1x1x96xf32>
    %48 = vector.shape_cast %47 : vector<1x1x96xf32> to vector<1x96xf32>
    %49 = vector.broadcast %48 : vector<1x96xf32> to vector<5x96xf32>
    %50 = arith.addf %46, %49 : vector<5x96xf32>
    %c0_28 = arith.constant 0 : index
    %c0_29 = arith.constant 0 : index
    %c0_30 = arith.constant 0 : index
    %51 = vector.load %arg10[%c0_28, %c0_29, %c0_30] : memref<2x32x32xbf16, #tpu.memory_space<vmem>>, vector<1x32x32xbf16>
    %52 = vector.shape_cast %51 : vector<1x32x32xbf16> to vector<32x32xbf16>
    %cst_31 = arith.constant 0.000000e+00 : f32
    %53 = vector.broadcast %cst_31 : f32 to vector<5x32xf32>
    %54 = vector.extract_strided_slice %50 {offsets = [0, 0], sizes = [5, 8], strides = [1, 1]} : vector<5x96xf32> to vector<5x8xf32>
    %55 = vector.extract_strided_slice %50 {offsets = [0, 32], sizes = [5, 8], strides = [1, 1]} : vector<5x96xf32> to vector<5x8xf32>
    %56 = vector.extract_strided_slice %50 {offsets = [0, 64], sizes = [5, 8], strides = [1, 1]} : vector<5x96xf32> to vector<5x8xf32>
    %cst_32 = arith.constant dense<0.000000e+00> : vector<5x5xf32>
    %57 = tpu.matmul %54, %55, %cst_32 {dimension_numbers = #tpu.dot_dimension_numbers<[1], [1], [0], [0], [0, 0, 1, 0], [], []>} : vector<5x8xf32>, vector<5x8xf32>, vector<5x5xf32> -> vector<5x5xf32>
    %cst_33 = arith.constant 0.353553385 : f32
    %58 = vector.broadcast %cst_33 : f32 to vector<5x5xf32>
    %59 = arith.mulf %57, %58 : vector<5x5xf32>
    %cst_34 = arith.constant dense<0xFF800000> : vector<5xf32>
    %60 = vector.multi_reduction <maximumf>, %59, %cst_34 [1] : vector<5x5xf32> to vector<5xf32>
    %61 = vector.shape_cast %60 : vector<5xf32> to vector<5x1xf32>
    %62 = vector.broadcast %61 : vector<5x1xf32> to vector<5x5xf32>
    %63 = arith.subf %59, %62 : vector<5x5xf32>
    %64 = math.exp %63 : vector<5x5xf32>
    %cst_35 = arith.constant dense<0.000000e+00> : vector<5xf32>
    %65 = vector.multi_reduction <add>, %64, %cst_35 [1] : vector<5x5xf32> to vector<5xf32>
    %66 = vector.shape_cast %65 : vector<5xf32> to vector<5x1xf32>
    %cst_36 = arith.constant dense<0.000000e+00> : vector<5x8xf32>
    %67 = tpu.matmul %64, %56, %cst_36 {dimension_numbers = #tpu.dot_dimension_numbers<[1], [0], [0], [1], [0, 0, 1, 1], [], []>} : vector<5x5xf32>, vector<5x8xf32>, vector<5x8xf32> -> vector<5x8xf32>
    %68 = tpu.reciprocal %66 {approx = true} : vector<5x1xf32> -> vector<5x1xf32>
    %69 = vector.broadcast %68 : vector<5x1xf32> to vector<5x8xf32>
    %70 = arith.mulf %67, %69 : vector<5x8xf32>
    %71 = vector.extract_strided_slice %52 {offsets = [0, 0], sizes = [8, 32], strides = [1, 1]} : vector<32x32xbf16> to vector<8x32xbf16>
    %72 = arith.truncf %70 : vector<5x8xf32> to vector<5x8xbf16>
    %cst_37 = arith.constant dense<0.000000e+00> : vector<5x32xf32>
    %73 = tpu.matmul %72, %71, %cst_37 {dimension_numbers = #tpu.dot_dimension_numbers<[1], [0], [0], [1], [0, 0, 1, 1], [], []>} : vector<5x8xbf16>, vector<8x32xbf16>, vector<5x32xf32> -> vector<5x32xf32>
    %74 = arith.addf %53, %73 : vector<5x32xf32>
    %75 = vector.extract_strided_slice %50 {offsets = [0, 8], sizes = [5, 8], strides = [1, 1]} : vector<5x96xf32> to vector<5x8xf32>
    %76 = vector.extract_strided_slice %50 {offsets = [0, 40], sizes = [5, 8], strides = [1, 1]} : vector<5x96xf32> to vector<5x8xf32>
    %77 = vector.extract_strided_slice %50 {offsets = [0, 72], sizes = [5, 8], strides = [1, 1]} : vector<5x96xf32> to vector<5x8xf32>
    %cst_38 = arith.constant dense<0.000000e+00> : vector<5x5xf32>
    %78 = tpu.matmul %75, %76, %cst_38 {dimension_numbers = #tpu.dot_dimension_numbers<[1], [1], [0], [0], [0, 0, 1, 0], [], []>} : vector<5x8xf32>, vector<5x8xf32>, vector<5x5xf32> -> vector<5x5xf32>
    %cst_39 = arith.constant 0.353553385 : f32
    %79 = vector.broadcast %cst_39 : f32 to vector<5x5xf32>
    %80 = arith.mulf %78, %79 : vector<5x5xf32>
    %cst_40 = arith.constant dense<0xFF800000> : vector<5xf32>
    %81 = vector.multi_reduction <maximumf>, %80, %cst_40 [1] : vector<5x5xf32> to vector<5xf32>
    %82 = vector.shape_cast %81 : vector<5xf32> to vector<5x1xf32>
    %83 = vector.broadcast %82 : vector<5x1xf32> to vector<5x5xf32>
    %84 = arith.subf %80, %83 : vector<5x5xf32>
    %85 = math.exp %84 : vector<5x5xf32>
    %cst_41 = arith.constant dense<0.000000e+00> : vector<5xf32>
    %86 = vector.multi_reduction <add>, %85, %cst_41 [1] : vector<5x5xf32> to vector<5xf32>
    %87 = vector.shape_cast %86 : vector<5xf32> to vector<5x1xf32>
    %cst_42 = arith.constant dense<0.000000e+00> : vector<5x8xf32>
    %88 = tpu.matmul %85, %77, %cst_42 {dimension_numbers = #tpu.dot_dimension_numbers<[1], [0], [0], [1], [0, 0, 1, 1], [], []>} : vector<5x5xf32>, vector<5x8xf32>, vector<5x8xf32> -> vector<5x8xf32>
    %89 = tpu.reciprocal %87 {approx = true} : vector<5x1xf32> -> vector<5x1xf32>
    %90 = vector.broadcast %89 : vector<5x1xf32> to vector<5x8xf32>
    %91 = arith.mulf %88, %90 : vector<5x8xf32>
    %92 = vector.extract_strided_slice %52 {offsets = [8, 0], sizes = [8, 32], strides = [1, 1]} : vector<32x32xbf16> to vector<8x32xbf16>
    %93 = arith.truncf %91 : vector<5x8xf32> to vector<5x8xbf16>
    %cst_43 = arith.constant dense<0.000000e+00> : vector<5x32xf32>
    %94 = tpu.matmul %93, %92, %cst_43 {dimension_numbers = #tpu.dot_dimension_numbers<[1], [0], [0], [1], [0, 0, 1, 1], [], []>} : vector<5x8xbf16>, vector<8x32xbf16>, vector<5x32xf32> -> vector<5x32xf32>
    %95 = arith.addf %74, %94 : vector<5x32xf32>
    %96 = vector.extract_strided_slice %50 {offsets = [0, 16], sizes = [5, 8], strides = [1, 1]} : vector<5x96xf32> to vector<5x8xf32>
    %97 = vector.extract_strided_slice %50 {offsets = [0, 48], sizes = [5, 8], strides = [1, 1]} : vector<5x96xf32> to vector<5x8xf32>
    %98 = vector.extract_strided_slice %50 {offsets = [0, 80], sizes = [5, 8], strides = [1, 1]} : vector<5x96xf32> to vector<5x8xf32>
    %cst_44 = arith.constant dense<0.000000e+00> : vector<5x5xf32>
    %99 = tpu.matmul %96, %97, %cst_44 {dimension_numbers = #tpu.dot_dimension_numbers<[1], [1], [0], [0], [0, 0, 1, 0], [], []>} : vector<5x8xf32>, vector<5x8xf32>, vector<5x5xf32> -> vector<5x5xf32>
    %cst_45 = arith.constant 0.353553385 : f32
    %100 = vector.broadcast %cst_45 : f32 to vector<5x5xf32>
    %101 = arith.mulf %99, %100 : vector<5x5xf32>
    %cst_46 = arith.constant dense<0xFF800000> : vector<5xf32>
    %102 = vector.multi_reduction <maximumf>, %101, %cst_46 [1] : vector<5x5xf32> to vector<5xf32>
    %103 = vector.shape_cast %102 : vector<5xf32> to vector<5x1xf32>
    %104 = vector.broadcast %103 : vector<5x1xf32> to vector<5x5xf32>
    %105 = arith.subf %101, %104 : vector<5x5xf32>
    %106 = math.exp %105 : vector<5x5xf32>
    %cst_47 = arith.constant dense<0.000000e+00> : vector<5xf32>
    %107 = vector.multi_reduction <add>, %106, %cst_47 [1] : vector<5x5xf32> to vector<5xf32>
    %108 = vector.shape_cast %107 : vector<5xf32> to vector<5x1xf32>
    %cst_48 = arith.constant dense<0.000000e+00> : vector<5x8xf32>
    %109 = tpu.matmul %106, %98, %cst_48 {dimension_numbers = #tpu.dot_dimension_numbers<[1], [0], [0], [1], [0, 0, 1, 1], [], []>} : vector<5x5xf32>, vector<5x8xf32>, vector<5x8xf32> -> vector<5x8xf32>
    %110 = tpu.reciprocal %108 {approx = true} : vector<5x1xf32> -> vector<5x1xf32>
    %111 = vector.broadcast %110 : vector<5x1xf32> to vector<5x8xf32>
    %112 = arith.mulf %109, %111 : vector<5x8xf32>
    %113 = vector.extract_strided_slice %52 {offsets = [16, 0], sizes = [8, 32], strides = [1, 1]} : vector<32x32xbf16> to vector<8x32xbf16>
    %114 = arith.truncf %112 : vector<5x8xf32> to vector<5x8xbf16>
    %cst_49 = arith.constant dense<0.000000e+00> : vector<5x32xf32>
    %115 = tpu.matmul %114, %113, %cst_49 {dimension_numbers = #tpu.dot_dimension_numbers<[1], [0], [0], [1], [0, 0, 1, 1], [], []>} : vector<5x8xbf16>, vector<8x32xbf16>, vector<5x32xf32> -> vector<5x32xf32>
    %116 = arith.addf %95, %115 : vector<5x32xf32>
    %117 = vector.extract_strided_slice %50 {offsets = [0, 24], sizes = [5, 8], strides = [1, 1]} : vector<5x96xf32> to vector<5x8xf32>
    %118 = vector.extract_strided_slice %50 {offsets = [0, 56], sizes = [5, 8], strides = [1, 1]} : vector<5x96xf32> to vector<5x8xf32>
    %119 = vector.extract_strided_slice %50 {offsets = [0, 88], sizes = [5, 8], strides = [1, 1]} : vector<5x96xf32> to vector<5x8xf32>
    %cst_50 = arith.constant dense<0.000000e+00> : vector<5x5xf32>
    %120 = tpu.matmul %117, %118, %cst_50 {dimension_numbers = #tpu.dot_dimension_numbers<[1], [1], [0], [0], [0, 0, 1, 0], [], []>} : vector<5x8xf32>, vector<5x8xf32>, vector<5x5xf32> -> vector<5x5xf32>
    %cst_51 = arith.constant 0.353553385 : f32
    %121 = vector.broadcast %cst_51 : f32 to vector<5x5xf32>
    %122 = arith.mulf %120, %121 : vector<5x5xf32>
    %cst_52 = arith.constant dense<0xFF800000> : vector<5xf32>
    %123 = vector.multi_reduction <maximumf>, %122, %cst_52 [1] : vector<5x5xf32> to vector<5xf32>
    %124 = vector.shape_cast %123 : vector<5xf32> to vector<5x1xf32>
    %125 = vector.broadcast %124 : vector<5x1xf32> to vector<5x5xf32>
    %126 = arith.subf %122, %125 : vector<5x5xf32>
    %127 = math.exp %126 : vector<5x5xf32>
    %cst_53 = arith.constant dense<0.000000e+00> : vector<5xf32>
    %128 = vector.multi_reduction <add>, %127, %cst_53 [1] : vector<5x5xf32> to vector<5xf32>
    %129 = vector.shape_cast %128 : vector<5xf32> to vector<5x1xf32>
    %cst_54 = arith.constant dense<0.000000e+00> : vector<5x8xf32>
    %130 = tpu.matmul %127, %119, %cst_54 {dimension_numbers = #tpu.dot_dimension_numbers<[1], [0], [0], [1], [0, 0, 1, 1], [], []>} : vector<5x5xf32>, vector<5x8xf32>, vector<5x8xf32> -> vector<5x8xf32>
    %131 = tpu.reciprocal %129 {approx = true} : vector<5x1xf32> -> vector<5x1xf32>
    %132 = vector.broadcast %131 : vector<5x1xf32> to vector<5x8xf32>
    %133 = arith.mulf %130, %132 : vector<5x8xf32>
    %134 = vector.extract_strided_slice %52 {offsets = [24, 0], sizes = [8, 32], strides = [1, 1]} : vector<32x32xbf16> to vector<8x32xbf16>
    %135 = arith.truncf %133 : vector<5x8xf32> to vector<5x8xbf16>
    %cst_55 = arith.constant dense<0.000000e+00> : vector<5x32xf32>
    %136 = tpu.matmul %135, %134, %cst_55 {dimension_numbers = #tpu.dot_dimension_numbers<[1], [0], [0], [1], [0, 0, 1, 1], [], []>} : vector<5x8xbf16>, vector<8x32xbf16>, vector<5x32xf32> -> vector<5x32xf32>
    %137 = arith.addf %116, %136 : vector<5x32xf32>
    %c0_56 = arith.constant 0 : index
    %c0_57 = arith.constant 0 : index
    %c0_58 = arith.constant 0 : index
    %138 = vector.load %arg11[%c0_56, %c0_57, %c0_58] : memref<2x1x32xf32, #tpu.memory_space<vmem>>, vector<1x1x32xf32>
    %139 = vector.shape_cast %138 : vector<1x1x32xf32> to vector<1x32xf32>
    %140 = vector.broadcast %139 : vector<1x32xf32> to vector<5x32xf32>
    %141 = arith.addf %137, %140 : vector<5x32xf32>
    %142 = arith.addf %16, %141 : vector<5x32xf32>
    %c0_59 = arith.constant 0 : index
    %c0_60 = arith.constant 0 : index
    %c0_61 = arith.constant 0 : index
    %143 = vector.load %arg12[%c0_59, %c0_60, %c0_61] : memref<2x1x32xf32, #tpu.memory_space<vmem>>, vector<1x1x32xf32>
    %144 = vector.shape_cast %143 : vector<1x1x32xf32> to vector<1x32xf32>
    %c0_62 = arith.constant 0 : index
    %c0_63 = arith.constant 0 : index
    %c0_64 = arith.constant 0 : index
    %145 = vector.load %arg13[%c0_62, %c0_63, %c0_64] : memref<2x1x32xf32, #tpu.memory_space<vmem>>, vector<1x1x32xf32>
    %146 = vector.shape_cast %145 : vector<1x1x32xf32> to vector<1x32xf32>
    %cst_65 = arith.constant dense<0.000000e+00> : vector<5xf32>
    %147 = vector.multi_reduction <add>, %142, %cst_65 [1] : vector<5x32xf32> to vector<5xf32>
    %148 = vector.shape_cast %147 : vector<5xf32> to vector<5x1xf32>
    %cst_66 = arith.constant 3.200000e+01 : f32
    %149 = vector.broadcast %cst_66 : f32 to vector<5x1xf32>
    %150 = arith.divf %148, %149 : vector<5x1xf32>
    %151 = vector.broadcast %150 : vector<5x1xf32> to vector<5x32xf32>
    %152 = arith.subf %142, %151 : vector<5x32xf32>
    %153 = arith.mulf %152, %152 : vector<5x32xf32>
    %cst_67 = arith.constant dense<0.000000e+00> : vector<5xf32>
    %154 = vector.multi_reduction <add>, %153, %cst_67 [1] : vector<5x32xf32> to vector<5xf32>
    %155 = vector.shape_cast %154 : vector<5xf32> to vector<5x1xf32>
    %cst_68 = arith.constant 3.200000e+01 : f32
    %156 = vector.broadcast %cst_68 : f32 to vector<5x1xf32>
    %157 = arith.divf %155, %156 : vector<5x1xf32>
    %158 = vector.broadcast %150 : vector<5x1xf32> to vector<5x32xf32>
    %159 = arith.subf %142, %158 : vector<5x32xf32>
    %cst_69 = arith.constant 9.99999997E-7 : f32
    %160 = vector.broadcast %cst_69 : f32 to vector<5x1xf32>
    %161 = arith.addf %157, %160 : vector<5x1xf32>
    %162 = math.rsqrt %161 : vector<5x1xf32>
    %163 = vector.broadcast %162 : vector<5x1xf32> to vector<5x32xf32>
    %164 = arith.mulf %159, %163 : vector<5x32xf32>
    %165 = vector.broadcast %144 : vector<1x32xf32> to vector<5x32xf32>
    %166 = arith.mulf %164, %165 : vector<5x32xf32>
    %167 = vector.broadcast %146 : vector<1x32xf32> to vector<5x32xf32>
    %168 = arith.addf %166, %167 : vector<5x32xf32>
    %c0_70 = arith.constant 0 : index
    %c0_71 = arith.constant 0 : index
    %c0_72 = arith.constant 0 : index
    %169 = vector.load %arg14[%c0_70, %c0_71, %c0_72] : memref<2x32x128xbf16, #tpu.memory_space<vmem>>, vector<1x32x128xbf16>
    %170 = vector.shape_cast %169 : vector<1x32x128xbf16> to vector<32x128xbf16>
    %171 = arith.truncf %168 : vector<5x32xf32> to vector<5x32xbf16>
    %cst_73 = arith.constant dense<0.000000e+00> : vector<5x128xf32>
    %172 = tpu.matmul %171, %170, %cst_73 {dimension_numbers = #tpu.dot_dimension_numbers<[1], [0], [0], [1], [0, 0, 1, 1], [], []>} : vector<5x32xbf16>, vector<32x128xbf16>, vector<5x128xf32> -> vector<5x128xf32>
    %c0_74 = arith.constant 0 : index
    %c0_75 = arith.constant 0 : index
    %c0_76 = arith.constant 0 : index
    %173 = vector.load %arg15[%c0_74, %c0_75, %c0_76] : memref<2x1x128xf32, #tpu.memory_space<vmem>>, vector<1x1x128xf32>
    %174 = vector.shape_cast %173 : vector<1x1x128xf32> to vector<1x128xf32>
    %175 = vector.broadcast %174 : vector<1x128xf32> to vector<5x128xf32>
    %176 = arith.addf %172, %175 : vector<5x128xf32>
    %177 = arith.mulf %176, %176 : vector<5x128xf32>
    %178 = arith.mulf %176, %177 : vector<5x128xf32>
    %cst_77 = arith.constant 4.471500e-02 : f32
    %179 = vector.broadcast %cst_77 : f32 to vector<5x128xf32>
    %180 = arith.mulf %179, %178 : vector<5x128xf32>
    %181 = arith.addf %176, %180 : vector<5x128xf32>
    %cst_78 = arith.constant 0.797884583 : f32
    %182 = vector.broadcast %cst_78 : f32 to vector<5x128xf32>
    %183 = arith.mulf %182, %181 : vector<5x128xf32>
    %184 = math.tanh %183 : vector<5x128xf32>
    %cst_79 = arith.constant 1.000000e+00 : f32
    %185 = vector.broadcast %cst_79 : f32 to vector<5x128xf32>
    %186 = arith.addf %185, %184 : vector<5x128xf32>
    %cst_80 = arith.constant 5.000000e-01 : f32
    %187 = vector.broadcast %cst_80 : f32 to vector<5x128xf32>
    %188 = arith.mulf %187, %186 : vector<5x128xf32>
    %189 = arith.mulf %176, %188 : vector<5x128xf32>
    %c0_81 = arith.constant 0 : index
    %c0_82 = arith.constant 0 : index
    %c0_83 = arith.constant 0 : index
    %190 = vector.load %arg16[%c0_81, %c0_82, %c0_83] : memref<2x128x32xbf16, #tpu.memory_space<vmem>>, vector<1x128x32xbf16>
    %191 = vector.shape_cast %190 : vector<1x128x32xbf16> to vector<128x32xbf16>
    %192 = arith.truncf %189 : vector<5x128xf32> to vector<5x128xbf16>
    %cst_84 = arith.constant dense<0.000000e+00> : vector<5x32xf32>
    %193 = tpu.matmul %192, %191, %cst_84 {dimension_numbers = #tpu.dot_dimension_numbers<[1], [0], [0], [1], [0, 0, 1, 1], [], []>} : vector<5x128xbf16>, vector<128x32xbf16>, vector<5x32xf32> -> vector<5x32xf32>
    %194 = arith.addf %142, %193 : vector<5x32xf32>
    %c0_85 = arith.constant 0 : index
    %c0_86 = arith.constant 0 : index
    %c0_87 = arith.constant 0 : index
    %195 = vector.load %arg17[%c0_85, %c0_86, %c0_87] : memref<2x1x32xf32, #tpu.memory_space<vmem>>, vector<1x1x32xf32>
    %196 = vector.shape_cast %195 : vector<1x1x32xf32> to vector<1x32xf32>
    %197 = vector.broadcast %196 : vector<1x32xf32> to vector<5x32xf32>
    %198 = arith.addf %194, %197 : vector<5x32xf32>
    %c1 = arith.constant 1 : index
    %c0_88 = arith.constant 0 : index
    %c0_89 = arith.constant 0 : index
    %199 = vector.load %arg6[%c1, %c0_88, %c0_89] : memref<2x1x32xf32, #tpu.memory_space<vmem>>, vector<1x1x32xf32>
    %200 = vector.shape_cast %199 : vector<1x1x32xf32> to vector<1x32xf32>
    %c1_90 = arith.constant 1 : index
    %c0_91 = arith.constant 0 : index
    %c0_92 = arith.constant 0 : index
    %201 = vector.load %arg7[%c1_90, %c0_91, %c0_92] : memref<2x1x32xf32, #tpu.memory_space<vmem>>, vector<1x1x32xf32>
    %202 = vector.shape_cast %201 : vector<1x1x32xf32> to vector<1x32xf32>
    %cst_93 = arith.constant dense<0.000000e+00> : vector<5xf32>
    %203 = vector.multi_reduction <add>, %198, %cst_93 [1] : vector<5x32xf32> to vector<5xf32>
    %204 = vector.shape_cast %203 : vector<5xf32> to vector<5x1xf32>
    %cst_94 = arith.constant 3.200000e+01 : f32
    %205 = vector.broadcast %cst_94 : f32 to vector<5x1xf32>
    %206 = arith.divf %204, %205 : vector<5x1xf32>
    %207 = vector.broadcast %206 : vector<5x1xf32> to vector<5x32xf32>
    %208 = arith.subf %198, %207 : vector<5x32xf32>
    %209 = arith.mulf %208, %208 : vector<5x32xf32>
    %cst_95 = arith.constant dense<0.000000e+00> : vector<5xf32>
    %210 = vector.multi_reduction <add>, %209, %cst_95 [1] : vector<5x32xf32> to vector<5xf32>
    %211 = vector.shape_cast %210 : vector<5xf32> to vector<5x1xf32>
    %cst_96 = arith.constant 3.200000e+01 : f32
    %212 = vector.broadcast %cst_96 : f32 to vector<5x1xf32>
    %213 = arith.divf %211, %212 : vector<5x1xf32>
    %214 = vector.broadcast %206 : vector<5x1xf32> to vector<5x32xf32>
    %215 = arith.subf %198, %214 : vector<5x32xf32>
    %cst_97 = arith.constant 9.99999997E-7 : f32
    %216 = vector.broadcast %cst_97 : f32 to vector<5x1xf32>
    %217 = arith.addf %213, %216 : vector<5x1xf32>
    %218 = math.rsqrt %217 : vector<5x1xf32>
    %219 = vector.broadcast %218 : vector<5x1xf32> to vector<5x32xf32>
    %220 = arith.mulf %215, %219 : vector<5x32xf32>
    %221 = vector.broadcast %200 : vector<1x32xf32> to vector<5x32xf32>
    %222 = arith.mulf %220, %221 : vector<5x32xf32>
    %223 = vector.broadcast %202 : vector<1x32xf32> to vector<5x32xf32>
    %224 = arith.addf %222, %223 : vector<5x32xf32>
    %c1_98 = arith.constant 1 : index
    %c0_99 = arith.constant 0 : index
    %c0_100 = arith.constant 0 : index
    %225 = vector.load %arg8[%c1_98, %c0_99, %c0_100] : memref<2x32x96xbf16, #tpu.memory_space<vmem>>, vector<1x32x96xbf16>
    %226 = vector.shape_cast %225 : vector<1x32x96xbf16> to vector<32x96xbf16>
    %227 = arith.truncf %224 : vector<5x32xf32> to vector<5x32xbf16>
    %cst_101 = arith.constant dense<0.000000e+00> : vector<5x96xf32>
    %228 = tpu.matmul %227, %226, %cst_101 {dimension_numbers = #tpu.dot_dimension_numbers<[1], [0], [0], [1], [0, 0, 1, 1], [], []>} : vector<5x32xbf16>, vector<32x96xbf16>, vector<5x96xf32> -> vector<5x96xf32>
    %c1_102 = arith.constant 1 : index
    %c0_103 = arith.constant 0 : index
    %c0_104 = arith.constant 0 : index
    %229 = vector.load %arg9[%c1_102, %c0_103, %c0_104] : memref<2x1x96xf32, #tpu.memory_space<vmem>>, vector<1x1x96xf32>
    %230 = vector.shape_cast %229 : vector<1x1x96xf32> to vector<1x96xf32>
    %231 = vector.broadcast %230 : vector<1x96xf32> to vector<5x96xf32>
    %232 = arith.addf %228, %231 : vector<5x96xf32>
    %c1_105 = arith.constant 1 : index
    %c0_106 = arith.constant 0 : index
    %c0_107 = arith.constant 0 : index
    %233 = vector.load %arg10[%c1_105, %c0_106, %c0_107] : memref<2x32x32xbf16, #tpu.memory_space<vmem>>, vector<1x32x32xbf16>
    %234 = vector.shape_cast %233 : vector<1x32x32xbf16> to vector<32x32xbf16>
    %cst_108 = arith.constant 0.000000e+00 : f32
    %235 = vector.broadcast %cst_108 : f32 to vector<5x32xf32>
    %236 = vector.extract_strided_slice %232 {offsets = [0, 0], sizes = [5, 8], strides = [1, 1]} : vector<5x96xf32> to vector<5x8xf32>
    %237 = vector.extract_strided_slice %232 {offsets = [0, 32], sizes = [5, 8], strides = [1, 1]} : vector<5x96xf32> to vector<5x8xf32>
    %238 = vector.extract_strided_slice %232 {offsets = [0, 64], sizes = [5, 8], strides = [1, 1]} : vector<5x96xf32> to vector<5x8xf32>
    %cst_109 = arith.constant dense<0.000000e+00> : vector<5x5xf32>
    %239 = tpu.matmul %236, %237, %cst_109 {dimension_numbers = #tpu.dot_dimension_numbers<[1], [1], [0], [0], [0, 0, 1, 0], [], []>} : vector<5x8xf32>, vector<5x8xf32>, vector<5x5xf32> -> vector<5x5xf32>
    %cst_110 = arith.constant 0.353553385 : f32
    %240 = vector.broadcast %cst_110 : f32 to vector<5x5xf32>
    %241 = arith.mulf %239, %240 : vector<5x5xf32>
    %cst_111 = arith.constant dense<0xFF800000> : vector<5xf32>
    %242 = vector.multi_reduction <maximumf>, %241, %cst_111 [1] : vector<5x5xf32> to vector<5xf32>
    %243 = vector.shape_cast %242 : vector<5xf32> to vector<5x1xf32>
    %244 = vector.broadcast %243 : vector<5x1xf32> to vector<5x5xf32>
    %245 = arith.subf %241, %244 : vector<5x5xf32>
    %246 = math.exp %245 : vector<5x5xf32>
    %cst_112 = arith.constant dense<0.000000e+00> : vector<5xf32>
    %247 = vector.multi_reduction <add>, %246, %cst_112 [1] : vector<5x5xf32> to vector<5xf32>
    %248 = vector.shape_cast %247 : vector<5xf32> to vector<5x1xf32>
    %cst_113 = arith.constant dense<0.000000e+00> : vector<5x8xf32>
    %249 = tpu.matmul %246, %238, %cst_113 {dimension_numbers = #tpu.dot_dimension_numbers<[1], [0], [0], [1], [0, 0, 1, 1], [], []>} : vector<5x5xf32>, vector<5x8xf32>, vector<5x8xf32> -> vector<5x8xf32>
    %250 = tpu.reciprocal %248 {approx = true} : vector<5x1xf32> -> vector<5x1xf32>
    %251 = vector.broadcast %250 : vector<5x1xf32> to vector<5x8xf32>
    %252 = arith.mulf %249, %251 : vector<5x8xf32>
    %253 = vector.extract_strided_slice %234 {offsets = [0, 0], sizes = [8, 32], strides = [1, 1]} : vector<32x32xbf16> to vector<8x32xbf16>
    %254 = arith.truncf %252 : vector<5x8xf32> to vector<5x8xbf16>
    %cst_114 = arith.constant dense<0.000000e+00> : vector<5x32xf32>
    %255 = tpu.matmul %254, %253, %cst_114 {dimension_numbers = #tpu.dot_dimension_numbers<[1], [0], [0], [1], [0, 0, 1, 1], [], []>} : vector<5x8xbf16>, vector<8x32xbf16>, vector<5x32xf32> -> vector<5x32xf32>
    %256 = arith.addf %235, %255 : vector<5x32xf32>
    %257 = vector.extract_strided_slice %232 {offsets = [0, 8], sizes = [5, 8], strides = [1, 1]} : vector<5x96xf32> to vector<5x8xf32>
    %258 = vector.extract_strided_slice %232 {offsets = [0, 40], sizes = [5, 8], strides = [1, 1]} : vector<5x96xf32> to vector<5x8xf32>
    %259 = vector.extract_strided_slice %232 {offsets = [0, 72], sizes = [5, 8], strides = [1, 1]} : vector<5x96xf32> to vector<5x8xf32>
    %cst_115 = arith.constant dense<0.000000e+00> : vector<5x5xf32>
    %260 = tpu.matmul %257, %258, %cst_115 {dimension_numbers = #tpu.dot_dimension_numbers<[1], [1], [0], [0], [0, 0, 1, 0], [], []>} : vector<5x8xf32>, vector<5x8xf32>, vector<5x5xf32> -> vector<5x5xf32>
    %cst_116 = arith.constant 0.353553385 : f32
    %261 = vector.broadcast %cst_116 : f32 to vector<5x5xf32>
    %262 = arith.mulf %260, %261 : vector<5x5xf32>
    %cst_117 = arith.constant dense<0xFF800000> : vector<5xf32>
    %263 = vector.multi_reduction <maximumf>, %262, %cst_117 [1] : vector<5x5xf32> to vector<5xf32>
    %264 = vector.shape_cast %263 : vector<5xf32> to vector<5x1xf32>
    %265 = vector.broadcast %264 : vector<5x1xf32> to vector<5x5xf32>
    %266 = arith.subf %262, %265 : vector<5x5xf32>
    %267 = math.exp %266 : vector<5x5xf32>
    %cst_118 = arith.constant dense<0.000000e+00> : vector<5xf32>
    %268 = vector.multi_reduction <add>, %267, %cst_118 [1] : vector<5x5xf32> to vector<5xf32>
    %269 = vector.shape_cast %268 : vector<5xf32> to vector<5x1xf32>
    %cst_119 = arith.constant dense<0.000000e+00> : vector<5x8xf32>
    %270 = tpu.matmul %267, %259, %cst_119 {dimension_numbers = #tpu.dot_dimension_numbers<[1], [0], [0], [1], [0, 0, 1, 1], [], []>} : vector<5x5xf32>, vector<5x8xf32>, vector<5x8xf32> -> vector<5x8xf32>
    %271 = tpu.reciprocal %269 {approx = true} : vector<5x1xf32> -> vector<5x1xf32>
    %272 = vector.broadcast %271 : vector<5x1xf32> to vector<5x8xf32>
    %273 = arith.mulf %270, %272 : vector<5x8xf32>
    %274 = vector.extract_strided_slice %234 {offsets = [8, 0], sizes = [8, 32], strides = [1, 1]} : vector<32x32xbf16> to vector<8x32xbf16>
    %275 = arith.truncf %273 : vector<5x8xf32> to vector<5x8xbf16>
    %cst_120 = arith.constant dense<0.000000e+00> : vector<5x32xf32>
    %276 = tpu.matmul %275, %274, %cst_120 {dimension_numbers = #tpu.dot_dimension_numbers<[1], [0], [0], [1], [0, 0, 1, 1], [], []>} : vector<5x8xbf16>, vector<8x32xbf16>, vector<5x32xf32> -> vector<5x32xf32>
    %277 = arith.addf %256, %276 : vector<5x32xf32>
    %278 = vector.extract_strided_slice %232 {offsets = [0, 16], sizes = [5, 8], strides = [1, 1]} : vector<5x96xf32> to vector<5x8xf32>
    %279 = vector.extract_strided_slice %232 {offsets = [0, 48], sizes = [5, 8], strides = [1, 1]} : vector<5x96xf32> to vector<5x8xf32>
    %280 = vector.extract_strided_slice %232 {offsets = [0, 80], sizes = [5, 8], strides = [1, 1]} : vector<5x96xf32> to vector<5x8xf32>
    %cst_121 = arith.constant dense<0.000000e+00> : vector<5x5xf32>
    %281 = tpu.matmul %278, %279, %cst_121 {dimension_numbers = #tpu.dot_dimension_numbers<[1], [1], [0], [0], [0, 0, 1, 0], [], []>} : vector<5x8xf32>, vector<5x8xf32>, vector<5x5xf32> -> vector<5x5xf32>
    %cst_122 = arith.constant 0.353553385 : f32
    %282 = vector.broadcast %cst_122 : f32 to vector<5x5xf32>
    %283 = arith.mulf %281, %282 : vector<5x5xf32>
    %cst_123 = arith.constant dense<0xFF800000> : vector<5xf32>
    %284 = vector.multi_reduction <maximumf>, %283, %cst_123 [1] : vector<5x5xf32> to vector<5xf32>
    %285 = vector.shape_cast %284 : vector<5xf32> to vector<5x1xf32>
    %286 = vector.broadcast %285 : vector<5x1xf32> to vector<5x5xf32>
    %287 = arith.subf %283, %286 : vector<5x5xf32>
    %288 = math.exp %287 : vector<5x5xf32>
    %cst_124 = arith.constant dense<0.000000e+00> : vector<5xf32>
    %289 = vector.multi_reduction <add>, %288, %cst_124 [1] : vector<5x5xf32> to vector<5xf32>
    %290 = vector.shape_cast %289 : vector<5xf32> to vector<5x1xf32>
    %cst_125 = arith.constant dense<0.000000e+00> : vector<5x8xf32>
    %291 = tpu.matmul %288, %280, %cst_125 {dimension_numbers = #tpu.dot_dimension_numbers<[1], [0], [0], [1], [0, 0, 1, 1], [], []>} : vector<5x5xf32>, vector<5x8xf32>, vector<5x8xf32> -> vector<5x8xf32>
    %292 = tpu.reciprocal %290 {approx = true} : vector<5x1xf32> -> vector<5x1xf32>
    %293 = vector.broadcast %292 : vector<5x1xf32> to vector<5x8xf32>
    %294 = arith.mulf %291, %293 : vector<5x8xf32>
    %295 = vector.extract_strided_slice %234 {offsets = [16, 0], sizes = [8, 32], strides = [1, 1]} : vector<32x32xbf16> to vector<8x32xbf16>
    %296 = arith.truncf %294 : vector<5x8xf32> to vector<5x8xbf16>
    %cst_126 = arith.constant dense<0.000000e+00> : vector<5x32xf32>
    %297 = tpu.matmul %296, %295, %cst_126 {dimension_numbers = #tpu.dot_dimension_numbers<[1], [0], [0], [1], [0, 0, 1, 1], [], []>} : vector<5x8xbf16>, vector<8x32xbf16>, vector<5x32xf32> -> vector<5x32xf32>
    %298 = arith.addf %277, %297 : vector<5x32xf32>
    %299 = vector.extract_strided_slice %232 {offsets = [0, 24], sizes = [5, 8], strides = [1, 1]} : vector<5x96xf32> to vector<5x8xf32>
    %300 = vector.extract_strided_slice %232 {offsets = [0, 56], sizes = [5, 8], strides = [1, 1]} : vector<5x96xf32> to vector<5x8xf32>
    %301 = vector.extract_strided_slice %232 {offsets = [0, 88], sizes = [5, 8], strides = [1, 1]} : vector<5x96xf32> to vector<5x8xf32>
    %cst_127 = arith.constant dense<0.000000e+00> : vector<5x5xf32>
    %302 = tpu.matmul %299, %300, %cst_127 {dimension_numbers = #tpu.dot_dimension_numbers<[1], [1], [0], [0], [0, 0, 1, 0], [], []>} : vector<5x8xf32>, vector<5x8xf32>, vector<5x5xf32> -> vector<5x5xf32>
    %cst_128 = arith.constant 0.353553385 : f32
    %303 = vector.broadcast %cst_128 : f32 to vector<5x5xf32>
    %304 = arith.mulf %302, %303 : vector<5x5xf32>
    %cst_129 = arith.constant dense<0xFF800000> : vector<5xf32>
    %305 = vector.multi_reduction <maximumf>, %304, %cst_129 [1] : vector<5x5xf32> to vector<5xf32>
    %306 = vector.shape_cast %305 : vector<5xf32> to vector<5x1xf32>
    %307 = vector.broadcast %306 : vector<5x1xf32> to vector<5x5xf32>
    %308 = arith.subf %304, %307 : vector<5x5xf32>
    %309 = math.exp %308 : vector<5x5xf32>
    %cst_130 = arith.constant dense<0.000000e+00> : vector<5xf32>
    %310 = vector.multi_reduction <add>, %309, %cst_130 [1] : vector<5x5xf32> to vector<5xf32>
    %311 = vector.shape_cast %310 : vector<5xf32> to vector<5x1xf32>
    %cst_131 = arith.constant dense<0.000000e+00> : vector<5x8xf32>
    %312 = tpu.matmul %309, %301, %cst_131 {dimension_numbers = #tpu.dot_dimension_numbers<[1], [0], [0], [1], [0, 0, 1, 1], [], []>} : vector<5x5xf32>, vector<5x8xf32>, vector<5x8xf32> -> vector<5x8xf32>
    %313 = tpu.reciprocal %311 {approx = true} : vector<5x1xf32> -> vector<5x1xf32>
    %314 = vector.broadcast %313 : vector<5x1xf32> to vector<5x8xf32>
    %315 = arith.mulf %312, %314 : vector<5x8xf32>
    %316 = vector.extract_strided_slice %234 {offsets = [24, 0], sizes = [8, 32], strides = [1, 1]} : vector<32x32xbf16> to vector<8x32xbf16>
    %317 = arith.truncf %315 : vector<5x8xf32> to vector<5x8xbf16>
    %cst_132 = arith.constant dense<0.000000e+00> : vector<5x32xf32>
    %318 = tpu.matmul %317, %316, %cst_132 {dimension_numbers = #tpu.dot_dimension_numbers<[1], [0], [0], [1], [0, 0, 1, 1], [], []>} : vector<5x8xbf16>, vector<8x32xbf16>, vector<5x32xf32> -> vector<5x32xf32>
    %319 = arith.addf %298, %318 : vector<5x32xf32>
    %c1_133 = arith.constant 1 : index
    %c0_134 = arith.constant 0 : index
    %c0_135 = arith.constant 0 : index
    %320 = vector.load %arg11[%c1_133, %c0_134, %c0_135] : memref<2x1x32xf32, #tpu.memory_space<vmem>>, vector<1x1x32xf32>
    %321 = vector.shape_cast %320 : vector<1x1x32xf32> to vector<1x32xf32>
    %322 = vector.broadcast %321 : vector<1x32xf32> to vector<5x32xf32>
    %323 = arith.addf %319, %322 : vector<5x32xf32>
    %324 = arith.addf %198, %323 : vector<5x32xf32>
    %c1_136 = arith.constant 1 : index
    %c0_137 = arith.constant 0 : index
    %c0_138 = arith.constant 0 : index
    %325 = vector.load %arg12[%c1_136, %c0_137, %c0_138] : memref<2x1x32xf32, #tpu.memory_space<vmem>>, vector<1x1x32xf32>
    %326 = vector.shape_cast %325 : vector<1x1x32xf32> to vector<1x32xf32>
    %c1_139 = arith.constant 1 : index
    %c0_140 = arith.constant 0 : index
    %c0_141 = arith.constant 0 : index
    %327 = vector.load %arg13[%c1_139, %c0_140, %c0_141] : memref<2x1x32xf32, #tpu.memory_space<vmem>>, vector<1x1x32xf32>
    %328 = vector.shape_cast %327 : vector<1x1x32xf32> to vector<1x32xf32>
    %cst_142 = arith.constant dense<0.000000e+00> : vector<5xf32>
    %329 = vector.multi_reduction <add>, %324, %cst_142 [1] : vector<5x32xf32> to vector<5xf32>
    %330 = vector.shape_cast %329 : vector<5xf32> to vector<5x1xf32>
    %cst_143 = arith.constant 3.200000e+01 : f32
    %331 = vector.broadcast %cst_143 : f32 to vector<5x1xf32>
    %332 = arith.divf %330, %331 : vector<5x1xf32>
    %333 = vector.broadcast %332 : vector<5x1xf32> to vector<5x32xf32>
    %334 = arith.subf %324, %333 : vector<5x32xf32>
    %335 = arith.mulf %334, %334 : vector<5x32xf32>
    %cst_144 = arith.constant dense<0.000000e+00> : vector<5xf32>
    %336 = vector.multi_reduction <add>, %335, %cst_144 [1] : vector<5x32xf32> to vector<5xf32>
    %337 = vector.shape_cast %336 : vector<5xf32> to vector<5x1xf32>
    %cst_145 = arith.constant 3.200000e+01 : f32
    %338 = vector.broadcast %cst_145 : f32 to vector<5x1xf32>
    %339 = arith.divf %337, %338 : vector<5x1xf32>
    %340 = vector.broadcast %332 : vector<5x1xf32> to vector<5x32xf32>
    %341 = arith.subf %324, %340 : vector<5x32xf32>
    %cst_146 = arith.constant 9.99999997E-7 : f32
    %342 = vector.broadcast %cst_146 : f32 to vector<5x1xf32>
    %343 = arith.addf %339, %342 : vector<5x1xf32>
    %344 = math.rsqrt %343 : vector<5x1xf32>
    %345 = vector.broadcast %344 : vector<5x1xf32> to vector<5x32xf32>
    %346 = arith.mulf %341, %345 : vector<5x32xf32>
    %347 = vector.broadcast %326 : vector<1x32xf32> to vector<5x32xf32>
    %348 = arith.mulf %346, %347 : vector<5x32xf32>
    %349 = vector.broadcast %328 : vector<1x32xf32> to vector<5x32xf32>
    %350 = arith.addf %348, %349 : vector<5x32xf32>
    %c1_147 = arith.constant 1 : index
    %c0_148 = arith.constant 0 : index
    %c0_149 = arith.constant 0 : index
    %351 = vector.load %arg14[%c1_147, %c0_148, %c0_149] : memref<2x32x128xbf16, #tpu.memory_space<vmem>>, vector<1x32x128xbf16>
    %352 = vector.shape_cast %351 : vector<1x32x128xbf16> to vector<32x128xbf16>
    %353 = arith.truncf %350 : vector<5x32xf32> to vector<5x32xbf16>
    %cst_150 = arith.constant dense<0.000000e+00> : vector<5x128xf32>
    %354 = tpu.matmul %353, %352, %cst_150 {dimension_numbers = #tpu.dot_dimension_numbers<[1], [0], [0], [1], [0, 0, 1, 1], [], []>} : vector<5x32xbf16>, vector<32x128xbf16>, vector<5x128xf32> -> vector<5x128xf32>
    %c1_151 = arith.constant 1 : index
    %c0_152 = arith.constant 0 : index
    %c0_153 = arith.constant 0 : index
    %355 = vector.load %arg15[%c1_151, %c0_152, %c0_153] : memref<2x1x128xf32, #tpu.memory_space<vmem>>, vector<1x1x128xf32>
    %356 = vector.shape_cast %355 : vector<1x1x128xf32> to vector<1x128xf32>
    %357 = vector.broadcast %356 : vector<1x128xf32> to vector<5x128xf32>
    %358 = arith.addf %354, %357 : vector<5x128xf32>
    %359 = arith.mulf %358, %358 : vector<5x128xf32>
    %360 = arith.mulf %358, %359 : vector<5x128xf32>
    %cst_154 = arith.constant 4.471500e-02 : f32
    %361 = vector.broadcast %cst_154 : f32 to vector<5x128xf32>
    %362 = arith.mulf %361, %360 : vector<5x128xf32>
    %363 = arith.addf %358, %362 : vector<5x128xf32>
    %cst_155 = arith.constant 0.797884583 : f32
    %364 = vector.broadcast %cst_155 : f32 to vector<5x128xf32>
    %365 = arith.mulf %364, %363 : vector<5x128xf32>
    %366 = math.tanh %365 : vector<5x128xf32>
    %cst_156 = arith.constant 1.000000e+00 : f32
    %367 = vector.broadcast %cst_156 : f32 to vector<5x128xf32>
    %368 = arith.addf %367, %366 : vector<5x128xf32>
    %cst_157 = arith.constant 5.000000e-01 : f32
    %369 = vector.broadcast %cst_157 : f32 to vector<5x128xf32>
    %370 = arith.mulf %369, %368 : vector<5x128xf32>
    %371 = arith.mulf %358, %370 : vector<5x128xf32>
    %c1_158 = arith.constant 1 : index
    %c0_159 = arith.constant 0 : index
    %c0_160 = arith.constant 0 : index
    %372 = vector.load %arg16[%c1_158, %c0_159, %c0_160] : memref<2x128x32xbf16, #tpu.memory_space<vmem>>, vector<1x128x32xbf16>
    %373 = vector.shape_cast %372 : vector<1x128x32xbf16> to vector<128x32xbf16>
    %374 = arith.truncf %371 : vector<5x128xf32> to vector<5x128xbf16>
    %cst_161 = arith.constant dense<0.000000e+00> : vector<5x32xf32>
    %375 = tpu.matmul %374, %373, %cst_161 {dimension_numbers = #tpu.dot_dimension_numbers<[1], [0], [0], [1], [0, 0, 1, 1], [], []>} : vector<5x128xbf16>, vector<128x32xbf16>, vector<5x32xf32> -> vector<5x32xf32>
    %376 = arith.addf %324, %375 : vector<5x32xf32>
    %c1_162 = arith.constant 1 : index
    %c0_163 = arith.constant 0 : index
    %c0_164 = arith.constant 0 : index
    %377 = vector.load %arg17[%c1_162, %c0_163, %c0_164] : memref<2x1x32xf32, #tpu.memory_space<vmem>>, vector<1x1x32xf32>
    %378 = vector.shape_cast %377 : vector<1x1x32xf32> to vector<1x32xf32>
    %379 = vector.broadcast %378 : vector<1x32xf32> to vector<5x32xf32>
    %380 = arith.addf %376, %379 : vector<5x32xf32>
    %381 = arith.mulf %380, %380 : vector<5x32xf32>
    %cst_165 = arith.constant dense<0.000000e+00> : vector<5xf32>
    %382 = vector.multi_reduction <add>, %381, %cst_165 [1] : vector<5x32xf32> to vector<5xf32>
    %383 = vector.shape_cast %382 : vector<5xf32> to vector<5x1xf32>
    %cst_166 = arith.constant 1.000000e-24 : f32
    %384 = vector.broadcast %cst_166 : f32 to vector<5x1xf32>
    %385 = arith.maximumf %383, %384 : vector<5x1xf32>
    %386 = math.rsqrt %385 : vector<5x1xf32>
    %387 = vector.broadcast %386 : vector<5x1xf32> to vector<5x32xf32>
    %388 = arith.mulf %380, %387 : vector<5x32xf32>
    %c0_167 = arith.constant 0 : index
    %c0_168 = arith.constant 0 : index
    %389 = vector.load %arg18[%c0_167, %c0_168] : memref<1x32xf32, #tpu.memory_space<vmem>>, vector<1x32xf32>
    %390 = arith.mulf %389, %389 : vector<1x32xf32>
    %cst_169 = arith.constant dense<0.000000e+00> : vector<1xf32>
    %391 = vector.multi_reduction <add>, %390, %cst_169 [1] : vector<1x32xf32> to vector<1xf32>
    %392 = vector.shape_cast %391 : vector<1xf32> to vector<1x1xf32>
    %cst_170 = arith.constant 1.000000e-24 : f32
    %393 = vector.broadcast %cst_170 : f32 to vector<1x1xf32>
    %394 = arith.maximumf %392, %393 : vector<1x1xf32>
    %395 = math.rsqrt %394 : vector<1x1xf32>
    %396 = vector.broadcast %395 : vector<1x1xf32> to vector<1x32xf32>
    %397 = arith.mulf %389, %396 : vector<1x32xf32>
    %398 = vector.broadcast %397 : vector<1x32xf32> to vector<5x32xf32>
    %399 = arith.mulf %388, %398 : vector<5x32xf32>
    %cst_171 = arith.constant dense<0.000000e+00> : vector<5xf32>
    %400 = vector.multi_reduction <add>, %399, %cst_171 [1] : vector<5x32xf32> to vector<5xf32>
    %401 = vector.shape_cast %400 : vector<5xf32> to vector<5x1xf32>
    %cst_172 = arith.constant 0.000000e+00 : f32
    %cst_173 = arith.constant 1.000000e+00 : f32
    %402 = vector.broadcast %cst_172 : f32 to vector<5x1xf32>
    %403 = arith.maximumf %402, %401 : vector<5x1xf32>
    %404 = vector.broadcast %cst_173 : f32 to vector<5x1xf32>
    %405 = arith.minimumf %404, %403 : vector<5x1xf32>
    %406 = vector.broadcast %405 : vector<5x1xf32> to vector<5x32xf32>
    %407 = arith.mulf %380, %406 : vector<5x32xf32>
    %c0_174 = arith.constant 0 : index
    %c0_175 = arith.constant 0 : index
    %408 = vector.load %arg19[%c0_174, %c0_175] : memref<32x32xbf16, #tpu.memory_space<vmem>>, vector<32x32xbf16>
    %409 = arith.truncf %407 : vector<5x32xf32> to vector<5x32xbf16>
    %cst_176 = arith.constant dense<0.000000e+00> : vector<5x32xf32>
    %410 = tpu.matmul %409, %408, %cst_176 {dimension_numbers = #tpu.dot_dimension_numbers<[1], [0], [0], [1], [0, 0, 1, 1], [], []>} : vector<5x32xbf16>, vector<32x32xbf16>, vector<5x32xf32> -> vector<5x32xf32>
    %c1_177 = arith.constant 1 : index
    %c0_178 = arith.constant 0 : index
    %c0_179 = arith.constant 0 : index
    %411 = vector.load %arg20[%c1_177, %c0_178, %c0_179] : memref<2x32x32xbf16, #tpu.memory_space<vmem>>, vector<1x32x32xbf16>
    %412 = vector.shape_cast %411 : vector<1x32x32xbf16> to vector<32x32xbf16>
    %413 = arith.truncf %410 : vector<5x32xf32> to vector<5x32xbf16>
    %cst_180 = arith.constant dense<0.000000e+00> : vector<5x32xf32>
    %414 = tpu.matmul %413, %412, %cst_180 {dimension_numbers = #tpu.dot_dimension_numbers<[1], [0], [0], [1], [0, 0, 1, 1], [], []>} : vector<5x32xbf16>, vector<32x32xbf16>, vector<5x32xf32> -> vector<5x32xf32>
    %c0_181 = arith.constant 0 : index
    %c0_182 = arith.constant 0 : index
    %c0_183 = arith.constant 0 : index
    %415 = vector.load %arg20[%c0_181, %c0_182, %c0_183] : memref<2x32x32xbf16, #tpu.memory_space<vmem>>, vector<1x32x32xbf16>
    %416 = vector.shape_cast %415 : vector<1x32x32xbf16> to vector<32x32xbf16>
    %417 = arith.truncf %414 : vector<5x32xf32> to vector<5x32xbf16>
    %cst_184 = arith.constant dense<0.000000e+00> : vector<5x32xf32>
    %418 = tpu.matmul %417, %416, %cst_184 {dimension_numbers = #tpu.dot_dimension_numbers<[1], [0], [0], [1], [0, 0, 1, 1], [], []>} : vector<5x32xbf16>, vector<32x32xbf16>, vector<5x32xf32> -> vector<5x32xf32>
    %c0_185 = arith.constant 0 : index
    %c0_186 = arith.constant 0 : index
    %c0_187 = arith.constant 0 : index
    %419 = vector.load %arg6[%c0_185, %c0_186, %c0_187] : memref<2x1x32xf32, #tpu.memory_space<vmem>>, vector<1x1x32xf32>
    %420 = vector.shape_cast %419 : vector<1x1x32xf32> to vector<1x32xf32>
    %c0_188 = arith.constant 0 : index
    %c0_189 = arith.constant 0 : index
    %c0_190 = arith.constant 0 : index
    %421 = vector.load %arg7[%c0_188, %c0_189, %c0_190] : memref<2x1x32xf32, #tpu.memory_space<vmem>>, vector<1x1x32xf32>
    %422 = vector.shape_cast %421 : vector<1x1x32xf32> to vector<1x32xf32>
    %cst_191 = arith.constant dense<0.000000e+00> : vector<5xf32>
    %423 = vector.multi_reduction <add>, %16, %cst_191 [1] : vector<5x32xf32> to vector<5xf32>
    %424 = vector.shape_cast %423 : vector<5xf32> to vector<5x1xf32>
    %cst_192 = arith.constant 3.200000e+01 : f32
    %425 = vector.broadcast %cst_192 : f32 to vector<5x1xf32>
    %426 = arith.divf %424, %425 : vector<5x1xf32>
    %427 = vector.broadcast %426 : vector<5x1xf32> to vector<5x32xf32>
    %428 = arith.subf %16, %427 : vector<5x32xf32>
    %429 = arith.mulf %428, %428 : vector<5x32xf32>
    %cst_193 = arith.constant dense<0.000000e+00> : vector<5xf32>
    %430 = vector.multi_reduction <add>, %429, %cst_193 [1] : vector<5x32xf32> to vector<5xf32>
    %431 = vector.shape_cast %430 : vector<5xf32> to vector<5x1xf32>
    %cst_194 = arith.constant 3.200000e+01 : f32
    %432 = vector.broadcast %cst_194 : f32 to vector<5x1xf32>
    %433 = arith.divf %431, %432 : vector<5x1xf32>
    %434 = vector.broadcast %426 : vector<5x1xf32> to vector<5x32xf32>
    %435 = arith.subf %16, %434 : vector<5x32xf32>
    %cst_195 = arith.constant 9.99999997E-7 : f32
    %436 = vector.broadcast %cst_195 : f32 to vector<5x1xf32>
    %437 = arith.addf %433, %436 : vector<5x1xf32>
    %438 = math.rsqrt %437 : vector<5x1xf32>
    %439 = vector.broadcast %438 : vector<5x1xf32> to vector<5x32xf32>
    %440 = arith.mulf %435, %439 : vector<5x32xf32>
    %441 = vector.broadcast %420 : vector<1x32xf32> to vector<5x32xf32>
    %442 = arith.mulf %440, %441 : vector<5x32xf32>
    %443 = vector.broadcast %422 : vector<1x32xf32> to vector<5x32xf32>
    %444 = arith.addf %442, %443 : vector<5x32xf32>
    %c0_196 = arith.constant 0 : index
    %c0_197 = arith.constant 0 : index
    %c0_198 = arith.constant 0 : index
    %445 = vector.load %arg8[%c0_196, %c0_197, %c0_198] : memref<2x32x96xbf16, #tpu.memory_space<vmem>>, vector<1x32x96xbf16>
    %446 = vector.shape_cast %445 : vector<1x32x96xbf16> to vector<32x96xbf16>
    %447 = arith.truncf %444 : vector<5x32xf32> to vector<5x32xbf16>
    %cst_199 = arith.constant dense<0.000000e+00> : vector<5x96xf32>
    %448 = tpu.matmul %447, %446, %cst_199 {dimension_numbers = #tpu.dot_dimension_numbers<[1], [0], [0], [1], [0, 0, 1, 1], [], []>} : vector<5x32xbf16>, vector<32x96xbf16>, vector<5x96xf32> -> vector<5x96xf32>
    %c0_200 = arith.constant 0 : index
    %c0_201 = arith.constant 0 : index
    %c0_202 = arith.constant 0 : index
    %449 = vector.load %arg9[%c0_200, %c0_201, %c0_202] : memref<2x1x96xf32, #tpu.memory_space<vmem>>, vector<1x1x96xf32>
    %450 = vector.shape_cast %449 : vector<1x1x96xf32> to vector<1x96xf32>
    %451 = vector.broadcast %450 : vector<1x96xf32> to vector<5x96xf32>
    %452 = arith.addf %448, %451 : vector<5x96xf32>
    %c0_203 = arith.constant 0 : index
    %c0_204 = arith.constant 0 : index
    %c0_205 = arith.constant 0 : index
    %453 = vector.load %arg10[%c0_203, %c0_204, %c0_205] : memref<2x32x32xbf16, #tpu.memory_space<vmem>>, vector<1x32x32xbf16>
    %454 = vector.shape_cast %453 : vector<1x32x32xbf16> to vector<32x32xbf16>
    %cst_206 = arith.constant 0.000000e+00 : f32
    %455 = vector.broadcast %cst_206 : f32 to vector<5x32xf32>
    %456 = vector.extract_strided_slice %452 {offsets = [0, 0], sizes = [5, 8], strides = [1, 1]} : vector<5x96xf32> to vector<5x8xf32>
    %457 = vector.extract_strided_slice %452 {offsets = [0, 32], sizes = [5, 8], strides = [1, 1]} : vector<5x96xf32> to vector<5x8xf32>
    %458 = vector.extract_strided_slice %452 {offsets = [0, 64], sizes = [5, 8], strides = [1, 1]} : vector<5x96xf32> to vector<5x8xf32>
    %459 = vector.extract_strided_slice %418 {offsets = [0, 0], sizes = [5, 8], strides = [1, 1]} : vector<5x32xf32> to vector<5x8xf32>
    %460 = arith.addf %458, %459 : vector<5x8xf32>
    %cst_207 = arith.constant dense<0.000000e+00> : vector<5x5xf32>
    %461 = tpu.matmul %456, %457, %cst_207 {dimension_numbers = #tpu.dot_dimension_numbers<[1], [1], [0], [0], [0, 0, 1, 0], [], []>} : vector<5x8xf32>, vector<5x8xf32>, vector<5x5xf32> -> vector<5x5xf32>
    %cst_208 = arith.constant 0.353553385 : f32
    %462 = vector.broadcast %cst_208 : f32 to vector<5x5xf32>
    %463 = arith.mulf %461, %462 : vector<5x5xf32>
    %cst_209 = arith.constant dense<0xFF800000> : vector<5xf32>
    %464 = vector.multi_reduction <maximumf>, %463, %cst_209 [1] : vector<5x5xf32> to vector<5xf32>
    %465 = vector.shape_cast %464 : vector<5xf32> to vector<5x1xf32>
    %466 = vector.broadcast %465 : vector<5x1xf32> to vector<5x5xf32>
    %467 = arith.subf %463, %466 : vector<5x5xf32>
    %468 = math.exp %467 : vector<5x5xf32>
    %cst_210 = arith.constant dense<0.000000e+00> : vector<5xf32>
    %469 = vector.multi_reduction <add>, %468, %cst_210 [1] : vector<5x5xf32> to vector<5xf32>
    %470 = vector.shape_cast %469 : vector<5xf32> to vector<5x1xf32>
    %cst_211 = arith.constant dense<0.000000e+00> : vector<5x8xf32>
    %471 = tpu.matmul %468, %460, %cst_211 {dimension_numbers = #tpu.dot_dimension_numbers<[1], [0], [0], [1], [0, 0, 1, 1], [], []>} : vector<5x5xf32>, vector<5x8xf32>, vector<5x8xf32> -> vector<5x8xf32>
    %472 = tpu.reciprocal %470 {approx = true} : vector<5x1xf32> -> vector<5x1xf32>
    %473 = vector.broadcast %472 : vector<5x1xf32> to vector<5x8xf32>
    %474 = arith.mulf %471, %473 : vector<5x8xf32>
    %475 = vector.extract_strided_slice %454 {offsets = [0, 0], sizes = [8, 32], strides = [1, 1]} : vector<32x32xbf16> to vector<8x32xbf16>
    %476 = arith.truncf %474 : vector<5x8xf32> to vector<5x8xbf16>
    %cst_212 = arith.constant dense<0.000000e+00> : vector<5x32xf32>
    %477 = tpu.matmul %476, %475, %cst_212 {dimension_numbers = #tpu.dot_dimension_numbers<[1], [0], [0], [1], [0, 0, 1, 1], [], []>} : vector<5x8xbf16>, vector<8x32xbf16>, vector<5x32xf32> -> vector<5x32xf32>
    %478 = arith.addf %455, %477 : vector<5x32xf32>
    %479 = vector.extract_strided_slice %452 {offsets = [0, 8], sizes = [5, 8], strides = [1, 1]} : vector<5x96xf32> to vector<5x8xf32>
    %480 = vector.extract_strided_slice %452 {offsets = [0, 40], sizes = [5, 8], strides = [1, 1]} : vector<5x96xf32> to vector<5x8xf32>
    %481 = vector.extract_strided_slice %452 {offsets = [0, 72], sizes = [5, 8], strides = [1, 1]} : vector<5x96xf32> to vector<5x8xf32>
    %482 = vector.extract_strided_slice %418 {offsets = [0, 8], sizes = [5, 8], strides = [1, 1]} : vector<5x32xf32> to vector<5x8xf32>
    %483 = arith.addf %481, %482 : vector<5x8xf32>
    %cst_213 = arith.constant dense<0.000000e+00> : vector<5x5xf32>
    %484 = tpu.matmul %479, %480, %cst_213 {dimension_numbers = #tpu.dot_dimension_numbers<[1], [1], [0], [0], [0, 0, 1, 0], [], []>} : vector<5x8xf32>, vector<5x8xf32>, vector<5x5xf32> -> vector<5x5xf32>
    %cst_214 = arith.constant 0.353553385 : f32
    %485 = vector.broadcast %cst_214 : f32 to vector<5x5xf32>
    %486 = arith.mulf %484, %485 : vector<5x5xf32>
    %cst_215 = arith.constant dense<0xFF800000> : vector<5xf32>
    %487 = vector.multi_reduction <maximumf>, %486, %cst_215 [1] : vector<5x5xf32> to vector<5xf32>
    %488 = vector.shape_cast %487 : vector<5xf32> to vector<5x1xf32>
    %489 = vector.broadcast %488 : vector<5x1xf32> to vector<5x5xf32>
    %490 = arith.subf %486, %489 : vector<5x5xf32>
    %491 = math.exp %490 : vector<5x5xf32>
    %cst_216 = arith.constant dense<0.000000e+00> : vector<5xf32>
    %492 = vector.multi_reduction <add>, %491, %cst_216 [1] : vector<5x5xf32> to vector<5xf32>
    %493 = vector.shape_cast %492 : vector<5xf32> to vector<5x1xf32>
    %cst_217 = arith.constant dense<0.000000e+00> : vector<5x8xf32>
    %494 = tpu.matmul %491, %483, %cst_217 {dimension_numbers = #tpu.dot_dimension_numbers<[1], [0], [0], [1], [0, 0, 1, 1], [], []>} : vector<5x5xf32>, vector<5x8xf32>, vector<5x8xf32> -> vector<5x8xf32>
    %495 = tpu.reciprocal %493 {approx = true} : vector<5x1xf32> -> vector<5x1xf32>
    %496 = vector.broadcast %495 : vector<5x1xf32> to vector<5x8xf32>
    %497 = arith.mulf %494, %496 : vector<5x8xf32>
    %498 = vector.extract_strided_slice %454 {offsets = [8, 0], sizes = [8, 32], strides = [1, 1]} : vector<32x32xbf16> to vector<8x32xbf16>
    %499 = arith.truncf %497 : vector<5x8xf32> to vector<5x8xbf16>
    %cst_218 = arith.constant dense<0.000000e+00> : vector<5x32xf32>
    %500 = tpu.matmul %499, %498, %cst_218 {dimension_numbers = #tpu.dot_dimension_numbers<[1], [0], [0], [1], [0, 0, 1, 1], [], []>} : vector<5x8xbf16>, vector<8x32xbf16>, vector<5x32xf32> -> vector<5x32xf32>
    %501 = arith.addf %478, %500 : vector<5x32xf32>
    %502 = vector.extract_strided_slice %452 {offsets = [0, 16], sizes = [5, 8], strides = [1, 1]} : vector<5x96xf32> to vector<5x8xf32>
    %503 = vector.extract_strided_slice %452 {offsets = [0, 48], sizes = [5, 8], strides = [1, 1]} : vector<5x96xf32> to vector<5x8xf32>
    %504 = vector.extract_strided_slice %452 {offsets = [0, 80], sizes = [5, 8], strides = [1, 1]} : vector<5x96xf32> to vector<5x8xf32>
    %505 = vector.extract_strided_slice %418 {offsets = [0, 16], sizes = [5, 8], strides = [1, 1]} : vector<5x32xf32> to vector<5x8xf32>
    %506 = arith.addf %504, %505 : vector<5x8xf32>
    %cst_219 = arith.constant dense<0.000000e+00> : vector<5x5xf32>
    %507 = tpu.matmul %502, %503, %cst_219 {dimension_numbers = #tpu.dot_dimension_numbers<[1], [1], [0], [0], [0, 0, 1, 0], [], []>} : vector<5x8xf32>, vector<5x8xf32>, vector<5x5xf32> -> vector<5x5xf32>
    %cst_220 = arith.constant 0.353553385 : f32
    %508 = vector.broadcast %cst_220 : f32 to vector<5x5xf32>
    %509 = arith.mulf %507, %508 : vector<5x5xf32>
    %cst_221 = arith.constant dense<0xFF800000> : vector<5xf32>
    %510 = vector.multi_reduction <maximumf>, %509, %cst_221 [1] : vector<5x5xf32> to vector<5xf32>
    %511 = vector.shape_cast %510 : vector<5xf32> to vector<5x1xf32>
    %512 = vector.broadcast %511 : vector<5x1xf32> to vector<5x5xf32>
    %513 = arith.subf %509, %512 : vector<5x5xf32>
    %514 = math.exp %513 : vector<5x5xf32>
    %cst_222 = arith.constant dense<0.000000e+00> : vector<5xf32>
    %515 = vector.multi_reduction <add>, %514, %cst_222 [1] : vector<5x5xf32> to vector<5xf32>
    %516 = vector.shape_cast %515 : vector<5xf32> to vector<5x1xf32>
    %cst_223 = arith.constant dense<0.000000e+00> : vector<5x8xf32>
    %517 = tpu.matmul %514, %506, %cst_223 {dimension_numbers = #tpu.dot_dimension_numbers<[1], [0], [0], [1], [0, 0, 1, 1], [], []>} : vector<5x5xf32>, vector<5x8xf32>, vector<5x8xf32> -> vector<5x8xf32>
    %518 = tpu.reciprocal %516 {approx = true} : vector<5x1xf32> -> vector<5x1xf32>
    %519 = vector.broadcast %518 : vector<5x1xf32> to vector<5x8xf32>
    %520 = arith.mulf %517, %519 : vector<5x8xf32>
    %521 = vector.extract_strided_slice %454 {offsets = [16, 0], sizes = [8, 32], strides = [1, 1]} : vector<32x32xbf16> to vector<8x32xbf16>
    %522 = arith.truncf %520 : vector<5x8xf32> to vector<5x8xbf16>
    %cst_224 = arith.constant dense<0.000000e+00> : vector<5x32xf32>
    %523 = tpu.matmul %522, %521, %cst_224 {dimension_numbers = #tpu.dot_dimension_numbers<[1], [0], [0], [1], [0, 0, 1, 1], [], []>} : vector<5x8xbf16>, vector<8x32xbf16>, vector<5x32xf32> -> vector<5x32xf32>
    %524 = arith.addf %501, %523 : vector<5x32xf32>
    %525 = vector.extract_strided_slice %452 {offsets = [0, 24], sizes = [5, 8], strides = [1, 1]} : vector<5x96xf32> to vector<5x8xf32>
    %526 = vector.extract_strided_slice %452 {offsets = [0, 56], sizes = [5, 8], strides = [1, 1]} : vector<5x96xf32> to vector<5x8xf32>
    %527 = vector.extract_strided_slice %452 {offsets = [0, 88], sizes = [5, 8], strides = [1, 1]} : vector<5x96xf32> to vector<5x8xf32>
    %528 = vector.extract_strided_slice %418 {offsets = [0, 24], sizes = [5, 8], strides = [1, 1]} : vector<5x32xf32> to vector<5x8xf32>
    %529 = arith.addf %527, %528 : vector<5x8xf32>
    %cst_225 = arith.constant dense<0.000000e+00> : vector<5x5xf32>
    %530 = tpu.matmul %525, %526, %cst_225 {dimension_numbers = #tpu.dot_dimension_numbers<[1], [1], [0], [0], [0, 0, 1, 0], [], []>} : vector<5x8xf32>, vector<5x8xf32>, vector<5x5xf32> -> vector<5x5xf32>
    %cst_226 = arith.constant 0.353553385 : f32
    %531 = vector.broadcast %cst_226 : f32 to vector<5x5xf32>
    %532 = arith.mulf %530, %531 : vector<5x5xf32>
    %cst_227 = arith.constant dense<0xFF800000> : vector<5xf32>
    %533 = vector.multi_reduction <maximumf>, %532, %cst_227 [1] : vector<5x5xf32> to vector<5xf32>
    %534 = vector.shape_cast %533 : vector<5xf32> to vector<5x1xf32>
    %535 = vector.broadcast %534 : vector<5x1xf32> to vector<5x5xf32>
    %536 = arith.subf %532, %535 : vector<5x5xf32>
    %537 = math.exp %536 : vector<5x5xf32>
    %cst_228 = arith.constant dense<0.000000e+00> : vector<5xf32>
    %538 = vector.multi_reduction <add>, %537, %cst_228 [1] : vector<5x5xf32> to vector<5xf32>
    %539 = vector.shape_cast %538 : vector<5xf32> to vector<5x1xf32>
    %cst_229 = arith.constant dense<0.000000e+00> : vector<5x8xf32>
    %540 = tpu.matmul %537, %529, %cst_229 {dimension_numbers = #tpu.dot_dimension_numbers<[1], [0], [0], [1], [0, 0, 1, 1], [], []>} : vector<5x5xf32>, vector<5x8xf32>, vector<5x8xf32> -> vector<5x8xf32>
    %541 = tpu.reciprocal %539 {approx = true} : vector<5x1xf32> -> vector<5x1xf32>
    %542 = vector.broadcast %541 : vector<5x1xf32> to vector<5x8xf32>
    %543 = arith.mulf %540, %542 : vector<5x8xf32>
    %544 = vector.extract_strided_slice %454 {offsets = [24, 0], sizes = [8, 32], strides = [1, 1]} : vector<32x32xbf16> to vector<8x32xbf16>
    %545 = arith.truncf %543 : vector<5x8xf32> to vector<5x8xbf16>
    %cst_230 = arith.constant dense<0.000000e+00> : vector<5x32xf32>
    %546 = tpu.matmul %545, %544, %cst_230 {dimension_numbers = #tpu.dot_dimension_numbers<[1], [0], [0], [1], [0, 0, 1, 1], [], []>} : vector<5x8xbf16>, vector<8x32xbf16>, vector<5x32xf32> -> vector<5x32xf32>
    %547 = arith.addf %524, %546 : vector<5x32xf32>
    %c0_231 = arith.constant 0 : index
    %c0_232 = arith.constant 0 : index
    %c0_233 = arith.constant 0 : index
    %548 = vector.load %arg11[%c0_231, %c0_232, %c0_233] : memref<2x1x32xf32, #tpu.memory_space<vmem>>, vector<1x1x32xf32>
    %549 = vector.shape_cast %548 : vector<1x1x32xf32> to vector<1x32xf32>
    %550 = vector.broadcast %549 : vector<1x32xf32> to vector<5x32xf32>
    %551 = arith.addf %547, %550 : vector<5x32xf32>
    %552 = arith.addf %16, %551 : vector<5x32xf32>
    %c0_234 = arith.constant 0 : index
    %c0_235 = arith.constant 0 : index
    %c0_236 = arith.constant 0 : index
    %553 = vector.load %arg12[%c0_234, %c0_235, %c0_236] : memref<2x1x32xf32, #tpu.memory_space<vmem>>, vector<1x1x32xf32>
    %554 = vector.shape_cast %553 : vector<1x1x32xf32> to vector<1x32xf32>
    %c0_237 = arith.constant 0 : index
    %c0_238 = arith.constant 0 : index
    %c0_239 = arith.constant 0 : index
    %555 = vector.load %arg13[%c0_237, %c0_238, %c0_239] : memref<2x1x32xf32, #tpu.memory_space<vmem>>, vector<1x1x32xf32>
    %556 = vector.shape_cast %555 : vector<1x1x32xf32> to vector<1x32xf32>
    %cst_240 = arith.constant dense<0.000000e+00> : vector<5xf32>
    %557 = vector.multi_reduction <add>, %552, %cst_240 [1] : vector<5x32xf32> to vector<5xf32>
    %558 = vector.shape_cast %557 : vector<5xf32> to vector<5x1xf32>
    %cst_241 = arith.constant 3.200000e+01 : f32
    %559 = vector.broadcast %cst_241 : f32 to vector<5x1xf32>
    %560 = arith.divf %558, %559 : vector<5x1xf32>
    %561 = vector.broadcast %560 : vector<5x1xf32> to vector<5x32xf32>
    %562 = arith.subf %552, %561 : vector<5x32xf32>
    %563 = arith.mulf %562, %562 : vector<5x32xf32>
    %cst_242 = arith.constant dense<0.000000e+00> : vector<5xf32>
    %564 = vector.multi_reduction <add>, %563, %cst_242 [1] : vector<5x32xf32> to vector<5xf32>
    %565 = vector.shape_cast %564 : vector<5xf32> to vector<5x1xf32>
    %cst_243 = arith.constant 3.200000e+01 : f32
    %566 = vector.broadcast %cst_243 : f32 to vector<5x1xf32>
    %567 = arith.divf %565, %566 : vector<5x1xf32>
    %568 = vector.broadcast %560 : vector<5x1xf32> to vector<5x32xf32>
    %569 = arith.subf %552, %568 : vector<5x32xf32>
    %cst_244 = arith.constant 9.99999997E-7 : f32
    %570 = vector.broadcast %cst_244 : f32 to vector<5x1xf32>
    %571 = arith.addf %567, %570 : vector<5x1xf32>
    %572 = math.rsqrt %571 : vector<5x1xf32>
    %573 = vector.broadcast %572 : vector<5x1xf32> to vector<5x32xf32>
    %574 = arith.mulf %569, %573 : vector<5x32xf32>
    %575 = vector.broadcast %554 : vector<1x32xf32> to vector<5x32xf32>
    %576 = arith.mulf %574, %575 : vector<5x32xf32>
    %577 = vector.broadcast %556 : vector<1x32xf32> to vector<5x32xf32>
    %578 = arith.addf %576, %577 : vector<5x32xf32>
    %c0_245 = arith.constant 0 : index
    %c0_246 = arith.constant 0 : index
    %c0_247 = arith.constant 0 : index
    %579 = vector.load %arg14[%c0_245, %c0_246, %c0_247] : memref<2x32x128xbf16, #tpu.memory_space<vmem>>, vector<1x32x128xbf16>
    %580 = vector.shape_cast %579 : vector<1x32x128xbf16> to vector<32x128xbf16>
    %581 = arith.truncf %578 : vector<5x32xf32> to vector<5x32xbf16>
    %cst_248 = arith.constant dense<0.000000e+00> : vector<5x128xf32>
    %582 = tpu.matmul %581, %580, %cst_248 {dimension_numbers = #tpu.dot_dimension_numbers<[1], [0], [0], [1], [0, 0, 1, 1], [], []>} : vector<5x32xbf16>, vector<32x128xbf16>, vector<5x128xf32> -> vector<5x128xf32>
    %c0_249 = arith.constant 0 : index
    %c0_250 = arith.constant 0 : index
    %c0_251 = arith.constant 0 : index
    %583 = vector.load %arg15[%c0_249, %c0_250, %c0_251] : memref<2x1x128xf32, #tpu.memory_space<vmem>>, vector<1x1x128xf32>
    %584 = vector.shape_cast %583 : vector<1x1x128xf32> to vector<1x128xf32>
    %585 = vector.broadcast %584 : vector<1x128xf32> to vector<5x128xf32>
    %586 = arith.addf %582, %585 : vector<5x128xf32>
    %587 = arith.mulf %586, %586 : vector<5x128xf32>
    %588 = arith.mulf %586, %587 : vector<5x128xf32>
    %cst_252 = arith.constant 4.471500e-02 : f32
    %589 = vector.broadcast %cst_252 : f32 to vector<5x128xf32>
    %590 = arith.mulf %589, %588 : vector<5x128xf32>
    %591 = arith.addf %586, %590 : vector<5x128xf32>
    %cst_253 = arith.constant 0.797884583 : f32
    %592 = vector.broadcast %cst_253 : f32 to vector<5x128xf32>
    %593 = arith.mulf %592, %591 : vector<5x128xf32>
    %594 = math.tanh %593 : vector<5x128xf32>
    %cst_254 = arith.constant 1.000000e+00 : f32
    %595 = vector.broadcast %cst_254 : f32 to vector<5x128xf32>
    %596 = arith.addf %595, %594 : vector<5x128xf32>
    %cst_255 = arith.constant 5.000000e-01 : f32
    %597 = vector.broadcast %cst_255 : f32 to vector<5x128xf32>
    %598 = arith.mulf %597, %596 : vector<5x128xf32>
    %599 = arith.mulf %586, %598 : vector<5x128xf32>
    %c0_256 = arith.constant 0 : index
    %c0_257 = arith.constant 0 : index
    %c0_258 = arith.constant 0 : index
    %600 = vector.load %arg16[%c0_256, %c0_257, %c0_258] : memref<2x128x32xbf16, #tpu.memory_space<vmem>>, vector<1x128x32xbf16>
    %601 = vector.shape_cast %600 : vector<1x128x32xbf16> to vector<128x32xbf16>
    %602 = arith.truncf %599 : vector<5x128xf32> to vector<5x128xbf16>
    %cst_259 = arith.constant dense<0.000000e+00> : vector<5x32xf32>
    %603 = tpu.matmul %602, %601, %cst_259 {dimension_numbers = #tpu.dot_dimension_numbers<[1], [0], [0], [1], [0, 0, 1, 1], [], []>} : vector<5x128xbf16>, vector<128x32xbf16>, vector<5x32xf32> -> vector<5x32xf32>
    %604 = arith.addf %552, %603 : vector<5x32xf32>
    %c0_260 = arith.constant 0 : index
    %c0_261 = arith.constant 0 : index
    %c0_262 = arith.constant 0 : index
    %605 = vector.load %arg17[%c0_260, %c0_261, %c0_262] : memref<2x1x32xf32, #tpu.memory_space<vmem>>, vector<1x1x32xf32>
    %606 = vector.shape_cast %605 : vector<1x1x32xf32> to vector<1x32xf32>
    %607 = vector.broadcast %606 : vector<1x32xf32> to vector<5x32xf32>
    %608 = arith.addf %604, %607 : vector<5x32xf32>
    %c1_263 = arith.constant 1 : index
    %c0_264 = arith.constant 0 : index
    %c0_265 = arith.constant 0 : index
    %609 = vector.load %arg6[%c1_263, %c0_264, %c0_265] : memref<2x1x32xf32, #tpu.memory_space<vmem>>, vector<1x1x32xf32>
    %610 = vector.shape_cast %609 : vector<1x1x32xf32> to vector<1x32xf32>
    %c1_266 = arith.constant 1 : index
    %c0_267 = arith.constant 0 : index
    %c0_268 = arith.constant 0 : index
    %611 = vector.load %arg7[%c1_266, %c0_267, %c0_268] : memref<2x1x32xf32, #tpu.memory_space<vmem>>, vector<1x1x32xf32>
    %612 = vector.shape_cast %611 : vector<1x1x32xf32> to vector<1x32xf32>
    %cst_269 = arith.constant dense<0.000000e+00> : vector<5xf32>
    %613 = vector.multi_reduction <add>, %608, %cst_269 [1] : vector<5x32xf32> to vector<5xf32>
    %614 = vector.shape_cast %613 : vector<5xf32> to vector<5x1xf32>
    %cst_270 = arith.constant 3.200000e+01 : f32
    %615 = vector.broadcast %cst_270 : f32 to vector<5x1xf32>
    %616 = arith.divf %614, %615 : vector<5x1xf32>
    %617 = vector.broadcast %616 : vector<5x1xf32> to vector<5x32xf32>
    %618 = arith.subf %608, %617 : vector<5x32xf32>
    %619 = arith.mulf %618, %618 : vector<5x32xf32>
    %cst_271 = arith.constant dense<0.000000e+00> : vector<5xf32>
    %620 = vector.multi_reduction <add>, %619, %cst_271 [1] : vector<5x32xf32> to vector<5xf32>
    %621 = vector.shape_cast %620 : vector<5xf32> to vector<5x1xf32>
    %cst_272 = arith.constant 3.200000e+01 : f32
    %622 = vector.broadcast %cst_272 : f32 to vector<5x1xf32>
    %623 = arith.divf %621, %622 : vector<5x1xf32>
    %624 = vector.broadcast %616 : vector<5x1xf32> to vector<5x32xf32>
    %625 = arith.subf %608, %624 : vector<5x32xf32>
    %cst_273 = arith.constant 9.99999997E-7 : f32
    %626 = vector.broadcast %cst_273 : f32 to vector<5x1xf32>
    %627 = arith.addf %623, %626 : vector<5x1xf32>
    %628 = math.rsqrt %627 : vector<5x1xf32>
    %629 = vector.broadcast %628 : vector<5x1xf32> to vector<5x32xf32>
    %630 = arith.mulf %625, %629 : vector<5x32xf32>
    %631 = vector.broadcast %610 : vector<1x32xf32> to vector<5x32xf32>
    %632 = arith.mulf %630, %631 : vector<5x32xf32>
    %633 = vector.broadcast %612 : vector<1x32xf32> to vector<5x32xf32>
    %634 = arith.addf %632, %633 : vector<5x32xf32>
    %c1_274 = arith.constant 1 : index
    %c0_275 = arith.constant 0 : index
    %c0_276 = arith.constant 0 : index
    %635 = vector.load %arg8[%c1_274, %c0_275, %c0_276] : memref<2x32x96xbf16, #tpu.memory_space<vmem>>, vector<1x32x96xbf16>
    %636 = vector.shape_cast %635 : vector<1x32x96xbf16> to vector<32x96xbf16>
    %637 = arith.truncf %634 : vector<5x32xf32> to vector<5x32xbf16>
    %cst_277 = arith.constant dense<0.000000e+00> : vector<5x96xf32>
    %638 = tpu.matmul %637, %636, %cst_277 {dimension_numbers = #tpu.dot_dimension_numbers<[1], [0], [0], [1], [0, 0, 1, 1], [], []>} : vector<5x32xbf16>, vector<32x96xbf16>, vector<5x96xf32> -> vector<5x96xf32>
    %c1_278 = arith.constant 1 : index
    %c0_279 = arith.constant 0 : index
    %c0_280 = arith.constant 0 : index
    %639 = vector.load %arg9[%c1_278, %c0_279, %c0_280] : memref<2x1x96xf32, #tpu.memory_space<vmem>>, vector<1x1x96xf32>
    %640 = vector.shape_cast %639 : vector<1x1x96xf32> to vector<1x96xf32>
    %641 = vector.broadcast %640 : vector<1x96xf32> to vector<5x96xf32>
    %642 = arith.addf %638, %641 : vector<5x96xf32>
    %c1_281 = arith.constant 1 : index
    %c0_282 = arith.constant 0 : index
    %c0_283 = arith.constant 0 : index
    %643 = vector.load %arg10[%c1_281, %c0_282, %c0_283] : memref<2x32x32xbf16, #tpu.memory_space<vmem>>, vector<1x32x32xbf16>
    %644 = vector.shape_cast %643 : vector<1x32x32xbf16> to vector<32x32xbf16>
    %cst_284 = arith.constant 0.000000e+00 : f32
    %645 = vector.broadcast %cst_284 : f32 to vector<5x32xf32>
    %646 = vector.extract_strided_slice %642 {offsets = [0, 0], sizes = [5, 8], strides = [1, 1]} : vector<5x96xf32> to vector<5x8xf32>
    %647 = vector.extract_strided_slice %642 {offsets = [0, 32], sizes = [5, 8], strides = [1, 1]} : vector<5x96xf32> to vector<5x8xf32>
    %648 = vector.extract_strided_slice %642 {offsets = [0, 64], sizes = [5, 8], strides = [1, 1]} : vector<5x96xf32> to vector<5x8xf32>
    %649 = vector.extract_strided_slice %414 {offsets = [0, 0], sizes = [5, 8], strides = [1, 1]} : vector<5x32xf32> to vector<5x8xf32>
    %650 = arith.addf %648, %649 : vector<5x8xf32>
    %cst_285 = arith.constant dense<0.000000e+00> : vector<5x5xf32>
    %651 = tpu.matmul %646, %647, %cst_285 {dimension_numbers = #tpu.dot_dimension_numbers<[1], [1], [0], [0], [0, 0, 1, 0], [], []>} : vector<5x8xf32>, vector<5x8xf32>, vector<5x5xf32> -> vector<5x5xf32>
    %cst_286 = arith.constant 0.353553385 : f32
    %652 = vector.broadcast %cst_286 : f32 to vector<5x5xf32>
    %653 = arith.mulf %651, %652 : vector<5x5xf32>
    %cst_287 = arith.constant dense<0xFF800000> : vector<5xf32>
    %654 = vector.multi_reduction <maximumf>, %653, %cst_287 [1] : vector<5x5xf32> to vector<5xf32>
    %655 = vector.shape_cast %654 : vector<5xf32> to vector<5x1xf32>
    %656 = vector.broadcast %655 : vector<5x1xf32> to vector<5x5xf32>
    %657 = arith.subf %653, %656 : vector<5x5xf32>
    %658 = math.exp %657 : vector<5x5xf32>
    %cst_288 = arith.constant dense<0.000000e+00> : vector<5xf32>
    %659 = vector.multi_reduction <add>, %658, %cst_288 [1] : vector<5x5xf32> to vector<5xf32>
    %660 = vector.shape_cast %659 : vector<5xf32> to vector<5x1xf32>
    %cst_289 = arith.constant dense<0.000000e+00> : vector<5x8xf32>
    %661 = tpu.matmul %658, %650, %cst_289 {dimension_numbers = #tpu.dot_dimension_numbers<[1], [0], [0], [1], [0, 0, 1, 1], [], []>} : vector<5x5xf32>, vector<5x8xf32>, vector<5x8xf32> -> vector<5x8xf32>
    %662 = tpu.reciprocal %660 {approx = true} : vector<5x1xf32> -> vector<5x1xf32>
    %663 = vector.broadcast %662 : vector<5x1xf32> to vector<5x8xf32>
    %664 = arith.mulf %661, %663 : vector<5x8xf32>
    %665 = vector.extract_strided_slice %644 {offsets = [0, 0], sizes = [8, 32], strides = [1, 1]} : vector<32x32xbf16> to vector<8x32xbf16>
    %666 = arith.truncf %664 : vector<5x8xf32> to vector<5x8xbf16>
    %cst_290 = arith.constant dense<0.000000e+00> : vector<5x32xf32>
    %667 = tpu.matmul %666, %665, %cst_290 {dimension_numbers = #tpu.dot_dimension_numbers<[1], [0], [0], [1], [0, 0, 1, 1], [], []>} : vector<5x8xbf16>, vector<8x32xbf16>, vector<5x32xf32> -> vector<5x32xf32>
    %668 = arith.addf %645, %667 : vector<5x32xf32>
    %669 = vector.extract_strided_slice %642 {offsets = [0, 8], sizes = [5, 8], strides = [1, 1]} : vector<5x96xf32> to vector<5x8xf32>
    %670 = vector.extract_strided_slice %642 {offsets = [0, 40], sizes = [5, 8], strides = [1, 1]} : vector<5x96xf32> to vector<5x8xf32>
    %671 = vector.extract_strided_slice %642 {offsets = [0, 72], sizes = [5, 8], strides = [1, 1]} : vector<5x96xf32> to vector<5x8xf32>
    %672 = vector.extract_strided_slice %414 {offsets = [0, 8], sizes = [5, 8], strides = [1, 1]} : vector<5x32xf32> to vector<5x8xf32>
    %673 = arith.addf %671, %672 : vector<5x8xf32>
    %cst_291 = arith.constant dense<0.000000e+00> : vector<5x5xf32>
    %674 = tpu.matmul %669, %670, %cst_291 {dimension_numbers = #tpu.dot_dimension_numbers<[1], [1], [0], [0], [0, 0, 1, 0], [], []>} : vector<5x8xf32>, vector<5x8xf32>, vector<5x5xf32> -> vector<5x5xf32>
    %cst_292 = arith.constant 0.353553385 : f32
    %675 = vector.broadcast %cst_292 : f32 to vector<5x5xf32>
    %676 = arith.mulf %674, %675 : vector<5x5xf32>
    %cst_293 = arith.constant dense<0xFF800000> : vector<5xf32>
    %677 = vector.multi_reduction <maximumf>, %676, %cst_293 [1] : vector<5x5xf32> to vector<5xf32>
    %678 = vector.shape_cast %677 : vector<5xf32> to vector<5x1xf32>
    %679 = vector.broadcast %678 : vector<5x1xf32> to vector<5x5xf32>
    %680 = arith.subf %676, %679 : vector<5x5xf32>
    %681 = math.exp %680 : vector<5x5xf32>
    %cst_294 = arith.constant dense<0.000000e+00> : vector<5xf32>
    %682 = vector.multi_reduction <add>, %681, %cst_294 [1] : vector<5x5xf32> to vector<5xf32>
    %683 = vector.shape_cast %682 : vector<5xf32> to vector<5x1xf32>
    %cst_295 = arith.constant dense<0.000000e+00> : vector<5x8xf32>
    %684 = tpu.matmul %681, %673, %cst_295 {dimension_numbers = #tpu.dot_dimension_numbers<[1], [0], [0], [1], [0, 0, 1, 1], [], []>} : vector<5x5xf32>, vector<5x8xf32>, vector<5x8xf32> -> vector<5x8xf32>
    %685 = tpu.reciprocal %683 {approx = true} : vector<5x1xf32> -> vector<5x1xf32>
    %686 = vector.broadcast %685 : vector<5x1xf32> to vector<5x8xf32>
    %687 = arith.mulf %684, %686 : vector<5x8xf32>
    %688 = vector.extract_strided_slice %644 {offsets = [8, 0], sizes = [8, 32], strides = [1, 1]} : vector<32x32xbf16> to vector<8x32xbf16>
    %689 = arith.truncf %687 : vector<5x8xf32> to vector<5x8xbf16>
    %cst_296 = arith.constant dense<0.000000e+00> : vector<5x32xf32>
    %690 = tpu.matmul %689, %688, %cst_296 {dimension_numbers = #tpu.dot_dimension_numbers<[1], [0], [0], [1], [0, 0, 1, 1], [], []>} : vector<5x8xbf16>, vector<8x32xbf16>, vector<5x32xf32> -> vector<5x32xf32>
    %691 = arith.addf %668, %690 : vector<5x32xf32>
    %692 = vector.extract_strided_slice %642 {offsets = [0, 16], sizes = [5, 8], strides = [1, 1]} : vector<5x96xf32> to vector<5x8xf32>
    %693 = vector.extract_strided_slice %642 {offsets = [0, 48], sizes = [5, 8], strides = [1, 1]} : vector<5x96xf32> to vector<5x8xf32>
    %694 = vector.extract_strided_slice %642 {offsets = [0, 80], sizes = [5, 8], strides = [1, 1]} : vector<5x96xf32> to vector<5x8xf32>
    %695 = vector.extract_strided_slice %414 {offsets = [0, 16], sizes = [5, 8], strides = [1, 1]} : vector<5x32xf32> to vector<5x8xf32>
    %696 = arith.addf %694, %695 : vector<5x8xf32>
    %cst_297 = arith.constant dense<0.000000e+00> : vector<5x5xf32>
    %697 = tpu.matmul %692, %693, %cst_297 {dimension_numbers = #tpu.dot_dimension_numbers<[1], [1], [0], [0], [0, 0, 1, 0], [], []>} : vector<5x8xf32>, vector<5x8xf32>, vector<5x5xf32> -> vector<5x5xf32>
    %cst_298 = arith.constant 0.353553385 : f32
    %698 = vector.broadcast %cst_298 : f32 to vector<5x5xf32>
    %699 = arith.mulf %697, %698 : vector<5x5xf32>
    %cst_299 = arith.constant dense<0xFF800000> : vector<5xf32>
    %700 = vector.multi_reduction <maximumf>, %699, %cst_299 [1] : vector<5x5xf32> to vector<5xf32>
    %701 = vector.shape_cast %700 : vector<5xf32> to vector<5x1xf32>
    %702 = vector.broadcast %701 : vector<5x1xf32> to vector<5x5xf32>
    %703 = arith.subf %699, %702 : vector<5x5xf32>
    %704 = math.exp %703 : vector<5x5xf32>
    %cst_300 = arith.constant dense<0.000000e+00> : vector<5xf32>
    %705 = vector.multi_reduction <add>, %704, %cst_300 [1] : vector<5x5xf32> to vector<5xf32>
    %706 = vector.shape_cast %705 : vector<5xf32> to vector<5x1xf32>
    %cst_301 = arith.constant dense<0.000000e+00> : vector<5x8xf32>
    %707 = tpu.matmul %704, %696, %cst_301 {dimension_numbers = #tpu.dot_dimension_numbers<[1], [0], [0], [1], [0, 0, 1, 1], [], []>} : vector<5x5xf32>, vector<5x8xf32>, vector<5x8xf32> -> vector<5x8xf32>
    %708 = tpu.reciprocal %706 {approx = true} : vector<5x1xf32> -> vector<5x1xf32>
    %709 = vector.broadcast %708 : vector<5x1xf32> to vector<5x8xf32>
    %710 = arith.mulf %707, %709 : vector<5x8xf32>
    %711 = vector.extract_strided_slice %644 {offsets = [16, 0], sizes = [8, 32], strides = [1, 1]} : vector<32x32xbf16> to vector<8x32xbf16>
    %712 = arith.truncf %710 : vector<5x8xf32> to vector<5x8xbf16>
    %cst_302 = arith.constant dense<0.000000e+00> : vector<5x32xf32>
    %713 = tpu.matmul %712, %711, %cst_302 {dimension_numbers = #tpu.dot_dimension_numbers<[1], [0], [0], [1], [0, 0, 1, 1], [], []>} : vector<5x8xbf16>, vector<8x32xbf16>, vector<5x32xf32> -> vector<5x32xf32>
    %714 = arith.addf %691, %713 : vector<5x32xf32>
    %715 = vector.extract_strided_slice %642 {offsets = [0, 24], sizes = [5, 8], strides = [1, 1]} : vector<5x96xf32> to vector<5x8xf32>
    %716 = vector.extract_strided_slice %642 {offsets = [0, 56], sizes = [5, 8], strides = [1, 1]} : vector<5x96xf32> to vector<5x8xf32>
    %717 = vector.extract_strided_slice %642 {offsets = [0, 88], sizes = [5, 8], strides = [1, 1]} : vector<5x96xf32> to vector<5x8xf32>
    %718 = vector.extract_strided_slice %414 {offsets = [0, 24], sizes = [5, 8], strides = [1, 1]} : vector<5x32xf32> to vector<5x8xf32>
    %719 = arith.addf %717, %718 : vector<5x8xf32>
    %cst_303 = arith.constant dense<0.000000e+00> : vector<5x5xf32>
    %720 = tpu.matmul %715, %716, %cst_303 {dimension_numbers = #tpu.dot_dimension_numbers<[1], [1], [0], [0], [0, 0, 1, 0], [], []>} : vector<5x8xf32>, vector<5x8xf32>, vector<5x5xf32> -> vector<5x5xf32>
    %cst_304 = arith.constant 0.353553385 : f32
    %721 = vector.broadcast %cst_304 : f32 to vector<5x5xf32>
    %722 = arith.mulf %720, %721 : vector<5x5xf32>
    %cst_305 = arith.constant dense<0xFF800000> : vector<5xf32>
    %723 = vector.multi_reduction <maximumf>, %722, %cst_305 [1] : vector<5x5xf32> to vector<5xf32>
    %724 = vector.shape_cast %723 : vector<5xf32> to vector<5x1xf32>
    %725 = vector.broadcast %724 : vector<5x1xf32> to vector<5x5xf32>
    %726 = arith.subf %722, %725 : vector<5x5xf32>
    %727 = math.exp %726 : vector<5x5xf32>
    %cst_306 = arith.constant dense<0.000000e+00> : vector<5xf32>
    %728 = vector.multi_reduction <add>, %727, %cst_306 [1] : vector<5x5xf32> to vector<5xf32>
    %729 = vector.shape_cast %728 : vector<5xf32> to vector<5x1xf32>
    %cst_307 = arith.constant dense<0.000000e+00> : vector<5x8xf32>
    %730 = tpu.matmul %727, %719, %cst_307 {dimension_numbers = #tpu.dot_dimension_numbers<[1], [0], [0], [1], [0, 0, 1, 1], [], []>} : vector<5x5xf32>, vector<5x8xf32>, vector<5x8xf32> -> vector<5x8xf32>
    %731 = tpu.reciprocal %729 {approx = true} : vector<5x1xf32> -> vector<5x1xf32>
    %732 = vector.broadcast %731 : vector<5x1xf32> to vector<5x8xf32>
    %733 = arith.mulf %730, %732 : vector<5x8xf32>
    %734 = vector.extract_strided_slice %644 {offsets = [24, 0], sizes = [8, 32], strides = [1, 1]} : vector<32x32xbf16> to vector<8x32xbf16>
    %735 = arith.truncf %733 : vector<5x8xf32> to vector<5x8xbf16>
    %cst_308 = arith.constant dense<0.000000e+00> : vector<5x32xf32>
    %736 = tpu.matmul %735, %734, %cst_308 {dimension_numbers = #tpu.dot_dimension_numbers<[1], [0], [0], [1], [0, 0, 1, 1], [], []>} : vector<5x8xbf16>, vector<8x32xbf16>, vector<5x32xf32> -> vector<5x32xf32>
    %737 = arith.addf %714, %736 : vector<5x32xf32>
    %c1_309 = arith.constant 1 : index
    %c0_310 = arith.constant 0 : index
    %c0_311 = arith.constant 0 : index
    %738 = vector.load %arg11[%c1_309, %c0_310, %c0_311] : memref<2x1x32xf32, #tpu.memory_space<vmem>>, vector<1x1x32xf32>
    %739 = vector.shape_cast %738 : vector<1x1x32xf32> to vector<1x32xf32>
    %740 = vector.broadcast %739 : vector<1x32xf32> to vector<5x32xf32>
    %741 = arith.addf %737, %740 : vector<5x32xf32>
    %742 = arith.addf %608, %741 : vector<5x32xf32>
    %c1_312 = arith.constant 1 : index
    %c0_313 = arith.constant 0 : index
    %c0_314 = arith.constant 0 : index
    %743 = vector.load %arg12[%c1_312, %c0_313, %c0_314] : memref<2x1x32xf32, #tpu.memory_space<vmem>>, vector<1x1x32xf32>
    %744 = vector.shape_cast %743 : vector<1x1x32xf32> to vector<1x32xf32>
    %c1_315 = arith.constant 1 : index
    %c0_316 = arith.constant 0 : index
    %c0_317 = arith.constant 0 : index
    %745 = vector.load %arg13[%c1_315, %c0_316, %c0_317] : memref<2x1x32xf32, #tpu.memory_space<vmem>>, vector<1x1x32xf32>
    %746 = vector.shape_cast %745 : vector<1x1x32xf32> to vector<1x32xf32>
    %cst_318 = arith.constant dense<0.000000e+00> : vector<5xf32>
    %747 = vector.multi_reduction <add>, %742, %cst_318 [1] : vector<5x32xf32> to vector<5xf32>
    %748 = vector.shape_cast %747 : vector<5xf32> to vector<5x1xf32>
    %cst_319 = arith.constant 3.200000e+01 : f32
    %749 = vector.broadcast %cst_319 : f32 to vector<5x1xf32>
    %750 = arith.divf %748, %749 : vector<5x1xf32>
    %751 = vector.broadcast %750 : vector<5x1xf32> to vector<5x32xf32>
    %752 = arith.subf %742, %751 : vector<5x32xf32>
    %753 = arith.mulf %752, %752 : vector<5x32xf32>
    %cst_320 = arith.constant dense<0.000000e+00> : vector<5xf32>
    %754 = vector.multi_reduction <add>, %753, %cst_320 [1] : vector<5x32xf32> to vector<5xf32>
    %755 = vector.shape_cast %754 : vector<5xf32> to vector<5x1xf32>
    %cst_321 = arith.constant 3.200000e+01 : f32
    %756 = vector.broadcast %cst_321 : f32 to vector<5x1xf32>
    %757 = arith.divf %755, %756 : vector<5x1xf32>
    %758 = vector.broadcast %750 : vector<5x1xf32> to vector<5x32xf32>
    %759 = arith.subf %742, %758 : vector<5x32xf32>
    %cst_322 = arith.constant 9.99999997E-7 : f32
    %760 = vector.broadcast %cst_322 : f32 to vector<5x1xf32>
    %761 = arith.addf %757, %760 : vector<5x1xf32>
    %762 = math.rsqrt %761 : vector<5x1xf32>
    %763 = vector.broadcast %762 : vector<5x1xf32> to vector<5x32xf32>
    %764 = arith.mulf %759, %763 : vector<5x32xf32>
    %765 = vector.broadcast %744 : vector<1x32xf32> to vector<5x32xf32>
    %766 = arith.mulf %764, %765 : vector<5x32xf32>
    %767 = vector.broadcast %746 : vector<1x32xf32> to vector<5x32xf32>
    %768 = arith.addf %766, %767 : vector<5x32xf32>
    %c1_323 = arith.constant 1 : index
    %c0_324 = arith.constant 0 : index
    %c0_325 = arith.constant 0 : index
    %769 = vector.load %arg14[%c1_323, %c0_324, %c0_325] : memref<2x32x128xbf16, #tpu.memory_space<vmem>>, vector<1x32x128xbf16>
    %770 = vector.shape_cast %769 : vector<1x32x128xbf16> to vector<32x128xbf16>
    %771 = arith.truncf %768 : vector<5x32xf32> to vector<5x32xbf16>
    %cst_326 = arith.constant dense<0.000000e+00> : vector<5x128xf32>
    %772 = tpu.matmul %771, %770, %cst_326 {dimension_numbers = #tpu.dot_dimension_numbers<[1], [0], [0], [1], [0, 0, 1, 1], [], []>} : vector<5x32xbf16>, vector<32x128xbf16>, vector<5x128xf32> -> vector<5x128xf32>
    %c1_327 = arith.constant 1 : index
    %c0_328 = arith.constant 0 : index
    %c0_329 = arith.constant 0 : index
    %773 = vector.load %arg15[%c1_327, %c0_328, %c0_329] : memref<2x1x128xf32, #tpu.memory_space<vmem>>, vector<1x1x128xf32>
    %774 = vector.shape_cast %773 : vector<1x1x128xf32> to vector<1x128xf32>
    %775 = vector.broadcast %774 : vector<1x128xf32> to vector<5x128xf32>
    %776 = arith.addf %772, %775 : vector<5x128xf32>
    %777 = arith.mulf %776, %776 : vector<5x128xf32>
    %778 = arith.mulf %776, %777 : vector<5x128xf32>
    %cst_330 = arith.constant 4.471500e-02 : f32
    %779 = vector.broadcast %cst_330 : f32 to vector<5x128xf32>
    %780 = arith.mulf %779, %778 : vector<5x128xf32>
    %781 = arith.addf %776, %780 : vector<5x128xf32>
    %cst_331 = arith.constant 0.797884583 : f32
    %782 = vector.broadcast %cst_331 : f32 to vector<5x128xf32>
    %783 = arith.mulf %782, %781 : vector<5x128xf32>
    %784 = math.tanh %783 : vector<5x128xf32>
    %cst_332 = arith.constant 1.000000e+00 : f32
    %785 = vector.broadcast %cst_332 : f32 to vector<5x128xf32>
    %786 = arith.addf %785, %784 : vector<5x128xf32>
    %cst_333 = arith.constant 5.000000e-01 : f32
    %787 = vector.broadcast %cst_333 : f32 to vector<5x128xf32>
    %788 = arith.mulf %787, %786 : vector<5x128xf32>
    %789 = arith.mulf %776, %788 : vector<5x128xf32>
    %c1_334 = arith.constant 1 : index
    %c0_335 = arith.constant 0 : index
    %c0_336 = arith.constant 0 : index
    %790 = vector.load %arg16[%c1_334, %c0_335, %c0_336] : memref<2x128x32xbf16, #tpu.memory_space<vmem>>, vector<1x128x32xbf16>
    %791 = vector.shape_cast %790 : vector<1x128x32xbf16> to vector<128x32xbf16>
    %792 = arith.truncf %789 : vector<5x128xf32> to vector<5x128xbf16>
    %cst_337 = arith.constant dense<0.000000e+00> : vector<5x32xf32>
    %793 = tpu.matmul %792, %791, %cst_337 {dimension_numbers = #tpu.dot_dimension_numbers<[1], [0], [0], [1], [0, 0, 1, 1], [], []>} : vector<5x128xbf16>, vector<128x32xbf16>, vector<5x32xf32> -> vector<5x32xf32>
    %794 = arith.addf %742, %793 : vector<5x32xf32>
    %c1_338 = arith.constant 1 : index
    %c0_339 = arith.constant 0 : index
    %c0_340 = arith.constant 0 : index
    %795 = vector.load %arg17[%c1_338, %c0_339, %c0_340] : memref<2x1x32xf32, #tpu.memory_space<vmem>>, vector<1x1x32xf32>
    %796 = vector.shape_cast %795 : vector<1x1x32xf32> to vector<1x32xf32>
    %797 = vector.broadcast %796 : vector<1x32xf32> to vector<5x32xf32>
    %798 = arith.addf %794, %797 : vector<5x32xf32>
    %c0_341 = arith.constant 0 : index
    %c0_342 = arith.constant 0 : index
    %799 = vector.load %arg21[%c0_341, %c0_342] : memref<1x32xf32, #tpu.memory_space<vmem>>, vector<1x32xf32>
    %c0_343 = arith.constant 0 : index
    %c0_344 = arith.constant 0 : index
    %800 = vector.load %arg22[%c0_343, %c0_344] : memref<1x32xf32, #tpu.memory_space<vmem>>, vector<1x32xf32>
    %cst_345 = arith.constant dense<0.000000e+00> : vector<5xf32>
    %801 = vector.multi_reduction <add>, %798, %cst_345 [1] : vector<5x32xf32> to vector<5xf32>
    %802 = vector.shape_cast %801 : vector<5xf32> to vector<5x1xf32>
    %cst_346 = arith.constant 3.200000e+01 : f32
    %803 = vector.broadcast %cst_346 : f32 to vector<5x1xf32>
    %804 = arith.divf %802, %803 : vector<5x1xf32>
    %805 = vector.broadcast %804 : vector<5x1xf32> to vector<5x32xf32>
    %806 = arith.subf %798, %805 : vector<5x32xf32>
    %807 = arith.mulf %806, %806 : vector<5x32xf32>
    %cst_347 = arith.constant dense<0.000000e+00> : vector<5xf32>
    %808 = vector.multi_reduction <add>, %807, %cst_347 [1] : vector<5x32xf32> to vector<5xf32>
    %809 = vector.shape_cast %808 : vector<5xf32> to vector<5x1xf32>
    %cst_348 = arith.constant 3.200000e+01 : f32
    %810 = vector.broadcast %cst_348 : f32 to vector<5x1xf32>
    %811 = arith.divf %809, %810 : vector<5x1xf32>
    %812 = vector.broadcast %804 : vector<5x1xf32> to vector<5x32xf32>
    %813 = arith.subf %798, %812 : vector<5x32xf32>
    %cst_349 = arith.constant 9.99999997E-7 : f32
    %814 = vector.broadcast %cst_349 : f32 to vector<5x1xf32>
    %815 = arith.addf %811, %814 : vector<5x1xf32>
    %816 = math.rsqrt %815 : vector<5x1xf32>
    %817 = vector.broadcast %816 : vector<5x1xf32> to vector<5x32xf32>
    %818 = arith.mulf %813, %817 : vector<5x32xf32>
    %819 = vector.broadcast %799 : vector<1x32xf32> to vector<5x32xf32>
    %820 = arith.mulf %818, %819 : vector<5x32xf32>
    %821 = vector.broadcast %800 : vector<1x32xf32> to vector<5x32xf32>
    %822 = arith.addf %820, %821 : vector<5x32xf32>
    %823 = vector.extract_strided_slice %822 {offsets = [0, 0], sizes = [1, 32], strides = [1, 1]} : vector<5x32xf32> to vector<1x32xf32>
    %c0_350 = arith.constant 0 : index
    %c0_351 = arith.constant 0 : index
    %c0_352 = arith.constant 0 : index
    %824 = vector.load %arg23[%c0_350, %c0_351, %c0_352] : memref<1x32x32xbf16, #tpu.memory_space<vmem>>, vector<1x32x32xbf16>
    %825 = vector.shape_cast %824 : vector<1x32x32xbf16> to vector<32x32xbf16>
    %826 = arith.truncf %823 : vector<1x32xf32> to vector<1x32xbf16>
    %cst_353 = arith.constant dense<0.000000e+00> : vector<1x32xf32>
    %827 = tpu.matmul %826, %825, %cst_353 {dimension_numbers = #tpu.dot_dimension_numbers<[1], [0], [0], [1], [0, 0, 1, 1], [], []>} : vector<1x32xbf16>, vector<32x32xbf16>, vector<1x32xf32> -> vector<1x32xf32>
    %c0_354 = arith.constant 0 : index
    %c0_355 = arith.constant 0 : index
    %c0_356 = arith.constant 0 : index
    %828 = vector.load %arg24[%c0_354, %c0_355, %c0_356] : memref<1x1x32xf32, #tpu.memory_space<vmem>>, vector<1x1x32xf32>
    %829 = vector.shape_cast %828 : vector<1x1x32xf32> to vector<1x32xf32>
    %830 = arith.addf %827, %829 : vector<1x32xf32>
    %cst_357 = arith.constant 0.000000e+00 : f32
    %831 = vector.broadcast %cst_357 : f32 to vector<1x32xf32>
    %832 = arith.maximumf %830, %831 : vector<1x32xf32>
    %c0_358 = arith.constant 0 : index
    %c0_359 = arith.constant 0 : index
    %833 = vector.load %arg25[%c0_358, %c0_359] : memref<32x128xbf16, #tpu.memory_space<vmem>>, vector<32x128xbf16>
    %834 = arith.truncf %832 : vector<1x32xf32> to vector<1x32xbf16>
    %cst_360 = arith.constant dense<0.000000e+00> : vector<1x128xf32>
    %835 = tpu.matmul %834, %833, %cst_360 {dimension_numbers = #tpu.dot_dimension_numbers<[1], [0], [0], [1], [0, 0, 1, 1], [], []>} : vector<1x32xbf16>, vector<32x128xbf16>, vector<1x128xf32> -> vector<1x128xf32>
    %c0_361 = arith.constant 0 : index
    %c0_362 = arith.constant 0 : index
    %836 = vector.load %arg26[%c0_361, %c0_362] : memref<1x128xf32, #tpu.memory_space<vmem>>, vector<1x128xf32>
    %837 = arith.addf %835, %836 : vector<1x128xf32>
    %c0_363 = arith.constant 0 : index
    %c0_364 = arith.constant 0 : index
    %c0_365 = arith.constant 0 : index
    %838 = vector.load %arg27[%c0_363, %c0_364, %c0_365] : memref<1x1x128xf32, #tpu.memory_space<vmem>>, vector<1x1x128xf32>
    %839 = vector.shape_cast %838 : vector<1x1x128xf32> to vector<1x128xf32>
    %840 = vector.shape_cast %837 : vector<1x128xf32> to vector<1x1x128xf32>
    tpu.vector_store %arg27[%c0_363, %c0_364, %c0_365], %840 {strides = array<i32>} : memref<1x1x128xf32, #tpu.memory_space<vmem>>, vector<1x1x128xf32>,
    return
  }
  func.func @transform_0(%arg0: i32) -> (i32, i32, i32) {
    %c0_i32 = arith.constant 0 : i32
    %c0_i32_0 = arith.constant 0 : i32
    %c0_i32_1 = arith.constant 0 : i32
    return %arg0, %c0_i32, %c0_i32_0 : i32, i32, i32
  }
  func.func @transform_1(%arg0: i32) -> (i32, i32) {
    %c0_i32 = arith.constant 0 : i32
    %c0_i32_0 = arith.constant 0 : i32
    %c0_i32_1 = arith.constant 0 : i32
    return %c0_i32, %c0_i32_0 : i32, i32
  }
  func.func @transform_2(%arg0: i32) -> (i32, i32) {
    %c0_i32 = arith.constant 0 : i32
    %c0_i32_0 = arith.constant 0 : i32
    %c0_i32_1 = arith.constant 0 : i32
    return %c0_i32, %c0_i32_0 : i32, i32
  }
  func.func @transform_3(%arg0: i32) -> (i32, i32) {
    %c0_i32 = arith.constant 0 : i32
    %c0_i32_0 = arith.constant 0 : i32
    %c0_i32_1 = arith.constant 0 : i32
    return %c0_i32, %c0_i32_0 : i32, i32
  }
  func.func @transform_4(%arg0: i32) -> (i32, i32) {
    %c0_i32 = arith.constant 0 : i32
    %c0_i32_0 = arith.constant 0 : i32
    %c0_i32_1 = arith.constant 0 : i32
    return %c0_i32, %c0_i32_0 : i32, i32
  }
  func.func @transform_5(%arg0: i32) -> (i32, i32, i32) {
    %c0_i32 = arith.constant 0 : i32
    %c0_i32_0 = arith.constant 0 : i32
    %c0_i32_1 = arith.constant 0 : i32
    %c0_i32_2 = arith.constant 0 : i32
    return %c0_i32, %c0_i32_0, %c0_i32_1 : i32, i32, i32
  }
  func.func @transform_6(%arg0: i32) -> (i32, i32, i32) {
    %c0_i32 = arith.constant 0 : i32
    %c0_i32_0 = arith.constant 0 : i32
    %c0_i32_1 = arith.constant 0 : i32
    %c0_i32_2 = arith.constant 0 : i32
    return %c0_i32, %c0_i32_0, %c0_i32_1 : i32, i32, i32
  }
  func.func @transform_7(%arg0: i32) -> (i32, i32, i32) {
    %c0_i32 = arith.constant 0 : i32
    %c0_i32_0 = arith.constant 0 : i32
    %c0_i32_1 = arith.constant 0 : i32
    %c0_i32_2 = arith.constant 0 : i32
    return %c0_i32, %c0_i32_0, %c0_i32_1 : i32, i32, i32
  }
  func.func @transform_8(%arg0: i32) -> (i32, i32, i32) {
    %c0_i32 = arith.constant 0 : i32
    %c0_i32_0 = arith.constant 0 : i32
    %c0_i32_1 = arith.constant 0 : i32
    %c0_i32_2 = arith.constant 0 : i32
    return %c0_i32, %c0_i32_0, %c0_i32_1 : i32, i32, i32
  }
  func.func @transform_9(%arg0: i32) -> (i32, i32, i32) {
    %c0_i32 = arith.constant 0 : i32
    %c0_i32_0 = arith.constant 0 : i32
    %c0_i32_1 = arith.constant 0 : i32
    %c0_i32_2 = arith.constant 0 : i32
    return %c0_i32, %c0_i32_0, %c0_i32_1 : i32, i32, i32
  }
  func.func @transform_10(%arg0: i32) -> (i32, i32, i32) {
    %c0_i32 = arith.constant 0 : i32
    %c0_i32_0 = arith.constant 0 : i32
    %c0_i32_1 = arith.constant 0 : i32
    %c0_i32_2 = arith.constant 0 : i32
    return %c0_i32, %c0_i32_0, %c0_i32_1 : i32, i32, i32
  }
  func.func @transform_11(%arg0: i32) -> (i32, i32, i32) {
    %c0_i32 = arith.constant 0 : i32
    %c0_i32_0 = arith.constant 0 : i32
    %c0_i32_1 = arith.constant 0 : i32
    %c0_i32_2 = arith.constant 0 : i32
    return %c0_i32, %c0_i32_0, %c0_i32_1 : i32, i32, i32
  }
  func.func @transform_12(%arg0: i32) -> (i32, i32, i32) {
    %c0_i32 = arith.constant 0 : i32
    %c0_i32_0 = arith.constant 0 : i32
    %c0_i32_1 = arith.constant 0 : i32
    %c0_i32_2 = arith.constant 0 : i32
    return %c0_i32, %c0_i32_0, %c0_i32_1 : i32, i32, i32
  }
  func.func @transform_13(%arg0: i32) -> (i32, i32, i32) {
    %c0_i32 = arith.constant 0 : i32
    %c0_i32_0 = arith.constant 0 : i32
    %c0_i32_1 = arith.constant 0 : i32
    %c0_i32_2 = arith.constant 0 : i32
    return %c0_i32, %c0_i32_0, %c0_i32_1 : i32, i32, i32
  }
  func.func @transform_14(%arg0: i32) -> (i32, i32, i32) {
    %c0_i32 = arith.constant 0 : i32
    %c0_i32_0 = arith.constant 0 : i32
    %c0_i32_1 = arith.constant 0 : i32
    %c0_i32_2 = arith.constant 0 : i32
    return %c0_i32, %c0_i32_0, %c0_i32_1 : i32, i32, i32
  }
  func.func @transform_15(%arg0: i32) -> (i32, i32, i32) {
    %c0_i32 = arith.constant 0 : i32
    %c0_i32_0 = arith.constant 0 : i32
    %c0_i32_1 = arith.constant 0 : i32
    %c0_i32_2 = arith.constant 0 : i32
    return %c0_i32, %c0_i32_0, %c0_i32_1 : i32, i32, i32
  }
  func.func @transform_16(%arg0: i32) -> (i32, i32, i32) {
    %c0_i32 = arith.constant 0 : i32
    %c0_i32_0 = arith.constant 0 : i32
    %c0_i32_1 = arith.constant 0 : i32
    %c0_i32_2 = arith.constant 0 : i32
    return %c0_i32, %c0_i32_0, %c0_i32_1 : i32, i32, i32
  }
  func.func @transform_17(%arg0: i32) -> (i32, i32) {
    %c0_i32 = arith.constant 0 : i32
    %c0_i32_0 = arith.constant 0 : i32
    %c0_i32_1 = arith.constant 0 : i32
    return %c0_i32, %c0_i32_0 : i32, i32
  }
  func.func @transform_18(%arg0: i32) -> (i32, i32) {
    %c0_i32 = arith.constant 0 : i32
    %c0_i32_0 = arith.constant 0 : i32
    %c0_i32_1 = arith.constant 0 : i32
    return %c0_i32, %c0_i32_0 : i32, i32
  }
  func.func @transform_19(%arg0: i32) -> (i32, i32, i32) {
    %c0_i32 = arith.constant 0 : i32
    %c0_i32_0 = arith.constant 0 : i32
    %c0_i32_1 = arith.constant 0 : i32
    %c0_i32_2 = arith.constant 0 : i32
    return %c0_i32, %c0_i32_0, %c0_i32_1 : i32, i32, i32
  }
  func.func @transform_20(%arg0: i32) -> (i32, i32) {
    %c0_i32 = arith.constant 0 : i32
    %c0_i32_0 = arith.constant 0 : i32
    %c0_i32_1 = arith.constant 0 : i32
    return %c0_i32, %c0_i32_0 : i32, i32
  }
  func.func @transform_21(%arg0: i32) -> (i32, i32) {
    %c0_i32 = arith.constant 0 : i32
    %c0_i32_0 = arith.constant 0 : i32
    %c0_i32_1 = arith.constant 0 : i32
    return %c0_i32, %c0_i32_0 : i32, i32
  }
  func.func @transform_22(%arg0: i32) -> (i32, i32, i32) {
    %c0_i32 = arith.constant 0 : i32
    %c0_i32_0 = arith.constant 0 : i32
    %c0_i32_1 = arith.constant 0 : i32
    %c0_i32_2 = arith.constant 0 : i32
    return %c0_i32, %c0_i32_0, %c0_i32_1 : i32, i32, i32
  }
  func.func @transform_23(%arg0: i32) -> (i32, i32, i32) {
    %c0_i32 = arith.constant 0 : i32
    %c0_i32_0 = arith.constant 0 : i32
    %c0_i32_1 = arith.constant 0 : i32
    %c0_i32_2 = arith.constant 0 : i32
    return %c0_i32, %c0_i32_0, %c0_i32_1 : i32, i32, i32
  }
  func.func @transform_24(%arg0: i32) -> (i32, i32) {
    %c0_i32 = arith.constant 0 : i32
    %c0_i32_0 = arith.constant 0 : i32
    %c0_i32_1 = arith.constant 0 : i32
    return %c0_i32, %c0_i32_0 : i32, i32
  }
  func.func @transform_25(%arg0: i32) -> (i32, i32) {
    %c0_i32 = arith.constant 0 : i32
    %c0_i32_0 = arith.constant 0 : i32
    %c0_i32_1 = arith.constant 0 : i32
    return %c0_i32, %c0_i32_0 : i32, i32
  }
  func.func @transform_26(%arg0: i32) -> (i32, i32, i32) {
    %c0_i32 = arith.constant 0 : i32
    %c0_i32_0 = arith.constant 0 : i32
    %c0_i32_1 = arith.constant 0 : i32
    return %arg0, %c0_i32, %c0_i32_0 : i32, i32, i32
  }
}

</mosaic_0001>

<llo_original>
// kernel: topdown_vit_forward.1
$region0: #{topdown_vit_forward.1}
  #allocation0 [shape = 'u32[]', space=smem, size = 0x4, offset = 0x4, fixed_abs, tag = 'smem constant byte address 0x4 - core index']
  #allocation1 [shape = 'u32[144,128]{1,0:T(1,128)}', space=vmem, size = 0x12000, scoped, tag = 'internal scratch']
  %s0 = inlined_call_operand.vmem [shape: f32[2,5,768], index: 0, kind: input, shape index: {}]
  %s1 = inlined_call_operand.vmem [shape: bf16[768,32], index: 1, kind: input, shape index: {}]
  %s2 = inlined_call_operand.vmem [shape: f32[1,32], index: 2, kind: input, shape index: {}]
  %s3 = inlined_call_operand.vmem [shape: f32[1,32], index: 3, kind: input, shape index: {}]
  %s4 = inlined_call_operand.vmem [shape: f32[5,32], index: 4, kind: input, shape index: {}]
  %s5 = inlined_call_operand.vmem [shape: f32[2,1,32], index: 5, kind: input, shape index: {}]
  %s6 = inlined_call_operand.vmem [shape: f32[2,1,32], index: 6, kind: input, shape index: {}]
  %s7 = inlined_call_operand.vmem [shape: bf16[2,32,96], index: 7, kind: input, shape index: {}]
  %s8 = inlined_call_operand.vmem [shape: f32[2,1,96], index: 8, kind: input, shape index: {}]
  %s9 = inlined_call_operand.vmem [shape: bf16[2,32,32], index: 9, kind: input, shape index: {}]
  %s10 = inlined_call_operand.vmem [shape: f32[2,1,32], index: 10, kind: input, shape index: {}]
  %s11 = inlined_call_operand.vmem [shape: f32[2,1,32], index: 11, kind: input, shape index: {}]
  %s12 = inlined_call_operand.vmem [shape: f32[2,1,32], index: 12, kind: input, shape index: {}]
  %s13 = inlined_call_operand.vmem [shape: bf16[2,32,128], index: 13, kind: input, shape index: {}]
  %s14 = inlined_call_operand.vmem [shape: f32[2,1,128], index: 14, kind: input, shape index: {}]
  %s15 = inlined_call_operand.vmem [shape: bf16[2,128,32], index: 15, kind: input, shape index: {}]
  %s16 = inlined_call_operand.vmem [shape: f32[2,1,32], index: 16, kind: input, shape index: {}]
  %s17 = inlined_call_operand.vmem [shape: f32[1,32], index: 17, kind: input, shape index: {}]
  %s18 = inlined_call_operand.vmem [shape: bf16[32,32], index: 18, kind: input, shape index: {}]
  %s19 = inlined_call_operand.vmem [shape: bf16[2,32,32], index: 19, kind: input, shape index: {}]
  %s20 = inlined_call_operand.vmem [shape: f32[1,32], index: 20, kind: input, shape index: {}]
  %s21 = inlined_call_operand.vmem [shape: f32[1,32], index: 21, kind: input, shape index: {}]
  %s22 = inlined_call_operand.vmem [shape: bf16[1,32,32], index: 22, kind: input, shape index: {}]
  %s23 = inlined_call_operand.vmem [shape: f32[1,1,32], index: 23, kind: input, shape index: {}]
  %s24 = inlined_call_operand.vmem [shape: bf16[32,128], index: 24, kind: input, shape index: {}]
  %s25 = inlined_call_operand.vmem [shape: f32[1,128], index: 25, kind: input, shape index: {}]
  %s26 = inlined_call_operand.hbm [shape: f32[2,1,128], index: 26, kind: output, shape index: {}]
  %s27 = sld [smem:[#allocation0]]
  $region137: #{topdown_vit_forward.1} parent=0
    _
  %s29 = ssub.s32 1, %s27
  %s30 = scalar_select 0, %s29, %s27
  $region1: #{topdown_vit_forward.1} parent=0
    #allocation2 [shape = 'u8[1024]{0}', space=vmem, size = 0x400, scoped, tag = 'output window, operand 0']
    #allocation3 [shape = 's32[2]{0}', space=sflag, size = 0x8, scoped, tag = 'scoped memory for topdown_vit_forward.1']
    %31 = vsyncpa [#allocation3], 0
    %s32 = scalar_lea.sflag [#allocation3], 1
    %33 = vsyncpa %s32, 0
    loop: start=0, step=1, limit=4
    $region2: #{topdown_vit_forward.1} parent=1 // loop_pre_header
      _
    $region3: #{topdown_vit_forward.1} parent=1 // loop_header
      %s35 = sphi 0, %s39
      %p36 = scmp.ge.s32.totalorder %s35, 4
      %s45 = sphi 0, %s47
      %s48 = sphi 0, %s45
      %s49 = sphi 0, %s48
      %s65 = sphi 0, %s49
      %s69 = sphi 0, %s69
      %s71 = sphi 0, %s69
      %s72 = sphi 0, %s71
      %s86 = sphi 0, %s72
      %s90 = sphi 0, %s90
      %s92 = sphi 0, %s90
      %s93 = sphi 0, %s92
      %s107 = sphi 0, %s93
      %s111 = sphi 0, %s111
      %s113 = sphi 0, %s111
      %s114 = sphi 0, %s113
      %s128 = sphi 0, %s114
      %s132 = sphi 0, %s132
      %s134 = sphi 0, %s132
      %s135 = sphi 0, %s134
      %s149 = sphi 0, %s135
      %s153 = sphi 0, %s153
      %s155 = sphi 0, %s153
      %s156 = sphi 0, %s155
      %s170 = sphi 0, %s156
      %s174 = sphi 0, %s174
      %s176 = sphi 0, %s174
      %s177 = sphi 0, %s176
      %s191 = sphi 0, %s177
      %s195 = sphi 0, %s195
      %s197 = sphi 0, %s195
      %s198 = sphi 0, %s197
      %s212 = sphi 0, %s198
      %s216 = sphi 0, %s216
      %s218 = sphi 0, %s216
      %s219 = sphi 0, %s218
      %s233 = sphi 0, %s219
      %s237 = sphi 0, %s237
      %s239 = sphi 0, %s237
      %s240 = sphi 0, %s239
      %s254 = sphi 0, %s240
      %s258 = sphi 0, %s258
      %s260 = sphi 0, %s258
      %s261 = sphi 0, %s260
      %s275 = sphi 0, %s261
      %s279 = sphi 0, %s279
      %s281 = sphi 0, %s279
      %s282 = sphi 0, %s281
      %s296 = sphi 0, %s282
      %s300 = sphi 0, %s300
      %s302 = sphi 0, %s300
      %s303 = sphi 0, %s302
      %s317 = sphi 0, %s303
      %s321 = sphi 0, %s321
      %s323 = sphi 0, %s321
      %s324 = sphi 0, %s323
      %s338 = sphi 0, %s324
      %s342 = sphi 0, %s342
      %s344 = sphi 0, %s342
      %s345 = sphi 0, %s344
      %s359 = sphi 0, %s345
      %s363 = sphi 0, %s363
      %s365 = sphi 0, %s363
      %s366 = sphi 0, %s365
      %s380 = sphi 0, %s366
      %s384 = sphi 0, %s384
      %s386 = sphi 0, %s384
      %s387 = sphi 0, %s386
      %s401 = sphi 0, %s387
      %s405 = sphi 0, %s405
      %s407 = sphi 0, %s405
      %s408 = sphi 0, %s407
      %s422 = sphi 0, %s408
      %s426 = sphi 0, %s426
      %s428 = sphi 0, %s426
      %s429 = sphi 0, %s428
      %s443 = sphi 0, %s429
      %s447 = sphi 0, %s447
      %s449 = sphi 0, %s447
      %s450 = sphi 0, %s449
      %s464 = sphi 0, %s450
      %s468 = sphi 0, %s468
      %s470 = sphi 0, %s468
      %s471 = sphi 0, %s470
      %s485 = sphi 0, %s471
      %s489 = sphi 0, %s489
      %s491 = sphi 0, %s489
      %s492 = sphi 0, %s491
      %s506 = sphi 0, %s492
      %s510 = sphi 0, %s510
      %s512 = sphi 0, %s510
      %s513 = sphi 0, %s512
      %s527 = sphi 0, %s513
      %s531 = sphi 0, %s531
      %s533 = sphi 0, %s531
      %s534 = sphi 0, %s533
      %s548 = sphi 0, %s534
      %s552 = sphi 0, %s552
      %s554 = sphi 0, %s552
      %s555 = sphi 0, %s554
      %s569 = sphi 0, %s555
      %s573 = sphi 0, %s573
      %s575 = sphi 0, %s573
      %s576 = sphi 0, %s575
      %s590 = sphi 0, %s576
      %s596 = sphi 0, %s598
      %s599 = sphi 0, %s596
      %s600 = sphi 0, %s599
      %s616 = sphi 0, %s600
    $region4: #{topdown_vit_forward.1} parent=1 // loop_header_branch
      %38 = sbr.rel (%p36) target = $region8
    $region5: #{topdown_vit_forward.1} parent=1 // loop_body
      %s40 = ssub.s32 %s35, 1
      %s41 = ssub.s32 %s35, 2
      %s42 = sadd.s32 %s35, 1
      %s43 = ssub.s32 %s35, %s42
      %p44 = scmp.eq.s32.totalorder %s43, 0
      %s46 = sadd.s32 %s45, 1
      %s47 = scalar_select %p44, %s45, %s46
      %p50 = pneg %p44
      %p51 = scmp.eq.s32.totalorder %s35, 1
      %p52 = por %p50, %p51
      %p53 = scmp.ne.s32.totalorder %s45, %s48
      %p54 = scmp.eq.s32.totalorder %s35, 0
      %p55 = por %p53, %p54
      %p56 = scmp.ne.s32.totalorder %s45, %s48
      %p57 = scmp.eq.s32.totalorder %s40, 1
      %p58 = por %p56, %p57
      %p59 = scmp.ne.s32.totalorder %s48, %s49
      %p60 = scmp.eq.s32.totalorder %s40, 0
      %p61 = por %p59, %p60
      %p62 = scmp.ne.s32.totalorder %s48, %s49
      %p63 = scmp.eq.s32.totalorder %s41, 1
      %p64 = por %p62, %p63
      %p66 = scmp.ne.s32.totalorder %s49, %s65
      %p67 = scmp.eq.s32.totalorder %s41, 0
      %p68 = por %p66, %p67
      %s70 = sadd.s32 %s69, 1
      %p73 = scmp.eq.s32.totalorder %s35, 1
      %p74 = scmp.ne.s32.totalorder %s69, %s71
      %p75 = scmp.eq.s32.totalorder %s35, 0
      %p76 = por %p74, %p75
      %p77 = scmp.ne.s32.totalorder %s69, %s71
      %p78 = scmp.eq.s32.totalorder %s40, 1
      %p79 = por %p77, %p78
      %p80 = scmp.ne.s32.totalorder %s71, %s72
      %p81 = scmp.eq.s32.totalorder %s40, 0
      %p82 = por %p80, %p81
      %p83 = scmp.ne.s32.totalorder %s71, %s72
      %p84 = scmp.eq.s32.totalorder %s41, 1
      %p85 = por %p83, %p84
      %p87 = scmp.ne.s32.totalorder %s72, %s86
      %p88 = scmp.eq.s32.totalorder %s41, 0
      %p89 = por %p87, %p88
      %s91 = sadd.s32 %s90, 1
      %p94 = scmp.eq.s32.totalorder %s35, 1
      %p95 = scmp.ne.s32.totalorder %s90, %s92
      %p96 = scmp.eq.s32.totalorder %s35, 0
      %p97 = por %p95, %p96
      %p98 = scmp.ne.s32.totalorder %s90, %s92
      %p99 = scmp.eq.s32.totalorder %s40, 1
      %p100 = por %p98, %p99
      %p101 = scmp.ne.s32.totalorder %s92, %s93
      %p102 = scmp.eq.s32.totalorder %s40, 0
      %p103 = por %p101, %p102
      %p104 = scmp.ne.s32.totalorder %s92, %s93
      %p105 = scmp.eq.s32.totalorder %s41, 1
      %p106 = por %p104, %p105
      %p108 = scmp.ne.s32.totalorder %s93, %s107
      %p109 = scmp.eq.s32.totalorder %s41, 0
      %p110 = por %p108, %p109
      %s112 = sadd.s32 %s111, 1
      %p115 = scmp.eq.s32.totalorder %s35, 1
      %p116 = scmp.ne.s32.totalorder %s111, %s113
      %p117 = scmp.eq.s32.totalorder %s35, 0
      %p118 = por %p116, %p117
      %p119 = scmp.ne.s32.totalorder %s111, %s113
      %p120 = scmp.eq.s32.totalorder %s40, 1
      %p121 = por %p119, %p120
      %p122 = scmp.ne.s32.totalorder %s113, %s114
      %p123 = scmp.eq.s32.totalorder %s40, 0
      %p124 = por %p122, %p123
      %p125 = scmp.ne.s32.totalorder %s113, %s114
      %p126 = scmp.eq.s32.totalorder %s41, 1
      %p127 = por %p125, %p126
      %p129 = scmp.ne.s32.totalorder %s114, %s128
      %p130 = scmp.eq.s32.totalorder %s41, 0
      %p131 = por %p129, %p130
      %s133 = sadd.s32 %s132, 1
      %p136 = scmp.eq.s32.totalorder %s35, 1
      %p137 = scmp.ne.s32.totalorder %s132, %s134
      %p138 = scmp.eq.s32.totalorder %s35, 0
      %p139 = por %p137, %p138
      %p140 = scmp.ne.s32.totalorder %s132, %s134
      %p141 = scmp.eq.s32.totalorder %s40, 1
      %p142 = por %p140, %p141
      %p143 = scmp.ne.s32.totalorder %s134, %s135
      %p144 = scmp.eq.s32.totalorder %s40, 0
      %p145 = por %p143, %p144
      %p146 = scmp.ne.s32.totalorder %s134, %s135
      %p147 = scmp.eq.s32.totalorder %s41, 1
      %p148 = por %p146, %p147
      %p150 = scmp.ne.s32.totalorder %s135, %s149
      %p151 = scmp.eq.s32.totalorder %s41, 0
      %p152 = por %p150, %p151
      %s154 = sadd.s32 %s153, 1
      %p157 = scmp.eq.s32.totalorder %s35, 1
      %p158 = scmp.ne.s32.totalorder %s153, %s155
      %p159 = scmp.eq.s32.totalorder %s35, 0
      %p160 = por %p158, %p159
      %p161 = scmp.ne.s32.totalorder %s153, %s155
      %p162 = scmp.eq.s32.totalorder %s40, 1
      %p163 = por %p161, %p162
      %p164 = scmp.ne.s32.totalorder %s155, %s156
      %p165 = scmp.eq.s32.totalorder %s40, 0
      %p166 = por %p164, %p165
      %p167 = scmp.ne.s32.totalorder %s155, %s156
      %p168 = scmp.eq.s32.totalorder %s41, 1
      %p169 = por %p167, %p168
      %p171 = scmp.ne.s32.totalorder %s156, %s170
      %p172 = scmp.eq.s32.totalorder %s41, 0
      %p173 = por %p171, %p172
      %s175 = sadd.s32 %s174, 1
      %p178 = scmp.eq.s32.totalorder %s35, 1
      %p179 = scmp.ne.s32.totalorder %s174, %s176
      %p180 = scmp.eq.s32.totalorder %s35, 0
      %p181 = por %p179, %p180
      %p182 = scmp.ne.s32.totalorder %s174, %s176
      %p183 = scmp.eq.s32.totalorder %s40, 1
      %p184 = por %p182, %p183
      %p185 = scmp.ne.s32.totalorder %s176, %s177
      %p186 = scmp.eq.s32.totalorder %s40, 0
      %p187 = por %p185, %p186
      %p188 = scmp.ne.s32.totalorder %s176, %s177
      %p189 = scmp.eq.s32.totalorder %s41, 1
      %p190 = por %p188, %p189
      %p192 = scmp.ne.s32.totalorder %s177, %s191
      %p193 = scmp.eq.s32.totalorder %s41, 0
      %p194 = por %p192, %p193
      %s196 = sadd.s32 %s195, 1
      %p199 = scmp.eq.s32.totalorder %s35, 1
      %p200 = scmp.ne.s32.totalorder %s195, %s197
      %p201 = scmp.eq.s32.totalorder %s35, 0
      %p202 = por %p200, %p201
      %p203 = scmp.ne.s32.totalorder %s195, %s197
      %p204 = scmp.eq.s32.totalorder %s40, 1
      %p205 = por %p203, %p204
      %p206 = scmp.ne.s32.totalorder %s197, %s198
      %p207 = scmp.eq.s32.totalorder %s40, 0
      %p208 = por %p206, %p207
      %p209 = scmp.ne.s32.totalorder %s197, %s198
      %p210 = scmp.eq.s32.totalorder %s41, 1
      %p211 = por %p209, %p210
      %p213 = scmp.ne.s32.totalorder %s198, %s212
      %p214 = scmp.eq.s32.totalorder %s41, 0
      %p215 = por %p213, %p214
      %s217 = sadd.s32 %s216, 1
      %p220 = scmp.eq.s32.totalorder %s35, 1
      %p221 = scmp.ne.s32.totalorder %s216, %s218
      %p222 = scmp.eq.s32.totalorder %s35, 0
      %p223 = por %p221, %p222
      %p224 = scmp.ne.s32.totalorder %s216, %s218
      %p225 = scmp.eq.s32.totalorder %s40, 1
      %p226 = por %p224, %p225
      %p227 = scmp.ne.s32.totalorder %s218, %s219
      %p228 = scmp.eq.s32.totalorder %s40, 0
      %p229 = por %p227, %p228
      %p230 = scmp.ne.s32.totalorder %s218, %s219
      %p231 = scmp.eq.s32.totalorder %s41, 1
      %p232 = por %p230, %p231
      %p234 = scmp.ne.s32.totalorder %s219, %s233
      %p235 = scmp.eq.s32.totalorder %s41, 0
      %p236 = por %p234, %p235
      %s238 = sadd.s32 %s237, 1
      %p241 = scmp.eq.s32.totalorder %s35, 1
      %p242 = scmp.ne.s32.totalorder %s237, %s239
      %p243 = scmp.eq.s32.totalorder %s35, 0
      %p244 = por %p242, %p243
      %p245 = scmp.ne.s32.totalorder %s237, %s239
      %p246 = scmp.eq.s32.totalorder %s40, 1
      %p247 = por %p245, %p246
      %p248 = scmp.ne.s32.totalorder %s239, %s240
      %p249 = scmp.eq.s32.totalorder %s40, 0
      %p250 = por %p248, %p249
      %p251 = scmp.ne.s32.totalorder %s239, %s240
      %p252 = scmp.eq.s32.totalorder %s41, 1
      %p253 = por %p251, %p252
      %p255 = scmp.ne.s32.totalorder %s240, %s254
      %p256 = scmp.eq.s32.totalorder %s41, 0
      %p257 = por %p255, %p256
      %s259 = sadd.s32 %s258, 1
      %p262 = scmp.eq.s32.totalorder %s35, 1
      %p263 = scmp.ne.s32.totalorder %s258, %s260
      %p264 = scmp.eq.s32.totalorder %s35, 0
      %p265 = por %p263, %p264
      %p266 = scmp.ne.s32.totalorder %s258, %s260
      %p267 = scmp.eq.s32.totalorder %s40, 1
      %p268 = por %p266, %p267
      %p269 = scmp.ne.s32.totalorder %s260, %s261
      %p270 = scmp.eq.s32.totalorder %s40, 0
      %p271 = por %p269, %p270
      %p272 = scmp.ne.s32.totalorder %s260, %s261
      %p273 = scmp.eq.s32.totalorder %s41, 1
      %p274 = por %p272, %p273
      %p276 = scmp.ne.s32.totalorder %s261, %s275
      %p277 = scmp.eq.s32.totalorder %s41, 0
      %p278 = por %p276, %p277
      %s280 = sadd.s32 %s279, 1
      %p283 = scmp.eq.s32.totalorder %s35, 1
      %p284 = scmp.ne.s32.totalorder %s279, %s281
      %p285 = scmp.eq.s32.totalorder %s35, 0
      %p286 = por %p284, %p285
      %p287 = scmp.ne.s32.totalorder %s279, %s281
      %p288 = scmp.eq.s32.totalorder %s40, 1
      %p289 = por %p287, %p288
      %p290 = scmp.ne.s32.totalorder %s281, %s282
      %p291 = scmp.eq.s32.totalorder %s40, 0
      %p292 = por %p290, %p291
      %p293 = scmp.ne.s32.totalorder %s281, %s282
      %p294 = scmp.eq.s32.totalorder %s41, 1
      %p295 = por %p293, %p294
      %p297 = scmp.ne.s32.totalorder %s282, %s296
      %p298 = scmp.eq.s32.totalorder %s41, 0
      %p299 = por %p297, %p298
      %s301 = sadd.s32 %s300, 1
      %p304 = scmp.eq.s32.totalorder %s35, 1
      %p305 = scmp.ne.s32.totalorder %s300, %s302
      %p306 = scmp.eq.s32.totalorder %s35, 0
      %p307 = por %p305, %p306
      %p308 = scmp.ne.s32.totalorder %s300, %s302
      %p309 = scmp.eq.s32.totalorder %s40, 1
      %p310 = por %p308, %p309
      %p311 = scmp.ne.s32.totalorder %s302, %s303
      %p312 = scmp.eq.s32.totalorder %s40, 0
      %p313 = por %p311, %p312
      %p314 = scmp.ne.s32.totalorder %s302, %s303
      %p315 = scmp.eq.s32.totalorder %s41, 1
      %p316 = por %p314, %p315
      %p318 = scmp.ne.s32.totalorder %s303, %s317
      %p319 = scmp.eq.s32.totalorder %s41, 0
      %p320 = por %p318, %p319
      %s322 = sadd.s32 %s321, 1
      %p325 = scmp.eq.s32.totalorder %s35, 1
      %p326 = scmp.ne.s32.totalorder %s321, %s323
      %p327 = scmp.eq.s32.totalorder %s35, 0
      %p328 = por %p326, %p327
      %p329 = scmp.ne.s32.totalorder %s321, %s323
      %p330 = scmp.eq.s32.totalorder %s40, 1
      %p331 = por %p329, %p330
      %p332 = scmp.ne.s32.totalorder %s323, %s324
      %p333 = scmp.eq.s32.totalorder %s40, 0
      %p334 = por %p332, %p333
      %p335 = scmp.ne.s32.totalorder %s323, %s324
      %p336 = scmp.eq.s32.totalorder %s41, 1
      %p337 = por %p335, %p336
      %p339 = scmp.ne.s32.totalorder %s324, %s338
      %p340 = scmp.eq.s32.totalorder %s41, 0
      %p341 = por %p339, %p340
      %s343 = sadd.s32 %s342, 1
      %p346 = scmp.eq.s32.totalorder %s35, 1
      %p347 = scmp.ne.s32.totalorder %s342, %s344
      %p348 = scmp.eq.s32.totalorder %s35, 0
      %p349 = por %p347, %p348
      %p350 = scmp.ne.s32.totalorder %s342, %s344
      %p351 = scmp.eq.s32.totalorder %s40, 1
      %p352 = por %p350, %p351
      %p353 = scmp.ne.s32.totalorder %s344, %s345
      %p354 = scmp.eq.s32.totalorder %s40, 0
      %p355 = por %p353, %p354
      %p356 = scmp.ne.s32.totalorder %s344, %s345
      %p357 = scmp.eq.s32.totalorder %s41, 1
      %p358 = por %p356, %p357
      %p360 = scmp.ne.s32.totalorder %s345, %s359
      %p361 = scmp.eq.s32.totalorder %s41, 0
      %p362 = por %p360, %p361
      %s364 = sadd.s32 %s363, 1
      %p367 = scmp.eq.s32.totalorder %s35, 1
      %p368 = scmp.ne.s32.totalorder %s363, %s365
      %p369 = scmp.eq.s32.totalorder %s35, 0
      %p370 = por %p368, %p369
      %p371 = scmp.ne.s32.totalorder %s363, %s365
      %p372 = scmp.eq.s32.totalorder %s40, 1
      %p373 = por %p371, %p372
      %p374 = scmp.ne.s32.totalorder %s365, %s366
      %p375 = scmp.eq.s32.totalorder %s40, 0
      %p376 = por %p374, %p375
      %p377 = scmp.ne.s32.totalorder %s365, %s366
      %p378 = scmp.eq.s32.totalorder %s41, 1
      %p379 = por %p377, %p378
      %p381 = scmp.ne.s32.totalorder %s366, %s380
      %p382 = scmp.eq.s32.totalorder %s41, 0
      %p383 = por %p381, %p382
      %s385 = sadd.s32 %s384, 1
      %p388 = scmp.eq.s32.totalorder %s35, 1
      %p389 = scmp.ne.s32.totalorder %s384, %s386
      %p390 = scmp.eq.s32.totalorder %s35, 0
      %p391 = por %p389, %p390
      %p392 = scmp.ne.s32.totalorder %s384, %s386
      %p393 = scmp.eq.s32.totalorder %s40, 1
      %p394 = por %p392, %p393
      %p395 = scmp.ne.s32.totalorder %s386, %s387
      %p396 = scmp.eq.s32.totalorder %s40, 0
      %p397 = por %p395, %p396
      %p398 = scmp.ne.s32.totalorder %s386, %s387
      %p399 = scmp.eq.s32.totalorder %s41, 1
      %p400 = por %p398, %p399
      %p402 = scmp.ne.s32.totalorder %s387, %s401
      %p403 = scmp.eq.s32.totalorder %s41, 0
      %p404 = por %p402, %p403
      %s406 = sadd.s32 %s405, 1
      %p409 = scmp.eq.s32.totalorder %s35, 1
      %p410 = scmp.ne.s32.totalorder %s405, %s407
      %p411 = scmp.eq.s32.totalorder %s35, 0
      %p412 = por %p410, %p411
      %p413 = scmp.ne.s32.totalorder %s405, %s407
      %p414 = scmp.eq.s32.totalorder %s40, 1
      %p415 = por %p413, %p414
      %p416 = scmp.ne.s32.totalorder %s407, %s408
      %p417 = scmp.eq.s32.totalorder %s40, 0
      %p418 = por %p416, %p417
      %p419 = scmp.ne.s32.totalorder %s407, %s408
      %p420 = scmp.eq.s32.totalorder %s41, 1
      %p421 = por %p419, %p420
      %p423 = scmp.ne.s32.totalorder %s408, %s422
      %p424 = scmp.eq.s32.totalorder %s41, 0
      %p425 = por %p423, %p424
      %s427 = sadd.s32 %s426, 1
      %p430 = scmp.eq.s32.totalorder %s35, 1
      %p431 = scmp.ne.s32.totalorder %s426, %s428
      %p432 = scmp.eq.s32.totalorder %s35, 0
      %p433 = por %p431, %p432
      %p434 = scmp.ne.s32.totalorder %s426, %s428
      %p435 = scmp.eq.s32.totalorder %s40, 1
      %p436 = por %p434, %p435
      %p437 = scmp.ne.s32.totalorder %s428, %s429
      %p438 = scmp.eq.s32.totalorder %s40, 0
      %p439 = por %p437, %p438
      %p440 = scmp.ne.s32.totalorder %s428, %s429
      %p441 = scmp.eq.s32.totalorder %s41, 1
      %p442 = por %p440, %p441
      %p444 = scmp.ne.s32.totalorder %s429, %s443
      %p445 = scmp.eq.s32.totalorder %s41, 0
      %p446 = por %p444, %p445
      %s448 = sadd.s32 %s447, 1
      %p451 = scmp.eq.s32.totalorder %s35, 1
      %p452 = scmp.ne.s32.totalorder %s447, %s449
      %p453 = scmp.eq.s32.totalorder %s35, 0
      %p454 = por %p452, %p453
      %p455 = scmp.ne.s32.totalorder %s447, %s449
      %p456 = scmp.eq.s32.totalorder %s40, 1
      %p457 = por %p455, %p456
      %p458 = scmp.ne.s32.totalorder %s449, %s450
      %p459 = scmp.eq.s32.totalorder %s40, 0
      %p460 = por %p458, %p459
      %p461 = scmp.ne.s32.totalorder %s449, %s450
      %p462 = scmp.eq.s32.totalorder %s41, 1
      %p463 = por %p461, %p462
      %p465 = scmp.ne.s32.totalorder %s450, %s464
      %p466 = scmp.eq.s32.totalorder %s41, 0
      %p467 = por %p465, %p466
      %s469 = sadd.s32 %s468, 1
      %p472 = scmp.eq.s32.totalorder %s35, 1
      %p473 = scmp.ne.s32.totalorder %s468, %s470
      %p474 = scmp.eq.s32.totalorder %s35, 0
      %p475 = por %p473, %p474
      %p476 = scmp.ne.s32.totalorder %s468, %s470
      %p477 = scmp.eq.s32.totalorder %s40, 1
      %p478 = por %p476, %p477
      %p479 = scmp.ne.s32.totalorder %s470, %s471
      %p480 = scmp.eq.s32.totalorder %s40, 0
      %p481 = por %p479, %p480
      %p482 = scmp.ne.s32.totalorder %s470, %s471
      %p483 = scmp.eq.s32.totalorder %s41, 1
      %p484 = por %p482, %p483
      %p486 = scmp.ne.s32.totalorder %s471, %s485
      %p487 = scmp.eq.s32.totalorder %s41, 0
      %p488 = por %p486, %p487
      %s490 = sadd.s32 %s489, 1
      %p493 = scmp.eq.s32.totalorder %s35, 1
      %p494 = scmp.ne.s32.totalorder %s489, %s491
      %p495 = scmp.eq.s32.totalorder %s35, 0
      %p496 = por %p494, %p495
      %p497 = scmp.ne.s32.totalorder %s489, %s491
      %p498 = scmp.eq.s32.totalorder %s40, 1
      %p499 = por %p497, %p498
      %p500 = scmp.ne.s32.totalorder %s491, %s492
      %p501 = scmp.eq.s32.totalorder %s40, 0
      %p502 = por %p500, %p501
      %p503 = scmp.ne.s32.totalorder %s491, %s492
      %p504 = scmp.eq.s32.totalorder %s41, 1
      %p505 = por %p503, %p504
      %p507 = scmp.ne.s32.totalorder %s492, %s506
      %p508 = scmp.eq.s32.totalorder %s41, 0
      %p509 = por %p507, %p508
      %s511 = sadd.s32 %s510, 1
      %p514 = scmp.eq.s32.totalorder %s35, 1
      %p515 = scmp.ne.s32.totalorder %s510, %s512
      %p516 = scmp.eq.s32.totalorder %s35, 0
      %p517 = por %p515, %p516
      %p518 = scmp.ne.s32.totalorder %s510, %s512
      %p519 = scmp.eq.s32.totalorder %s40, 1
      %p520 = por %p518, %p519
      %p521 = scmp.ne.s32.totalorder %s512, %s513
      %p522 = scmp.eq.s32.totalorder %s40, 0
      %p523 = por %p521, %p522
      %p524 = scmp.ne.s32.totalorder %s512, %s513
      %p525 = scmp.eq.s32.totalorder %s41, 1
      %p526 = por %p524, %p525
      %p528 = scmp.ne.s32.totalorder %s513, %s527
      %p529 = scmp.eq.s32.totalorder %s41, 0
      %p530 = por %p528, %p529
      %s532 = sadd.s32 %s531, 1
      %p535 = scmp.eq.s32.totalorder %s35, 1
      %p536 = scmp.ne.s32.totalorder %s531, %s533
      %p537 = scmp.eq.s32.totalorder %s35, 0
      %p538 = por %p536, %p537
      %p539 = scmp.ne.s32.totalorder %s531, %s533
      %p540 = scmp.eq.s32.totalorder %s40, 1
      %p541 = por %p539, %p540
      %p542 = scmp.ne.s32.totalorder %s533, %s534
      %p543 = scmp.eq.s32.totalorder %s40, 0
      %p544 = por %p542, %p543
      %p545 = scmp.ne.s32.totalorder %s533, %s534
      %p546 = scmp.eq.s32.totalorder %s41, 1
      %p547 = por %p545, %p546
      %p549 = scmp.ne.s32.totalorder %s534, %s548
      %p550 = scmp.eq.s32.totalorder %s41, 0
      %p551 = por %p549, %p550
      %s553 = sadd.s32 %s552, 1
      %p556 = scmp.eq.s32.totalorder %s35, 1
      %p557 = scmp.ne.s32.totalorder %s552, %s554
      %p558 = scmp.eq.s32.totalorder %s35, 0
      %p559 = por %p557, %p558
      %p560 = scmp.ne.s32.totalorder %s552, %s554
      %p561 = scmp.eq.s32.totalorder %s40, 1
      %p562 = por %p560, %p561
      %p563 = scmp.ne.s32.totalorder %s554, %s555
      %p564 = scmp.eq.s32.totalorder %s40, 0
      %p565 = por %p563, %p564
      %p566 = scmp.ne.s32.totalorder %s554, %s555
      %p567 = scmp.eq.s32.totalorder %s41, 1
      %p568 = por %p566, %p567
      %p570 = scmp.ne.s32.totalorder %s555, %s569
      %p571 = scmp.eq.s32.totalorder %s41, 0
      %p572 = por %p570, %p571
      %s574 = sadd.s32 %s573, 1
      %p577 = scmp.eq.s32.totalorder %s35, 1
      %p578 = scmp.ne.s32.totalorder %s573, %s575
      %p579 = scmp.eq.s32.totalorder %s35, 0
      %p580 = por %p578, %p579
      %p581 = scmp.ne.s32.totalorder %s573, %s575
      %p582 = scmp.eq.s32.totalorder %s40, 1
      %p583 = por %p581, %p582
      %p584 = scmp.ne.s32.totalorder %s575, %s576
      %p585 = scmp.eq.s32.totalorder %s40, 0
      %p586 = por %p584, %p585
      %p587 = scmp.ne.s32.totalorder %s575, %s576
      %p588 = scmp.eq.s32.totalorder %s41, 1
      %p589 = por %p587, %p588
      %p591 = scmp.ne.s32.totalorder %s576, %s590
      %p592 = scmp.eq.s32.totalorder %s41, 0
      %p593 = por %p591, %p592
      %s594 = ssub.s32 %s35, %s42
      %p595 = scmp.eq.s32.totalorder %s594, 0
      %s597 = sadd.s32 %s596, 1
      %s598 = scalar_select %p595, %s596, %s597
      %p601 = pneg %p595
      %p602 = scmp.eq.s32.totalorder %s35, 1
      %p603 = por %p601, %p602
      %p604 = scmp.ne.s32.totalorder %s596, %s599
      %p605 = scmp.eq.s32.totalorder %s35, 0
      %p606 = por %p604, %p605
      %p607 = scmp.ne.s32.totalorder %s596, %s599
      %p608 = scmp.eq.s32.totalorder %s40, 1
      %p609 = por %p607, %p608
      %p610 = scmp.ne.s32.totalorder %s599, %s600
      %p611 = scmp.eq.s32.totalorder %s40, 0
      %p612 = por %p610, %p611
      %p613 = scmp.ne.s32.totalorder %s599, %s600
      %p614 = scmp.eq.s32.totalorder %s41, 1
      %p615 = por %p613, %p614
      %p617 = scmp.ne.s32.totalorder %s600, %s616
      %p618 = scmp.eq.s32.totalorder %s41, 0
      %p619 = por %p617, %p618
      %p620 = scmp.le.s32.totalorder 1, %s35
      %p621 = scmp.lt.s32.totalorder %s35, 3
      %p622 = pnand %p620, %p621
      %p623 = pneg %p622
      // Predicated region
      $region9: #{topdown_vit_forward.1} parent=5 // pred_check
        _
      $region10: #{topdown_vit_forward.1} parent=5 // pred_check_branch
        %625 = sbr.rel (%p622) target = $region12
      $region11: #{topdown_vit_forward.1} parent=5 // pred_region
        %s626 = ssub.s32 %s35, 1
        // Predicated region
        $region13: #{topdown_vit_forward.1} parent=11 // pred_check
          %p627 = pneg %p82
        $region14: #{topdown_vit_forward.1} parent=11 // pred_check_branch
          %629 = sbr.rel (%p627) target = $region16
        $region15: #{topdown_vit_forward.1} parent=11 // pred_region
          _
        $region16: #{topdown_vit_forward.1} parent=11 // pred_fallthru
          _
        // Predicated region
        $region17: #{topdown_vit_forward.1} parent=11 // pred_check
          %p630 = pneg %p103
        $region18: #{topdown_vit_forward.1} parent=11 // pred_check_branch
          %632 = sbr.rel (%p630) target = $region20
        $region19: #{topdown_vit_forward.1} parent=11 // pred_region
          _
        $region20: #{topdown_vit_forward.1} parent=11 // pred_fallthru
          _
        // Predicated region
        $region21: #{topdown_vit_forward.1} parent=11 // pred_check
          %p633 = pneg %p124
        $region22: #{topdown_vit_forward.1} parent=11 // pred_check_branch
          %635 = sbr.rel (%p633) target = $region24
        $region23: #{topdown_vit_forward.1} parent=11 // pred_region
          _
        $region24: #{topdown_vit_forward.1} parent=11 // pred_fallthru
          _
        // Predicated region
        $region25: #{topdown_vit_forward.1} parent=11 // pred_check
          %p636 = pneg %p145
        $region26: #{topdown_vit_forward.1} parent=11 // pred_check_branch
          %638 = sbr.rel (%p636) target = $region28
        $region27: #{topdown_vit_forward.1} parent=11 // pred_region
          _
        $region28: #{topdown_vit_forward.1} parent=11 // pred_fallthru
          _
        // Predicated region
        $region29: #{topdown_vit_forward.1} parent=11 // pred_check
          %p639 = pneg %p166
        $region30: #{topdown_vit_forward.1} parent=11 // pred_check_branch
          %641 = sbr.rel (%p639) target = $region32
        $region31: #{topdown_vit_forward.1} parent=11 // pred_region
          _
        $region32: #{topdown_vit_forward.1} parent=11 // pred_fallthru
          _
        // Predicated region
        $region33: #{topdown_vit_forward.1} parent=11 // pred_check
          %p642 = pneg %p187
        $region34: #{topdown_vit_forward.1} parent=11 // pred_check_branch
          %644 = sbr.rel (%p642) target = $region36
        $region35: #{topdown_vit_forward.1} parent=11 // pred_region
          _
        $region36: #{topdown_vit_forward.1} parent=11 // pred_fallthru
          _
        // Predicated region
        $region37: #{topdown_vit_forward.1} parent=11 // pred_check
          %p645 = pneg %p208
        $region38: #{topdown_vit_forward.1} parent=11 // pred_check_branch
          %647 = sbr.rel (%p645) target = $region40
        $region39: #{topdown_vit_forward.1} parent=11 // pred_region
          _
        $region40: #{topdown_vit_forward.1} parent=11 // pred_fallthru
          _
        // Predicated region
        $region41: #{topdown_vit_forward.1} parent=11 // pred_check
          %p648 = pneg %p229
        $region42: #{topdown_vit_forward.1} parent=11 // pred_check_branch
          %650 = sbr.rel (%p648) target = $region44
        $region43: #{topdown_vit_forward.1} parent=11 // pred_region
          _
        $region44: #{topdown_vit_forward.1} parent=11 // pred_fallthru
          _
        // Predicated region
        $region45: #{topdown_vit_forward.1} parent=11 // pred_check
          %p651 = pneg %p250
        $region46: #{topdown_vit_forward.1} parent=11 // pred_check_branch
          %653 = sbr.rel (%p651) target = $region48
        $region47: #{topdown_vit_forward.1} parent=11 // pred_region
          _
        $region48: #{topdown_vit_forward.1} parent=11 // pred_fallthru
          _
        // Predicated region
        $region49: #{topdown_vit_forward.1} parent=11 // pred_check
          %p654 = pneg %p271
        $region50: #{topdown_vit_forward.1} parent=11 // pred_check_branch
          %656 = sbr.rel (%p654) target = $region52
        $region51: #{topdown_vit_forward.1} parent=11 // pred_region
          _
        $region52: #{topdown_vit_forward.1} parent=11 // pred_fallthru
          _
        // Predicated region
        $region53: #{topdown_vit_forward.1} parent=11 // pred_check
          %p657 = pneg %p292
        $region54: #{topdown_vit_forward.1} parent=11 // pred_check_branch
          %659 = sbr.rel (%p657) target = $region56
        $region55: #{topdown_vit_forward.1} parent=11 // pred_region
          _
        $region56: #{topdown_vit_forward.1} parent=11 // pred_fallthru
          _
        // Predicated region
        $region57: #{topdown_vit_forward.1} parent=11 // pred_check
          %p660 = pneg %p313
        $region58: #{topdown_vit_forward.1} parent=11 // pred_check_branch
          %662 = sbr.rel (%p660) target = $region60
        $region59: #{topdown_vit_forward.1} parent=11 // pred_region
          _
        $region60: #{topdown_vit_forward.1} parent=11 // pred_fallthru
          _
        // Predicated region
        $region61: #{topdown_vit_forward.1} parent=11 // pred_check
          %p663 = pneg %p334
        $region62: #{topdown_vit_forward.1} parent=11 // pred_check_branch
          %665 = sbr.rel (%p663) target = $region64
        $region63: #{topdown_vit_forward.1} parent=11 // pred_region
          _
        $region64: #{topdown_vit_forward.1} parent=11 // pred_fallthru
          _
        // Predicated region
        $region65: #{topdown_vit_forward.1} parent=11 // pred_check
          %p666 = pneg %p355
        $region66: #{topdown_vit_forward.1} parent=11 // pred_check_branch
          %668 = sbr.rel (%p666) target = $region68
        $region67: #{topdown_vit_forward.1} parent=11 // pred_region
          _
        $region68: #{topdown_vit_forward.1} parent=11 // pred_fallthru
          _
        // Predicated region
        $region69: #{topdown_vit_forward.1} parent=11 // pred_check
          %p669 = pneg %p376
        $region70: #{topdown_vit_forward.1} parent=11 // pred_check_branch
          %671 = sbr.rel (%p669) target = $region72
        $region71: #{topdown_vit_forward.1} parent=11 // pred_region
          _
        $region72: #{topdown_vit_forward.1} parent=11 // pred_fallthru
          _
        // Predicated region
        $region73: #{topdown_vit_forward.1} parent=11 // pred_check
          %p672 = pneg %p397
        $region74: #{topdown_vit_forward.1} parent=11 // pred_check_branch
          %674 = sbr.rel (%p672) target = $region76
        $region75: #{topdown_vit_forward.1} parent=11 // pred_region
          _
        $region76: #{topdown_vit_forward.1} parent=11 // pred_fallthru
          _
        // Predicated region
        $region77: #{topdown_vit_forward.1} parent=11 // pred_check
          %p675 = pneg %p418
        $region78: #{topdown_vit_forward.1} parent=11 // pred_check_branch
          %677 = sbr.rel (%p675) target = $region80
        $region79: #{topdown_vit_forward.1} parent=11 // pred_region
          _
        $region80: #{topdown_vit_forward.1} parent=11 // pred_fallthru
          _
        // Predicated region
        $region81: #{topdown_vit_forward.1} parent=11 // pred_check
          %p678 = pneg %p439
        $region82: #{topdown_vit_forward.1} parent=11 // pred_check_branch
          %680 = sbr.rel (%p678) target = $region84
        $region83: #{topdown_vit_forward.1} parent=11 // pred_region
          _
        $region84: #{topdown_vit_forward.1} parent=11 // pred_fallthru
          _
        // Predicated region
        $region85: #{topdown_vit_forward.1} parent=11 // pred_check
          %p681 = pneg %p460
        $region86: #{topdown_vit_forward.1} parent=11 // pred_check_branch
          %683 = sbr.rel (%p681) target = $region88
        $region87: #{topdown_vit_forward.1} parent=11 // pred_region
          _
        $region88: #{topdown_vit_forward.1} parent=11 // pred_fallthru
          _
        // Predicated region
        $region89: #{topdown_vit_forward.1} parent=11 // pred_check
          %p684 = pneg %p481
        $region90: #{topdown_vit_forward.1} parent=11 // pred_check_branch
          %686 = sbr.rel (%p684) target = $region92
        $region91: #{topdown_vit_forward.1} parent=11 // pred_region
          _
        $region92: #{topdown_vit_forward.1} parent=11 // pred_fallthru
          _
        // Predicated region
        $region93: #{topdown_vit_forward.1} parent=11 // pred_check
          %p687 = pneg %p502
        $region94: #{topdown_vit_forward.1} parent=11 // pred_check_branch
          %689 = sbr.rel (%p687) target = $region96
        $region95: #{topdown_vit_forward.1} parent=11 // pred_region
          _
        $region96: #{topdown_vit_forward.1} parent=11 // pred_fallthru
          _
        // Predicated region
        $region97: #{topdown_vit_forward.1} parent=11 // pred_check
          %p690 = pneg %p523
        $region98: #{topdown_vit_forward.1} parent=11 // pred_check_branch
          %692 = sbr.rel (%p690) target = $region100
        $region99: #{topdown_vit_forward.1} parent=11 // pred_region
          _
        $region100: #{topdown_vit_forward.1} parent=11 // pred_fallthru
          _
        // Predicated region
        $region101: #{topdown_vit_forward.1} parent=11 // pred_check
          %p693 = pneg %p544
        $region102: #{topdown_vit_forward.1} parent=11 // pred_check_branch
          %695 = sbr.rel (%p693) target = $region104
        $region103: #{topdown_vit_forward.1} parent=11 // pred_region
          _
        $region104: #{topdown_vit_forward.1} parent=11 // pred_fallthru
          _
        // Predicated region
        $region105: #{topdown_vit_forward.1} parent=11 // pred_check
          %p696 = pneg %p565
        $region106: #{topdown_vit_forward.1} parent=11 // pred_check_branch
          %698 = sbr.rel (%p696) target = $region108
        $region107: #{topdown_vit_forward.1} parent=11 // pred_region
          _
        $region108: #{topdown_vit_forward.1} parent=11 // pred_fallthru
          _
        // Predicated region
        $region109: #{topdown_vit_forward.1} parent=11 // pred_check
          %p699 = pneg %p586
        $region110: #{topdown_vit_forward.1} parent=11 // pred_check_branch
          %701 = sbr.rel (%p699) target = $region112
        $region111: #{topdown_vit_forward.1} parent=11 // pred_region
          _
        $region112: #{topdown_vit_forward.1} parent=11 // pred_fallthru
          _
      $region12: #{topdown_vit_forward.1} parent=5 // pred_fallthru
        _
      %p702 = scmp.lt.s32.totalorder %s35, 2
      // Predicated region
      $region113: #{topdown_vit_forward.1} parent=5 // pred_check
        %p703 = pneg %p702
      $region114: #{topdown_vit_forward.1} parent=5 // pred_check_branch
        %705 = sbr.rel (%p703) target = $region116
      $region115: #{topdown_vit_forward.1} parent=5 // pred_region
        // Predicated region
        $region117: #{topdown_vit_forward.1} parent=115 // pred_check
          %p706 = pneg %p55
        $region118: #{topdown_vit_forward.1} parent=115 // pred_check_branch
          %708 = sbr.rel (%p706) target = $region120
        $region119: #{topdown_vit_forward.1} parent=115 // pred_region
          %p709 = scmp.lt.s32.totalorder %s35, 1
          %s710 = scalar_select %p709, %s35, 1
          %s711 = smul.addr %s710, 6
          %s712 = smul.addr %s711, 8
          %s713 = scalar_lea.vmem %s0, %s712
        $region120: #{topdown_vit_forward.1} parent=115 // pred_fallthru
          _
      $region116: #{topdown_vit_forward.1} parent=5 // pred_fallthru
        _
      %p714 = scmp.le.s32.totalorder 1, %s35
      %p715 = scmp.lt.s32.totalorder %s35, 3
      %p716 = pnand %p714, %p715
      %p717 = pneg %p716
      // Predicated region
      $region121: #{topdown_vit_forward.1} parent=5 // pred_check
        _
      $region122: #{topdown_vit_forward.1} parent=5 // pred_check_branch
        %719 = sbr.rel (%p716) target = $region124
      $region123: #{topdown_vit_forward.1} parent=5 // pred_region
        %s720 = ssub.s32 %s35, 1
        %p721 = scmp.lt.s32.totalorder %s40, 1
        %s722 = scalar_select %p721, %s40, 1
        %s723 = smul.addr %s722, 6
        %s724 = smul.addr %s723, 8
        %s725 = scalar_lea.vmem %s0, %s724
        %p726 = pneg %p61
        %p727 = pneg %p58
        %p728 = pneg %p82
        %p729 = pneg %p79
        %p730 = pneg %p103
        %p731 = pneg %p100
        %p732 = pneg %p124
        %p733 = pneg %p121
        %p734 = pneg %p145
        %p735 = pneg %p142
        %p736 = pneg %p166
        %p737 = pneg %p163
        %p738 = pneg %p187
        %p739 = pneg %p184
        %p740 = pneg %p208
        %p741 = pneg %p205
        %p742 = pneg %p229
        %p743 = pneg %p226
        %p744 = pneg %p250
        %p745 = pneg %p247
        %p746 = pneg %p271
        %p747 = pneg %p268
        %p748 = pneg %p292
        %p749 = pneg %p289
        %p750 = pneg %p313
        %p751 = pneg %p310
        %p752 = pneg %p334
        %p753 = pneg %p331
        %p754 = pneg %p355
        %p755 = pneg %p352
        %p756 = pneg %p376
        %p757 = pneg %p373
        %p758 = pneg %p397
        %p759 = pneg %p394
        %p760 = pneg %p418
        %p761 = pneg %p415
        %p762 = pneg %p439
        %p763 = pneg %p436
        %p764 = pneg %p460
        %p765 = pneg %p457
        %p766 = pneg %p481
        %p767 = pneg %p478
        %p768 = pneg %p502
        %p769 = pneg %p499
        %p770 = pneg %p523
        %p771 = pneg %p520
        %p772 = pneg %p544
        %p773 = pneg %p541
        %p774 = pneg %p565
        %p775 = pneg %p562
        %p776 = pneg %p586
        %p777 = pneg %p583
        %p778 = pneg %p612
        %p779 = pneg %p609
        %s780 = sand.u32 %s599, 1
        %s781 = scalar_lea.sflag [#allocation3], %s780
        %s782 = sand.u32 %s599, 1
        %s783 = scalar_lea.vmem [#allocation2], %s782
        %p784 = scmp.lt.s32.totalorder %s40, 1
        %s785 = scalar_select %p784, %s40, 1
        %s786 = smul.addr %s785, 6
        %s787 = smul.addr %s786, 8
        %s788 = scalar_lea.vmem %s0, %s787
        %v790 = vld [vmem:[%s788] sm:$0x1f]
        %v791 = vld [vmem:[%s788 + $0x8] sm:$0x1f]
        %v792 = vld [vmem:[%s788 + $0x10] sm:$0x1f]
        %v793 = vld [vmem:[%s788 + $0x18] sm:$0x1f]
        %v794 = vld [vmem:[%s788 + $0x20] sm:$0x1f]
        %v795 = vld [vmem:[%s788 + $0x28] sm:$0x1f]
        %v796 = vld [vmem:[%s1] sm:$0xf]
        %v797 = vld [vmem:[%s1 + $0x4] sm:$0xf]
        %v798 = vld [vmem:[%s1 + $0x8] sm:$0xf]
        %v799 = vld [vmem:[%s1 + $0xc] sm:$0xf]
        %v800 = vld [vmem:[%s1 + $0x10] sm:$0xf]
        %v801 = vld [vmem:[%s1 + $0x14] sm:$0xf]
        %v802 = vld [vmem:[%s1 + $0x18] sm:$0xf]
        %v803 = vld [vmem:[%s1 + $0x1c] sm:$0xf]
        %v804 = vld [vmem:[%s1 + $0x20] sm:$0xf]
        %v805 = vld [vmem:[%s1 + $0x24] sm:$0xf]
        %v806 = vld [vmem:[%s1 + $0x28] sm:$0xf]
        %v807 = vld [vmem:[%s1 + $0x2c] sm:$0xf]
        %v808 = vld [vmem:[%s1 + $0x30] sm:$0xf]
        %v809 = vld [vmem:[%s1 + $0x34] sm:$0xf]
        %v810 = vld [vmem:[%s1 + $0x38] sm:$0xf]
        %v811 = vld [vmem:[%s1 + $0x3c] sm:$0xf]
        %v812 = vld [vmem:[%s1 + $0x40] sm:$0xf]
        %v813 = vld [vmem:[%s1 + $0x44] sm:$0xf]
        %v814 = vld [vmem:[%s1 + $0x48] sm:$0xf]
        %v815 = vld [vmem:[%s1 + $0x4c] sm:$0xf]
        %v816 = vld [vmem:[%s1 + $0x50] sm:$0xf]
        %v817 = vld [vmem:[%s1 + $0x54] sm:$0xf]
        %v818 = vld [vmem:[%s1 + $0x58] sm:$0xf]
        %v819 = vld [vmem:[%s1 + $0x5c] sm:$0xf]
        %v820 = vld [vmem:[%s1 + $0x60] sm:$0xf]
        %v821 = vld [vmem:[%s1 + $0x64] sm:$0xf]
        %v822 = vld [vmem:[%s1 + $0x68] sm:$0xf]
        %v823 = vld [vmem:[%s1 + $0x6c] sm:$0xf]
        %v824 = vld [vmem:[%s1 + $0x70] sm:$0xf]
        %v825 = vld [vmem:[%s1 + $0x74] sm:$0xf]
        %v826 = vld [vmem:[%s1 + $0x78] sm:$0xf]
        %v827 = vld [vmem:[%s1 + $0x7c] sm:$0xf]
        %v828 = vld [vmem:[%s1 + $0x80] sm:$0xf]
        %v829 = vld [vmem:[%s1 + $0x84] sm:$0xf]
        %v830 = vld [vmem:[%s1 + $0x88] sm:$0xf]
        %v831 = vld [vmem:[%s1 + $0x8c] sm:$0xf]
        %v832 = vld [vmem:[%s1 + $0x90] sm:$0xf]
        %v833 = vld [vmem:[%s1 + $0x94] sm:$0xf]
        %v834 = vld [vmem:[%s1 + $0x98] sm:$0xf]
        %v835 = vld [vmem:[%s1 + $0x9c] sm:$0xf]
        %v836 = vld [vmem:[%s1 + $0xa0] sm:$0xf]
        %v837 = vld [vmem:[%s1 + $0xa4] sm:$0xf]
        %v838 = vld [vmem:[%s1 + $0xa8] sm:$0xf]
        %v839 = vld [vmem:[%s1 + $0xac] sm:$0xf]
        %v840 = vld [vmem:[%s1 + $0xb0] sm:$0xf]
        %v841 = vld [vmem:[%s1 + $0xb4] sm:$0xf]
        %v842 = vld [vmem:[%s1 + $0xb8] sm:$0xf]
        %v843 = vld [vmem:[%s1 + $0xbc] sm:$0xf]
        %v844 = vld [vmem:[%s1 + $0xc0] sm:$0xf]
        %v845 = vld [vmem:[%s1 + $0xc4] sm:$0xf]
        %v846 = vld [vmem:[%s1 + $0xc8] sm:$0xf]
        %v847 = vld [vmem:[%s1 + $0xcc] sm:$0xf]
        %v848 = vld [vmem:[%s1 + $0xd0] sm:$0xf]
        %v849 = vld [vmem:[%s1 + $0xd4] sm:$0xf]
        %v850 = vld [vmem:[%s1 + $0xd8] sm:$0xf]
        %v851 = vld [vmem:[%s1 + $0xdc] sm:$0xf]
        %v852 = vld [vmem:[%s1 + $0xe0] sm:$0xf]
        %v853 = vld [vmem:[%s1 + $0xe4] sm:$0xf]
        %v854 = vld [vmem:[%s1 + $0xe8] sm:$0xf]
        %v855 = vld [vmem:[%s1 + $0xec] sm:$0xf]
        %v856 = vld [vmem:[%s1 + $0xf0] sm:$0xf]
        %v857 = vld [vmem:[%s1 + $0xf4] sm:$0xf]
        %v858 = vld [vmem:[%s1 + $0xf8] sm:$0xf]
        %v859 = vld [vmem:[%s1 + $0xfc] sm:$0xf]
        %v860 = vld [vmem:[%s1 + $0x100] sm:$0xf]
        %v861 = vld [vmem:[%s1 + $0x104] sm:$0xf]
        %v862 = vld [vmem:[%s1 + $0x108] sm:$0xf]
        %v863 = vld [vmem:[%s1 + $0x10c] sm:$0xf]
        %v864 = vld [vmem:[%s1 + $0x110] sm:$0xf]
        %v865 = vld [vmem:[%s1 + $0x114] sm:$0xf]
        %v866 = vld [vmem:[%s1 + $0x118] sm:$0xf]
        %v867 = vld [vmem:[%s1 + $0x11c] sm:$0xf]
        %v868 = vld [vmem:[%s1 + $0x120] sm:$0xf]
        %v869 = vld [vmem:[%s1 + $0x124] sm:$0xf]
        %v870 = vld [vmem:[%s1 + $0x128] sm:$0xf]
        %v871 = vld [vmem:[%s1 + $0x12c] sm:$0xf]
        %v872 = vld [vmem:[%s1 + $0x130] sm:$0xf]
        %v873 = vld [vmem:[%s1 + $0x134] sm:$0xf]
        %v874 = vld [vmem:[%s1 + $0x138] sm:$0xf]
        %v875 = vld [vmem:[%s1 + $0x13c] sm:$0xf]
        %v876 = vld [vmem:[%s1 + $0x140] sm:$0xf]
        %v877 = vld [vmem:[%s1 + $0x144] sm:$0xf]
        %v878 = vld [vmem:[%s1 + $0x148] sm:$0xf]
        %v879 = vld [vmem:[%s1 + $0x14c] sm:$0xf]
        %v880 = vld [vmem:[%s1 + $0x150] sm:$0xf]
        %v881 = vld [vmem:[%s1 + $0x154] sm:$0xf]
        %v882 = vld [vmem:[%s1 + $0x158] sm:$0xf]
        %v883 = vld [vmem:[%s1 + $0x15c] sm:$0xf]
        %v884 = vld [vmem:[%s1 + $0x160] sm:$0xf]
        %v885 = vld [vmem:[%s1 + $0x164] sm:$0xf]
        %v886 = vld [vmem:[%s1 + $0x168] sm:$0xf]
        %v887 = vld [vmem:[%s1 + $0x16c] sm:$0xf]
        %v888 = vld [vmem:[%s1 + $0x170] sm:$0xf]
        %v889 = vld [vmem:[%s1 + $0x174] sm:$0xf]
        %v890 = vld [vmem:[%s1 + $0x178] sm:$0xf]
        %v891 = vld [vmem:[%s1 + $0x17c] sm:$0xf]
        %v892 = vpack.c.bf16 %v790, %v790
        %v893 = vpack.c.bf16 %v791, %v791
        %v894 = vpack.c.bf16 %v792, %v792
        %v895 = vpack.c.bf16 %v793, %v793
        %v896 = vpack.c.bf16 %v794, %v794
        %v897 = vpack.c.bf16 %v795, %v795
        %v898 = vld [vmem:[%s2] sm:$0x1]
        %v900 = vlaneseq
        %v901 = vshrl.u32 %v900, 7
        %v902 = vsub.s32 0, %v901
        %v903 = vrot.slane %v898, %v902
        %v1001 = vunpack.c.l.b16 %v796
        %v1002 = vunpack.c.l.b16 %v797
        %v1003 = vunpack.c.l.b16 %v798
        %v1004 = vunpack.c.l.b16 %v799
        %v1005 = vunpack.c.l.b16 %v800
        %v1006 = vunpack.c.l.b16 %v801
        %v1007 = vunpack.c.l.b16 %v802
        %v1008 = vunpack.c.l.b16 %v803
        %v1009 = vunpack.c.l.b16 %v804
        %v1010 = vunpack.c.l.b16 %v805
        %v1011 = vunpack.c.l.b16 %v806
        %v1012 = vunpack.c.l.b16 %v807
        %v1013 = vunpack.c.l.b16 %v808
        %v1014 = vunpack.c.l.b16 %v809
        %v1015 = vunpack.c.l.b16 %v810
        %v1016 = vunpack.c.l.b16 %v811
        %v1017 = vunpack.c.l.b16 %v812
        %v1018 = vunpack.c.l.b16 %v813
        %v1019 = vunpack.c.l.b16 %v814
        %v1020 = vunpack.c.l.b16 %v815
        %v1021 = vunpack.c.l.b16 %v816
        %v1022 = vunpack.c.l.b16 %v817
        %v1023 = vunpack.c.l.b16 %v818
        %v1024 = vunpack.c.l.b16 %v819
        %v1025 = vunpack.c.l.b16 %v820
        %v1026 = vunpack.c.l.b16 %v821
        %v1027 = vunpack.c.l.b16 %v822
        %v1028 = vunpack.c.l.b16 %v823
        %v1029 = vunpack.c.l.b16 %v824
        %v1030 = vunpack.c.l.b16 %v825
        %v1031 = vunpack.c.l.b16 %v826
        %v1032 = vunpack.c.l.b16 %v827
        %v1033 = vunpack.c.l.b16 %v828
        %v1034 = vunpack.c.l.b16 %v829
        %v1035 = vunpack.c.l.b16 %v830
        %v1036 = vunpack.c.l.b16 %v831
        %v1037 = vunpack.c.l.b16 %v832
        %v1038 = vunpack.c.l.b16 %v833
        %v1039 = vunpack.c.l.b16 %v834
        %v1040 = vunpack.c.l.b16 %v835
        %v1041 = vunpack.c.l.b16 %v836
        %v1042 = vunpack.c.l.b16 %v837
        %v1043 = vunpack.c.l.b16 %v838
        %v1044 = vunpack.c.l.b16 %v839
        %v1045 = vunpack.c.l.b16 %v840
        %v1046 = vunpack.c.l.b16 %v841
        %v1047 = vunpack.c.l.b16 %v842
        %v1048 = vunpack.c.l.b16 %v843
        %v1049 = vunpack.c.l.b16 %v844
        %v1050 = vunpack.c.l.b16 %v845
        %v1051 = vunpack.c.l.b16 %v846
        %v1052 = vunpack.c.l.b16 %v847
        %v1053 = vunpack.c.l.b16 %v848
        %v1054 = vunpack.c.l.b16 %v849
        %v1055 = vunpack.c.l.b16 %v850
        %v1056 = vunpack.c.l.b16 %v851
        %v1057 = vunpack.c.l.b16 %v852
        %v1058 = vunpack.c.l.b16 %v853
        %v1059 = vunpack.c.l.b16 %v854
        %v1060 = vunpack.c.l.b16 %v855
        %v1061 = vunpack.c.l.b16 %v856
        %v1062 = vunpack.c.l.b16 %v857
        %v1063 = vunpack.c.l.b16 %v858
        %v1064 = vunpack.c.l.b16 %v859
        %v1065 = vunpack.c.l.b16 %v860
        %v1066 = vunpack.c.l.b16 %v861
        %v1067 = vunpack.c.l.b16 %v862
        %v1068 = vunpack.c.l.b16 %v863
        %v1069 = vunpack.c.l.b16 %v864
        %v1070 = vunpack.c.l.b16 %v865
        %v1071 = vunpack.c.l.b16 %v866
        %v1072 = vunpack.c.l.b16 %v867
        %v1073 = vunpack.c.l.b16 %v868
        %v1074 = vunpack.c.l.b16 %v869
        %v1075 = vunpack.c.l.b16 %v870
        %v1076 = vunpack.c.l.b16 %v871
        %v1077 = vunpack.c.l.b16 %v872
        %v1078 = vunpack.c.l.b16 %v873
        %v1079 = vunpack.c.l.b16 %v874
        %v1080 = vunpack.c.l.b16 %v875
        %v1081 = vunpack.c.l.b16 %v876
        %v1082 = vunpack.c.l.b16 %v877
        %v1083 = vunpack.c.l.b16 %v878
        %v1084 = vunpack.c.l.b16 %v879
        %v1085 = vunpack.c.l.b16 %v880
        %v1086 = vunpack.c.l.b16 %v881
        %v1087 = vunpack.c.l.b16 %v882
        %v1088 = vunpack.c.l.b16 %v883
        %v1089 = vunpack.c.l.b16 %v884
        %v1090 = vunpack.c.l.b16 %v885
        %v1091 = vunpack.c.l.b16 %v886
        %v1092 = vunpack.c.l.b16 %v887
        %v1093 = vunpack.c.l.b16 %v888
        %v1094 = vunpack.c.l.b16 %v889
        %v1095 = vunpack.c.l.b16 %v890
        %v1096 = vunpack.c.l.b16 %v891
        %v1097 = vpack.c.b16 %v1002, %v1001
        %v1098 = vpack.c.b16 %v1004, %v1003
        %v1099 = vpack.c.b16 %v1006, %v1005
        %v1100 = vpack.c.b16 %v1008, %v1007
        %v1101 = vpack.c.b16 %v1010, %v1009
        %v1102 = vpack.c.b16 %v1012, %v1011
        %v1103 = vpack.c.b16 %v1014, %v1013
        %v1104 = vpack.c.b16 %v1016, %v1015
        %v1105 = vpack.c.b16 %v1018, %v1017
        %v1106 = vpack.c.b16 %v1020, %v1019
        %v1107 = vpack.c.b16 %v1022, %v1021
        %v1108 = vpack.c.b16 %v1024, %v1023
        %v1109 = vpack.c.b16 %v1026, %v1025
        %v1110 = vpack.c.b16 %v1028, %v1027
        %v1111 = vpack.c.b16 %v1030, %v1029
        %v1112 = vpack.c.b16 %v1032, %v1031
        %v1113 = vpack.c.b16 %v1034, %v1033
        %v1114 = vpack.c.b16 %v1036, %v1035
        %v1115 = vpack.c.b16 %v1038, %v1037
        %v1116 = vpack.c.b16 %v1040, %v1039
        %v1117 = vpack.c.b16 %v1042, %v1041
        %v1118 = vpack.c.b16 %v1044, %v1043
        %v1119 = vpack.c.b16 %v1046, %v1045
        %v1120 = vpack.c.b16 %v1048, %v1047
        %v1121 = vpack.c.b16 %v1050, %v1049
        %v1122 = vpack.c.b16 %v1052, %v1051
        %v1123 = vpack.c.b16 %v1054, %v1053
        %v1124 = vpack.c.b16 %v1056, %v1055
        %v1125 = vpack.c.b16 %v1058, %v1057
        %v1126 = vpack.c.b16 %v1060, %v1059
        %v1127 = vpack.c.b16 %v1062, %v1061
        %v1128 = vpack.c.b16 %v1064, %v1063
        %v1129 = vpack.c.b16 %v1066, %v1065
        %v1130 = vpack.c.b16 %v1068, %v1067
        %v1131 = vpack.c.b16 %v1070, %v1069
        %v1132 = vpack.c.b16 %v1072, %v1071
        %v1133 = vpack.c.b16 %v1074, %v1073
        %v1134 = vpack.c.b16 %v1076, %v1075
        %v1135 = vpack.c.b16 %v1078, %v1077
        %v1136 = vpack.c.b16 %v1080, %v1079
        %v1137 = vpack.c.b16 %v1082, %v1081
        %v1138 = vpack.c.b16 %v1084, %v1083
        %v1139 = vpack.c.b16 %v1086, %v1085
        %v1140 = vpack.c.b16 %v1088, %v1087
        %v1141 = vpack.c.b16 %v1090, %v1089
        %v1142 = vpack.c.b16 %v1092, %v1091
        %v1143 = vpack.c.b16 %v1094, %v1093
        %v1144 = vpack.c.b16 %v1096, %v1095
        %1193 = vmatprep.subr.bf16.mxu0 0
        %1194 = vmatpush1.bf16.msra.mxu0 %v1104
        %1195 = vmatprep.subr.bf16.mxu0 0
        %1196 = vmatpush1.bf16.msra.mxu0 %v1103
        %1197 = vmatprep.subr.bf16.mxu0 0
        %1198 = vmatpush1.bf16.msra.mxu0 %v1102
        %1199 = vmatprep.subr.bf16.mxu0 0
        %1200 = vmatpush1.bf16.msra.mxu0 %v1101
        %1201 = vmatprep.subr.bf16.mxu0 0
        %1202 = vmatpush1.bf16.msra.mxu0 %v1100
        %1203 = vmatprep.subr.bf16.mxu0 0
        %1204 = vmatpush1.bf16.msra.mxu0 %v1099
        %1205 = vmatprep.subr.bf16.mxu0 0
        %1206 = vmatpush1.bf16.msra.mxu0 %v1098
        %1207 = vmatprep.subr.bf16.mxu0 0
        %1208 = vmatpush1.bf16.msra.mxu0 %v1097
        %1209 = vmatprep.subr.bf16.mxu0 0
        %1210 = vmatpush2.bf16.msra.mxu0 %v1112
        %1211 = vmatprep.subr.bf16.mxu0 0
        %1212 = vmatpush2.bf16.msra.mxu0 %v1111
        %1213 = vmatprep.subr.bf16.mxu0 0
        %1214 = vmatpush2.bf16.msra.mxu0 %v1110
        %1215 = vmatprep.subr.bf16.mxu0 0
        %1216 = vmatpush2.bf16.msra.mxu0 %v1109
        %1217 = vmatprep.subr.bf16.mxu0 0
        %1218 = vmatpush2.bf16.msra.mxu0 %v1108
        %1219 = vmatprep.subr.bf16.mxu0 0
        %1220 = vmatpush2.bf16.msra.mxu0 %v1107
        %1221 = vmatprep.subr.bf16.mxu0 0
        %1222 = vmatpush2.bf16.msra.mxu0 %v1106
        %1223 = vmatprep.subr.bf16.mxu0 0
        %1224 = vmatpush2.bf16.msra.mxu0 %v1105
        %1225 = vmatprep.mubr.bf16.mxu0 %v893
        %1226 = vmatmul.mubr.bf16.gmra.mxu0 %v892
        %v1227 = vpop.f32.mrf.mxu0
        %v1228 = vadd.f32 %v903, %v1227
        %v1229 = vpop.f32.mrf.mxu0
        %v1230 = vpop.f32.mrf.mxu0
        %v1231 = vpop.f32.mrf.mxu0
        %1232 = vdwg.mxu0
        %1233 = vmatprep.subr.bf16.mxu0 0
        %1234 = vmatpush1.bf16.msra.mxu0 %v1120
        %1235 = vmatprep.subr.bf16.mxu0 0
        %1236 = vmatpush1.bf16.msra.mxu0 %v1119
        %1237 = vmatprep.subr.bf16.mxu0 0
        %1238 = vmatpush1.bf16.msra.mxu0 %v1118
        %1239 = vmatprep.subr.bf16.mxu0 0
        %1240 = vmatpush1.bf16.msra.mxu0 %v1117
        %1241 = vmatprep.subr.bf16.mxu0 0
        %1242 = vmatpush1.bf16.msra.mxu0 %v1116
        %1243 = vmatprep.subr.bf16.mxu0 0
        %1244 = vmatpush1.bf16.msra.mxu0 %v1115
        %1245 = vmatprep.subr.bf16.mxu0 0
        %1246 = vmatpush1.bf16.msra.mxu0 %v1114
        %1247 = vmatprep.subr.bf16.mxu0 0
        %1248 = vmatpush1.bf16.msra.mxu0 %v1113
        %1249 = vmatprep.subr.bf16.mxu0 0
        %1250 = vmatpush2.bf16.msra.mxu0 %v1128
        %1251 = vmatprep.subr.bf16.mxu0 0
        %1252 = vmatpush2.bf16.msra.mxu0 %v1127
        %1253 = vmatprep.subr.bf16.mxu0 0
        %1254 = vmatpush2.bf16.msra.mxu0 %v1126
        %1255 = vmatprep.subr.bf16.mxu0 0
        %1256 = vmatpush2.bf16.msra.mxu0 %v1125
        %1257 = vmatprep.subr.bf16.mxu0 0
        %1258 = vmatpush2.bf16.msra.mxu0 %v1124
        %1259 = vmatprep.subr.bf16.mxu0 0
        %1260 = vmatpush2.bf16.msra.mxu0 %v1123
        %1261 = vmatprep.subr.bf16.mxu0 0
        %1262 = vmatpush2.bf16.msra.mxu0 %v1122
        %1263 = vmatprep.subr.bf16.mxu0 0
        %1264 = vmatpush2.bf16.msra.mxu0 %v1121
        %1265 = vmatprep.mubr.bf16.mxu0 %v895
        %1266 = vmatmul.mubr.bf16.gmra.mxu0 %v894
        %v1267 = vpop.f32.mrf.mxu0
        %v1268 = vadd.f32 %v1228, %v1267
        %v1269 = vpop.f32.mrf.mxu0
        %v1270 = vpop.f32.mrf.mxu0
        %v1271 = vpop.f32.mrf.mxu0
        %1272 = vdwg.mxu0
        %1273 = vmatprep.subr.bf16.mxu0 0
        %1274 = vmatpush1.bf16.msra.mxu0 %v1136
        %1275 = vmatprep.subr.bf16.mxu0 0
        %1276 = vmatpush1.bf16.msra.mxu0 %v1135
        %1277 = vmatprep.subr.bf16.mxu0 0
        %1278 = vmatpush1.bf16.msra.mxu0 %v1134
        %1279 = vmatprep.subr.bf16.mxu0 0
        %1280 = vmatpush1.bf16.msra.mxu0 %v1133
        %1281 = vmatprep.subr.bf16.mxu0 0
        %1282 = vmatpush1.bf16.msra.mxu0 %v1132
        %1283 = vmatprep.subr.bf16.mxu0 0
        %1284 = vmatpush1.bf16.msra.mxu0 %v1131
        %1285 = vmatprep.subr.bf16.mxu0 0
        %1286 = vmatpush1.bf16.msra.mxu0 %v1130
        %1287 = vmatprep.subr.bf16.mxu0 0
        %1288 = vmatpush1.bf16.msra.mxu0 %v1129
        %1289 = vmatprep.subr.bf16.mxu0 0
        %1290 = vmatpush2.bf16.msra.mxu0 %v1144
        %1291 = vmatprep.subr.bf16.mxu0 0
        %1292 = vmatpush2.bf16.msra.mxu0 %v1143
        %1293 = vmatprep.subr.bf16.mxu0 0
        %1294 = vmatpush2.bf16.msra.mxu0 %v1142
        %1295 = vmatprep.subr.bf16.mxu0 0
        %1296 = vmatpush2.bf16.msra.mxu0 %v1141
        %1297 = vmatprep.subr.bf16.mxu0 0
        %1298 = vmatpush2.bf16.msra.mxu0 %v1140
        %1299 = vmatprep.subr.bf16.mxu0 0
        %1300 = vmatpush2.bf16.msra.mxu0 %v1139
        %1301 = vmatprep.subr.bf16.mxu0 0
        %1302 = vmatpush2.bf16.msra.mxu0 %v1138
        %1303 = vmatprep.subr.bf16.mxu0 0
        %1304 = vmatpush2.bf16.msra.mxu0 %v1137
        %1305 = vmatprep.mubr.bf16.mxu0 %v897
        %1306 = vmatmul.mubr.bf16.gmra.mxu0 %v896
        %v1307 = vpop.f32.mrf.mxu0
        %v1308 = vadd.f32 %v1268, %v1307
        %v1309 = vpop.f32.mrf.mxu0
        %v1310 = vpop.f32.mrf.mxu0
        %v1311 = vpop.f32.mrf.mxu0
        %1312 = vdwg.mxu0
        %v1313 = vlaneseq
        %v1314 = vshrl.u32 %v1313, 7
        %vm1315 = vcmp.eq.s32.totalorder %v1314, 0
        %v1316 = vld [vmem:[%s3] sm:$0x1]
        %v1318 = vlaneseq
        %v1319 = vshrl.u32 %v1318, 7
        %v1320 = vsub.s32 0, %v1319
        %v1321 = vrot.slane %v1316, %v1320
        %v1323 = vsel %vm1315, %v1321, %v1308
        %v1324 = vld [vmem:[%s4] sm:$0x1f]
        %v1325 = vadd.f32 %v1323, %v1324
        %v1326 = vld [vmem:[%s5] sm:$0x1]
        %v1327 = vld [vmem:[%s6] sm:$0x1]
        %vm1328 = vcmask 258048
        %v1329 = vsel %vm1328, %v1325, 0.0
        %1330 = vadd.xlane.f32.xlu0 %v1329
        %v1331 = vpop.xlane.xlu0 %1330
        %v1332 = vrcp.pop 32.0
        %v1333 = vmul.f32 %v1331, %v1332
        %v1334 = vsub.f32 %v1325, %v1333
        %v1335 = vmul.f32 %v1334, %v1334
        %v1336 = vsel %vm1328, %v1335, 0.0
        %1337 = vadd.xlane.f32.xlu0 %v1336
        %v1338 = vpop.xlane.xlu0 %1337
        %v1339 = vmul.f32 %v1338, %v1332
        %v1340 = vadd.f32 %v1339, 1e-06
        %v1341 = vrsqrt.pop %v1340
        %v1342 = vmul.f32 %v1334, %v1341
        %v1344 = vlaneseq
        %v1345 = vshrl.u32 %v1344, 7
        %v1346 = vsub.s32 0, %v1345
        %v1347 = vrot.slane %v1326, %v1346
        %v1349 = vmul.f32 %v1342, %v1347
        %v1351 = vlaneseq
        %v1352 = vshrl.u32 %v1351, 7
        %v1353 = vsub.s32 0, %v1352
        %v1354 = vrot.slane %v1327, %v1353
        %v1356 = vadd.f32 %v1349, %v1354
        %v1357 = vld [vmem:[%s7] sm:$0xf]
        %v1358 = vld [vmem:[%s7 + $0x4] sm:$0xf]
        %v1359 = vld [vmem:[%s7 + $0x8] sm:$0xf]
        %v1360 = vld [vmem:[%s7 + $0xc] sm:$0xf]
        %v1361 = vpack.c.bf16 %v1356, %v1356
        %v1362 = vld [vmem:[%s8] sm:$0x1]
        %v1364 = vlaneseq
        %v1365 = vshrl.u32 %v1364, 7
        %v1366 = vsub.s32 0, %v1365
        %v1367 = vrot.slane %v1362, %v1366
        %v1373 = vunpack.c.l.b16 %v1357
        %v1374 = vunpack.c.l.b16 %v1358
        %v1375 = vunpack.c.l.b16 %v1359
        %v1376 = vunpack.c.l.b16 %v1360
        %v1377 = vpack.c.b16 %v1374, %v1373
        %v1378 = vpack.c.b16 %v1376, %v1375
        %vm1381 = vcmask 261120
        %v1383 = vsel %vm1381, %v1361, 0
        %1385 = vmatprep.subr.bf16.mxu0 0
        %1386 = vmatpush1.bf16.msra.mxu0 0
        %1387 = vmatprep.subr.bf16.mxu0 0
        %1388 = vmatpush1.bf16.msra.mxu0 0
        %1389 = vmatprep.subr.bf16.mxu0 0
        %1390 = vmatpush1.bf16.msra.mxu0 0
        %1391 = vmatprep.subr.bf16.mxu0 0
        %1392 = vmatpush1.bf16.msra.mxu0 0
        %1393 = vmatprep.subr.bf16.mxu0 0
        %1394 = vmatpush1.bf16.msra.mxu0 0
        %1395 = vmatprep.subr.bf16.mxu0 0
        %1396 = vmatpush1.bf16.msra.mxu0 0
        %1397 = vmatprep.subr.bf16.mxu0 0
        %1398 = vmatpush1.bf16.msra.mxu0 %v1378
        %1399 = vmatprep.subr.bf16.mxu0 0
        %1400 = vmatpush1.bf16.msra.mxu0 %v1377
        %1401 = vmatprep.subr.bf16.mxu0 0
        %1402 = vmatpush2.bf16.msra.mxu0 0
        %1403 = vmatprep.subr.bf16.mxu0 0
        %1404 = vmatpush2.bf16.msra.mxu0 0
        %1405 = vmatprep.subr.bf16.mxu0 0
        %1406 = vmatpush2.bf16.msra.mxu0 0
        %1407 = vmatprep.subr.bf16.mxu0 0
        %1408 = vmatpush2.bf16.msra.mxu0 0
        %1409 = vmatprep.subr.bf16.mxu0 0
        %1410 = vmatpush2.bf16.msra.mxu0 0
        %1411 = vmatprep.subr.bf16.mxu0 0
        %1412 = vmatpush2.bf16.msra.mxu0 0
        %1413 = vmatprep.subr.bf16.mxu0 0
        %1414 = vmatpush2.bf16.msra.mxu0 0
        %1415 = vmatprep.subr.bf16.mxu0 0
        %1416 = vmatpush2.bf16.msra.mxu0 0
        %1417 = vmatprep.mubr.bf16.mxu0 0
        %1418 = vmatmul.mubr.bf16.gmra.mxu0 %v1383
        %v1419 = vpop.f32.mrf.mxu0
        %v1420 = vadd.f32 %v1367, %v1419
        %v1421 = vpop.f32.mrf.mxu0
        %v1422 = vpop.f32.mrf.mxu0
        %v1423 = vpop.f32.mrf.mxu0
        %1424 = vdwg.mxu0
        %v1425 = vld [vmem:[%s9] sm:$0xf]
        %v1426 = vld [vmem:[%s9 + $0x4] sm:$0xf]
        %v1427 = vld [vmem:[%s9 + $0x8] sm:$0xf]
        %v1428 = vld [vmem:[%s9 + $0xc] sm:$0xf]
        %1430 = vrot.lane.b32.xlu0 %v1420, 96
        %v1431 = vpop.permute.xlu0 %1430
        %vm1432 = vcmask 64512
        %v1433 = vsel %vm1432, %v1420, 0
        %v1435 = vsel %vm1432, %v1431, 0
        %1437 = vmatprep.subr.mxu0 0.0
        %1438 = vmatpush1.xpose.msra.mxu0 0.0
        %1439 = vmatprep.subr.mxu0 0.0
        %1440 = vmatpush1.xpose.msra.mxu0 0.0
        %1441 = vmatprep.subr.mxu0 0.0
        %1442 = vmatpush1.xpose.msra.mxu0 0.0
        %1443 = vmatprep.subr.mxu0 0.0
        %1444 = vmatpush1.xpose.msra.mxu0 0.0
        %1445 = vmatprep.subr.mxu0 0.0
        %1446 = vmatpush1.xpose.msra.mxu0 0.0
        %1447 = vmatprep.subr.mxu0 0.0
        %1448 = vmatpush1.xpose.msra.mxu0 0.0
        %1449 = vmatprep.subr.mxu0 0.0
        %1450 = vmatpush1.xpose.msra.mxu0 0.0
        %1451 = vmatprep.subr.mxu0 0.0
        %1452 = vmatpush1.xpose.msra.mxu0 0.0
        %1453 = vmatprep.subr.mxu0 0.0
        %1454 = vmatpush1.xpose.msra.mxu0 0.0
        %1455 = vmatprep.subr.mxu0 0.0
        %1456 = vmatpush1.xpose.msra.mxu0 0.0
        %1457 = vmatprep.subr.mxu0 0.0
        %1458 = vmatpush1.xpose.msra.mxu0 0.0
        %1459 = vmatprep.subr.mxu0 0.0
        %1460 = vmatpush1.xpose.msra.mxu0 0.0
        %1461 = vmatprep.subr.mxu0 0.0
        %1462 = vmatpush1.xpose.msra.mxu0 0.0
        %1463 = vmatprep.subr.mxu0 0.0
        %1464 = vmatpush1.xpose.msra.mxu0 0.0
        %1465 = vmatprep.subr.mxu0 0.0
        %1466 = vmatpush1.xpose.msra.mxu0 0.0
        %1467 = vmatprep.subr.mxu0 0.0
        %1468 = vmatpush1.xpose.msra.mxu0 %v1435
        %1469 = vmatprep.subr.mxu0 0.0
        %1470 = vmatpush2.xpose.msra.mxu0 0.0
        %1471 = vmatprep.subr.mxu0 0.0
        %1472 = vmatpush2.xpose.msra.mxu0 0.0
        %1473 = vmatprep.subr.mxu0 0.0
        %1474 = vmatpush2.xpose.msra.mxu0 0.0
        %1475 = vmatprep.subr.mxu0 0.0
        %1476 = vmatpush2.xpose.msra.mxu0 0.0
        %1477 = vmatprep.subr.mxu0 0.0
        %1478 = vmatpush2.xpose.msra.mxu0 0.0
        %1479 = vmatprep.subr.mxu0 0.0
        %1480 = vmatpush2.xpose.msra.mxu0 0.0
        %1481 = vmatprep.subr.mxu0 0.0
        %1482 = vmatpush2.xpose.msra.mxu0 0.0
        %1483 = vmatprep.subr.mxu0 0.0
        %1484 = vmatpush2.xpose.msra.mxu0 0.0
        %1485 = vmatprep.subr.mxu0 0.0
        %1486 = vmatpush2.xpose.msra.mxu0 0.0
        %1487 = vmatprep.subr.mxu0 0.0
        %1488 = vmatpush2.xpose.msra.mxu0 0.0
        %1489 = vmatprep.subr.mxu0 0.0
        %1490 = vmatpush2.xpose.msra.mxu0 0.0
        %1491 = vmatprep.subr.mxu0 0.0
        %1492 = vmatpush2.xpose.msra.mxu0 0.0
        %1493 = vmatprep.subr.mxu0 0.0
        %1494 = vmatpush2.xpose.msra.mxu0 0.0
        %1495 = vmatprep.subr.mxu0 0.0
        %1496 = vmatpush2.xpose.msra.mxu0 0.0
        %1497 = vmatprep.subr.mxu0 0.0
        %1498 = vmatpush2.xpose.msra.mxu0 0.0
        %1499 = vmatprep.subr.mxu0 0.0
        %1500 = vmatpush2.xpose.msra.mxu0 0.0
        %1501 = vmatprep.mubr.f32.mxu0 0.0
        %1502 = vmatmul.mubr.f32.gmra.mxu0 %v1433
        %v1503 = vpop.f32.mrf.mxu0
        %v1504 = vadd.f32 0.0, %v1503
        %v1505 = vpop.f32.mrf.mxu0
        %1506 = vdwg.mxu0
        %v1507 = vmul.f32 %v1504, 0.35355338
        %vm1508 = vcmask 36864
        %v1509 = vsel %vm1508, %v1507, -inf
        %1510 = vmax.xlane.f32.xlu0 %v1509
        %v1511 = vpop.xlane.xlu0 %1510
        %v1512 = vsub.f32 %v1507, %v1511
        %v1513 = vmul.f32 %v1512, 1.442695
        %v1514 = vpow.pop %v1513
        %v1515 = vsel %vm1508, %v1514, 0.0
        %1516 = vadd.xlane.f32.xlu0 %v1515
        %v1517 = vpop.xlane.xlu0 %1516
        %1518 = vrot.lane.b32.xlu0 %v1420, 64
        %v1519 = vpop.permute.xlu0 %1518
        %vm1520 = vcmask 39936
        %v1522 = vsel %vm1520, %v1514, 0
        %vm1524 = vcmask 1044480
        %v1525 = vsel %vm1524, %v1519, 0
        %1527 = vmatprep.subr.mxu0 0.0
        %1528 = vmatpush1.msra.mxu0 0.0
        %1529 = vmatprep.subr.mxu0 0.0
        %1530 = vmatpush1.msra.mxu0 0.0
        %1531 = vmatprep.subr.mxu0 0.0
        %1532 = vmatpush1.msra.mxu0 0.0
        %1533 = vmatprep.subr.mxu0 0.0
        %1534 = vmatpush1.msra.mxu0 0.0
        %1535 = vmatprep.subr.mxu0 0.0
        %1536 = vmatpush1.msra.mxu0 0.0
        %1537 = vmatprep.subr.mxu0 0.0
        %1538 = vmatpush1.msra.mxu0 0.0
        %1539 = vmatprep.subr.mxu0 0.0
        %1540 = vmatpush1.msra.mxu0 0.0
        %1541 = vmatprep.subr.mxu0 0.0
        %1542 = vmatpush1.msra.mxu0 0.0
        %1543 = vmatprep.subr.mxu0 0.0
        %1544 = vmatpush1.msra.mxu0 0.0
        %1545 = vmatprep.subr.mxu0 0.0
        %1546 = vmatpush1.msra.mxu0 0.0
        %1547 = vmatprep.subr.mxu0 0.0
        %1548 = vmatpush1.msra.mxu0 0.0
        %1549 = vmatprep.subr.mxu0 0.0
        %1550 = vmatpush1.msra.mxu0 0.0
        %1551 = vmatprep.subr.mxu0 0.0
        %1552 = vmatpush1.msra.mxu0 0.0
        %1553 = vmatprep.subr.mxu0 0.0
        %1554 = vmatpush1.msra.mxu0 0.0
        %1555 = vmatprep.subr.mxu0 0.0
        %1556 = vmatpush1.msra.mxu0 0.0
        %1557 = vmatprep.subr.mxu0 0.0
        %1558 = vmatpush1.msra.mxu0 %v1525
        %1559 = vmatprep.subr.mxu0 0.0
        %1560 = vmatpush2.msra.mxu0 0.0
        %1561 = vmatprep.subr.mxu0 0.0
        %1562 = vmatpush2.msra.mxu0 0.0
        %1563 = vmatprep.subr.mxu0 0.0
        %1564 = vmatpush2.msra.mxu0 0.0
        %1565 = vmatprep.subr.mxu0 0.0
        %1566 = vmatpush2.msra.mxu0 0.0
        %1567 = vmatprep.subr.mxu0 0.0
        %1568 = vmatpush2.msra.mxu0 0.0
        %1569 = vmatprep.subr.mxu0 0.0
        %1570 = vmatpush2.msra.mxu0 0.0
        %1571 = vmatprep.subr.mxu0 0.0
        %1572 = vmatpush2.msra.mxu0 0.0
        %1573 = vmatprep.subr.mxu0 0.0
        %1574 = vmatpush2.msra.mxu0 0.0
        %1575 = vmatprep.subr.mxu0 0.0
        %1576 = vmatpush2.msra.mxu0 0.0
        %1577 = vmatprep.subr.mxu0 0.0
        %1578 = vmatpush2.msra.mxu0 0.0
        %1579 = vmatprep.subr.mxu0 0.0
        %1580 = vmatpush2.msra.mxu0 0.0
        %1581 = vmatprep.subr.mxu0 0.0
        %1582 = vmatpush2.msra.mxu0 0.0
        %1583 = vmatprep.subr.mxu0 0.0
        %1584 = vmatpush2.msra.mxu0 0.0
        %1585 = vmatprep.subr.mxu0 0.0
        %1586 = vmatpush2.msra.mxu0 0.0
        %1587 = vmatprep.subr.mxu0 0.0
        %1588 = vmatpush2.msra.mxu0 0.0
        %1589 = vmatprep.subr.mxu0 0.0
        %1590 = vmatpush2.msra.mxu0 0.0
        %1591 = vmatprep.mubr.f32.mxu0 0.0
        %1592 = vmatmul.mubr.f32.gmra.mxu0 %v1522
        %v1593 = vpop.f32.mrf.mxu0
        %v1594 = vadd.f32 0.0, %v1593
        %v1595 = vpop.f32.mrf.mxu0
        %1596 = vdwg.mxu0
        %v1597 = vrcp.pop %v1517
        %v1598 = vmul.f32 %v1594, %v1597
        %v1599 = vpack.c.bf16 %v1598, %v1598
        %1600 = vrot.lane.b32.xlu0 %v1420, 120
        %v1601 = vpop.permute.xlu0 %1600
        %1602 = vrot.lane.b32.xlu0 %v1420, 88
        %v1603 = vpop.permute.xlu0 %1602
        %v1604 = vsel %vm1432, %v1601, 0
        %v1606 = vsel %vm1432, %v1603, 0
        %1608 = vmatprep.subr.mxu0 0.0
        %1609 = vmatpush1.xpose.msra.mxu0 0.0
        %1610 = vmatprep.subr.mxu0 0.0
        %1611 = vmatpush1.xpose.msra.mxu0 0.0
        %1612 = vmatprep.subr.mxu0 0.0
        %1613 = vmatpush1.xpose.msra.mxu0 0.0
        %1614 = vmatprep.subr.mxu0 0.0
        %1615 = vmatpush1.xpose.msra.mxu0 0.0
        %1616 = vmatprep.subr.mxu0 0.0
        %1617 = vmatpush1.xpose.msra.mxu0 0.0
        %1618 = vmatprep.subr.mxu0 0.0
        %1619 = vmatpush1.xpose.msra.mxu0 0.0
        %1620 = vmatprep.subr.mxu0 0.0
        %1621 = vmatpush1.xpose.msra.mxu0 0.0
        %1622 = vmatprep.subr.mxu0 0.0
        %1623 = vmatpush1.xpose.msra.mxu0 0.0
        %1624 = vmatprep.subr.mxu0 0.0
        %1625 = vmatpush1.xpose.msra.mxu0 0.0
        %1626 = vmatprep.subr.mxu0 0.0
        %1627 = vmatpush1.xpose.msra.mxu0 0.0
        %1628 = vmatprep.subr.mxu0 0.0
        %1629 = vmatpush1.xpose.msra.mxu0 0.0
        %1630 = vmatprep.subr.mxu0 0.0
        %1631 = vmatpush1.xpose.msra.mxu0 0.0
        %1632 = vmatprep.subr.mxu0 0.0
        %1633 = vmatpush1.xpose.msra.mxu0 0.0
        %1634 = vmatprep.subr.mxu0 0.0
        %1635 = vmatpush1.xpose.msra.mxu0 0.0
        %1636 = vmatprep.subr.mxu0 0.0
        %1637 = vmatpush1.xpose.msra.mxu0 0.0
        %1638 = vmatprep.subr.mxu0 0.0
        %1639 = vmatpush1.xpose.msra.mxu0 %v1606
        %1640 = vmatprep.subr.mxu0 0.0
        %1641 = vmatpush2.xpose.msra.mxu0 0.0
        %1642 = vmatprep.subr.mxu0 0.0
        %1643 = vmatpush2.xpose.msra.mxu0 0.0
        %1644 = vmatprep.subr.mxu0 0.0
        %1645 = vmatpush2.xpose.msra.mxu0 0.0
        %1646 = vmatprep.subr.mxu0 0.0
        %1647 = vmatpush2.xpose.msra.mxu0 0.0
        %1648 = vmatprep.subr.mxu0 0.0
        %1649 = vmatpush2.xpose.msra.mxu0 0.0
        %1650 = vmatprep.subr.mxu0 0.0
        %1651 = vmatpush2.xpose.msra.mxu0 0.0
        %1652 = vmatprep.subr.mxu0 0.0
        %1653 = vmatpush2.xpose.msra.mxu0 0.0
        %1654 = vmatprep.subr.mxu0 0.0
        %1655 = vmatpush2.xpose.msra.mxu0 0.0
        %1656 = vmatprep.subr.mxu0 0.0
        %1657 = vmatpush2.xpose.msra.mxu0 0.0
        %1658 = vmatprep.subr.mxu0 0.0
        %1659 = vmatpush2.xpose.msra.mxu0 0.0
        %1660 = vmatprep.subr.mxu0 0.0
        %1661 = vmatpush2.xpose.msra.mxu0 0.0
        %1662 = vmatprep.subr.mxu0 0.0
        %1663 = vmatpush2.xpose.msra.mxu0 0.0
        %1664 = vmatprep.subr.mxu0 0.0
        %1665 = vmatpush2.xpose.msra.mxu0 0.0
        %1666 = vmatprep.subr.mxu0 0.0
        %1667 = vmatpush2.xpose.msra.mxu0 0.0
        %1668 = vmatprep.subr.mxu0 0.0
        %1669 = vmatpush2.xpose.msra.mxu0 0.0
        %1670 = vmatprep.subr.mxu0 0.0
        %1671 = vmatpush2.xpose.msra.mxu0 0.0
        %1672 = vmatprep.mubr.f32.mxu0 0.0
        %1673 = vmatmul.mubr.f32.gmra.mxu0 %v1604
        %v1674 = vpop.f32.mrf.mxu0
        %v1675 = vadd.f32 0.0, %v1674
        %v1676 = vpop.f32.mrf.mxu0
        %1677 = vdwg.mxu0
        %v1678 = vmul.f32 %v1675, 0.35355338
        %v1679 = vsel %vm1508, %v1678, -inf
        %1680 = vmax.xlane.f32.xlu0 %v1679
        %v1681 = vpop.xlane.xlu0 %1680
        %v1682 = vsub.f32 %v1678, %v1681
        %v1683 = vmul.f32 %v1682, 1.442695
        %v1684 = vpow.pop %v1683
        %v1685 = vsel %vm1508, %v1684, 0.0
        %1686 = vadd.xlane.f32.xlu0 %v1685
        %v1687 = vpop.xlane.xlu0 %1686
        %1688 = vrot.lane.b32.xlu0 %v1420, 56
        %v1689 = vpop.permute.xlu0 %1688
        %v1691 = vsel %vm1520, %v1684, 0
        %v1693 = vsel %vm1524, %v1689, 0
        %1695 = vmatprep.subr.mxu0 0.0
        %1696 = vmatpush1.msra.mxu0 0.0
        %1697 = vmatprep.subr.mxu0 0.0
        %1698 = vmatpush1.msra.mxu0 0.0
        %1699 = vmatprep.subr.mxu0 0.0
        %1700 = vmatpush1.msra.mxu0 0.0
        %1701 = vmatprep.subr.mxu0 0.0
        %1702 = vmatpush1.msra.mxu0 0.0
        %1703 = vmatprep.subr.mxu0 0.0
        %1704 = vmatpush1.msra.mxu0 0.0
        %1705 = vmatprep.subr.mxu0 0.0
        %1706 = vmatpush1.msra.mxu0 0.0
        %1707 = vmatprep.subr.mxu0 0.0
        %1708 = vmatpush1.msra.mxu0 0.0
        %1709 = vmatprep.subr.mxu0 0.0
        %1710 = vmatpush1.msra.mxu0 0.0
        %1711 = vmatprep.subr.mxu0 0.0
        %1712 = vmatpush1.msra.mxu0 0.0
        %1713 = vmatprep.subr.mxu0 0.0
        %1714 = vmatpush1.msra.mxu0 0.0
        %1715 = vmatprep.subr.mxu0 0.0
        %1716 = vmatpush1.msra.mxu0 0.0
        %1717 = vmatprep.subr.mxu0 0.0
        %1718 = vmatpush1.msra.mxu0 0.0
        %1719 = vmatprep.subr.mxu0 0.0
        %1720 = vmatpush1.msra.mxu0 0.0
        %1721 = vmatprep.subr.mxu0 0.0
        %1722 = vmatpush1.msra.mxu0 0.0
        %1723 = vmatprep.subr.mxu0 0.0
        %1724 = vmatpush1.msra.mxu0 0.0
        %1725 = vmatprep.subr.mxu0 0.0
        %1726 = vmatpush1.msra.mxu0 %v1693
        %1727 = vmatprep.subr.mxu0 0.0
        %1728 = vmatpush2.msra.mxu0 0.0
        %1729 = vmatprep.subr.mxu0 0.0
        %1730 = vmatpush2.msra.mxu0 0.0
        %1731 = vmatprep.subr.mxu0 0.0
        %1732 = vmatpush2.msra.mxu0 0.0
        %1733 = vmatprep.subr.mxu0 0.0
        %1734 = vmatpush2.msra.mxu0 0.0
        %1735 = vmatprep.subr.mxu0 0.0
        %1736 = vmatpush2.msra.mxu0 0.0
        %1737 = vmatprep.subr.mxu0 0.0
        %1738 = vmatpush2.msra.mxu0 0.0
        %1739 = vmatprep.subr.mxu0 0.0
        %1740 = vmatpush2.msra.mxu0 0.0
        %1741 = vmatprep.subr.mxu0 0.0
        %1742 = vmatpush2.msra.mxu0 0.0
        %1743 = vmatprep.subr.mxu0 0.0
        %1744 = vmatpush2.msra.mxu0 0.0
        %1745 = vmatprep.subr.mxu0 0.0
        %1746 = vmatpush2.msra.mxu0 0.0
        %1747 = vmatprep.subr.mxu0 0.0
        %1748 = vmatpush2.msra.mxu0 0.0
        %1749 = vmatprep.subr.mxu0 0.0
        %1750 = vmatpush2.msra.mxu0 0.0
        %1751 = vmatprep.subr.mxu0 0.0
        %1752 = vmatpush2.msra.mxu0 0.0
        %1753 = vmatprep.subr.mxu0 0.0
        %1754 = vmatpush2.msra.mxu0 0.0
        %1755 = vmatprep.subr.mxu0 0.0
        %1756 = vmatpush2.msra.mxu0 0.0
        %1757 = vmatprep.subr.mxu0 0.0
        %1758 = vmatpush2.msra.mxu0 0.0
        %1759 = vmatprep.mubr.f32.mxu0 0.0
        %1760 = vmatmul.mubr.f32.gmra.mxu0 %v1691
        %v1761 = vpop.f32.mrf.mxu0
        %v1762 = vadd.f32 0.0, %v1761
        %v1763 = vpop.f32.mrf.mxu0
        %1764 = vdwg.mxu0
        %v1765 = vrcp.pop %v1687
        %v1766 = vmul.f32 %v1762, %v1765
        %v1767 = vpack.c.bf16 %v1766, %v1766
        %v1769 = vsel %vm1432, %v1767, 0
        %vm1771 = vcmask 1043456
        %v1773 = vsel %vm1771, %v1426, 0
        %1775 = vmatprep.subr.bf16.mxu0 0
        %1776 = vmatpush1.bf16.msra.mxu0 0
        %1777 = vmatprep.subr.bf16.mxu0 0
        %1778 = vmatpush1.bf16.msra.mxu0 0
        %1779 = vmatprep.subr.bf16.mxu0 0
        %1780 = vmatpush1.bf16.msra.mxu0 0
        %1781 = vmatprep.subr.bf16.mxu0 0
        %1782 = vmatpush1.bf16.msra.mxu0 0
        %1783 = vmatprep.subr.bf16.mxu0 0
        %1784 = vmatpush1.bf16.msra.mxu0 0
        %1785 = vmatprep.subr.bf16.mxu0 0
        %1786 = vmatpush1.bf16.msra.mxu0 0
        %1787 = vmatprep.subr.bf16.mxu0 0
        %1788 = vmatpush1.bf16.msra.mxu0 0
        %1789 = vmatprep.subr.bf16.mxu0 0
        %1790 = vmatpush1.bf16.msra.mxu0 %v1773
        %1791 = vmatprep.subr.bf16.mxu0 0
        %1792 = vmatpush2.bf16.msra.mxu0 0
        %1793 = vmatprep.subr.bf16.mxu0 0
        %1794 = vmatpush2.bf16.msra.mxu0 0
        %1795 = vmatprep.subr.bf16.mxu0 0
        %1796 = vmatpush2.bf16.msra.mxu0 0
        %1797 = vmatprep.subr.bf16.mxu0 0
        %1798 = vmatpush2.bf16.msra.mxu0 0
        %1799 = vmatprep.subr.bf16.mxu0 0
        %1800 = vmatpush2.bf16.msra.mxu0 0
        %1801 = vmatprep.subr.bf16.mxu0 0
        %1802 = vmatpush2.bf16.msra.mxu0 0
        %1803 = vmatprep.subr.bf16.mxu0 0
        %1804 = vmatpush2.bf16.msra.mxu0 0
        %1805 = vmatprep.subr.bf16.mxu0 0
        %1806 = vmatpush2.bf16.msra.mxu0 0
        %1807 = vmatprep.mubr.bf16.mxu0 0
        %1808 = vmatmul.mubr.bf16.gmra.mxu0 %v1769
        %v1809 = vpop.f32.mrf.mxu0
        %v1810 = vadd.f32 0.0, %v1809
        %v1811 = vpop.f32.mrf.mxu0
        %v1812 = vpop.f32.mrf.mxu0
        %v1813 = vpop.f32.mrf.mxu0
        %1814 = vdwg.mxu0
        %v1816 = vsel %vm1432, %v1599, 0
        %v1819 = vsel %vm1771, %v1425, 0
        %1821 = vmatprep.subr.bf16.mxu0 0
        %1822 = vmatpush1.bf16.msra.mxu0 0
        %1823 = vmatprep.subr.bf16.mxu0 0
        %1824 = vmatpush1.bf16.msra.mxu0 0
        %1825 = vmatprep.subr.bf16.mxu0 0
        %1826 = vmatpush1.bf16.msra.mxu0 0
        %1827 = vmatprep.subr.bf16.mxu0 0
        %1828 = vmatpush1.bf16.msra.mxu0 0
        %1829 = vmatprep.subr.bf16.mxu0 0
        %1830 = vmatpush1.bf16.msra.mxu0 0
        %1831 = vmatprep.subr.bf16.mxu0 0
        %1832 = vmatpush1.bf16.msra.mxu0 0
        %1833 = vmatprep.subr.bf16.mxu0 0
        %1834 = vmatpush1.bf16.msra.mxu0 0
        %1835 = vmatprep.subr.bf16.mxu0 0
        %1836 = vmatpush1.bf16.msra.mxu0 %v1819
        %1837 = vmatprep.subr.bf16.mxu0 0
        %1838 = vmatpush2.bf16.msra.mxu0 0
        %1839 = vmatprep.subr.bf16.mxu0 0
        %1840 = vmatpush2.bf16.msra.mxu0 0
        %1841 = vmatprep.subr.bf16.mxu0 0
        %1842 = vmatpush2.bf16.msra.mxu0 0
        %1843 = vmatprep.subr.bf16.mxu0 0
        %1844 = vmatpush2.bf16.msra.mxu0 0
        %1845 = vmatprep.subr.bf16.mxu0 0
        %1846 = vmatpush2.bf16.msra.mxu0 0
        %1847 = vmatprep.subr.bf16.mxu0 0
        %1848 = vmatpush2.bf16.msra.mxu0 0
        %1849 = vmatprep.subr.bf16.mxu0 0
        %1850 = vmatpush2.bf16.msra.mxu0 0
        %1851 = vmatprep.subr.bf16.mxu0 0
        %1852 = vmatpush2.bf16.msra.mxu0 0
        %1853 = vmatprep.mubr.bf16.mxu0 0
        %1854 = vmatmul.mubr.bf16.gmra.mxu0 %v1816
        %v1855 = vpop.f32.mrf.mxu0
        %v1856 = vadd.f32 %v1810, %v1855
        %v1857 = vpop.f32.mrf.mxu0
        %v1858 = vpop.f32.mrf.mxu0
        %v1859 = vpop.f32.mrf.mxu0
        %1860 = vdwg.mxu0
        %1861 = vrot.lane.b32.xlu0 %v1420, 112
        %v1862 = vpop.permute.xlu0 %1861
        %1863 = vrot.lane.b32.xlu0 %v1420, 80
        %v1864 = vpop.permute.xlu0 %1863
        %v1865 = vsel %vm1432, %v1862, 0
        %v1867 = vsel %vm1432, %v1864, 0
        %1869 = vmatprep.subr.mxu0 0.0
        %1870 = vmatpush1.xpose.msra.mxu0 0.0
        %1871 = vmatprep.subr.mxu0 0.0
        %1872 = vmatpush1.xpose.msra.mxu0 0.0
        %1873 = vmatprep.subr.mxu0 0.0
        %1874 = vmatpush1.xpose.msra.mxu0 0.0
        %1875 = vmatprep.subr.mxu0 0.0
        %1876 = vmatpush1.xpose.msra.mxu0 0.0
        %1877 = vmatprep.subr.mxu0 0.0
        %1878 = vmatpush1.xpose.msra.mxu0 0.0
        %1879 = vmatprep.subr.mxu0 0.0
        %1880 = vmatpush1.xpose.msra.mxu0 0.0
        %1881 = vmatprep.subr.mxu0 0.0
        %1882 = vmatpush1.xpose.msra.mxu0 0.0
        %1883 = vmatprep.subr.mxu0 0.0
        %1884 = vmatpush1.xpose.msra.mxu0 0.0
        %1885 = vmatprep.subr.mxu0 0.0
        %1886 = vmatpush1.xpose.msra.mxu0 0.0
        %1887 = vmatprep.subr.mxu0 0.0
        %1888 = vmatpush1.xpose.msra.mxu0 0.0
        %1889 = vmatprep.subr.mxu0 0.0
        %1890 = vmatpush1.xpose.msra.mxu0 0.0
        %1891 = vmatprep.subr.mxu0 0.0
        %1892 = vmatpush1.xpose.msra.mxu0 0.0
        %1893 = vmatprep.subr.mxu0 0.0
        %1894 = vmatpush1.xpose.msra.mxu0 0.0
        %1895 = vmatprep.subr.mxu0 0.0
        %1896 = vmatpush1.xpose.msra.mxu0 0.0
        %1897 = vmatprep.subr.mxu0 0.0
        %1898 = vmatpush1.xpose.msra.mxu0 0.0
        %1899 = vmatprep.subr.mxu0 0.0
        %1900 = vmatpush1.xpose.msra.mxu0 %v1867
        %1901 = vmatprep.subr.mxu0 0.0
        %1902 = vmatpush2.xpose.msra.mxu0 0.0
        %1903 = vmatprep.subr.mxu0 0.0
        %1904 = vmatpush2.xpose.msra.mxu0 0.0
        %1905 = vmatprep.subr.mxu0 0.0
        %1906 = vmatpush2.xpose.msra.mxu0 0.0
        %1907 = vmatprep.subr.mxu0 0.0
        %1908 = vmatpush2.xpose.msra.mxu0 0.0
        %1909 = vmatprep.subr.mxu0 0.0
        %1910 = vmatpush2.xpose.msra.mxu0 0.0
        %1911 = vmatprep.subr.mxu0 0.0
        %1912 = vmatpush2.xpose.msra.mxu0 0.0
        %1913 = vmatprep.subr.mxu0 0.0
        %1914 = vmatpush2.xpose.msra.mxu0 0.0
        %1915 = vmatprep.subr.mxu0 0.0
        %1916 = vmatpush2.xpose.msra.mxu0 0.0
        %1917 = vmatprep.subr.mxu0 0.0
        %1918 = vmatpush2.xpose.msra.mxu0 0.0
        %1919 = vmatprep.subr.mxu0 0.0
        %1920 = vmatpush2.xpose.msra.mxu0 0.0
        %1921 = vmatprep.subr.mxu0 0.0
        %1922 = vmatpush2.xpose.msra.mxu0 0.0
        %1923 = vmatprep.subr.mxu0 0.0
        %1924 = vmatpush2.xpose.msra.mxu0 0.0
        %1925 = vmatprep.subr.mxu0 0.0
        %1926 = vmatpush2.xpose.msra.mxu0 0.0
        %1927 = vmatprep.subr.mxu0 0.0
        %1928 = vmatpush2.xpose.msra.mxu0 0.0
        %1929 = vmatprep.subr.mxu0 0.0
        %1930 = vmatpush2.xpose.msra.mxu0 0.0
        %1931 = vmatprep.subr.mxu0 0.0
        %1932 = vmatpush2.xpose.msra.mxu0 0.0
        %1933 = vmatprep.mubr.f32.mxu0 0.0
        %1934 = vmatmul.mubr.f32.gmra.mxu0 %v1865
        %v1935 = vpop.f32.mrf.mxu0
        %v1936 = vadd.f32 0.0, %v1935
        %v1937 = vpop.f32.mrf.mxu0
        %1938 = vdwg.mxu0
        %v1939 = vmul.f32 %v1936, 0.35355338
        %v1940 = vsel %vm1508, %v1939, -inf
        %1941 = vmax.xlane.f32.xlu0 %v1940
        %v1942 = vpop.xlane.xlu0 %1941
        %v1943 = vsub.f32 %v1939, %v1942
        %v1944 = vmul.f32 %v1943, 1.442695
        %v1945 = vpow.pop %v1944
        %v1946 = vsel %vm1508, %v1945, 0.0
        %1947 = vadd.xlane.f32.xlu0 %v1946
        %v1948 = vpop.xlane.xlu0 %1947
        %1949 = vrot.lane.b32.xlu0 %v1420, 48
        %v1950 = vpop.permute.xlu0 %1949
        %v1952 = vsel %vm1520, %v1945, 0
        %v1954 = vsel %vm1524, %v1950, 0
        %1956 = vmatprep.subr.mxu0 0.0
        %1957 = vmatpush1.msra.mxu0 0.0
        %1958 = vmatprep.subr.mxu0 0.0
        %1959 = vmatpush1.msra.mxu0 0.0
        %1960 = vmatprep.subr.mxu0 0.0
        %1961 = vmatpush1.msra.mxu0 0.0
        %1962 = vmatprep.subr.mxu0 0.0
        %1963 = vmatpush1.msra.mxu0 0.0
        %1964 = vmatprep.subr.mxu0 0.0
        %1965 = vmatpush1.msra.mxu0 0.0
        %1966 = vmatprep.subr.mxu0 0.0
        %1967 = vmatpush1.msra.mxu0 0.0
        %1968 = vmatprep.subr.mxu0 0.0
        %1969 = vmatpush1.msra.mxu0 0.0
        %1970 = vmatprep.subr.mxu0 0.0
        %1971 = vmatpush1.msra.mxu0 0.0
        %1972 = vmatprep.subr.mxu0 0.0
        %1973 = vmatpush1.msra.mxu0 0.0
        %1974 = vmatprep.subr.mxu0 0.0
        %1975 = vmatpush1.msra.mxu0 0.0
        %1976 = vmatprep.subr.mxu0 0.0
        %1977 = vmatpush1.msra.mxu0 0.0
        %1978 = vmatprep.subr.mxu0 0.0
        %1979 = vmatpush1.msra.mxu0 0.0
        %1980 = vmatprep.subr.mxu0 0.0
        %1981 = vmatpush1.msra.mxu0 0.0
        %1982 = vmatprep.subr.mxu0 0.0
        %1983 = vmatpush1.msra.mxu0 0.0
        %1984 = vmatprep.subr.mxu0 0.0
        %1985 = vmatpush1.msra.mxu0 0.0
        %1986 = vmatprep.subr.mxu0 0.0
        %1987 = vmatpush1.msra.mxu0 %v1954
        %1988 = vmatprep.subr.mxu0 0.0
        %1989 = vmatpush2.msra.mxu0 0.0
        %1990 = vmatprep.subr.mxu0 0.0
        %1991 = vmatpush2.msra.mxu0 0.0
        %1992 = vmatprep.subr.mxu0 0.0
        %1993 = vmatpush2.msra.mxu0 0.0
        %1994 = vmatprep.subr.mxu0 0.0
        %1995 = vmatpush2.msra.mxu0 0.0
        %1996 = vmatprep.subr.mxu0 0.0
        %1997 = vmatpush2.msra.mxu0 0.0
        %1998 = vmatprep.subr.mxu0 0.0
        %1999 = vmatpush2.msra.mxu0 0.0
        %2000 = vmatprep.subr.mxu0 0.0
        %2001 = vmatpush2.msra.mxu0 0.0
        %2002 = vmatprep.subr.mxu0 0.0
        %2003 = vmatpush2.msra.mxu0 0.0
        %2004 = vmatprep.subr.mxu0 0.0
        %2005 = vmatpush2.msra.mxu0 0.0
        %2006 = vmatprep.subr.mxu0 0.0
        %2007 = vmatpush2.msra.mxu0 0.0
        %2008 = vmatprep.subr.mxu0 0.0
        %2009 = vmatpush2.msra.mxu0 0.0
        %2010 = vmatprep.subr.mxu0 0.0
        %2011 = vmatpush2.msra.mxu0 0.0
        %2012 = vmatprep.subr.mxu0 0.0
        %2013 = vmatpush2.msra.mxu0 0.0
        %2014 = vmatprep.subr.mxu0 0.0
        %2015 = vmatpush2.msra.mxu0 0.0
        %2016 = vmatprep.subr.mxu0 0.0
        %2017 = vmatpush2.msra.mxu0 0.0
        %2018 = vmatprep.subr.mxu0 0.0
        %2019 = vmatpush2.msra.mxu0 0.0
        %2020 = vmatprep.mubr.f32.mxu0 0.0
        %2021 = vmatmul.mubr.f32.gmra.mxu0 %v1952
        %v2022 = vpop.f32.mrf.mxu0
        %v2023 = vadd.f32 0.0, %v2022
        %v2024 = vpop.f32.mrf.mxu0
        %2025 = vdwg.mxu0
        %v2026 = vrcp.pop %v1948
        %v2027 = vmul.f32 %v2023, %v2026
        %v2028 = vpack.c.bf16 %v2027, %v2027
        %v2030 = vsel %vm1432, %v2028, 0
        %v2033 = vsel %vm1771, %v1427, 0
        %2035 = vmatprep.subr.bf16.mxu0 0
        %2036 = vmatpush1.bf16.msra.mxu0 0
        %2037 = vmatprep.subr.bf16.mxu0 0
        %2038 = vmatpush1.bf16.msra.mxu0 0
        %2039 = vmatprep.subr.bf16.mxu0 0
        %2040 = vmatpush1.bf16.msra.mxu0 0
        %2041 = vmatprep.subr.bf16.mxu0 0
        %2042 = vmatpush1.bf16.msra.mxu0 0
        %2043 = vmatprep.subr.bf16.mxu0 0
        %2044 = vmatpush1.bf16.msra.mxu0 0
        %2045 = vmatprep.subr.bf16.mxu0 0
        %2046 = vmatpush1.bf16.msra.mxu0 0
        %2047 = vmatprep.subr.bf16.mxu0 0
        %2048 = vmatpush1.bf16.msra.mxu0 0
        %2049 = vmatprep.subr.bf16.mxu0 0
        %2050 = vmatpush1.bf16.msra.mxu0 %v2033
        %2051 = vmatprep.subr.bf16.mxu0 0
        %2052 = vmatpush2.bf16.msra.mxu0 0
        %2053 = vmatprep.subr.bf16.mxu0 0
        %2054 = vmatpush2.bf16.msra.mxu0 0
        %2055 = vmatprep.subr.bf16.mxu0 0
        %2056 = vmatpush2.bf16.msra.mxu0 0
        %2057 = vmatprep.subr.bf16.mxu0 0
        %2058 = vmatpush2.bf16.msra.mxu0 0
        %2059 = vmatprep.subr.bf16.mxu0 0
        %2060 = vmatpush2.bf16.msra.mxu0 0
        %2061 = vmatprep.subr.bf16.mxu0 0
        %2062 = vmatpush2.bf16.msra.mxu0 0
        %2063 = vmatprep.subr.bf16.mxu0 0
        %2064 = vmatpush2.bf16.msra.mxu0 0
        %2065 = vmatprep.subr.bf16.mxu0 0
        %2066 = vmatpush2.bf16.msra.mxu0 0
        %2067 = vmatprep.mubr.bf16.mxu0 0
        %2068 = vmatmul.mubr.bf16.gmra.mxu0 %v2030
        %v2069 = vpop.f32.mrf.mxu0
        %v2070 = vadd.f32 0.0, %v2069
        %v2071 = vpop.f32.mrf.mxu0
        %v2072 = vpop.f32.mrf.mxu0
        %v2073 = vpop.f32.mrf.mxu0
        %2074 = vdwg.mxu0
        %v2075 = vadd.f32 %v1856, %v2070
        %2076 = vrot.lane.b32.xlu0 %v1420, 104
        %v2077 = vpop.permute.xlu0 %2076
        %2078 = vrot.lane.b32.xlu0 %v1420, 72
        %v2079 = vpop.permute.xlu0 %2078
        %v2080 = vsel %vm1432, %v2077, 0
        %v2082 = vsel %vm1432, %v2079, 0
        %2084 = vmatprep.subr.mxu0 0.0
        %2085 = vmatpush1.xpose.msra.mxu0 0.0
        %2086 = vmatprep.subr.mxu0 0.0
        %2087 = vmatpush1.xpose.msra.mxu0 0.0
        %2088 = vmatprep.subr.mxu0 0.0
        %2089 = vmatpush1.xpose.msra.mxu0 0.0
        %2090 = vmatprep.subr.mxu0 0.0
        %2091 = vmatpush1.xpose.msra.mxu0 0.0
        %2092 = vmatprep.subr.mxu0 0.0
        %2093 = vmatpush1.xpose.msra.mxu0 0.0
        %2094 = vmatprep.subr.mxu0 0.0
        %2095 = vmatpush1.xpose.msra.mxu0 0.0
        %2096 = vmatprep.subr.mxu0 0.0
        %2097 = vmatpush1.xpose.msra.mxu0 0.0
        %2098 = vmatprep.subr.mxu0 0.0
        %2099 = vmatpush1.xpose.msra.mxu0 0.0
        %2100 = vmatprep.subr.mxu0 0.0
        %2101 = vmatpush1.xpose.msra.mxu0 0.0
        %2102 = vmatprep.subr.mxu0 0.0
        %2103 = vmatpush1.xpose.msra.mxu0 0.0
        %2104 = vmatprep.subr.mxu0 0.0
        %2105 = vmatpush1.xpose.msra.mxu0 0.0
        %2106 = vmatprep.subr.mxu0 0.0
        %2107 = vmatpush1.xpose.msra.mxu0 0.0
        %2108 = vmatprep.subr.mxu0 0.0
        %2109 = vmatpush1.xpose.msra.mxu0 0.0
        %2110 = vmatprep.subr.mxu0 0.0
        %2111 = vmatpush1.xpose.msra.mxu0 0.0
        %2112 = vmatprep.subr.mxu0 0.0
        %2113 = vmatpush1.xpose.msra.mxu0 0.0
        %2114 = vmatprep.subr.mxu0 0.0
        %2115 = vmatpush1.xpose.msra.mxu0 %v2082
        %2116 = vmatprep.subr.mxu0 0.0
        %2117 = vmatpush2.xpose.msra.mxu0 0.0
        %2118 = vmatprep.subr.mxu0 0.0
        %2119 = vmatpush2.xpose.msra.mxu0 0.0
        %2120 = vmatprep.subr.mxu0 0.0
        %2121 = vmatpush2.xpose.msra.mxu0 0.0
        %2122 = vmatprep.subr.mxu0 0.0
        %2123 = vmatpush2.xpose.msra.mxu0 0.0
        %2124 = vmatprep.subr.mxu0 0.0
        %2125 = vmatpush2.xpose.msra.mxu0 0.0
        %2126 = vmatprep.subr.mxu0 0.0
        %2127 = vmatpush2.xpose.msra.mxu0 0.0
        %2128 = vmatprep.subr.mxu0 0.0
        %2129 = vmatpush2.xpose.msra.mxu0 0.0
        %2130 = vmatprep.subr.mxu0 0.0
        %2131 = vmatpush2.xpose.msra.mxu0 0.0
        %2132 = vmatprep.subr.mxu0 0.0
        %2133 = vmatpush2.xpose.msra.mxu0 0.0
        %2134 = vmatprep.subr.mxu0 0.0
        %2135 = vmatpush2.xpose.msra.mxu0 0.0
        %2136 = vmatprep.subr.mxu0 0.0
        %2137 = vmatpush2.xpose.msra.mxu0 0.0
        %2138 = vmatprep.subr.mxu0 0.0
        %2139 = vmatpush2.xpose.msra.mxu0 0.0
        %2140 = vmatprep.subr.mxu0 0.0
        %2141 = vmatpush2.xpose.msra.mxu0 0.0
        %2142 = vmatprep.subr.mxu0 0.0
        %2143 = vmatpush2.xpose.msra.mxu0 0.0
        %2144 = vmatprep.subr.mxu0 0.0
        %2145 = vmatpush2.xpose.msra.mxu0 0.0
        %2146 = vmatprep.subr.mxu0 0.0
        %2147 = vmatpush2.xpose.msra.mxu0 0.0
        %2148 = vmatprep.mubr.f32.mxu0 0.0
        %2149 = vmatmul.mubr.f32.gmra.mxu0 %v2080
        %v2150 = vpop.f32.mrf.mxu0
        %v2151 = vadd.f32 0.0, %v2150
        %v2152 = vpop.f32.mrf.mxu0
        %2153 = vdwg.mxu0
        %v2154 = vmul.f32 %v2151, 0.35355338
        %v2155 = vsel %vm1508, %v2154, -inf
        %2156 = vmax.xlane.f32.xlu0 %v2155
        %v2157 = vpop.xlane.xlu0 %2156
        %v2158 = vsub.f32 %v2154, %v2157
        %v2159 = vmul.f32 %v2158, 1.442695
        %v2160 = vpow.pop %v2159
        %v2161 = vsel %vm1508, %v2160, 0.0
        %2162 = vadd.xlane.f32.xlu0 %v2161
        %v2163 = vpop.xlane.xlu0 %2162
        %2164 = vrot.lane.b32.xlu0 %v1420, 40
        %v2165 = vpop.permute.xlu0 %2164
        %v2167 = vsel %vm1520, %v2160, 0
        %v2169 = vsel %vm1524, %v2165, 0
        %2171 = vmatprep.subr.mxu0 0.0
        %2172 = vmatpush1.msra.mxu0 0.0
        %2173 = vmatprep.subr.mxu0 0.0
        %2174 = vmatpush1.msra.mxu0 0.0
        %2175 = vmatprep.subr.mxu0 0.0
        %2176 = vmatpush1.msra.mxu0 0.0
        %2177 = vmatprep.subr.mxu0 0.0
        %2178 = vmatpush1.msra.mxu0 0.0
        %2179 = vmatprep.subr.mxu0 0.0
        %2180 = vmatpush1.msra.mxu0 0.0
        %2181 = vmatprep.subr.mxu0 0.0
        %2182 = vmatpush1.msra.mxu0 0.0
        %2183 = vmatprep.subr.mxu0 0.0
        %2184 = vmatpush1.msra.mxu0 0.0
        %2185 = vmatprep.subr.mxu0 0.0
        %2186 = vmatpush1.msra.mxu0 0.0
        %2187 = vmatprep.subr.mxu0 0.0
        %2188 = vmatpush1.msra.mxu0 0.0
        %2189 = vmatprep.subr.mxu0 0.0
        %2190 = vmatpush1.msra.mxu0 0.0
        %2191 = vmatprep.subr.mxu0 0.0
        %2192 = vmatpush1.msra.mxu0 0.0
        %2193 = vmatprep.subr.mxu0 0.0
        %2194 = vmatpush1.msra.mxu0 0.0
        %2195 = vmatprep.subr.mxu0 0.0
        %2196 = vmatpush1.msra.mxu0 0.0
        %2197 = vmatprep.subr.mxu0 0.0
        %2198 = vmatpush1.msra.mxu0 0.0
        %2199 = vmatprep.subr.mxu0 0.0
        %2200 = vmatpush1.msra.mxu0 0.0
        %2201 = vmatprep.subr.mxu0 0.0
        %2202 = vmatpush1.msra.mxu0 %v2169
        %2203 = vmatprep.subr.mxu0 0.0
        %2204 = vmatpush2.msra.mxu0 0.0
        %2205 = vmatprep.subr.mxu0 0.0
        %2206 = vmatpush2.msra.mxu0 0.0
        %2207 = vmatprep.subr.mxu0 0.0
        %2208 = vmatpush2.msra.mxu0 0.0
        %2209 = vmatprep.subr.mxu0 0.0
        %2210 = vmatpush2.msra.mxu0 0.0
        %2211 = vmatprep.subr.mxu0 0.0
        %2212 = vmatpush2.msra.mxu0 0.0
        %2213 = vmatprep.subr.mxu0 0.0
        %2214 = vmatpush2.msra.mxu0 0.0
        %2215 = vmatprep.subr.mxu0 0.0
        %2216 = vmatpush2.msra.mxu0 0.0
        %2217 = vmatprep.subr.mxu0 0.0
        %2218 = vmatpush2.msra.mxu0 0.0
        %2219 = vmatprep.subr.mxu0 0.0
        %2220 = vmatpush2.msra.mxu0 0.0
        %2221 = vmatprep.subr.mxu0 0.0
        %2222 = vmatpush2.msra.mxu0 0.0
        %2223 = vmatprep.subr.mxu0 0.0
        %2224 = vmatpush2.msra.mxu0 0.0
        %2225 = vmatprep.subr.mxu0 0.0
        %2226 = vmatpush2.msra.mxu0 0.0
        %2227 = vmatprep.subr.mxu0 0.0
        %2228 = vmatpush2.msra.mxu0 0.0
        %2229 = vmatprep.subr.mxu0 0.0
        %2230 = vmatpush2.msra.mxu0 0.0
        %2231 = vmatprep.subr.mxu0 0.0
        %2232 = vmatpush2.msra.mxu0 0.0
        %2233 = vmatprep.subr.mxu0 0.0
        %2234 = vmatpush2.msra.mxu0 0.0
        %2235 = vmatprep.mubr.f32.mxu0 0.0
        %2236 = vmatmul.mubr.f32.gmra.mxu0 %v2167
        %v2237 = vpop.f32.mrf.mxu0
        %v2238 = vadd.f32 0.0, %v2237
        %v2239 = vpop.f32.mrf.mxu0
        %2240 = vdwg.mxu0
        %v2241 = vrcp.pop %v2163
        %v2242 = vmul.f32 %v2238, %v2241
        %v2243 = vpack.c.bf16 %v2242, %v2242
        %v2245 = vsel %vm1432, %v2243, 0
        %v2248 = vsel %vm1771, %v1428, 0
        %2250 = vmatprep.subr.bf16.mxu0 0
        %2251 = vmatpush1.bf16.msra.mxu0 0
        %2252 = vmatprep.subr.bf16.mxu0 0
        %2253 = vmatpush1.bf16.msra.mxu0 0
        %2254 = vmatprep.subr.bf16.mxu0 0
        %2255 = vmatpush1.bf16.msra.mxu0 0
        %2256 = vmatprep.subr.bf16.mxu0 0
        %2257 = vmatpush1.bf16.msra.mxu0 0
        %2258 = vmatprep.subr.bf16.mxu0 0
        %2259 = vmatpush1.bf16.msra.mxu0 0
        %2260 = vmatprep.subr.bf16.mxu0 0
        %2261 = vmatpush1.bf16.msra.mxu0 0
        %2262 = vmatprep.subr.bf16.mxu0 0
        %2263 = vmatpush1.bf16.msra.mxu0 0
        %2264 = vmatprep.subr.bf16.mxu0 0
        %2265 = vmatpush1.bf16.msra.mxu0 %v2248
        %2266 = vmatprep.subr.bf16.mxu0 0
        %2267 = vmatpush2.bf16.msra.mxu0 0
        %2268 = vmatprep.subr.bf16.mxu0 0
        %2269 = vmatpush2.bf16.msra.mxu0 0
        %2270 = vmatprep.subr.bf16.mxu0 0
        %2271 = vmatpush2.bf16.msra.mxu0 0
        %2272 = vmatprep.subr.bf16.mxu0 0
        %2273 = vmatpush2.bf16.msra.mxu0 0
        %2274 = vmatprep.subr.bf16.mxu0 0
        %2275 = vmatpush2.bf16.msra.mxu0 0
        %2276 = vmatprep.subr.bf16.mxu0 0
        %2277 = vmatpush2.bf16.msra.mxu0 0
        %2278 = vmatprep.subr.bf16.mxu0 0
        %2279 = vmatpush2.bf16.msra.mxu0 0
        %2280 = vmatprep.subr.bf16.mxu0 0
        %2281 = vmatpush2.bf16.msra.mxu0 0
        %2282 = vmatprep.mubr.bf16.mxu0 0
        %2283 = vmatmul.mubr.bf16.gmra.mxu0 %v2245
        %v2284 = vpop.f32.mrf.mxu0
        %v2285 = vadd.f32 0.0, %v2284
        %v2286 = vpop.f32.mrf.mxu0
        %v2287 = vpop.f32.mrf.mxu0
        %v2288 = vpop.f32.mrf.mxu0
        %2289 = vdwg.mxu0
        %v2290 = vadd.f32 %v2075, %v2285
        %v2291 = vld [vmem:[%s10] sm:$0x1]
        %v2293 = vlaneseq
        %v2294 = vshrl.u32 %v2293, 7
        %v2295 = vsub.s32 0, %v2294
        %v2296 = vrot.slane %v2291, %v2295
        %v2298 = vadd.f32 %v2290, %v2296
        %v2299 = vadd.f32 %v1325, %v2298
        %v2300 = vld [vmem:[%s11] sm:$0x1]
        %v2301 = vld [vmem:[%s12] sm:$0x1]
        %v2302 = vsel %vm1328, %v2299, 0.0
        %2303 = vadd.xlane.f32.xlu0 %v2302
        %v2304 = vpop.xlane.xlu0 %2303
        %v2305 = vmul.f32 %v2304, %v1332
        %v2306 = vsub.f32 %v2299, %v2305
        %v2307 = vmul.f32 %v2306, %v2306
        %v2308 = vsel %vm1328, %v2307, 0.0
        %2309 = vadd.xlane.f32.xlu0 %v2308
        %v2310 = vpop.xlane.xlu0 %2309
        %v2311 = vmul.f32 %v2310, %v1332
        %v2312 = vadd.f32 %v2311, 1e-06
        %v2313 = vrsqrt.pop %v2312
        %v2314 = vmul.f32 %v2306, %v2313
        %v2316 = vlaneseq
        %v2317 = vshrl.u32 %v2316, 7
        %v2318 = vsub.s32 0, %v2317
        %v2319 = vrot.slane %v2300, %v2318
        %v2321 = vmul.f32 %v2314, %v2319
        %v2323 = vlaneseq
        %v2324 = vshrl.u32 %v2323, 7
        %v2325 = vsub.s32 0, %v2324
        %v2326 = vrot.slane %v2301, %v2325
        %v2328 = vadd.f32 %v2321, %v2326
        %v2329 = vld [vmem:[%s13] sm:$0xf]
        %v2330 = vld [vmem:[%s13 + $0x4] sm:$0xf]
        %v2331 = vld [vmem:[%s13 + $0x8] sm:$0xf]
        %v2332 = vld [vmem:[%s13 + $0xc] sm:$0xf]
        %v2333 = vpack.c.bf16 %v2328, %v2328
        %v2334 = vld [vmem:[%s14] sm:$0x1]
        %v2336 = vlaneseq
        %v2337 = vshrl.u32 %v2336, 7
        %v2338 = vsub.s32 0, %v2337
        %v2339 = vrot.slane %v2334, %v2338
        %v2345 = vunpack.c.l.b16 %v2329
        %v2346 = vunpack.c.l.b16 %v2330
        %v2347 = vunpack.c.l.b16 %v2331
        %v2348 = vunpack.c.l.b16 %v2332
        %v2349 = vpack.c.b16 %v2346, %v2345
        %v2350 = vpack.c.b16 %v2348, %v2347
        %v2354 = vsel %vm1381, %v2333, 0
        %2356 = vmatprep.subr.bf16.mxu0 0
        %2357 = vmatpush1.bf16.msra.mxu0 0
        %2358 = vmatprep.subr.bf16.mxu0 0
        %2359 = vmatpush1.bf16.msra.mxu0 0
        %2360 = vmatprep.subr.bf16.mxu0 0
        %2361 = vmatpush1.bf16.msra.mxu0 0
        %2362 = vmatprep.subr.bf16.mxu0 0
        %2363 = vmatpush1.bf16.msra.mxu0 0
        %2364 = vmatprep.subr.bf16.mxu0 0
        %2365 = vmatpush1.bf16.msra.mxu0 0
        %2366 = vmatprep.subr.bf16.mxu0 0
        %2367 = vmatpush1.bf16.msra.mxu0 0
        %2368 = vmatprep.subr.bf16.mxu0 0
        %2369 = vmatpush1.bf16.msra.mxu0 %v2350
        %2370 = vmatprep.subr.bf16.mxu0 0
        %2371 = vmatpush1.bf16.msra.mxu0 %v2349
        %2372 = vmatprep.subr.bf16.mxu0 0
        %2373 = vmatpush2.bf16.msra.mxu0 0
        %2374 = vmatprep.subr.bf16.mxu0 0
        %2375 = vmatpush2.bf16.msra.mxu0 0
        %2376 = vmatprep.subr.bf16.mxu0 0
        %2377 = vmatpush2.bf16.msra.mxu0 0
        %2378 = vmatprep.subr.bf16.mxu0 0
        %2379 = vmatpush2.bf16.msra.mxu0 0
        %2380 = vmatprep.subr.bf16.mxu0 0
        %2381 = vmatpush2.bf16.msra.mxu0 0
        %2382 = vmatprep.subr.bf16.mxu0 0
        %2383 = vmatpush2.bf16.msra.mxu0 0
        %2384 = vmatprep.subr.bf16.mxu0 0
        %2385 = vmatpush2.bf16.msra.mxu0 0
        %2386 = vmatprep.subr.bf16.mxu0 0
        %2387 = vmatpush2.bf16.msra.mxu0 0
        %2388 = vmatprep.mubr.bf16.mxu0 0
        %2389 = vmatmul.mubr.bf16.gmra.mxu0 %v2354
        %v2390 = vpop.f32.mrf.mxu0
        %v2391 = vadd.f32 %v2339, %v2390
        %v2392 = vpop.f32.mrf.mxu0
        %v2393 = vpop.f32.mrf.mxu0
        %v2394 = vpop.f32.mrf.mxu0
        %2395 = vdwg.mxu0
        %v2396 = vmul.f32 %v2391, %v2391
        %v2397 = vmul.f32 %v2391, %v2396
        %v2398 = vmul.f32 %v2397, 0.044715
        %v2399 = vadd.f32 %v2391, %v2398
        %v2400 = vmul.f32 %v2399, 0.7978846
        %v2401 = vtanh.pop %v2400
        %v2402 = vadd.f32 %v2401, 1.0
        %v2403 = vmul.f32 %v2402, 0.5
        %v2404 = vmul.f32 %v2391, %v2403
        %v2405 = vld [vmem:[%s15] sm:$0xf]
        %v2406 = vld [vmem:[%s15 + $0x4] sm:$0xf]
        %v2407 = vld [vmem:[%s15 + $0x8] sm:$0xf]
        %v2408 = vld [vmem:[%s15 + $0xc] sm:$0xf]
        %v2409 = vld [vmem:[%s15 + $0x10] sm:$0xf]
        %v2410 = vld [vmem:[%s15 + $0x14] sm:$0xf]
        %v2411 = vld [vmem:[%s15 + $0x18] sm:$0xf]
        %v2412 = vld [vmem:[%s15 + $0x1c] sm:$0xf]
        %v2413 = vld [vmem:[%s15 + $0x20] sm:$0xf]
        %v2414 = vld [vmem:[%s15 + $0x24] sm:$0xf]
        %v2415 = vld [vmem:[%s15 + $0x28] sm:$0xf]
        %v2416 = vld [vmem:[%s15 + $0x2c] sm:$0xf]
        %v2417 = vld [vmem:[%s15 + $0x30] sm:$0xf]
        %v2418 = vld [vmem:[%s15 + $0x34] sm:$0xf]
        %v2419 = vld [vmem:[%s15 + $0x38] sm:$0xf]
        %v2420 = vld [vmem:[%s15 + $0x3c] sm:$0xf]
        %v2421 = vpack.c.bf16 %v2404, %v2404
        %v2438 = vunpack.c.l.b16 %v2405
        %v2439 = vunpack.c.l.b16 %v2406
        %v2440 = vunpack.c.l.b16 %v2407
        %v2441 = vunpack.c.l.b16 %v2408
        %v2442 = vunpack.c.l.b16 %v2409
        %v2443 = vunpack.c.l.b16 %v2410
        %v2444 = vunpack.c.l.b16 %v2411
        %v2445 = vunpack.c.l.b16 %v2412
        %v2446 = vunpack.c.l.b16 %v2413
        %v2447 = vunpack.c.l.b16 %v2414
        %v2448 = vunpack.c.l.b16 %v2415
        %v2449 = vunpack.c.l.b16 %v2416
        %v2450 = vunpack.c.l.b16 %v2417
        %v2451 = vunpack.c.l.b16 %v2418
        %v2452 = vunpack.c.l.b16 %v2419
        %v2453 = vunpack.c.l.b16 %v2420
        %v2454 = vpack.c.b16 %v2439, %v2438
        %v2455 = vpack.c.b16 %v2441, %v2440
        %v2456 = vpack.c.b16 %v2443, %v2442
        %v2457 = vpack.c.b16 %v2445, %v2444
        %v2458 = vpack.c.b16 %v2447, %v2446
        %v2459 = vpack.c.b16 %v2449, %v2448
        %v2460 = vpack.c.b16 %v2451, %v2450
        %v2461 = vpack.c.b16 %v2453, %v2452
        %2470 = vmatprep.subr.bf16.mxu0 0
        %2471 = vmatpush1.bf16.msra.mxu0 %v2461
        %2472 = vmatprep.subr.bf16.mxu0 0
        %2473 = vmatpush1.bf16.msra.mxu0 %v2460
        %2474 = vmatprep.subr.bf16.mxu0 0
        %2475 = vmatpush1.bf16.msra.mxu0 %v2459
        %2476 = vmatprep.subr.bf16.mxu0 0
        %2477 = vmatpush1.bf16.msra.mxu0 %v2458
        %2478 = vmatprep.subr.bf16.mxu0 0
        %2479 = vmatpush1.bf16.msra.mxu0 %v2457
        %2480 = vmatprep.subr.bf16.mxu0 0
        %2481 = vmatpush1.bf16.msra.mxu0 %v2456
        %2482 = vmatprep.subr.bf16.mxu0 0
        %2483 = vmatpush1.bf16.msra.mxu0 %v2455
        %2484 = vmatprep.subr.bf16.mxu0 0
        %2485 = vmatpush1.bf16.msra.mxu0 %v2454
        %2486 = vmatprep.subr.bf16.mxu0 0
        %2487 = vmatpush2.bf16.msra.mxu0 0
        %2488 = vmatprep.subr.bf16.mxu0 0
        %2489 = vmatpush2.bf16.msra.mxu0 0
        %2490 = vmatprep.subr.bf16.mxu0 0
        %2491 = vmatpush2.bf16.msra.mxu0 0
        %2492 = vmatprep.subr.bf16.mxu0 0
        %2493 = vmatpush2.bf16.msra.mxu0 0
        %2494 = vmatprep.subr.bf16.mxu0 0
        %2495 = vmatpush2.bf16.msra.mxu0 0
        %2496 = vmatprep.subr.bf16.mxu0 0
        %2497 = vmatpush2.bf16.msra.mxu0 0
        %2498 = vmatprep.subr.bf16.mxu0 0
        %2499 = vmatpush2.bf16.msra.mxu0 0
        %2500 = vmatprep.subr.bf16.mxu0 0
        %2501 = vmatpush2.bf16.msra.mxu0 0
        %2502 = vmatprep.mubr.bf16.mxu0 0
        %2503 = vmatmul.mubr.bf16.gmra.mxu0 %v2421
        %v2504 = vpop.f32.mrf.mxu0
        %v2505 = vadd.f32 0.0, %v2504
        %v2506 = vpop.f32.mrf.mxu0
        %v2507 = vpop.f32.mrf.mxu0
        %v2508 = vpop.f32.mrf.mxu0
        %2509 = vdwg.mxu0
        %v2510 = vadd.f32 %v2299, %v2505
        %v2511 = vld [vmem:[%s16] sm:$0x1]
        %v2513 = vlaneseq
        %v2514 = vshrl.u32 %v2513, 7
        %v2515 = vsub.s32 0, %v2514
        %v2516 = vrot.slane %v2511, %v2515
        %v2518 = vadd.f32 %v2510, %v2516
        %s2519 = scalar_lea.vmem %s5, 1
        %v2520 = vld [vmem:[%s2519] sm:$0x1]
        %s2521 = scalar_lea.vmem %s6, 1
        %v2522 = vld [vmem:[%s2521] sm:$0x1]
        %v2523 = vsel %vm1328, %v2518, 0.0
        %2524 = vadd.xlane.f32.xlu0 %v2523
        %v2525 = vpop.xlane.xlu0 %2524
        %v2526 = vmul.f32 %v2525, %v1332
        %v2527 = vsub.f32 %v2518, %v2526
        %v2528 = vmul.f32 %v2527, %v2527
        %v2529 = vsel %vm1328, %v2528, 0.0
        %2530 = vadd.xlane.f32.xlu0 %v2529
        %v2531 = vpop.xlane.xlu0 %2530
        %v2532 = vmul.f32 %v2531, %v1332
        %v2533 = vadd.f32 %v2532, 1e-06
        %v2534 = vrsqrt.pop %v2533
        %v2535 = vmul.f32 %v2527, %v2534
        %v2537 = vlaneseq
        %v2538 = vshrl.u32 %v2537, 7
        %v2539 = vsub.s32 0, %v2538
        %v2540 = vrot.slane %v2520, %v2539
        %v2542 = vmul.f32 %v2535, %v2540
        %v2544 = vlaneseq
        %v2545 = vshrl.u32 %v2544, 7
        %v2546 = vsub.s32 0, %v2545
        %v2547 = vrot.slane %v2522, %v2546
        %v2549 = vadd.f32 %v2542, %v2547
        %s2550 = scalar_lea.vmem %s7, 16
        %v2551 = vld [vmem:[%s2550] sm:$0xf]
        %v2552 = vld [vmem:[%s2550 + $0x4] sm:$0xf]
        %v2553 = vld [vmem:[%s2550 + $0x8] sm:$0xf]
        %v2554 = vld [vmem:[%s2550 + $0xc] sm:$0xf]
        %v2555 = vpack.c.bf16 %v2549, %v2549
        %s2556 = scalar_lea.vmem %s8, 1
        %v2557 = vld [vmem:[%s2556] sm:$0x1]
        %v2559 = vlaneseq
        %v2560 = vshrl.u32 %v2559, 7
        %v2561 = vsub.s32 0, %v2560
        %v2562 = vrot.slane %v2557, %v2561
        %v2568 = vunpack.c.l.b16 %v2551
        %v2569 = vunpack.c.l.b16 %v2552
        %v2570 = vunpack.c.l.b16 %v2553
        %v2571 = vunpack.c.l.b16 %v2554
        %v2572 = vpack.c.b16 %v2569, %v2568
        %v2573 = vpack.c.b16 %v2571, %v2570
        %v2577 = vsel %vm1381, %v2555, 0
        %2579 = vmatprep.subr.bf16.mxu0 0
        %2580 = vmatpush1.bf16.msra.mxu0 0
        %2581 = vmatprep.subr.bf16.mxu0 0
        %2582 = vmatpush1.bf16.msra.mxu0 0
        %2583 = vmatprep.subr.bf16.mxu0 0
        %2584 = vmatpush1.bf16.msra.mxu0 0
        %2585 = vmatprep.subr.bf16.mxu0 0
        %2586 = vmatpush1.bf16.msra.mxu0 0
        %2587 = vmatprep.subr.bf16.mxu0 0
        %2588 = vmatpush1.bf16.msra.mxu0 0
        %2589 = vmatprep.subr.bf16.mxu0 0
        %2590 = vmatpush1.bf16.msra.mxu0 0
        %2591 = vmatprep.subr.bf16.mxu0 0
        %2592 = vmatpush1.bf16.msra.mxu0 %v2573
        %2593 = vmatprep.subr.bf16.mxu0 0
        %2594 = vmatpush1.bf16.msra.mxu0 %v2572
        %2595 = vmatprep.subr.bf16.mxu0 0
        %2596 = vmatpush2.bf16.msra.mxu0 0
        %2597 = vmatprep.subr.bf16.mxu0 0
        %2598 = vmatpush2.bf16.msra.mxu0 0
        %2599 = vmatprep.subr.bf16.mxu0 0
        %2600 = vmatpush2.bf16.msra.mxu0 0
        %2601 = vmatprep.subr.bf16.mxu0 0
        %2602 = vmatpush2.bf16.msra.mxu0 0
        %2603 = vmatprep.subr.bf16.mxu0 0
        %2604 = vmatpush2.bf16.msra.mxu0 0
        %2605 = vmatprep.subr.bf16.mxu0 0
        %2606 = vmatpush2.bf16.msra.mxu0 0
        %2607 = vmatprep.subr.bf16.mxu0 0
        %2608 = vmatpush2.bf16.msra.mxu0 0
        %2609 = vmatprep.subr.bf16.mxu0 0
        %2610 = vmatpush2.bf16.msra.mxu0 0
        %2611 = vmatprep.mubr.bf16.mxu0 0
        %2612 = vmatmul.mubr.bf16.gmra.mxu0 %v2577
        %v2613 = vpop.f32.mrf.mxu0
        %v2614 = vadd.f32 %v2562, %v2613
        %v2615 = vpop.f32.mrf.mxu0
        %v2616 = vpop.f32.mrf.mxu0
        %v2617 = vpop.f32.mrf.mxu0
        %2618 = vdwg.mxu0
        %s2619 = scalar_lea.vmem %s9, 16
        %v2620 = vld [vmem:[%s2619] sm:$0xf]
        %v2621 = vld [vmem:[%s2619 + $0x4] sm:$0xf]
        %v2622 = vld [vmem:[%s2619 + $0x8] sm:$0xf]
        %v2623 = vld [vmem:[%s2619 + $0xc] sm:$0xf]
        %2625 = vrot.lane.b32.xlu0 %v2614, 96
        %v2626 = vpop.permute.xlu0 %2625
        %v2627 = vsel %vm1432, %v2614, 0
        %v2629 = vsel %vm1432, %v2626, 0
        %2631 = vmatprep.subr.mxu0 0.0
        %2632 = vmatpush1.xpose.msra.mxu0 0.0
        %2633 = vmatprep.subr.mxu0 0.0
        %2634 = vmatpush1.xpose.msra.mxu0 0.0
        %2635 = vmatprep.subr.mxu0 0.0
        %2636 = vmatpush1.xpose.msra.mxu0 0.0
        %2637 = vmatprep.subr.mxu0 0.0
        %2638 = vmatpush1.xpose.msra.mxu0 0.0
        %2639 = vmatprep.subr.mxu0 0.0
        %2640 = vmatpush1.xpose.msra.mxu0 0.0
        %2641 = vmatprep.subr.mxu0 0.0
        %2642 = vmatpush1.xpose.msra.mxu0 0.0
        %2643 = vmatprep.subr.mxu0 0.0
        %2644 = vmatpush1.xpose.msra.mxu0 0.0
        %2645 = vmatprep.subr.mxu0 0.0
        %2646 = vmatpush1.xpose.msra.mxu0 0.0
        %2647 = vmatprep.subr.mxu0 0.0
        %2648 = vmatpush1.xpose.msra.mxu0 0.0
        %2649 = vmatprep.subr.mxu0 0.0
        %2650 = vmatpush1.xpose.msra.mxu0 0.0
        %2651 = vmatprep.subr.mxu0 0.0
        %2652 = vmatpush1.xpose.msra.mxu0 0.0
        %2653 = vmatprep.subr.mxu0 0.0
        %2654 = vmatpush1.xpose.msra.mxu0 0.0
        %2655 = vmatprep.subr.mxu0 0.0
        %2656 = vmatpush1.xpose.msra.mxu0 0.0
        %2657 = vmatprep.subr.mxu0 0.0
        %2658 = vmatpush1.xpose.msra.mxu0 0.0
        %2659 = vmatprep.subr.mxu0 0.0
        %2660 = vmatpush1.xpose.msra.mxu0 0.0
        %2661 = vmatprep.subr.mxu0 0.0
        %2662 = vmatpush1.xpose.msra.mxu0 %v2629
        %2663 = vmatprep.subr.mxu0 0.0
        %2664 = vmatpush2.xpose.msra.mxu0 0.0
        %2665 = vmatprep.subr.mxu0 0.0
        %2666 = vmatpush2.xpose.msra.mxu0 0.0
        %2667 = vmatprep.subr.mxu0 0.0
        %2668 = vmatpush2.xpose.msra.mxu0 0.0
        %2669 = vmatprep.subr.mxu0 0.0
        %2670 = vmatpush2.xpose.msra.mxu0 0.0
        %2671 = vmatprep.subr.mxu0 0.0
        %2672 = vmatpush2.xpose.msra.mxu0 0.0
        %2673 = vmatprep.subr.mxu0 0.0
        %2674 = vmatpush2.xpose.msra.mxu0 0.0
        %2675 = vmatprep.subr.mxu0 0.0
        %2676 = vmatpush2.xpose.msra.mxu0 0.0
        %2677 = vmatprep.subr.mxu0 0.0
        %2678 = vmatpush2.xpose.msra.mxu0 0.0
        %2679 = vmatprep.subr.mxu0 0.0
        %2680 = vmatpush2.xpose.msra.mxu0 0.0
        %2681 = vmatprep.subr.mxu0 0.0
        %2682 = vmatpush2.xpose.msra.mxu0 0.0
        %2683 = vmatprep.subr.mxu0 0.0
        %2684 = vmatpush2.xpose.msra.mxu0 0.0
        %2685 = vmatprep.subr.mxu0 0.0
        %2686 = vmatpush2.xpose.msra.mxu0 0.0
        %2687 = vmatprep.subr.mxu0 0.0
        %2688 = vmatpush2.xpose.msra.mxu0 0.0
        %2689 = vmatprep.subr.mxu0 0.0
        %2690 = vmatpush2.xpose.msra.mxu0 0.0
        %2691 = vmatprep.subr.mxu0 0.0
        %2692 = vmatpush2.xpose.msra.mxu0 0.0
        %2693 = vmatprep.subr.mxu0 0.0
        %2694 = vmatpush2.xpose.msra.mxu0 0.0
        %2695 = vmatprep.mubr.f32.mxu0 0.0
        %2696 = vmatmul.mubr.f32.gmra.mxu0 %v2627
        %v2697 = vpop.f32.mrf.mxu0
        %v2698 = vadd.f32 0.0, %v2697
        %v2699 = vpop.f32.mrf.mxu0
        %2700 = vdwg.mxu0
        %v2701 = vmul.f32 %v2698, 0.35355338
        %v2702 = vsel %vm1508, %v2701, -inf
        %2703 = vmax.xlane.f32.xlu0 %v2702
        %v2704 = vpop.xlane.xlu0 %2703
        %v2705 = vsub.f32 %v2701, %v2704
        %v2706 = vmul.f32 %v2705, 1.442695
        %v2707 = vpow.pop %v2706
        %v2708 = vsel %vm1508, %v2707, 0.0
        %2709 = vadd.xlane.f32.xlu0 %v2708
        %v2710 = vpop.xlane.xlu0 %2709
        %2711 = vrot.lane.b32.xlu0 %v2614, 64
        %v2712 = vpop.permute.xlu0 %2711
        %v2714 = vsel %vm1520, %v2707, 0
        %v2716 = vsel %vm1524, %v2712, 0
        %2718 = vmatprep.subr.mxu0 0.0
        %2719 = vmatpush1.msra.mxu0 0.0
        %2720 = vmatprep.subr.mxu0 0.0
        %2721 = vmatpush1.msra.mxu0 0.0
        %2722 = vmatprep.subr.mxu0 0.0
        %2723 = vmatpush1.msra.mxu0 0.0
        %2724 = vmatprep.subr.mxu0 0.0
        %2725 = vmatpush1.msra.mxu0 0.0
        %2726 = vmatprep.subr.mxu0 0.0
        %2727 = vmatpush1.msra.mxu0 0.0
        %2728 = vmatprep.subr.mxu0 0.0
        %2729 = vmatpush1.msra.mxu0 0.0
        %2730 = vmatprep.subr.mxu0 0.0
        %2731 = vmatpush1.msra.mxu0 0.0
        %2732 = vmatprep.subr.mxu0 0.0
        %2733 = vmatpush1.msra.mxu0 0.0
        %2734 = vmatprep.subr.mxu0 0.0
        %2735 = vmatpush1.msra.mxu0 0.0
        %2736 = vmatprep.subr.mxu0 0.0
        %2737 = vmatpush1.msra.mxu0 0.0
        %2738 = vmatprep.subr.mxu0 0.0
        %2739 = vmatpush1.msra.mxu0 0.0
        %2740 = vmatprep.subr.mxu0 0.0
        %2741 = vmatpush1.msra.mxu0 0.0
        %2742 = vmatprep.subr.mxu0 0.0
        %2743 = vmatpush1.msra.mxu0 0.0
        %2744 = vmatprep.subr.mxu0 0.0
        %2745 = vmatpush1.msra.mxu0 0.0
        %2746 = vmatprep.subr.mxu0 0.0
        %2747 = vmatpush1.msra.mxu0 0.0
        %2748 = vmatprep.subr.mxu0 0.0
        %2749 = vmatpush1.msra.mxu0 %v2716
        %2750 = vmatprep.subr.mxu0 0.0
        %2751 = vmatpush2.msra.mxu0 0.0
        %2752 = vmatprep.subr.mxu0 0.0
        %2753 = vmatpush2.msra.mxu0 0.0
        %2754 = vmatprep.subr.mxu0 0.0
        %2755 = vmatpush2.msra.mxu0 0.0
        %2756 = vmatprep.subr.mxu0 0.0
        %2757 = vmatpush2.msra.mxu0 0.0
        %2758 = vmatprep.subr.mxu0 0.0
        %2759 = vmatpush2.msra.mxu0 0.0
        %2760 = vmatprep.subr.mxu0 0.0
        %2761 = vmatpush2.msra.mxu0 0.0
        %2762 = vmatprep.subr.mxu0 0.0
        %2763 = vmatpush2.msra.mxu0 0.0
        %2764 = vmatprep.subr.mxu0 0.0
        %2765 = vmatpush2.msra.mxu0 0.0
        %2766 = vmatprep.subr.mxu0 0.0
        %2767 = vmatpush2.msra.mxu0 0.0
        %2768 = vmatprep.subr.mxu0 0.0
        %2769 = vmatpush2.msra.mxu0 0.0
        %2770 = vmatprep.subr.mxu0 0.0
        %2771 = vmatpush2.msra.mxu0 0.0
        %2772 = vmatprep.subr.mxu0 0.0
        %2773 = vmatpush2.msra.mxu0 0.0
        %2774 = vmatprep.subr.mxu0 0.0
        %2775 = vmatpush2.msra.mxu0 0.0
        %2776 = vmatprep.subr.mxu0 0.0
        %2777 = vmatpush2.msra.mxu0 0.0
        %2778 = vmatprep.subr.mxu0 0.0
        %2779 = vmatpush2.msra.mxu0 0.0
        %2780 = vmatprep.subr.mxu0 0.0
        %2781 = vmatpush2.msra.mxu0 0.0
        %2782 = vmatprep.mubr.f32.mxu0 0.0
        %2783 = vmatmul.mubr.f32.gmra.mxu0 %v2714
        %v2784 = vpop.f32.mrf.mxu0
        %v2785 = vadd.f32 0.0, %v2784
        %v2786 = vpop.f32.mrf.mxu0
        %2787 = vdwg.mxu0
        %v2788 = vrcp.pop %v2710
        %v2789 = vmul.f32 %v2785, %v2788
        %v2790 = vpack.c.bf16 %v2789, %v2789
        %2791 = vrot.lane.b32.xlu0 %v2614, 120
        %v2792 = vpop.permute.xlu0 %2791
        %2793 = vrot.lane.b32.xlu0 %v2614, 88
        %v2794 = vpop.permute.xlu0 %2793
        %v2795 = vsel %vm1432, %v2792, 0
        %v2797 = vsel %vm1432, %v2794, 0
        %2799 = vmatprep.subr.mxu0 0.0
        %2800 = vmatpush1.xpose.msra.mxu0 0.0
        %2801 = vmatprep.subr.mxu0 0.0
        %2802 = vmatpush1.xpose.msra.mxu0 0.0
        %2803 = vmatprep.subr.mxu0 0.0
        %2804 = vmatpush1.xpose.msra.mxu0 0.0
        %2805 = vmatprep.subr.mxu0 0.0
        %2806 = vmatpush1.xpose.msra.mxu0 0.0
        %2807 = vmatprep.subr.mxu0 0.0
        %2808 = vmatpush1.xpose.msra.mxu0 0.0
        %2809 = vmatprep.subr.mxu0 0.0
        %2810 = vmatpush1.xpose.msra.mxu0 0.0
        %2811 = vmatprep.subr.mxu0 0.0
        %2812 = vmatpush1.xpose.msra.mxu0 0.0
        %2813 = vmatprep.subr.mxu0 0.0
        %2814 = vmatpush1.xpose.msra.mxu0 0.0
        %2815 = vmatprep.subr.mxu0 0.0
        %2816 = vmatpush1.xpose.msra.mxu0 0.0
        %2817 = vmatprep.subr.mxu0 0.0
        %2818 = vmatpush1.xpose.msra.mxu0 0.0
        %2819 = vmatprep.subr.mxu0 0.0
        %2820 = vmatpush1.xpose.msra.mxu0 0.0
        %2821 = vmatprep.subr.mxu0 0.0
        %2822 = vmatpush1.xpose.msra.mxu0 0.0
        %2823 = vmatprep.subr.mxu0 0.0
        %2824 = vmatpush1.xpose.msra.mxu0 0.0
        %2825 = vmatprep.subr.mxu0 0.0
        %2826 = vmatpush1.xpose.msra.mxu0 0.0
        %2827 = vmatprep.subr.mxu0 0.0
        %2828 = vmatpush1.xpose.msra.mxu0 0.0
        %2829 = vmatprep.subr.mxu0 0.0
        %2830 = vmatpush1.xpose.msra.mxu0 %v2797
        %2831 = vmatprep.subr.mxu0 0.0
        %2832 = vmatpush2.xpose.msra.mxu0 0.0
        %2833 = vmatprep.subr.mxu0 0.0
        %2834 = vmatpush2.xpose.msra.mxu0 0.0
        %2835 = vmatprep.subr.mxu0 0.0
        %2836 = vmatpush2.xpose.msra.mxu0 0.0
        %2837 = vmatprep.subr.mxu0 0.0
        %2838 = vmatpush2.xpose.msra.mxu0 0.0
        %2839 = vmatprep.subr.mxu0 0.0
        %2840 = vmatpush2.xpose.msra.mxu0 0.0
        %2841 = vmatprep.subr.mxu0 0.0
        %2842 = vmatpush2.xpose.msra.mxu0 0.0
        %2843 = vmatprep.subr.mxu0 0.0
        %2844 = vmatpush2.xpose.msra.mxu0 0.0
        %2845 = vmatprep.subr.mxu0 0.0
        %2846 = vmatpush2.xpose.msra.mxu0 0.0
        %2847 = vmatprep.subr.mxu0 0.0
        %2848 = vmatpush2.xpose.msra.mxu0 0.0
        %2849 = vmatprep.subr.mxu0 0.0
        %2850 = vmatpush2.xpose.msra.mxu0 0.0
        %2851 = vmatprep.subr.mxu0 0.0
        %2852 = vmatpush2.xpose.msra.mxu0 0.0
        %2853 = vmatprep.subr.mxu0 0.0
        %2854 = vmatpush2.xpose.msra.mxu0 0.0
        %2855 = vmatprep.subr.mxu0 0.0
        %2856 = vmatpush2.xpose.msra.mxu0 0.0
        %2857 = vmatprep.subr.mxu0 0.0
        %2858 = vmatpush2.xpose.msra.mxu0 0.0
        %2859 = vmatprep.subr.mxu0 0.0
        %2860 = vmatpush2.xpose.msra.mxu0 0.0
        %2861 = vmatprep.subr.mxu0 0.0
        %2862 = vmatpush2.xpose.msra.mxu0 0.0
        %2863 = vmatprep.mubr.f32.mxu0 0.0
        %2864 = vmatmul.mubr.f32.gmra.mxu0 %v2795
        %v2865 = vpop.f32.mrf.mxu0
        %v2866 = vadd.f32 0.0, %v2865
        %v2867 = vpop.f32.mrf.mxu0
        %2868 = vdwg.mxu0
        %v2869 = vmul.f32 %v2866, 0.35355338
        %v2870 = vsel %vm1508, %v2869, -inf
        %2871 = vmax.xlane.f32.xlu0 %v2870
        %v2872 = vpop.xlane.xlu0 %2871
        %v2873 = vsub.f32 %v2869, %v2872
        %v2874 = vmul.f32 %v2873, 1.442695
        %v2875 = vpow.pop %v2874
        %v2876 = vsel %vm1508, %v2875, 0.0
        %2877 = vadd.xlane.f32.xlu0 %v2876
        %v2878 = vpop.xlane.xlu0 %2877
        %2879 = vrot.lane.b32.xlu0 %v2614, 56
        %v2880 = vpop.permute.xlu0 %2879
        %v2882 = vsel %vm1520, %v2875, 0
        %v2884 = vsel %vm1524, %v2880, 0
        %2886 = vmatprep.subr.mxu0 0.0
        %2887 = vmatpush1.msra.mxu0 0.0
        %2888 = vmatprep.subr.mxu0 0.0
        %2889 = vmatpush1.msra.mxu0 0.0
        %2890 = vmatprep.subr.mxu0 0.0
        %2891 = vmatpush1.msra.mxu0 0.0
        %2892 = vmatprep.subr.mxu0 0.0
        %2893 = vmatpush1.msra.mxu0 0.0
        %2894 = vmatprep.subr.mxu0 0.0
        %2895 = vmatpush1.msra.mxu0 0.0
        %2896 = vmatprep.subr.mxu0 0.0
        %2897 = vmatpush1.msra.mxu0 0.0
        %2898 = vmatprep.subr.mxu0 0.0
        %2899 = vmatpush1.msra.mxu0 0.0
        %2900 = vmatprep.subr.mxu0 0.0
        %2901 = vmatpush1.msra.mxu0 0.0
        %2902 = vmatprep.subr.mxu0 0.0
        %2903 = vmatpush1.msra.mxu0 0.0
        %2904 = vmatprep.subr.mxu0 0.0
        %2905 = vmatpush1.msra.mxu0 0.0
        %2906 = vmatprep.subr.mxu0 0.0
        %2907 = vmatpush1.msra.mxu0 0.0
        %2908 = vmatprep.subr.mxu0 0.0
        %2909 = vmatpush1.msra.mxu0 0.0
        %2910 = vmatprep.subr.mxu0 0.0
        %2911 = vmatpush1.msra.mxu0 0.0
        %2912 = vmatprep.subr.mxu0 0.0
        %2913 = vmatpush1.msra.mxu0 0.0
        %2914 = vmatprep.subr.mxu0 0.0
        %2915 = vmatpush1.msra.mxu0 0.0
        %2916 = vmatprep.subr.mxu0 0.0
        %2917 = vmatpush1.msra.mxu0 %v2884
        %2918 = vmatprep.subr.mxu0 0.0
        %2919 = vmatpush2.msra.mxu0 0.0
        %2920 = vmatprep.subr.mxu0 0.0
        %2921 = vmatpush2.msra.mxu0 0.0
        %2922 = vmatprep.subr.mxu0 0.0
        %2923 = vmatpush2.msra.mxu0 0.0
        %2924 = vmatprep.subr.mxu0 0.0
        %2925 = vmatpush2.msra.mxu0 0.0
        %2926 = vmatprep.subr.mxu0 0.0
        %2927 = vmatpush2.msra.mxu0 0.0
        %2928 = vmatprep.subr.mxu0 0.0
        %2929 = vmatpush2.msra.mxu0 0.0
        %2930 = vmatprep.subr.mxu0 0.0
        %2931 = vmatpush2.msra.mxu0 0.0
        %2932 = vmatprep.subr.mxu0 0.0
        %2933 = vmatpush2.msra.mxu0 0.0
        %2934 = vmatprep.subr.mxu0 0.0
        %2935 = vmatpush2.msra.mxu0 0.0
        %2936 = vmatprep.subr.mxu0 0.0
        %2937 = vmatpush2.msra.mxu0 0.0
        %2938 = vmatprep.subr.mxu0 0.0
        %2939 = vmatpush2.msra.mxu0 0.0
        %2940 = vmatprep.subr.mxu0 0.0
        %2941 = vmatpush2.msra.mxu0 0.0
        %2942 = vmatprep.subr.mxu0 0.0
        %2943 = vmatpush2.msra.mxu0 0.0
        %2944 = vmatprep.subr.mxu0 0.0
        %2945 = vmatpush2.msra.mxu0 0.0
        %2946 = vmatprep.subr.mxu0 0.0
        %2947 = vmatpush2.msra.mxu0 0.0
        %2948 = vmatprep.subr.mxu0 0.0
        %2949 = vmatpush2.msra.mxu0 0.0
        %2950 = vmatprep.mubr.f32.mxu0 0.0
        %2951 = vmatmul.mubr.f32.gmra.mxu0 %v2882
        %v2952 = vpop.f32.mrf.mxu0
        %v2953 = vadd.f32 0.0, %v2952
        %v2954 = vpop.f32.mrf.mxu0
        %2955 = vdwg.mxu0
        %v2956 = vrcp.pop %v2878
        %v2957 = vmul.f32 %v2953, %v2956
        %v2958 = vpack.c.bf16 %v2957, %v2957
        %v2960 = vsel %vm1432, %v2958, 0
        %v2963 = vsel %vm1771, %v2621, 0
        %2965 = vmatprep.subr.bf16.mxu0 0
        %2966 = vmatpush1.bf16.msra.mxu0 0
        %2967 = vmatprep.subr.bf16.mxu0 0
        %2968 = vmatpush1.bf16.msra.mxu0 0
        %2969 = vmatprep.subr.bf16.mxu0 0
        %2970 = vmatpush1.bf16.msra.mxu0 0
        %2971 = vmatprep.subr.bf16.mxu0 0
        %2972 = vmatpush1.bf16.msra.mxu0 0
        %2973 = vmatprep.subr.bf16.mxu0 0
        %2974 = vmatpush1.bf16.msra.mxu0 0
        %2975 = vmatprep.subr.bf16.mxu0 0
        %2976 = vmatpush1.bf16.msra.mxu0 0
        %2977 = vmatprep.subr.bf16.mxu0 0
        %2978 = vmatpush1.bf16.msra.mxu0 0
        %2979 = vmatprep.subr.bf16.mxu0 0
        %2980 = vmatpush1.bf16.msra.mxu0 %v2963
        %2981 = vmatprep.subr.bf16.mxu0 0
        %2982 = vmatpush2.bf16.msra.mxu0 0
        %2983 = vmatprep.subr.bf16.mxu0 0
        %2984 = vmatpush2.bf16.msra.mxu0 0
        %2985 = vmatprep.subr.bf16.mxu0 0
        %2986 = vmatpush2.bf16.msra.mxu0 0
        %2987 = vmatprep.subr.bf16.mxu0 0
        %2988 = vmatpush2.bf16.msra.mxu0 0
        %2989 = vmatprep.subr.bf16.mxu0 0
        %2990 = vmatpush2.bf16.msra.mxu0 0
        %2991 = vmatprep.subr.bf16.mxu0 0
        %2992 = vmatpush2.bf16.msra.mxu0 0
        %2993 = vmatprep.subr.bf16.mxu0 0
        %2994 = vmatpush2.bf16.msra.mxu0 0
        %2995 = vmatprep.subr.bf16.mxu0 0
        %2996 = vmatpush2.bf16.msra.mxu0 0
        %2997 = vmatprep.mubr.bf16.mxu0 0
        %2998 = vmatmul.mubr.bf16.gmra.mxu0 %v2960
        %v2999 = vpop.f32.mrf.mxu0
        %v3000 = vadd.f32 0.0, %v2999
        %v3001 = vpop.f32.mrf.mxu0
        %v3002 = vpop.f32.mrf.mxu0
        %v3003 = vpop.f32.mrf.mxu0
        %3004 = vdwg.mxu0
        %v3006 = vsel %vm1432, %v2790, 0
        %v3009 = vsel %vm1771, %v2620, 0
        %3011 = vmatprep.subr.bf16.mxu0 0
        %3012 = vmatpush1.bf16.msra.mxu0 0
        %3013 = vmatprep.subr.bf16.mxu0 0
        %3014 = vmatpush1.bf16.msra.mxu0 0
        %3015 = vmatprep.subr.bf16.mxu0 0
        %3016 = vmatpush1.bf16.msra.mxu0 0
        %3017 = vmatprep.subr.bf16.mxu0 0
        %3018 = vmatpush1.bf16.msra.mxu0 0
        %3019 = vmatprep.subr.bf16.mxu0 0
        %3020 = vmatpush1.bf16.msra.mxu0 0
        %3021 = vmatprep.subr.bf16.mxu0 0
        %3022 = vmatpush1.bf16.msra.mxu0 0
        %3023 = vmatprep.subr.bf16.mxu0 0
        %3024 = vmatpush1.bf16.msra.mxu0 0
        %3025 = vmatprep.subr.bf16.mxu0 0
        %3026 = vmatpush1.bf16.msra.mxu0 %v3009
        %3027 = vmatprep.subr.bf16.mxu0 0
        %3028 = vmatpush2.bf16.msra.mxu0 0
        %3029 = vmatprep.subr.bf16.mxu0 0
        %3030 = vmatpush2.bf16.msra.mxu0 0
        %3031 = vmatprep.subr.bf16.mxu0 0
        %3032 = vmatpush2.bf16.msra.mxu0 0
        %3033 = vmatprep.subr.bf16.mxu0 0
        %3034 = vmatpush2.bf16.msra.mxu0 0
        %3035 = vmatprep.subr.bf16.mxu0 0
        %3036 = vmatpush2.bf16.msra.mxu0 0
        %3037 = vmatprep.subr.bf16.mxu0 0
        %3038 = vmatpush2.bf16.msra.mxu0 0
        %3039 = vmatprep.subr.bf16.mxu0 0
        %3040 = vmatpush2.bf16.msra.mxu0 0
        %3041 = vmatprep.subr.bf16.mxu0 0
        %3042 = vmatpush2.bf16.msra.mxu0 0
        %3043 = vmatprep.mubr.bf16.mxu0 0
        %3044 = vmatmul.mubr.bf16.gmra.mxu0 %v3006
        %v3045 = vpop.f32.mrf.mxu0
        %v3046 = vadd.f32 %v3000, %v3045
        %v3047 = vpop.f32.mrf.mxu0
        %v3048 = vpop.f32.mrf.mxu0
        %v3049 = vpop.f32.mrf.mxu0
        %3050 = vdwg.mxu0
        %3051 = vrot.lane.b32.xlu0 %v2614, 112
        %v3052 = vpop.permute.xlu0 %3051
        %3053 = vrot.lane.b32.xlu0 %v2614, 80
        %v3054 = vpop.permute.xlu0 %3053
        %v3055 = vsel %vm1432, %v3052, 0
        %v3057 = vsel %vm1432, %v3054, 0
        %3059 = vmatprep.subr.mxu0 0.0
        %3060 = vmatpush1.xpose.msra.mxu0 0.0
        %3061 = vmatprep.subr.mxu0 0.0
        %3062 = vmatpush1.xpose.msra.mxu0 0.0
        %3063 = vmatprep.subr.mxu0 0.0
        %3064 = vmatpush1.xpose.msra.mxu0 0.0
        %3065 = vmatprep.subr.mxu0 0.0
        %3066 = vmatpush1.xpose.msra.mxu0 0.0
        %3067 = vmatprep.subr.mxu0 0.0
        %3068 = vmatpush1.xpose.msra.mxu0 0.0
        %3069 = vmatprep.subr.mxu0 0.0
        %3070 = vmatpush1.xpose.msra.mxu0 0.0
        %3071 = vmatprep.subr.mxu0 0.0
        %3072 = vmatpush1.xpose.msra.mxu0 0.0
        %3073 = vmatprep.subr.mxu0 0.0
        %3074 = vmatpush1.xpose.msra.mxu0 0.0
        %3075 = vmatprep.subr.mxu0 0.0
        %3076 = vmatpush1.xpose.msra.mxu0 0.0
        %3077 = vmatprep.subr.mxu0 0.0
        %3078 = vmatpush1.xpose.msra.mxu0 0.0
        %3079 = vmatprep.subr.mxu0 0.0
        %3080 = vmatpush1.xpose.msra.mxu0 0.0
        %3081 = vmatprep.subr.mxu0 0.0
        %3082 = vmatpush1.xpose.msra.mxu0 0.0
        %3083 = vmatprep.subr.mxu0 0.0
        %3084 = vmatpush1.xpose.msra.mxu0 0.0
        %3085 = vmatprep.subr.mxu0 0.0
        %3086 = vmatpush1.xpose.msra.mxu0 0.0
        %3087 = vmatprep.subr.mxu0 0.0
        %3088 = vmatpush1.xpose.msra.mxu0 0.0
        %3089 = vmatprep.subr.mxu0 0.0
        %3090 = vmatpush1.xpose.msra.mxu0 %v3057
        %3091 = vmatprep.subr.mxu0 0.0
        %3092 = vmatpush2.xpose.msra.mxu0 0.0
        %3093 = vmatprep.subr.mxu0 0.0
        %3094 = vmatpush2.xpose.msra.mxu0 0.0
        %3095 = vmatprep.subr.mxu0 0.0
        %3096 = vmatpush2.xpose.msra.mxu0 0.0
        %3097 = vmatprep.subr.mxu0 0.0
        %3098 = vmatpush2.xpose.msra.mxu0 0.0
        %3099 = vmatprep.subr.mxu0 0.0
        %3100 = vmatpush2.xpose.msra.mxu0 0.0
        %3101 = vmatprep.subr.mxu0 0.0
        %3102 = vmatpush2.xpose.msra.mxu0 0.0
        %3103 = vmatprep.subr.mxu0 0.0
        %3104 = vmatpush2.xpose.msra.mxu0 0.0
        %3105 = vmatprep.subr.mxu0 0.0
        %3106 = vmatpush2.xpose.msra.mxu0 0.0
        %3107 = vmatprep.subr.mxu0 0.0
        %3108 = vmatpush2.xpose.msra.mxu0 0.0
        %3109 = vmatprep.subr.mxu0 0.0
        %3110 = vmatpush2.xpose.msra.mxu0 0.0
        %3111 = vmatprep.subr.mxu0 0.0
        %3112 = vmatpush2.xpose.msra.mxu0 0.0
        %3113 = vmatprep.subr.mxu0 0.0
        %3114 = vmatpush2.xpose.msra.mxu0 0.0
        %3115 = vmatprep.subr.mxu0 0.0
        %3116 = vmatpush2.xpose.msra.mxu0 0.0
        %3117 = vmatprep.subr.mxu0 0.0
        %3118 = vmatpush2.xpose.msra.mxu0 0.0
        %3119 = vmatprep.subr.mxu0 0.0
        %3120 = vmatpush2.xpose.msra.mxu0 0.0
        %3121 = vmatprep.subr.mxu0 0.0
        %3122 = vmatpush2.xpose.msra.mxu0 0.0
        %3123 = vmatprep.mubr.f32.mxu0 0.0
        %3124 = vmatmul.mubr.f32.gmra.mxu0 %v3055
        %v3125 = vpop.f32.mrf.mxu0
        %v3126 = vadd.f32 0.0, %v3125
        %v3127 = vpop.f32.mrf.mxu0
        %3128 = vdwg.mxu0
        %v3129 = vmul.f32 %v3126, 0.35355338
        %v3130 = vsel %vm1508, %v3129, -inf
        %3131 = vmax.xlane.f32.xlu0 %v3130
        %v3132 = vpop.xlane.xlu0 %3131
        %v3133 = vsub.f32 %v3129, %v3132
        %v3134 = vmul.f32 %v3133, 1.442695
        %v3135 = vpow.pop %v3134
        %v3136 = vsel %vm1508, %v3135, 0.0
        %3137 = vadd.xlane.f32.xlu0 %v3136
        %v3138 = vpop.xlane.xlu0 %3137
        %3139 = vrot.lane.b32.xlu0 %v2614, 48
        %v3140 = vpop.permute.xlu0 %3139
        %v3142 = vsel %vm1520, %v3135, 0
        %v3144 = vsel %vm1524, %v3140, 0
        %3146 = vmatprep.subr.mxu0 0.0
        %3147 = vmatpush1.msra.mxu0 0.0
        %3148 = vmatprep.subr.mxu0 0.0
        %3149 = vmatpush1.msra.mxu0 0.0
        %3150 = vmatprep.subr.mxu0 0.0
        %3151 = vmatpush1.msra.mxu0 0.0
        %3152 = vmatprep.subr.mxu0 0.0
        %3153 = vmatpush1.msra.mxu0 0.0
        %3154 = vmatprep.subr.mxu0 0.0
        %3155 = vmatpush1.msra.mxu0 0.0
        %3156 = vmatprep.subr.mxu0 0.0
        %3157 = vmatpush1.msra.mxu0 0.0
        %3158 = vmatprep.subr.mxu0 0.0
        %3159 = vmatpush1.msra.mxu0 0.0
        %3160 = vmatprep.subr.mxu0 0.0
        %3161 = vmatpush1.msra.mxu0 0.0
        %3162 = vmatprep.subr.mxu0 0.0
        %3163 = vmatpush1.msra.mxu0 0.0
        %3164 = vmatprep.subr.mxu0 0.0
        %3165 = vmatpush1.msra.mxu0 0.0
        %3166 = vmatprep.subr.mxu0 0.0
        %3167 = vmatpush1.msra.mxu0 0.0
        %3168 = vmatprep.subr.mxu0 0.0
        %3169 = vmatpush1.msra.mxu0 0.0
        %3170 = vmatprep.subr.mxu0 0.0
        %3171 = vmatpush1.msra.mxu0 0.0
        %3172 = vmatprep.subr.mxu0 0.0
        %3173 = vmatpush1.msra.mxu0 0.0
        %3174 = vmatprep.subr.mxu0 0.0
        %3175 = vmatpush1.msra.mxu0 0.0
        %3176 = vmatprep.subr.mxu0 0.0
        %3177 = vmatpush1.msra.mxu0 %v3144
        %3178 = vmatprep.subr.mxu0 0.0
        %3179 = vmatpush2.msra.mxu0 0.0
        %3180 = vmatprep.subr.mxu0 0.0
        %3181 = vmatpush2.msra.mxu0 0.0
        %3182 = vmatprep.subr.mxu0 0.0
        %3183 = vmatpush2.msra.mxu0 0.0
        %3184 = vmatprep.subr.mxu0 0.0
        %3185 = vmatpush2.msra.mxu0 0.0
        %3186 = vmatprep.subr.mxu0 0.0
        %3187 = vmatpush2.msra.mxu0 0.0
        %3188 = vmatprep.subr.mxu0 0.0
        %3189 = vmatpush2.msra.mxu0 0.0
        %3190 = vmatprep.subr.mxu0 0.0
        %3191 = vmatpush2.msra.mxu0 0.0
        %3192 = vmatprep.subr.mxu0 0.0
        %3193 = vmatpush2.msra.mxu0 0.0
        %3194 = vmatprep.subr.mxu0 0.0
        %3195 = vmatpush2.msra.mxu0 0.0
        %3196 = vmatprep.subr.mxu0 0.0
        %3197 = vmatpush2.msra.mxu0 0.0
        %3198 = vmatprep.subr.mxu0 0.0
        %3199 = vmatpush2.msra.mxu0 0.0
        %3200 = vmatprep.subr.mxu0 0.0
        %3201 = vmatpush2.msra.mxu0 0.0
        %3202 = vmatprep.subr.mxu0 0.0
        %3203 = vmatpush2.msra.mxu0 0.0
        %3204 = vmatprep.subr.mxu0 0.0
        %3205 = vmatpush2.msra.mxu0 0.0
        %3206 = vmatprep.subr.mxu0 0.0
        %3207 = vmatpush2.msra.mxu0 0.0
        %3208 = vmatprep.subr.mxu0 0.0
        %3209 = vmatpush2.msra.mxu0 0.0
        %3210 = vmatprep.mubr.f32.mxu0 0.0
        %3211 = vmatmul.mubr.f32.gmra.mxu0 %v3142
        %v3212 = vpop.f32.mrf.mxu0
        %v3213 = vadd.f32 0.0, %v3212
        %v3214 = vpop.f32.mrf.mxu0
        %3215 = vdwg.mxu0
        %v3216 = vrcp.pop %v3138
        %v3217 = vmul.f32 %v3213, %v3216
        %v3218 = vpack.c.bf16 %v3217, %v3217
        %v3220 = vsel %vm1432, %v3218, 0
        %v3223 = vsel %vm1771, %v2622, 0
        %3225 = vmatprep.subr.bf16.mxu0 0
        %3226 = vmatpush1.bf16.msra.mxu0 0
        %3227 = vmatprep.subr.bf16.mxu0 0
        %3228 = vmatpush1.bf16.msra.mxu0 0
        %3229 = vmatprep.subr.bf16.mxu0 0
        %3230 = vmatpush1.bf16.msra.mxu0 0
        %3231 = vmatprep.subr.bf16.mxu0 0
        %3232 = vmatpush1.bf16.msra.mxu0 0
        %3233 = vmatprep.subr.bf16.mxu0 0
        %3234 = vmatpush1.bf16.msra.mxu0 0
        %3235 = vmatprep.subr.bf16.mxu0 0
        %3236 = vmatpush1.bf16.msra.mxu0 0
        %3237 = vmatprep.subr.bf16.mxu0 0
        %3238 = vmatpush1.bf16.msra.mxu0 0
        %3239 = vmatprep.subr.bf16.mxu0 0
        %3240 = vmatpush1.bf16.msra.mxu0 %v3223
        %3241 = vmatprep.subr.bf16.mxu0 0
        %3242 = vmatpush2.bf16.msra.mxu0 0
        %3243 = vmatprep.subr.bf16.mxu0 0
        %3244 = vmatpush2.bf16.msra.mxu0 0
        %3245 = vmatprep.subr.bf16.mxu0 0
        %3246 = vmatpush2.bf16.msra.mxu0 0
        %3247 = vmatprep.subr.bf16.mxu0 0
        %3248 = vmatpush2.bf16.msra.mxu0 0
        %3249 = vmatprep.subr.bf16.mxu0 0
        %3250 = vmatpush2.bf16.msra.mxu0 0
        %3251 = vmatprep.subr.bf16.mxu0 0
        %3252 = vmatpush2.bf16.msra.mxu0 0
        %3253 = vmatprep.subr.bf16.mxu0 0
        %3254 = vmatpush2.bf16.msra.mxu0 0
        %3255 = vmatprep.subr.bf16.mxu0 0
        %3256 = vmatpush2.bf16.msra.mxu0 0
        %3257 = vmatprep.mubr.bf16.mxu0 0
        %3258 = vmatmul.mubr.bf16.gmra.mxu0 %v3220
        %v3259 = vpop.f32.mrf.mxu0
        %v3260 = vadd.f32 0.0, %v3259
        %v3261 = vpop.f32.mrf.mxu0
        %v3262 = vpop.f32.mrf.mxu0
        %v3263 = vpop.f32.mrf.mxu0
        %3264 = vdwg.mxu0
        %v3265 = vadd.f32 %v3046, %v3260
        %3266 = vrot.lane.b32.xlu0 %v2614, 104
        %v3267 = vpop.permute.xlu0 %3266
        %3268 = vrot.lane.b32.xlu0 %v2614, 72
        %v3269 = vpop.permute.xlu0 %3268
        %v3270 = vsel %vm1432, %v3267, 0
        %v3272 = vsel %vm1432, %v3269, 0
        %3274 = vmatprep.subr.mxu0 0.0
        %3275 = vmatpush1.xpose.msra.mxu0 0.0
        %3276 = vmatprep.subr.mxu0 0.0
        %3277 = vmatpush1.xpose.msra.mxu0 0.0
        %3278 = vmatprep.subr.mxu0 0.0
        %3279 = vmatpush1.xpose.msra.mxu0 0.0
        %3280 = vmatprep.subr.mxu0 0.0
        %3281 = vmatpush1.xpose.msra.mxu0 0.0
        %3282 = vmatprep.subr.mxu0 0.0
        %3283 = vmatpush1.xpose.msra.mxu0 0.0
        %3284 = vmatprep.subr.mxu0 0.0
        %3285 = vmatpush1.xpose.msra.mxu0 0.0
        %3286 = vmatprep.subr.mxu0 0.0
        %3287 = vmatpush1.xpose.msra.mxu0 0.0
        %3288 = vmatprep.subr.mxu0 0.0
        %3289 = vmatpush1.xpose.msra.mxu0 0.0
        %3290 = vmatprep.subr.mxu0 0.0
        %3291 = vmatpush1.xpose.msra.mxu0 0.0
        %3292 = vmatprep.subr.mxu0 0.0
        %3293 = vmatpush1.xpose.msra.mxu0 0.0
        %3294 = vmatprep.subr.mxu0 0.0
        %3295 = vmatpush1.xpose.msra.mxu0 0.0
        %3296 = vmatprep.subr.mxu0 0.0
        %3297 = vmatpush1.xpose.msra.mxu0 0.0
        %3298 = vmatprep.subr.mxu0 0.0
        %3299 = vmatpush1.xpose.msra.mxu0 0.0
        %3300 = vmatprep.subr.mxu0 0.0
        %3301 = vmatpush1.xpose.msra.mxu0 0.0
        %3302 = vmatprep.subr.mxu0 0.0
        %3303 = vmatpush1.xpose.msra.mxu0 0.0
        %3304 = vmatprep.subr.mxu0 0.0
        %3305 = vmatpush1.xpose.msra.mxu0 %v3272
        %3306 = vmatprep.subr.mxu0 0.0
        %3307 = vmatpush2.xpose.msra.mxu0 0.0
        %3308 = vmatprep.subr.mxu0 0.0
        %3309 = vmatpush2.xpose.msra.mxu0 0.0
        %3310 = vmatprep.subr.mxu0 0.0
        %3311 = vmatpush2.xpose.msra.mxu0 0.0
        %3312 = vmatprep.subr.mxu0 0.0
        %3313 = vmatpush2.xpose.msra.mxu0 0.0
        %3314 = vmatprep.subr.mxu0 0.0
        %3315 = vmatpush2.xpose.msra.mxu0 0.0
        %3316 = vmatprep.subr.mxu0 0.0
        %3317 = vmatpush2.xpose.msra.mxu0 0.0
        %3318 = vmatprep.subr.mxu0 0.0
        %3319 = vmatpush2.xpose.msra.mxu0 0.0
        %3320 = vmatprep.subr.mxu0 0.0
        %3321 = vmatpush2.xpose.msra.mxu0 0.0
        %3322 = vmatprep.subr.mxu0 0.0
        %3323 = vmatpush2.xpose.msra.mxu0 0.0
        %3324 = vmatprep.subr.mxu0 0.0
        %3325 = vmatpush2.xpose.msra.mxu0 0.0
        %3326 = vmatprep.subr.mxu0 0.0
        %3327 = vmatpush2.xpose.msra.mxu0 0.0
        %3328 = vmatprep.subr.mxu0 0.0
        %3329 = vmatpush2.xpose.msra.mxu0 0.0
        %3330 = vmatprep.subr.mxu0 0.0
        %3331 = vmatpush2.xpose.msra.mxu0 0.0
        %3332 = vmatprep.subr.mxu0 0.0
        %3333 = vmatpush2.xpose.msra.mxu0 0.0
        %3334 = vmatprep.subr.mxu0 0.0
        %3335 = vmatpush2.xpose.msra.mxu0 0.0
        %3336 = vmatprep.subr.mxu0 0.0
        %3337 = vmatpush2.xpose.msra.mxu0 0.0
        %3338 = vmatprep.mubr.f32.mxu0 0.0
        %3339 = vmatmul.mubr.f32.gmra.mxu0 %v3270
        %v3340 = vpop.f32.mrf.mxu0
        %v3341 = vadd.f32 0.0, %v3340
        %v3342 = vpop.f32.mrf.mxu0
        %3343 = vdwg.mxu0
        %v3344 = vmul.f32 %v3341, 0.35355338
        %v3345 = vsel %vm1508, %v3344, -inf
        %3346 = vmax.xlane.f32.xlu0 %v3345
        %v3347 = vpop.xlane.xlu0 %3346
        %v3348 = vsub.f32 %v3344, %v3347
        %v3349 = vmul.f32 %v3348, 1.442695
        %v3350 = vpow.pop %v3349
        %v3351 = vsel %vm1508, %v3350, 0.0
        %3352 = vadd.xlane.f32.xlu0 %v3351
        %v3353 = vpop.xlane.xlu0 %3352
        %3354 = vrot.lane.b32.xlu0 %v2614, 40
        %v3355 = vpop.permute.xlu0 %3354
        %v3357 = vsel %vm1520, %v3350, 0
        %v3359 = vsel %vm1524, %v3355, 0
        %3361 = vmatprep.subr.mxu0 0.0
        %3362 = vmatpush1.msra.mxu0 0.0
        %3363 = vmatprep.subr.mxu0 0.0
        %3364 = vmatpush1.msra.mxu0 0.0
        %3365 = vmatprep.subr.mxu0 0.0
        %3366 = vmatpush1.msra.mxu0 0.0
        %3367 = vmatprep.subr.mxu0 0.0
        %3368 = vmatpush1.msra.mxu0 0.0
        %3369 = vmatprep.subr.mxu0 0.0
        %3370 = vmatpush1.msra.mxu0 0.0
        %3371 = vmatprep.subr.mxu0 0.0
        %3372 = vmatpush1.msra.mxu0 0.0
        %3373 = vmatprep.subr.mxu0 0.0
        %3374 = vmatpush1.msra.mxu0 0.0
        %3375 = vmatprep.subr.mxu0 0.0
        %3376 = vmatpush1.msra.mxu0 0.0
        %3377 = vmatprep.subr.mxu0 0.0
        %3378 = vmatpush1.msra.mxu0 0.0
        %3379 = vmatprep.subr.mxu0 0.0
        %3380 = vmatpush1.msra.mxu0 0.0
        %3381 = vmatprep.subr.mxu0 0.0
        %3382 = vmatpush1.msra.mxu0 0.0
        %3383 = vmatprep.subr.mxu0 0.0
        %3384 = vmatpush1.msra.mxu0 0.0
        %3385 = vmatprep.subr.mxu0 0.0
        %3386 = vmatpush1.msra.mxu0 0.0
        %3387 = vmatprep.subr.mxu0 0.0
        %3388 = vmatpush1.msra.mxu0 0.0
        %3389 = vmatprep.subr.mxu0 0.0
        %3390 = vmatpush1.msra.mxu0 0.0
        %3391 = vmatprep.subr.mxu0 0.0
        %3392 = vmatpush1.msra.mxu0 %v3359
        %3393 = vmatprep.subr.mxu0 0.0
        %3394 = vmatpush2.msra.mxu0 0.0
        %3395 = vmatprep.subr.mxu0 0.0
        %3396 = vmatpush2.msra.mxu0 0.0
        %3397 = vmatprep.subr.mxu0 0.0
        %3398 = vmatpush2.msra.mxu0 0.0
        %3399 = vmatprep.subr.mxu0 0.0
        %3400 = vmatpush2.msra.mxu0 0.0
        %3401 = vmatprep.subr.mxu0 0.0
        %3402 = vmatpush2.msra.mxu0 0.0
        %3403 = vmatprep.subr.mxu0 0.0
        %3404 = vmatpush2.msra.mxu0 0.0
        %3405 = vmatprep.subr.mxu0 0.0
        %3406 = vmatpush2.msra.mxu0 0.0
        %3407 = vmatprep.subr.mxu0 0.0
        %3408 = vmatpush2.msra.mxu0 0.0
        %3409 = vmatprep.subr.mxu0 0.0
        %3410 = vmatpush2.msra.mxu0 0.0
        %3411 = vmatprep.subr.mxu0 0.0
        %3412 = vmatpush2.msra.mxu0 0.0
        %3413 = vmatprep.subr.mxu0 0.0
        %3414 = vmatpush2.msra.mxu0 0.0
        %3415 = vmatprep.subr.mxu0 0.0
        %3416 = vmatpush2.msra.mxu0 0.0
        %3417 = vmatprep.subr.mxu0 0.0
        %3418 = vmatpush2.msra.mxu0 0.0
        %3419 = vmatprep.subr.mxu0 0.0
        %3420 = vmatpush2.msra.mxu0 0.0
        %3421 = vmatprep.subr.mxu0 0.0
        %3422 = vmatpush2.msra.mxu0 0.0
        %3423 = vmatprep.subr.mxu0 0.0
        %3424 = vmatpush2.msra.mxu0 0.0
        %3425 = vmatprep.mubr.f32.mxu0 0.0
        %3426 = vmatmul.mubr.f32.gmra.mxu0 %v3357
        %v3427 = vpop.f32.mrf.mxu0
        %v3428 = vadd.f32 0.0, %v3427
        %v3429 = vpop.f32.mrf.mxu0
        %3430 = vdwg.mxu0
        %v3431 = vrcp.pop %v3353
        %v3432 = vmul.f32 %v3428, %v3431
        %v3433 = vpack.c.bf16 %v3432, %v3432
        %v3435 = vsel %vm1432, %v3433, 0
        %v3438 = vsel %vm1771, %v2623, 0
        %3440 = vmatprep.subr.bf16.mxu0 0
        %3441 = vmatpush1.bf16.msra.mxu0 0
        %3442 = vmatprep.subr.bf16.mxu0 0
        %3443 = vmatpush1.bf16.msra.mxu0 0
        %3444 = vmatprep.subr.bf16.mxu0 0
        %3445 = vmatpush1.bf16.msra.mxu0 0
        %3446 = vmatprep.subr.bf16.mxu0 0
        %3447 = vmatpush1.bf16.msra.mxu0 0
        %3448 = vmatprep.subr.bf16.mxu0 0
        %3449 = vmatpush1.bf16.msra.mxu0 0
        %3450 = vmatprep.subr.bf16.mxu0 0
        %3451 = vmatpush1.bf16.msra.mxu0 0
        %3452 = vmatprep.subr.bf16.mxu0 0
        %3453 = vmatpush1.bf16.msra.mxu0 0
        %3454 = vmatprep.subr.bf16.mxu0 0
        %3455 = vmatpush1.bf16.msra.mxu0 %v3438
        %3456 = vmatprep.subr.bf16.mxu0 0
        %3457 = vmatpush2.bf16.msra.mxu0 0
        %3458 = vmatprep.subr.bf16.mxu0 0
        %3459 = vmatpush2.bf16.msra.mxu0 0
        %3460 = vmatprep.subr.bf16.mxu0 0
        %3461 = vmatpush2.bf16.msra.mxu0 0
        %3462 = vmatprep.subr.bf16.mxu0 0
        %3463 = vmatpush2.bf16.msra.mxu0 0
        %3464 = vmatprep.subr.bf16.mxu0 0
        %3465 = vmatpush2.bf16.msra.mxu0 0
        %3466 = vmatprep.subr.bf16.mxu0 0
        %3467 = vmatpush2.bf16.msra.mxu0 0
        %3468 = vmatprep.subr.bf16.mxu0 0
        %3469 = vmatpush2.bf16.msra.mxu0 0
        %3470 = vmatprep.subr.bf16.mxu0 0
        %3471 = vmatpush2.bf16.msra.mxu0 0
        %3472 = vmatprep.mubr.bf16.mxu0 0
        %3473 = vmatmul.mubr.bf16.gmra.mxu0 %v3435
        %v3474 = vpop.f32.mrf.mxu0
        %v3475 = vadd.f32 0.0, %v3474
        %v3476 = vpop.f32.mrf.mxu0
        %v3477 = vpop.f32.mrf.mxu0
        %v3478 = vpop.f32.mrf.mxu0
        %3479 = vdwg.mxu0
        %v3480 = vadd.f32 %v3265, %v3475
        %s3481 = scalar_lea.vmem %s10, 1
        %v3482 = vld [vmem:[%s3481] sm:$0x1]
        %v3484 = vlaneseq
        %v3485 = vshrl.u32 %v3484, 7
        %v3486 = vsub.s32 0, %v3485
        %v3487 = vrot.slane %v3482, %v3486
        %v3489 = vadd.f32 %v3480, %v3487
        %v3490 = vadd.f32 %v2518, %v3489
        %s3491 = scalar_lea.vmem %s11, 1
        %v3492 = vld [vmem:[%s3491] sm:$0x1]
        %s3493 = scalar_lea.vmem %s12, 1
        %v3494 = vld [vmem:[%s3493] sm:$0x1]
        %v3495 = vsel %vm1328, %v3490, 0.0
        %3496 = vadd.xlane.f32.xlu0 %v3495
        %v3497 = vpop.xlane.xlu0 %3496
        %v3498 = vmul.f32 %v3497, %v1332
        %v3499 = vsub.f32 %v3490, %v3498
        %v3500 = vmul.f32 %v3499, %v3499
        %v3501 = vsel %vm1328, %v3500, 0.0
        %3502 = vadd.xlane.f32.xlu0 %v3501
        %v3503 = vpop.xlane.xlu0 %3502
        %v3504 = vmul.f32 %v3503, %v1332
        %v3505 = vadd.f32 %v3504, 1e-06
        %v3506 = vrsqrt.pop %v3505
        %v3507 = vmul.f32 %v3499, %v3506
        %v3509 = vlaneseq
        %v3510 = vshrl.u32 %v3509, 7
        %v3511 = vsub.s32 0, %v3510
        %v3512 = vrot.slane %v3492, %v3511
        %v3514 = vmul.f32 %v3507, %v3512
        %v3516 = vlaneseq
        %v3517 = vshrl.u32 %v3516, 7
        %v3518 = vsub.s32 0, %v3517
        %v3519 = vrot.slane %v3494, %v3518
        %v3521 = vadd.f32 %v3514, %v3519
        %s3522 = scalar_lea.vmem %s13, 16
        %v3523 = vld [vmem:[%s3522] sm:$0xf]
        %v3524 = vld [vmem:[%s3522 + $0x4] sm:$0xf]
        %v3525 = vld [vmem:[%s3522 + $0x8] sm:$0xf]
        %v3526 = vld [vmem:[%s3522 + $0xc] sm:$0xf]
        %v3527 = vpack.c.bf16 %v3521, %v3521
        %s3528 = scalar_lea.vmem %s14, 1
        %v3529 = vld [vmem:[%s3528] sm:$0x1]
        %v3531 = vlaneseq
        %v3532 = vshrl.u32 %v3531, 7
        %v3533 = vsub.s32 0, %v3532
        %v3534 = vrot.slane %v3529, %v3533
        %v3540 = vunpack.c.l.b16 %v3523
        %v3541 = vunpack.c.l.b16 %v3524
        %v3542 = vunpack.c.l.b16 %v3525
        %v3543 = vunpack.c.l.b16 %v3526
        %v3544 = vpack.c.b16 %v3541, %v3540
        %v3545 = vpack.c.b16 %v3543, %v3542
        %v3549 = vsel %vm1381, %v3527, 0
        %3551 = vmatprep.subr.bf16.mxu0 0
        %3552 = vmatpush1.bf16.msra.mxu0 0
        %3553 = vmatprep.subr.bf16.mxu0 0
        %3554 = vmatpush1.bf16.msra.mxu0 0
        %3555 = vmatprep.subr.bf16.mxu0 0
        %3556 = vmatpush1.bf16.msra.mxu0 0
        %3557 = vmatprep.subr.bf16.mxu0 0
        %3558 = vmatpush1.bf16.msra.mxu0 0
        %3559 = vmatprep.subr.bf16.mxu0 0
        %3560 = vmatpush1.bf16.msra.mxu0 0
        %3561 = vmatprep.subr.bf16.mxu0 0
        %3562 = vmatpush1.bf16.msra.mxu0 0
        %3563 = vmatprep.subr.bf16.mxu0 0
        %3564 = vmatpush1.bf16.msra.mxu0 %v3545
        %3565 = vmatprep.subr.bf16.mxu0 0
        %3566 = vmatpush1.bf16.msra.mxu0 %v3544
        %3567 = vmatprep.subr.bf16.mxu0 0
        %3568 = vmatpush2.bf16.msra.mxu0 0
        %3569 = vmatprep.subr.bf16.mxu0 0
        %3570 = vmatpush2.bf16.msra.mxu0 0
        %3571 = vmatprep.subr.bf16.mxu0 0
        %3572 = vmatpush2.bf16.msra.mxu0 0
        %3573 = vmatprep.subr.bf16.mxu0 0
        %3574 = vmatpush2.bf16.msra.mxu0 0
        %3575 = vmatprep.subr.bf16.mxu0 0
        %3576 = vmatpush2.bf16.msra.mxu0 0
        %3577 = vmatprep.subr.bf16.mxu0 0
        %3578 = vmatpush2.bf16.msra.mxu0 0
        %3579 = vmatprep.subr.bf16.mxu0 0
        %3580 = vmatpush2.bf16.msra.mxu0 0
        %3581 = vmatprep.subr.bf16.mxu0 0
        %3582 = vmatpush2.bf16.msra.mxu0 0
        %3583 = vmatprep.mubr.bf16.mxu0 0
        %3584 = vmatmul.mubr.bf16.gmra.mxu0 %v3549
        %v3585 = vpop.f32.mrf.mxu0
        %v3586 = vadd.f32 %v3534, %v3585
        %v3587 = vpop.f32.mrf.mxu0
        %v3588 = vpop.f32.mrf.mxu0
        %v3589 = vpop.f32.mrf.mxu0
        %3590 = vdwg.mxu0
        %v3591 = vmul.f32 %v3586, %v3586
        %v3592 = vmul.f32 %v3586, %v3591
        %v3593 = vmul.f32 %v3592, 0.044715
        %v3594 = vadd.f32 %v3586, %v3593
        %v3595 = vmul.f32 %v3594, 0.7978846
        %v3596 = vtanh.pop %v3595
        %v3597 = vadd.f32 %v3596, 1.0
        %v3598 = vmul.f32 %v3597, 0.5
        %v3599 = vmul.f32 %v3586, %v3598
        %s3600 = scalar_lea.vmem %s15, 64
        %v3601 = vld [vmem:[%s3600] sm:$0xf]
        %v3602 = vld [vmem:[%s3600 + $0x4] sm:$0xf]
        %v3603 = vld [vmem:[%s3600 + $0x8] sm:$0xf]
        %v3604 = vld [vmem:[%s3600 + $0xc] sm:$0xf]
        %v3605 = vld [vmem:[%s3600 + $0x10] sm:$0xf]
        %v3606 = vld [vmem:[%s3600 + $0x14] sm:$0xf]
        %v3607 = vld [vmem:[%s3600 + $0x18] sm:$0xf]
        %v3608 = vld [vmem:[%s3600 + $0x1c] sm:$0xf]
        %v3609 = vld [vmem:[%s3600 + $0x20] sm:$0xf]
        %v3610 = vld [vmem:[%s3600 + $0x24] sm:$0xf]
        %v3611 = vld [vmem:[%s3600 + $0x28] sm:$0xf]
        %v3612 = vld [vmem:[%s3600 + $0x2c] sm:$0xf]
        %v3613 = vld [vmem:[%s3600 + $0x30] sm:$0xf]
        %v3614 = vld [vmem:[%s3600 + $0x34] sm:$0xf]
        %v3615 = vld [vmem:[%s3600 + $0x38] sm:$0xf]
        %v3616 = vld [vmem:[%s3600 + $0x3c] sm:$0xf]
        %v3617 = vpack.c.bf16 %v3599, %v3599
        %v3634 = vunpack.c.l.b16 %v3601
        %v3635 = vunpack.c.l.b16 %v3602
        %v3636 = vunpack.c.l.b16 %v3603
        %v3637 = vunpack.c.l.b16 %v3604
        %v3638 = vunpack.c.l.b16 %v3605
        %v3639 = vunpack.c.l.b16 %v3606
        %v3640 = vunpack.c.l.b16 %v3607
        %v3641 = vunpack.c.l.b16 %v3608
        %v3642 = vunpack.c.l.b16 %v3609
        %v3643 = vunpack.c.l.b16 %v3610
        %v3644 = vunpack.c.l.b16 %v3611
        %v3645 = vunpack.c.l.b16 %v3612
        %v3646 = vunpack.c.l.b16 %v3613
        %v3647 = vunpack.c.l.b16 %v3614
        %v3648 = vunpack.c.l.b16 %v3615
        %v3649 = vunpack.c.l.b16 %v3616
        %v3650 = vpack.c.b16 %v3635, %v3634
        %v3651 = vpack.c.b16 %v3637, %v3636
        %v3652 = vpack.c.b16 %v3639, %v3638
        %v3653 = vpack.c.b16 %v3641, %v3640
        %v3654 = vpack.c.b16 %v3643, %v3642
        %v3655 = vpack.c.b16 %v3645, %v3644
        %v3656 = vpack.c.b16 %v3647, %v3646
        %v3657 = vpack.c.b16 %v3649, %v3648
        %3666 = vmatprep.subr.bf16.mxu0 0
        %3667 = vmatpush1.bf16.msra.mxu0 %v3657
        %3668 = vmatprep.subr.bf16.mxu0 0
        %3669 = vmatpush1.bf16.msra.mxu0 %v3656
        %3670 = vmatprep.subr.bf16.mxu0 0
        %3671 = vmatpush1.bf16.msra.mxu0 %v3655
        %3672 = vmatprep.subr.bf16.mxu0 0
        %3673 = vmatpush1.bf16.msra.mxu0 %v3654
        %3674 = vmatprep.subr.bf16.mxu0 0
        %3675 = vmatpush1.bf16.msra.mxu0 %v3653
        %3676 = vmatprep.subr.bf16.mxu0 0
        %3677 = vmatpush1.bf16.msra.mxu0 %v3652
        %3678 = vmatprep.subr.bf16.mxu0 0
        %3679 = vmatpush1.bf16.msra.mxu0 %v3651
        %3680 = vmatprep.subr.bf16.mxu0 0
        %3681 = vmatpush1.bf16.msra.mxu0 %v3650
        %3682 = vmatprep.subr.bf16.mxu0 0
        %3683 = vmatpush2.bf16.msra.mxu0 0
        %3684 = vmatprep.subr.bf16.mxu0 0
        %3685 = vmatpush2.bf16.msra.mxu0 0
        %3686 = vmatprep.subr.bf16.mxu0 0
        %3687 = vmatpush2.bf16.msra.mxu0 0
        %3688 = vmatprep.subr.bf16.mxu0 0
        %3689 = vmatpush2.bf16.msra.mxu0 0
        %3690 = vmatprep.subr.bf16.mxu0 0
        %3691 = vmatpush2.bf16.msra.mxu0 0
        %3692 = vmatprep.subr.bf16.mxu0 0
        %3693 = vmatpush2.bf16.msra.mxu0 0
        %3694 = vmatprep.subr.bf16.mxu0 0
        %3695 = vmatpush2.bf16.msra.mxu0 0
        %3696 = vmatprep.subr.bf16.mxu0 0
        %3697 = vmatpush2.bf16.msra.mxu0 0
        %3698 = vmatprep.mubr.bf16.mxu0 0
        %3699 = vmatmul.mubr.bf16.gmra.mxu0 %v3617
        %v3700 = vpop.f32.mrf.mxu0
        %v3701 = vadd.f32 0.0, %v3700
        %v3702 = vpop.f32.mrf.mxu0
        %v3703 = vpop.f32.mrf.mxu0
        %v3704 = vpop.f32.mrf.mxu0
        %3705 = vdwg.mxu0
        %v3706 = vadd.f32 %v3490, %v3701
        %s3707 = scalar_lea.vmem %s16, 1
        %v3708 = vld [vmem:[%s3707] sm:$0x1]
        %v3710 = vlaneseq
        %v3711 = vshrl.u32 %v3710, 7
        %v3712 = vsub.s32 0, %v3711
        %v3713 = vrot.slane %v3708, %v3712
        %v3715 = vadd.f32 %v3706, %v3713
        %v3716 = vmul.f32 %v3715, %v3715
        %v3717 = vsel %vm1328, %v3716, 0.0
        %3718 = vadd.xlane.f32.xlu0 %v3717
        %v3719 = vpop.xlane.xlu0 %3718
        %v3720 = vmax.f32 %v3719, 1e-24
        %v3721 = vrsqrt.pop %v3720
        %v3722 = vmul.f32 %v3715, %v3721
        %v3723 = vld [vmem:[%s17] sm:$0x1]
        %v3724 = vmul.f32 %v3723, %v3723
        %vm3725 = vcmask 253952
        %v3726 = vsel %vm3725, %v3724, 0.0
        %3727 = vadd.xlane.f32.xlu0 %v3726
        %v3728 = vpop.xlane.xlu0 %3727
        %v3729 = vmax.f32 %v3728, 1e-24
        %v3730 = vrsqrt.pop %v3729
        %v3731 = vmul.f32 %v3723, %v3730
        %v3733 = vlaneseq
        %v3734 = vshrl.u32 %v3733, 7
        %v3735 = vsub.s32 0, %v3734
        %v3736 = vrot.slane %v3731, %v3735
        %v3738 = vmul.f32 %v3722, %v3736
        %v3739 = vsel %vm1328, %v3738, 0.0
        %3740 = vadd.xlane.f32.xlu0 %v3739
        %v3741 = vpop.xlane.xlu0 %3740
        %v3742 = vmax.f32 %v3741, 0.0
        %v3743 = vmin.f32 %v3742, 1.0
        %v3744 = vmul.f32 %v3715, %v3743
        %v3745 = vld [vmem:[%s18] sm:$0xf]
        %v3746 = vld [vmem:[%s18 + $0x4] sm:$0xf]
        %v3747 = vld [vmem:[%s18 + $0x8] sm:$0xf]
        %v3748 = vld [vmem:[%s18 + $0xc] sm:$0xf]
        %v3749 = vpack.c.bf16 %v3744, %v3744
        %v3754 = vunpack.c.l.b16 %v3745
        %v3755 = vunpack.c.l.b16 %v3746
        %v3756 = vunpack.c.l.b16 %v3747
        %v3757 = vunpack.c.l.b16 %v3748
        %v3758 = vpack.c.b16 %v3755, %v3754
        %v3759 = vpack.c.b16 %v3757, %v3756
        %v3763 = vsel %vm1381, %v3749, 0
        %3765 = vmatprep.subr.bf16.mxu0 0
        %3766 = vmatpush1.bf16.msra.mxu0 0
        %3767 = vmatprep.subr.bf16.mxu0 0
        %3768 = vmatpush1.bf16.msra.mxu0 0
        %3769 = vmatprep.subr.bf16.mxu0 0
        %3770 = vmatpush1.bf16.msra.mxu0 0
        %3771 = vmatprep.subr.bf16.mxu0 0
        %3772 = vmatpush1.bf16.msra.mxu0 0
        %3773 = vmatprep.subr.bf16.mxu0 0
        %3774 = vmatpush1.bf16.msra.mxu0 0
        %3775 = vmatprep.subr.bf16.mxu0 0
        %3776 = vmatpush1.bf16.msra.mxu0 0
        %3777 = vmatprep.subr.bf16.mxu0 0
        %3778 = vmatpush1.bf16.msra.mxu0 %v3759
        %3779 = vmatprep.subr.bf16.mxu0 0
        %3780 = vmatpush1.bf16.msra.mxu0 %v3758
        %3781 = vmatprep.subr.bf16.mxu0 0
        %3782 = vmatpush2.bf16.msra.mxu0 0
        %3783 = vmatprep.subr.bf16.mxu0 0
        %3784 = vmatpush2.bf16.msra.mxu0 0
        %3785 = vmatprep.subr.bf16.mxu0 0
        %3786 = vmatpush2.bf16.msra.mxu0 0
        %3787 = vmatprep.subr.bf16.mxu0 0
        %3788 = vmatpush2.bf16.msra.mxu0 0
        %3789 = vmatprep.subr.bf16.mxu0 0
        %3790 = vmatpush2.bf16.msra.mxu0 0
        %3791 = vmatprep.subr.bf16.mxu0 0
        %3792 = vmatpush2.bf16.msra.mxu0 0
        %3793 = vmatprep.subr.bf16.mxu0 0
        %3794 = vmatpush2.bf16.msra.mxu0 0
        %3795 = vmatprep.subr.bf16.mxu0 0
        %3796 = vmatpush2.bf16.msra.mxu0 0
        %3797 = vmatprep.mubr.bf16.mxu0 0
        %3798 = vmatmul.mubr.bf16.gmra.mxu0 %v3763
        %v3799 = vpop.f32.mrf.mxu0
        %v3800 = vadd.f32 0.0, %v3799
        %v3801 = vpop.f32.mrf.mxu0
        %v3802 = vpop.f32.mrf.mxu0
        %v3803 = vpop.f32.mrf.mxu0
        %3804 = vdwg.mxu0
        %s3805 = scalar_lea.vmem %s19, 16
        %v3806 = vld [vmem:[%s3805] sm:$0xf]
        %v3807 = vld [vmem:[%s3805 + $0x4] sm:$0xf]
        %v3808 = vld [vmem:[%s3805 + $0x8] sm:$0xf]
        %v3809 = vld [vmem:[%s3805 + $0xc] sm:$0xf]
        %v3810 = vpack.c.bf16 %v3800, %v3800
        %v3815 = vunpack.c.l.b16 %v3806
        %v3816 = vunpack.c.l.b16 %v3807
        %v3817 = vunpack.c.l.b16 %v3808
        %v3818 = vunpack.c.l.b16 %v3809
        %v3819 = vpack.c.b16 %v3816, %v3815
        %v3820 = vpack.c.b16 %v3818, %v3817
        %v3824 = vsel %vm1381, %v3810, 0
        %3826 = vmatprep.subr.bf16.mxu0 0
        %3827 = vmatpush1.bf16.msra.mxu0 0
        %3828 = vmatprep.subr.bf16.mxu0 0
        %3829 = vmatpush1.bf16.msra.mxu0 0
        %3830 = vmatprep.subr.bf16.mxu0 0
        %3831 = vmatpush1.bf16.msra.mxu0 0
        %3832 = vmatprep.subr.bf16.mxu0 0
        %3833 = vmatpush1.bf16.msra.mxu0 0
        %3834 = vmatprep.subr.bf16.mxu0 0
        %3835 = vmatpush1.bf16.msra.mxu0 0
        %3836 = vmatprep.subr.bf16.mxu0 0
        %3837 = vmatpush1.bf16.msra.mxu0 0
        %3838 = vmatprep.subr.bf16.mxu0 0
        %3839 = vmatpush1.bf16.msra.mxu0 %v3820
        %3840 = vmatprep.subr.bf16.mxu0 0
        %3841 = vmatpush1.bf16.msra.mxu0 %v3819
        %3842 = vmatprep.subr.bf16.mxu0 0
        %3843 = vmatpush2.bf16.msra.mxu0 0
        %3844 = vmatprep.subr.bf16.mxu0 0
        %3845 = vmatpush2.bf16.msra.mxu0 0
        %3846 = vmatprep.subr.bf16.mxu0 0
        %3847 = vmatpush2.bf16.msra.mxu0 0
        %3848 = vmatprep.subr.bf16.mxu0 0
        %3849 = vmatpush2.bf16.msra.mxu0 0
        %3850 = vmatprep.subr.bf16.mxu0 0
        %3851 = vmatpush2.bf16.msra.mxu0 0
        %3852 = vmatprep.subr.bf16.mxu0 0
        %3853 = vmatpush2.bf16.msra.mxu0 0
        %3854 = vmatprep.subr.bf16.mxu0 0
        %3855 = vmatpush2.bf16.msra.mxu0 0
        %3856 = vmatprep.subr.bf16.mxu0 0
        %3857 = vmatpush2.bf16.msra.mxu0 0
        %3858 = vmatprep.mubr.bf16.mxu0 0
        %3859 = vmatmul.mubr.bf16.gmra.mxu0 %v3824
        %v3860 = vpop.f32.mrf.mxu0
        %v3861 = vadd.f32 0.0, %v3860
        %v3862 = vpop.f32.mrf.mxu0
        %v3863 = vpop.f32.mrf.mxu0
        %v3864 = vpop.f32.mrf.mxu0
        %3865 = vdwg.mxu0
        %v3866 = vld [vmem:[%s19] sm:$0xf]
        %v3867 = vld [vmem:[%s19 + $0x4] sm:$0xf]
        %v3868 = vld [vmem:[%s19 + $0x8] sm:$0xf]
        %v3869 = vld [vmem:[%s19 + $0xc] sm:$0xf]
        %v3870 = vpack.c.bf16 %v3861, %v3861
        %v3875 = vunpack.c.l.b16 %v3866
        %v3876 = vunpack.c.l.b16 %v3867
        %v3877 = vunpack.c.l.b16 %v3868
        %v3878 = vunpack.c.l.b16 %v3869
        %v3879 = vpack.c.b16 %v3876, %v3875
        %v3880 = vpack.c.b16 %v3878, %v3877
        %v3884 = vsel %vm1381, %v3870, 0
        %3886 = vmatprep.subr.bf16.mxu0 0
        %3887 = vmatpush1.bf16.msra.mxu0 0
        %3888 = vmatprep.subr.bf16.mxu0 0
        %3889 = vmatpush1.bf16.msra.mxu0 0
        %3890 = vmatprep.subr.bf16.mxu0 0
        %3891 = vmatpush1.bf16.msra.mxu0 0
        %3892 = vmatprep.subr.bf16.mxu0 0
        %3893 = vmatpush1.bf16.msra.mxu0 0
        %3894 = vmatprep.subr.bf16.mxu0 0
        %3895 = vmatpush1.bf16.msra.mxu0 0
        %3896 = vmatprep.subr.bf16.mxu0 0
        %3897 = vmatpush1.bf16.msra.mxu0 0
        %3898 = vmatprep.subr.bf16.mxu0 0
        %3899 = vmatpush1.bf16.msra.mxu0 %v3880
        %3900 = vmatprep.subr.bf16.mxu0 0
        %3901 = vmatpush1.bf16.msra.mxu0 %v3879
        %3902 = vmatprep.subr.bf16.mxu0 0
        %3903 = vmatpush2.bf16.msra.mxu0 0
        %3904 = vmatprep.subr.bf16.mxu0 0
        %3905 = vmatpush2.bf16.msra.mxu0 0
        %3906 = vmatprep.subr.bf16.mxu0 0
        %3907 = vmatpush2.bf16.msra.mxu0 0
        %3908 = vmatprep.subr.bf16.mxu0 0
        %3909 = vmatpush2.bf16.msra.mxu0 0
        %3910 = vmatprep.subr.bf16.mxu0 0
        %3911 = vmatpush2.bf16.msra.mxu0 0
        %3912 = vmatprep.subr.bf16.mxu0 0
        %3913 = vmatpush2.bf16.msra.mxu0 0
        %3914 = vmatprep.subr.bf16.mxu0 0
        %3915 = vmatpush2.bf16.msra.mxu0 0
        %3916 = vmatprep.subr.bf16.mxu0 0
        %3917 = vmatpush2.bf16.msra.mxu0 0
        %3918 = vmatprep.mubr.bf16.mxu0 0
        %3919 = vmatmul.mubr.bf16.gmra.mxu0 %v3884
        %v3920 = vpop.f32.mrf.mxu0
        %v3921 = vadd.f32 0.0, %v3920
        %v3922 = vpop.f32.mrf.mxu0
        %v3923 = vpop.f32.mrf.mxu0
        %v3924 = vpop.f32.mrf.mxu0
        %3925 = vdwg.mxu0
        %3927 = vrot.lane.b32.xlu0 %v3921, 64
        %v3928 = vpop.permute.xlu0 %3927
        %v3930 = vadd.f32 %v1420, %v3928
        %3932 = vrot.lane.b32.xlu0 %v3930, 64
        %v3933 = vpop.permute.xlu0 %3932
        %v3934 = vsel %vm1524, %v3933, 0
        %3936 = vmatprep.subr.mxu0 0.0
        %3937 = vmatpush1.msra.mxu0 0.0
        %3938 = vmatprep.subr.mxu0 0.0
        %3939 = vmatpush1.msra.mxu0 0.0
        %3940 = vmatprep.subr.mxu0 0.0
        %3941 = vmatpush1.msra.mxu0 0.0
        %3942 = vmatprep.subr.mxu0 0.0
        %3943 = vmatpush1.msra.mxu0 0.0
        %3944 = vmatprep.subr.mxu0 0.0
        %3945 = vmatpush1.msra.mxu0 0.0
        %3946 = vmatprep.subr.mxu0 0.0
        %3947 = vmatpush1.msra.mxu0 0.0
        %3948 = vmatprep.subr.mxu0 0.0
        %3949 = vmatpush1.msra.mxu0 0.0
        %3950 = vmatprep.subr.mxu0 0.0
        %3951 = vmatpush1.msra.mxu0 0.0
        %3952 = vmatprep.subr.mxu0 0.0
        %3953 = vmatpush1.msra.mxu0 0.0
        %3954 = vmatprep.subr.mxu0 0.0
        %3955 = vmatpush1.msra.mxu0 0.0
        %3956 = vmatprep.subr.mxu0 0.0
        %3957 = vmatpush1.msra.mxu0 0.0
        %3958 = vmatprep.subr.mxu0 0.0
        %3959 = vmatpush1.msra.mxu0 0.0
        %3960 = vmatprep.subr.mxu0 0.0
        %3961 = vmatpush1.msra.mxu0 0.0
        %3962 = vmatprep.subr.mxu0 0.0
        %3963 = vmatpush1.msra.mxu0 0.0
        %3964 = vmatprep.subr.mxu0 0.0
        %3965 = vmatpush1.msra.mxu0 0.0
        %3966 = vmatprep.subr.mxu0 0.0
        %3967 = vmatpush1.msra.mxu0 %v3934
        %3968 = vmatprep.subr.mxu0 0.0
        %3969 = vmatpush2.msra.mxu0 0.0
        %3970 = vmatprep.subr.mxu0 0.0
        %3971 = vmatpush2.msra.mxu0 0.0
        %3972 = vmatprep.subr.mxu0 0.0
        %3973 = vmatpush2.msra.mxu0 0.0
        %3974 = vmatprep.subr.mxu0 0.0
        %3975 = vmatpush2.msra.mxu0 0.0
        %3976 = vmatprep.subr.mxu0 0.0
        %3977 = vmatpush2.msra.mxu0 0.0
        %3978 = vmatprep.subr.mxu0 0.0
        %3979 = vmatpush2.msra.mxu0 0.0
        %3980 = vmatprep.subr.mxu0 0.0
        %3981 = vmatpush2.msra.mxu0 0.0
        %3982 = vmatprep.subr.mxu0 0.0
        %3983 = vmatpush2.msra.mxu0 0.0
        %3984 = vmatprep.subr.mxu0 0.0
        %3985 = vmatpush2.msra.mxu0 0.0
        %3986 = vmatprep.subr.mxu0 0.0
        %3987 = vmatpush2.msra.mxu0 0.0
        %3988 = vmatprep.subr.mxu0 0.0
        %3989 = vmatpush2.msra.mxu0 0.0
        %3990 = vmatprep.subr.mxu0 0.0
        %3991 = vmatpush2.msra.mxu0 0.0
        %3992 = vmatprep.subr.mxu0 0.0
        %3993 = vmatpush2.msra.mxu0 0.0
        %3994 = vmatprep.subr.mxu0 0.0
        %3995 = vmatpush2.msra.mxu0 0.0
        %3996 = vmatprep.subr.mxu0 0.0
        %3997 = vmatpush2.msra.mxu0 0.0
        %3998 = vmatprep.subr.mxu0 0.0
        %3999 = vmatpush2.msra.mxu0 0.0
        %4000 = vmatprep.mubr.f32.mxu0 0.0
        %4001 = vmatmul.mubr.f32.gmra.mxu0 %v1522
        %v4002 = vpop.f32.mrf.mxu0
        %v4003 = vadd.f32 0.0, %v4002
        %v4004 = vpop.f32.mrf.mxu0
        %4005 = vdwg.mxu0
        %v4006 = vmul.f32 %v4003, %v1597
        %v4007 = vpack.c.bf16 %v4006, %v4006
        %4008 = vrot.lane.b32.xlu0 %v3930, 56
        %v4009 = vpop.permute.xlu0 %4008
        %v4010 = vsel %vm1524, %v4009, 0
        %4012 = vmatprep.subr.mxu0 0.0
        %4013 = vmatpush1.msra.mxu0 0.0
        %4014 = vmatprep.subr.mxu0 0.0
        %4015 = vmatpush1.msra.mxu0 0.0
        %4016 = vmatprep.subr.mxu0 0.0
        %4017 = vmatpush1.msra.mxu0 0.0
        %4018 = vmatprep.subr.mxu0 0.0
        %4019 = vmatpush1.msra.mxu0 0.0
        %4020 = vmatprep.subr.mxu0 0.0
        %4021 = vmatpush1.msra.mxu0 0.0
        %4022 = vmatprep.subr.mxu0 0.0
        %4023 = vmatpush1.msra.mxu0 0.0
        %4024 = vmatprep.subr.mxu0 0.0
        %4025 = vmatpush1.msra.mxu0 0.0
        %4026 = vmatprep.subr.mxu0 0.0
        %4027 = vmatpush1.msra.mxu0 0.0
        %4028 = vmatprep.subr.mxu0 0.0
        %4029 = vmatpush1.msra.mxu0 0.0
        %4030 = vmatprep.subr.mxu0 0.0
        %4031 = vmatpush1.msra.mxu0 0.0
        %4032 = vmatprep.subr.mxu0 0.0
        %4033 = vmatpush1.msra.mxu0 0.0
        %4034 = vmatprep.subr.mxu0 0.0
        %4035 = vmatpush1.msra.mxu0 0.0
        %4036 = vmatprep.subr.mxu0 0.0
        %4037 = vmatpush1.msra.mxu0 0.0
        %4038 = vmatprep.subr.mxu0 0.0
        %4039 = vmatpush1.msra.mxu0 0.0
        %4040 = vmatprep.subr.mxu0 0.0
        %4041 = vmatpush1.msra.mxu0 0.0
        %4042 = vmatprep.subr.mxu0 0.0
        %4043 = vmatpush1.msra.mxu0 %v4010
        %4044 = vmatprep.subr.mxu0 0.0
        %4045 = vmatpush2.msra.mxu0 0.0
        %4046 = vmatprep.subr.mxu0 0.0
        %4047 = vmatpush2.msra.mxu0 0.0
        %4048 = vmatprep.subr.mxu0 0.0
        %4049 = vmatpush2.msra.mxu0 0.0
        %4050 = vmatprep.subr.mxu0 0.0
        %4051 = vmatpush2.msra.mxu0 0.0
        %4052 = vmatprep.subr.mxu0 0.0
        %4053 = vmatpush2.msra.mxu0 0.0
        %4054 = vmatprep.subr.mxu0 0.0
        %4055 = vmatpush2.msra.mxu0 0.0
        %4056 = vmatprep.subr.mxu0 0.0
        %4057 = vmatpush2.msra.mxu0 0.0
        %4058 = vmatprep.subr.mxu0 0.0
        %4059 = vmatpush2.msra.mxu0 0.0
        %4060 = vmatprep.subr.mxu0 0.0
        %4061 = vmatpush2.msra.mxu0 0.0
        %4062 = vmatprep.subr.mxu0 0.0
        %4063 = vmatpush2.msra.mxu0 0.0
        %4064 = vmatprep.subr.mxu0 0.0
        %4065 = vmatpush2.msra.mxu0 0.0
        %4066 = vmatprep.subr.mxu0 0.0
        %4067 = vmatpush2.msra.mxu0 0.0
        %4068 = vmatprep.subr.mxu0 0.0
        %4069 = vmatpush2.msra.mxu0 0.0
        %4070 = vmatprep.subr.mxu0 0.0
        %4071 = vmatpush2.msra.mxu0 0.0
        %4072 = vmatprep.subr.mxu0 0.0
        %4073 = vmatpush2.msra.mxu0 0.0
        %4074 = vmatprep.subr.mxu0 0.0
        %4075 = vmatpush2.msra.mxu0 0.0
        %4076 = vmatprep.mubr.f32.mxu0 0.0
        %4077 = vmatmul.mubr.f32.gmra.mxu0 %v1691
        %v4078 = vpop.f32.mrf.mxu0
        %v4079 = vadd.f32 0.0, %v4078
        %v4080 = vpop.f32.mrf.mxu0
        %4081 = vdwg.mxu0
        %v4082 = vmul.f32 %v4079, %v1765
        %v4083 = vpack.c.bf16 %v4082, %v4082
        %v4085 = vsel %vm1432, %v4083, 0
        %4087 = vmatprep.subr.bf16.mxu0 0
        %4088 = vmatpush1.bf16.msra.mxu0 0
        %4089 = vmatprep.subr.bf16.mxu0 0
        %4090 = vmatpush1.bf16.msra.mxu0 0
        %4091 = vmatprep.subr.bf16.mxu0 0
        %4092 = vmatpush1.bf16.msra.mxu0 0
        %4093 = vmatprep.subr.bf16.mxu0 0
        %4094 = vmatpush1.bf16.msra.mxu0 0
        %4095 = vmatprep.subr.bf16.mxu0 0
        %4096 = vmatpush1.bf16.msra.mxu0 0
        %4097 = vmatprep.subr.bf16.mxu0 0
        %4098 = vmatpush1.bf16.msra.mxu0 0
        %4099 = vmatprep.subr.bf16.mxu0 0
        %4100 = vmatpush1.bf16.msra.mxu0 0
        %4101 = vmatprep.subr.bf16.mxu0 0
        %4102 = vmatpush1.bf16.msra.mxu0 %v1773
        %4103 = vmatprep.subr.bf16.mxu0 0
        %4104 = vmatpush2.bf16.msra.mxu0 0
        %4105 = vmatprep.subr.bf16.mxu0 0
        %4106 = vmatpush2.bf16.msra.mxu0 0
        %4107 = vmatprep.subr.bf16.mxu0 0
        %4108 = vmatpush2.bf16.msra.mxu0 0
        %4109 = vmatprep.subr.bf16.mxu0 0
        %4110 = vmatpush2.bf16.msra.mxu0 0
        %4111 = vmatprep.subr.bf16.mxu0 0
        %4112 = vmatpush2.bf16.msra.mxu0 0
        %4113 = vmatprep.subr.bf16.mxu0 0
        %4114 = vmatpush2.bf16.msra.mxu0 0
        %4115 = vmatprep.subr.bf16.mxu0 0
        %4116 = vmatpush2.bf16.msra.mxu0 0
        %4117 = vmatprep.subr.bf16.mxu0 0
        %4118 = vmatpush2.bf16.msra.mxu0 0
        %4119 = vmatprep.mubr.bf16.mxu0 0
        %4120 = vmatmul.mubr.bf16.gmra.mxu0 %v4085
        %v4121 = vpop.f32.mrf.mxu0
        %v4122 = vadd.f32 0.0, %v4121
        %v4123 = vpop.f32.mrf.mxu0
        %v4124 = vpop.f32.mrf.mxu0
        %v4125 = vpop.f32.mrf.mxu0
        %4126 = vdwg.mxu0
        %v4128 = vsel %vm1432, %v4007, 0
        %4130 = vmatprep.subr.bf16.mxu0 0
        %4131 = vmatpush1.bf16.msra.mxu0 0
        %4132 = vmatprep.subr.bf16.mxu0 0
        %4133 = vmatpush1.bf16.msra.mxu0 0
        %4134 = vmatprep.subr.bf16.mxu0 0
        %4135 = vmatpush1.bf16.msra.mxu0 0
        %4136 = vmatprep.subr.bf16.mxu0 0
        %4137 = vmatpush1.bf16.msra.mxu0 0
        %4138 = vmatprep.subr.bf16.mxu0 0
        %4139 = vmatpush1.bf16.msra.mxu0 0
        %4140 = vmatprep.subr.bf16.mxu0 0
        %4141 = vmatpush1.bf16.msra.mxu0 0
        %4142 = vmatprep.subr.bf16.mxu0 0
        %4143 = vmatpush1.bf16.msra.mxu0 0
        %4144 = vmatprep.subr.bf16.mxu0 0
        %4145 = vmatpush1.bf16.msra.mxu0 %v1819
        %4146 = vmatprep.subr.bf16.mxu0 0
        %4147 = vmatpush2.bf16.msra.mxu0 0
        %4148 = vmatprep.subr.bf16.mxu0 0
        %4149 = vmatpush2.bf16.msra.mxu0 0
        %4150 = vmatprep.subr.bf16.mxu0 0
        %4151 = vmatpush2.bf16.msra.mxu0 0
        %4152 = vmatprep.subr.bf16.mxu0 0
        %4153 = vmatpush2.bf16.msra.mxu0 0
        %4154 = vmatprep.subr.bf16.mxu0 0
        %4155 = vmatpush2.bf16.msra.mxu0 0
        %4156 = vmatprep.subr.bf16.mxu0 0
        %4157 = vmatpush2.bf16.msra.mxu0 0
        %4158 = vmatprep.subr.bf16.mxu0 0
        %4159 = vmatpush2.bf16.msra.mxu0 0
        %4160 = vmatprep.subr.bf16.mxu0 0
        %4161 = vmatpush2.bf16.msra.mxu0 0
        %4162 = vmatprep.mubr.bf16.mxu0 0
        %4163 = vmatmul.mubr.bf16.gmra.mxu0 %v4128
        %v4164 = vpop.f32.mrf.mxu0
        %v4165 = vadd.f32 %v4122, %v4164
        %v4166 = vpop.f32.mrf.mxu0
        %v4167 = vpop.f32.mrf.mxu0
        %v4168 = vpop.f32.mrf.mxu0
        %4169 = vdwg.mxu0
        %4170 = vrot.lane.b32.xlu0 %v3930, 48
        %v4171 = vpop.permute.xlu0 %4170
        %v4172 = vsel %vm1524, %v4171, 0
        %4174 = vmatprep.subr.mxu0 0.0
        %4175 = vmatpush1.msra.mxu0 0.0
        %4176 = vmatprep.subr.mxu0 0.0
        %4177 = vmatpush1.msra.mxu0 0.0
        %4178 = vmatprep.subr.mxu0 0.0
        %4179 = vmatpush1.msra.mxu0 0.0
        %4180 = vmatprep.subr.mxu0 0.0
        %4181 = vmatpush1.msra.mxu0 0.0
        %4182 = vmatprep.subr.mxu0 0.0
        %4183 = vmatpush1.msra.mxu0 0.0
        %4184 = vmatprep.subr.mxu0 0.0
        %4185 = vmatpush1.msra.mxu0 0.0
        %4186 = vmatprep.subr.mxu0 0.0
        %4187 = vmatpush1.msra.mxu0 0.0
        %4188 = vmatprep.subr.mxu0 0.0
        %4189 = vmatpush1.msra.mxu0 0.0
        %4190 = vmatprep.subr.mxu0 0.0
        %4191 = vmatpush1.msra.mxu0 0.0
        %4192 = vmatprep.subr.mxu0 0.0
        %4193 = vmatpush1.msra.mxu0 0.0
        %4194 = vmatprep.subr.mxu0 0.0
        %4195 = vmatpush1.msra.mxu0 0.0
        %4196 = vmatprep.subr.mxu0 0.0
        %4197 = vmatpush1.msra.mxu0 0.0
        %4198 = vmatprep.subr.mxu0 0.0
        %4199 = vmatpush1.msra.mxu0 0.0
        %4200 = vmatprep.subr.mxu0 0.0
        %4201 = vmatpush1.msra.mxu0 0.0
        %4202 = vmatprep.subr.mxu0 0.0
        %4203 = vmatpush1.msra.mxu0 0.0
        %4204 = vmatprep.subr.mxu0 0.0
        %4205 = vmatpush1.msra.mxu0 %v4172
        %4206 = vmatprep.subr.mxu0 0.0
        %4207 = vmatpush2.msra.mxu0 0.0
        %4208 = vmatprep.subr.mxu0 0.0
        %4209 = vmatpush2.msra.mxu0 0.0
        %4210 = vmatprep.subr.mxu0 0.0
        %4211 = vmatpush2.msra.mxu0 0.0
        %4212 = vmatprep.subr.mxu0 0.0
        %4213 = vmatpush2.msra.mxu0 0.0
        %4214 = vmatprep.subr.mxu0 0.0
        %4215 = vmatpush2.msra.mxu0 0.0
        %4216 = vmatprep.subr.mxu0 0.0
        %4217 = vmatpush2.msra.mxu0 0.0
        %4218 = vmatprep.subr.mxu0 0.0
        %4219 = vmatpush2.msra.mxu0 0.0
        %4220 = vmatprep.subr.mxu0 0.0
        %4221 = vmatpush2.msra.mxu0 0.0
        %4222 = vmatprep.subr.mxu0 0.0
        %4223 = vmatpush2.msra.mxu0 0.0
        %4224 = vmatprep.subr.mxu0 0.0
        %4225 = vmatpush2.msra.mxu0 0.0
        %4226 = vmatprep.subr.mxu0 0.0
        %4227 = vmatpush2.msra.mxu0 0.0
        %4228 = vmatprep.subr.mxu0 0.0
        %4229 = vmatpush2.msra.mxu0 0.0
        %4230 = vmatprep.subr.mxu0 0.0
        %4231 = vmatpush2.msra.mxu0 0.0
        %4232 = vmatprep.subr.mxu0 0.0
        %4233 = vmatpush2.msra.mxu0 0.0
        %4234 = vmatprep.subr.mxu0 0.0
        %4235 = vmatpush2.msra.mxu0 0.0
        %4236 = vmatprep.subr.mxu0 0.0
        %4237 = vmatpush2.msra.mxu0 0.0
        %4238 = vmatprep.mubr.f32.mxu0 0.0
        %4239 = vmatmul.mubr.f32.gmra.mxu0 %v1952
        %v4240 = vpop.f32.mrf.mxu0
        %v4241 = vadd.f32 0.0, %v4240
        %v4242 = vpop.f32.mrf.mxu0
        %4243 = vdwg.mxu0
        %v4244 = vmul.f32 %v4241, %v2026
        %v4245 = vpack.c.bf16 %v4244, %v4244
        %v4247 = vsel %vm1432, %v4245, 0
        %4249 = vmatprep.subr.bf16.mxu0 0
        %4250 = vmatpush1.bf16.msra.mxu0 0
        %4251 = vmatprep.subr.bf16.mxu0 0
        %4252 = vmatpush1.bf16.msra.mxu0 0
        %4253 = vmatprep.subr.bf16.mxu0 0
        %4254 = vmatpush1.bf16.msra.mxu0 0
        %4255 = vmatprep.subr.bf16.mxu0 0
        %4256 = vmatpush1.bf16.msra.mxu0 0
        %4257 = vmatprep.subr.bf16.mxu0 0
        %4258 = vmatpush1.bf16.msra.mxu0 0
        %4259 = vmatprep.subr.bf16.mxu0 0
        %4260 = vmatpush1.bf16.msra.mxu0 0
        %4261 = vmatprep.subr.bf16.mxu0 0
        %4262 = vmatpush1.bf16.msra.mxu0 0
        %4263 = vmatprep.subr.bf16.mxu0 0
        %4264 = vmatpush1.bf16.msra.mxu0 %v2033
        %4265 = vmatprep.subr.bf16.mxu0 0
        %4266 = vmatpush2.bf16.msra.mxu0 0
        %4267 = vmatprep.subr.bf16.mxu0 0
        %4268 = vmatpush2.bf16.msra.mxu0 0
        %4269 = vmatprep.subr.bf16.mxu0 0
        %4270 = vmatpush2.bf16.msra.mxu0 0
        %4271 = vmatprep.subr.bf16.mxu0 0
        %4272 = vmatpush2.bf16.msra.mxu0 0
        %4273 = vmatprep.subr.bf16.mxu0 0
        %4274 = vmatpush2.bf16.msra.mxu0 0
        %4275 = vmatprep.subr.bf16.mxu0 0
        %4276 = vmatpush2.bf16.msra.mxu0 0
        %4277 = vmatprep.subr.bf16.mxu0 0
        %4278 = vmatpush2.bf16.msra.mxu0 0
        %4279 = vmatprep.subr.bf16.mxu0 0
        %4280 = vmatpush2.bf16.msra.mxu0 0
        %4281 = vmatprep.mubr.bf16.mxu0 0
        %4282 = vmatmul.mubr.bf16.gmra.mxu0 %v4247
        %v4283 = vpop.f32.mrf.mxu0
        %v4284 = vadd.f32 0.0, %v4283
        %v4285 = vpop.f32.mrf.mxu0
        %v4286 = vpop.f32.mrf.mxu0
        %v4287 = vpop.f32.mrf.mxu0
        %4288 = vdwg.mxu0
        %v4289 = vadd.f32 %v4165, %v4284
        %4290 = vrot.lane.b32.xlu0 %v3930, 40
        %v4291 = vpop.permute.xlu0 %4290
        %v4292 = vsel %vm1524, %v4291, 0
        %4294 = vmatprep.subr.mxu0 0.0
        %4295 = vmatpush1.msra.mxu0 0.0
        %4296 = vmatprep.subr.mxu0 0.0
        %4297 = vmatpush1.msra.mxu0 0.0
        %4298 = vmatprep.subr.mxu0 0.0
        %4299 = vmatpush1.msra.mxu0 0.0
        %4300 = vmatprep.subr.mxu0 0.0
        %4301 = vmatpush1.msra.mxu0 0.0
        %4302 = vmatprep.subr.mxu0 0.0
        %4303 = vmatpush1.msra.mxu0 0.0
        %4304 = vmatprep.subr.mxu0 0.0
        %4305 = vmatpush1.msra.mxu0 0.0
        %4306 = vmatprep.subr.mxu0 0.0
        %4307 = vmatpush1.msra.mxu0 0.0
        %4308 = vmatprep.subr.mxu0 0.0
        %4309 = vmatpush1.msra.mxu0 0.0
        %4310 = vmatprep.subr.mxu0 0.0
        %4311 = vmatpush1.msra.mxu0 0.0
        %4312 = vmatprep.subr.mxu0 0.0
        %4313 = vmatpush1.msra.mxu0 0.0
        %4314 = vmatprep.subr.mxu0 0.0
        %4315 = vmatpush1.msra.mxu0 0.0
        %4316 = vmatprep.subr.mxu0 0.0
        %4317 = vmatpush1.msra.mxu0 0.0
        %4318 = vmatprep.subr.mxu0 0.0
        %4319 = vmatpush1.msra.mxu0 0.0
        %4320 = vmatprep.subr.mxu0 0.0
        %4321 = vmatpush1.msra.mxu0 0.0
        %4322 = vmatprep.subr.mxu0 0.0
        %4323 = vmatpush1.msra.mxu0 0.0
        %4324 = vmatprep.subr.mxu0 0.0
        %4325 = vmatpush1.msra.mxu0 %v4292
        %4326 = vmatprep.subr.mxu0 0.0
        %4327 = vmatpush2.msra.mxu0 0.0
        %4328 = vmatprep.subr.mxu0 0.0
        %4329 = vmatpush2.msra.mxu0 0.0
        %4330 = vmatprep.subr.mxu0 0.0
        %4331 = vmatpush2.msra.mxu0 0.0
        %4332 = vmatprep.subr.mxu0 0.0
        %4333 = vmatpush2.msra.mxu0 0.0
        %4334 = vmatprep.subr.mxu0 0.0
        %4335 = vmatpush2.msra.mxu0 0.0
        %4336 = vmatprep.subr.mxu0 0.0
        %4337 = vmatpush2.msra.mxu0 0.0
        %4338 = vmatprep.subr.mxu0 0.0
        %4339 = vmatpush2.msra.mxu0 0.0
        %4340 = vmatprep.subr.mxu0 0.0
        %4341 = vmatpush2.msra.mxu0 0.0
        %4342 = vmatprep.subr.mxu0 0.0
        %4343 = vmatpush2.msra.mxu0 0.0
        %4344 = vmatprep.subr.mxu0 0.0
        %4345 = vmatpush2.msra.mxu0 0.0
        %4346 = vmatprep.subr.mxu0 0.0
        %4347 = vmatpush2.msra.mxu0 0.0
        %4348 = vmatprep.subr.mxu0 0.0
        %4349 = vmatpush2.msra.mxu0 0.0
        %4350 = vmatprep.subr.mxu0 0.0
        %4351 = vmatpush2.msra.mxu0 0.0
        %4352 = vmatprep.subr.mxu0 0.0
        %4353 = vmatpush2.msra.mxu0 0.0
        %4354 = vmatprep.subr.mxu0 0.0
        %4355 = vmatpush2.msra.mxu0 0.0
        %4356 = vmatprep.subr.mxu0 0.0
        %4357 = vmatpush2.msra.mxu0 0.0
        %4358 = vmatprep.mubr.f32.mxu0 0.0
        %4359 = vmatmul.mubr.f32.gmra.mxu0 %v2167
        %v4360 = vpop.f32.mrf.mxu0
        %v4361 = vadd.f32 0.0, %v4360
        %v4362 = vpop.f32.mrf.mxu0
        %4363 = vdwg.mxu0
        %v4364 = vmul.f32 %v4361, %v2241
        %v4365 = vpack.c.bf16 %v4364, %v4364
        %v4367 = vsel %vm1432, %v4365, 0
        %4369 = vmatprep.subr.bf16.mxu0 0
        %4370 = vmatpush1.bf16.msra.mxu0 0
        %4371 = vmatprep.subr.bf16.mxu0 0
        %4372 = vmatpush1.bf16.msra.mxu0 0
        %4373 = vmatprep.subr.bf16.mxu0 0
        %4374 = vmatpush1.bf16.msra.mxu0 0
        %4375 = vmatprep.subr.bf16.mxu0 0
        %4376 = vmatpush1.bf16.msra.mxu0 0
        %4377 = vmatprep.subr.bf16.mxu0 0
        %4378 = vmatpush1.bf16.msra.mxu0 0
        %4379 = vmatprep.subr.bf16.mxu0 0
        %4380 = vmatpush1.bf16.msra.mxu0 0
        %4381 = vmatprep.subr.bf16.mxu0 0
        %4382 = vmatpush1.bf16.msra.mxu0 0
        %4383 = vmatprep.subr.bf16.mxu0 0
        %4384 = vmatpush1.bf16.msra.mxu0 %v2248
        %4385 = vmatprep.subr.bf16.mxu0 0
        %4386 = vmatpush2.bf16.msra.mxu0 0
        %4387 = vmatprep.subr.bf16.mxu0 0
        %4388 = vmatpush2.bf16.msra.mxu0 0
        %4389 = vmatprep.subr.bf16.mxu0 0
        %4390 = vmatpush2.bf16.msra.mxu0 0
        %4391 = vmatprep.subr.bf16.mxu0 0
        %4392 = vmatpush2.bf16.msra.mxu0 0
        %4393 = vmatprep.subr.bf16.mxu0 0
        %4394 = vmatpush2.bf16.msra.mxu0 0
        %4395 = vmatprep.subr.bf16.mxu0 0
        %4396 = vmatpush2.bf16.msra.mxu0 0
        %4397 = vmatprep.subr.bf16.mxu0 0
        %4398 = vmatpush2.bf16.msra.mxu0 0
        %4399 = vmatprep.subr.bf16.mxu0 0
        %4400 = vmatpush2.bf16.msra.mxu0 0
        %4401 = vmatprep.mubr.bf16.mxu0 0
        %4402 = vmatmul.mubr.bf16.gmra.mxu0 %v4367
        %v4403 = vpop.f32.mrf.mxu0
        %v4404 = vadd.f32 0.0, %v4403
        %v4405 = vpop.f32.mrf.mxu0
        %v4406 = vpop.f32.mrf.mxu0
        %v4407 = vpop.f32.mrf.mxu0
        %4408 = vdwg.mxu0
        %v4409 = vadd.f32 %v4289, %v4404
        %v4410 = vadd.f32 %v4409, %v2296
        %v4411 = vadd.f32 %v1325, %v4410
        %v4412 = vsel %vm1328, %v4411, 0.0
        %4413 = vadd.xlane.f32.xlu0 %v4412
        %v4414 = vpop.xlane.xlu0 %4413
        %v4415 = vmul.f32 %v4414, %v1332
        %v4416 = vsub.f32 %v4411, %v4415
        %v4417 = vmul.f32 %v4416, %v4416
        %v4418 = vsel %vm1328, %v4417, 0.0
        %4419 = vadd.xlane.f32.xlu0 %v4418
        %v4420 = vpop.xlane.xlu0 %4419
        %v4421 = vmul.f32 %v4420, %v1332
        %v4422 = vadd.f32 %v4421, 1e-06
        %v4423 = vrsqrt.pop %v4422
        %v4424 = vmul.f32 %v4416, %v4423
        %v4425 = vmul.f32 %v4424, %v2319
        %v4426 = vadd.f32 %v4425, %v2326
        %v4427 = vpack.c.bf16 %v4426, %v4426
        %v4429 = vsel %vm1381, %v4427, 0
        %4431 = vmatprep.subr.bf16.mxu0 0
        %4432 = vmatpush1.bf16.msra.mxu0 0
        %4433 = vmatprep.subr.bf16.mxu0 0
        %4434 = vmatpush1.bf16.msra.mxu0 0
        %4435 = vmatprep.subr.bf16.mxu0 0
        %4436 = vmatpush1.bf16.msra.mxu0 0
        %4437 = vmatprep.subr.bf16.mxu0 0
        %4438 = vmatpush1.bf16.msra.mxu0 0
        %4439 = vmatprep.subr.bf16.mxu0 0
        %4440 = vmatpush1.bf16.msra.mxu0 0
        %4441 = vmatprep.subr.bf16.mxu0 0
        %4442 = vmatpush1.bf16.msra.mxu0 0
        %4443 = vmatprep.subr.bf16.mxu0 0
        %4444 = vmatpush1.bf16.msra.mxu0 %v2350
        %4445 = vmatprep.subr.bf16.mxu0 0
        %4446 = vmatpush1.bf16.msra.mxu0 %v2349
        %4447 = vmatprep.subr.bf16.mxu0 0
        %4448 = vmatpush2.bf16.msra.mxu0 0
        %4449 = vmatprep.subr.bf16.mxu0 0
        %4450 = vmatpush2.bf16.msra.mxu0 0
        %4451 = vmatprep.subr.bf16.mxu0 0
        %4452 = vmatpush2.bf16.msra.mxu0 0
        %4453 = vmatprep.subr.bf16.mxu0 0
        %4454 = vmatpush2.bf16.msra.mxu0 0
        %4455 = vmatprep.subr.bf16.mxu0 0
        %4456 = vmatpush2.bf16.msra.mxu0 0
        %4457 = vmatprep.subr.bf16.mxu0 0
        %4458 = vmatpush2.bf16.msra.mxu0 0
        %4459 = vmatprep.subr.bf16.mxu0 0
        %4460 = vmatpush2.bf16.msra.mxu0 0
        %4461 = vmatprep.subr.bf16.mxu0 0
        %4462 = vmatpush2.bf16.msra.mxu0 0
        %4463 = vmatprep.mubr.bf16.mxu0 0
        %4464 = vmatmul.mubr.bf16.gmra.mxu0 %v4429
        %v4465 = vpop.f32.mrf.mxu0
        %v4466 = vadd.f32 %v2339, %v4465
        %v4467 = vpop.f32.mrf.mxu0
        %v4468 = vpop.f32.mrf.mxu0
        %v4469 = vpop.f32.mrf.mxu0
        %4470 = vdwg.mxu0
        %v4471 = vmul.f32 %v4466, %v4466
        %v4472 = vmul.f32 %v4466, %v4471
        %v4473 = vmul.f32 %v4472, 0.044715
        %v4474 = vadd.f32 %v4466, %v4473
        %v4475 = vmul.f32 %v4474, 0.7978846
        %v4476 = vtanh.pop %v4475
        %v4477 = vadd.f32 %v4476, 1.0
        %v4478 = vmul.f32 %v4477, 0.5
        %v4479 = vmul.f32 %v4466, %v4478
        %v4480 = vpack.c.bf16 %v4479, %v4479
        %4481 = vmatprep.subr.bf16.mxu0 0
        %4482 = vmatpush1.bf16.msra.mxu0 %v2461
        %4483 = vmatprep.subr.bf16.mxu0 0
        %4484 = vmatpush1.bf16.msra.mxu0 %v2460
        %4485 = vmatprep.subr.bf16.mxu0 0
        %4486 = vmatpush1.bf16.msra.mxu0 %v2459
        %4487 = vmatprep.subr.bf16.mxu0 0
        %4488 = vmatpush1.bf16.msra.mxu0 %v2458
        %4489 = vmatprep.subr.bf16.mxu0 0
        %4490 = vmatpush1.bf16.msra.mxu0 %v2457
        %4491 = vmatprep.subr.bf16.mxu0 0
        %4492 = vmatpush1.bf16.msra.mxu0 %v2456
        %4493 = vmatprep.subr.bf16.mxu0 0
        %4494 = vmatpush1.bf16.msra.mxu0 %v2455
        %4495 = vmatprep.subr.bf16.mxu0 0
        %4496 = vmatpush1.bf16.msra.mxu0 %v2454
        %4497 = vmatprep.subr.bf16.mxu0 0
        %4498 = vmatpush2.bf16.msra.mxu0 0
        %4499 = vmatprep.subr.bf16.mxu0 0
        %4500 = vmatpush2.bf16.msra.mxu0 0
        %4501 = vmatprep.subr.bf16.mxu0 0
        %4502 = vmatpush2.bf16.msra.mxu0 0
        %4503 = vmatprep.subr.bf16.mxu0 0
        %4504 = vmatpush2.bf16.msra.mxu0 0
        %4505 = vmatprep.subr.bf16.mxu0 0
        %4506 = vmatpush2.bf16.msra.mxu0 0
        %4507 = vmatprep.subr.bf16.mxu0 0
        %4508 = vmatpush2.bf16.msra.mxu0 0
        %4509 = vmatprep.subr.bf16.mxu0 0
        %4510 = vmatpush2.bf16.msra.mxu0 0
        %4511 = vmatprep.subr.bf16.mxu0 0
        %4512 = vmatpush2.bf16.msra.mxu0 0
        %4513 = vmatprep.mubr.bf16.mxu0 0
        %4514 = vmatmul.mubr.bf16.gmra.mxu0 %v4480
        %v4515 = vpop.f32.mrf.mxu0
        %v4516 = vadd.f32 0.0, %v4515
        %v4517 = vpop.f32.mrf.mxu0
        %v4518 = vpop.f32.mrf.mxu0
        %v4519 = vpop.f32.mrf.mxu0
        %4520 = vdwg.mxu0
        %v4521 = vadd.f32 %v4411, %v4516
        %v4522 = vadd.f32 %v4521, %v2516
        %v4523 = vsel %vm1328, %v4522, 0.0
        %4524 = vadd.xlane.f32.xlu0 %v4523
        %v4525 = vpop.xlane.xlu0 %4524
        %v4526 = vmul.f32 %v4525, %v1332
        %v4527 = vsub.f32 %v4522, %v4526
        %v4528 = vmul.f32 %v4527, %v4527
        %v4529 = vsel %vm1328, %v4528, 0.0
        %4530 = vadd.xlane.f32.xlu0 %v4529
        %v4531 = vpop.xlane.xlu0 %4530
        %v4532 = vmul.f32 %v4531, %v1332
        %v4533 = vadd.f32 %v4532, 1e-06
        %v4534 = vrsqrt.pop %v4533
        %v4535 = vmul.f32 %v4527, %v4534
        %v4536 = vmul.f32 %v4535, %v2540
        %v4537 = vadd.f32 %v4536, %v2547
        %v4538 = vpack.c.bf16 %v4537, %v4537
        %v4540 = vsel %vm1381, %v4538, 0
        %4542 = vmatprep.subr.bf16.mxu0 0
        %4543 = vmatpush1.bf16.msra.mxu0 0
        %4544 = vmatprep.subr.bf16.mxu0 0
        %4545 = vmatpush1.bf16.msra.mxu0 0
        %4546 = vmatprep.subr.bf16.mxu0 0
        %4547 = vmatpush1.bf16.msra.mxu0 0
        %4548 = vmatprep.subr.bf16.mxu0 0
        %4549 = vmatpush1.bf16.msra.mxu0 0
        %4550 = vmatprep.subr.bf16.mxu0 0
        %4551 = vmatpush1.bf16.msra.mxu0 0
        %4552 = vmatprep.subr.bf16.mxu0 0
        %4553 = vmatpush1.bf16.msra.mxu0 0
        %4554 = vmatprep.subr.bf16.mxu0 0
        %4555 = vmatpush1.bf16.msra.mxu0 %v2573
        %4556 = vmatprep.subr.bf16.mxu0 0
        %4557 = vmatpush1.bf16.msra.mxu0 %v2572
        %4558 = vmatprep.subr.bf16.mxu0 0
        %4559 = vmatpush2.bf16.msra.mxu0 0
        %4560 = vmatprep.subr.bf16.mxu0 0
        %4561 = vmatpush2.bf16.msra.mxu0 0
        %4562 = vmatprep.subr.bf16.mxu0 0
        %4563 = vmatpush2.bf16.msra.mxu0 0
        %4564 = vmatprep.subr.bf16.mxu0 0
        %4565 = vmatpush2.bf16.msra.mxu0 0
        %4566 = vmatprep.subr.bf16.mxu0 0
        %4567 = vmatpush2.bf16.msra.mxu0 0
        %4568 = vmatprep.subr.bf16.mxu0 0
        %4569 = vmatpush2.bf16.msra.mxu0 0
        %4570 = vmatprep.subr.bf16.mxu0 0
        %4571 = vmatpush2.bf16.msra.mxu0 0
        %4572 = vmatprep.subr.bf16.mxu0 0
        %4573 = vmatpush2.bf16.msra.mxu0 0
        %4574 = vmatprep.mubr.bf16.mxu0 0
        %4575 = vmatmul.mubr.bf16.gmra.mxu0 %v4540
        %v4576 = vpop.f32.mrf.mxu0
        %v4577 = vadd.f32 %v2562, %v4576
        %v4578 = vpop.f32.mrf.mxu0
        %v4579 = vpop.f32.mrf.mxu0
        %v4580 = vpop.f32.mrf.mxu0
        %4581 = vdwg.mxu0
        %4583 = vrot.lane.b32.xlu0 %v3861, 64
        %v4584 = vpop.permute.xlu0 %4583
        %v4586 = vadd.f32 %v4577, %v4584
        %4588 = vrot.lane.b32.xlu0 %v4577, 96
        %v4589 = vpop.permute.xlu0 %4588
        %v4590 = vsel %vm1432, %v4577, 0
        %v4592 = vsel %vm1432, %v4589, 0
        %4594 = vmatprep.subr.mxu0 0.0
        %4595 = vmatpush1.xpose.msra.mxu0 0.0
        %4596 = vmatprep.subr.mxu0 0.0
        %4597 = vmatpush1.xpose.msra.mxu0 0.0
        %4598 = vmatprep.subr.mxu0 0.0
        %4599 = vmatpush1.xpose.msra.mxu0 0.0
        %4600 = vmatprep.subr.mxu0 0.0
        %4601 = vmatpush1.xpose.msra.mxu0 0.0
        %4602 = vmatprep.subr.mxu0 0.0
        %4603 = vmatpush1.xpose.msra.mxu0 0.0
        %4604 = vmatprep.subr.mxu0 0.0
        %4605 = vmatpush1.xpose.msra.mxu0 0.0
        %4606 = vmatprep.subr.mxu0 0.0
        %4607 = vmatpush1.xpose.msra.mxu0 0.0
        %4608 = vmatprep.subr.mxu0 0.0
        %4609 = vmatpush1.xpose.msra.mxu0 0.0
        %4610 = vmatprep.subr.mxu0 0.0
        %4611 = vmatpush1.xpose.msra.mxu0 0.0
        %4612 = vmatprep.subr.mxu0 0.0
        %4613 = vmatpush1.xpose.msra.mxu0 0.0
        %4614 = vmatprep.subr.mxu0 0.0
        %4615 = vmatpush1.xpose.msra.mxu0 0.0
        %4616 = vmatprep.subr.mxu0 0.0
        %4617 = vmatpush1.xpose.msra.mxu0 0.0
        %4618 = vmatprep.subr.mxu0 0.0
        %4619 = vmatpush1.xpose.msra.mxu0 0.0
        %4620 = vmatprep.subr.mxu0 0.0
        %4621 = vmatpush1.xpose.msra.mxu0 0.0
        %4622 = vmatprep.subr.mxu0 0.0
        %4623 = vmatpush1.xpose.msra.mxu0 0.0
        %4624 = vmatprep.subr.mxu0 0.0
        %4625 = vmatpush1.xpose.msra.mxu0 %v4592
        %4626 = vmatprep.subr.mxu0 0.0
        %4627 = vmatpush2.xpose.msra.mxu0 0.0
        %4628 = vmatprep.subr.mxu0 0.0
        %4629 = vmatpush2.xpose.msra.mxu0 0.0
        %4630 = vmatprep.subr.mxu0 0.0
        %4631 = vmatpush2.xpose.msra.mxu0 0.0
        %4632 = vmatprep.subr.mxu0 0.0
        %4633 = vmatpush2.xpose.msra.mxu0 0.0
        %4634 = vmatprep.subr.mxu0 0.0
        %4635 = vmatpush2.xpose.msra.mxu0 0.0
        %4636 = vmatprep.subr.mxu0 0.0
        %4637 = vmatpush2.xpose.msra.mxu0 0.0
        %4638 = vmatprep.subr.mxu0 0.0
        %4639 = vmatpush2.xpose.msra.mxu0 0.0
        %4640 = vmatprep.subr.mxu0 0.0
        %4641 = vmatpush2.xpose.msra.mxu0 0.0
        %4642 = vmatprep.subr.mxu0 0.0
        %4643 = vmatpush2.xpose.msra.mxu0 0.0
        %4644 = vmatprep.subr.mxu0 0.0
        %4645 = vmatpush2.xpose.msra.mxu0 0.0
        %4646 = vmatprep.subr.mxu0 0.0
        %4647 = vmatpush2.xpose.msra.mxu0 0.0
        %4648 = vmatprep.subr.mxu0 0.0
        %4649 = vmatpush2.xpose.msra.mxu0 0.0
        %4650 = vmatprep.subr.mxu0 0.0
        %4651 = vmatpush2.xpose.msra.mxu0 0.0
        %4652 = vmatprep.subr.mxu0 0.0
        %4653 = vmatpush2.xpose.msra.mxu0 0.0
        %4654 = vmatprep.subr.mxu0 0.0
        %4655 = vmatpush2.xpose.msra.mxu0 0.0
        %4656 = vmatprep.subr.mxu0 0.0
        %4657 = vmatpush2.xpose.msra.mxu0 0.0
        %4658 = vmatprep.mubr.f32.mxu0 0.0
        %4659 = vmatmul.mubr.f32.gmra.mxu0 %v4590
        %v4660 = vpop.f32.mrf.mxu0
        %v4661 = vadd.f32 0.0, %v4660
        %v4662 = vpop.f32.mrf.mxu0
        %4663 = vdwg.mxu0
        %v4664 = vmul.f32 %v4661, 0.35355338
        %v4665 = vsel %vm1508, %v4664, -inf
        %4666 = vmax.xlane.f32.xlu0 %v4665
        %v4667 = vpop.xlane.xlu0 %4666
        %v4668 = vsub.f32 %v4664, %v4667
        %v4669 = vmul.f32 %v4668, 1.442695
        %v4670 = vpow.pop %v4669
        %v4671 = vsel %vm1508, %v4670, 0.0
        %4672 = vadd.xlane.f32.xlu0 %v4671
        %v4673 = vpop.xlane.xlu0 %4672
        %4675 = vrot.lane.b32.xlu0 %v4586, 64
        %v4676 = vpop.permute.xlu0 %4675
        %v4678 = vsel %vm1520, %v4670, 0
        %v4680 = vsel %vm1524, %v4676, 0
        %4682 = vmatprep.subr.mxu0 0.0
        %4683 = vmatpush1.msra.mxu0 0.0
        %4684 = vmatprep.subr.mxu0 0.0
        %4685 = vmatpush1.msra.mxu0 0.0
        %4686 = vmatprep.subr.mxu0 0.0
        %4687 = vmatpush1.msra.mxu0 0.0
        %4688 = vmatprep.subr.mxu0 0.0
        %4689 = vmatpush1.msra.mxu0 0.0
        %4690 = vmatprep.subr.mxu0 0.0
        %4691 = vmatpush1.msra.mxu0 0.0
        %4692 = vmatprep.subr.mxu0 0.0
        %4693 = vmatpush1.msra.mxu0 0.0
        %4694 = vmatprep.subr.mxu0 0.0
        %4695 = vmatpush1.msra.mxu0 0.0
        %4696 = vmatprep.subr.mxu0 0.0
        %4697 = vmatpush1.msra.mxu0 0.0
        %4698 = vmatprep.subr.mxu0 0.0
        %4699 = vmatpush1.msra.mxu0 0.0
        %4700 = vmatprep.subr.mxu0 0.0
        %4701 = vmatpush1.msra.mxu0 0.0
        %4702 = vmatprep.subr.mxu0 0.0
        %4703 = vmatpush1.msra.mxu0 0.0
        %4704 = vmatprep.subr.mxu0 0.0
        %4705 = vmatpush1.msra.mxu0 0.0
        %4706 = vmatprep.subr.mxu0 0.0
        %4707 = vmatpush1.msra.mxu0 0.0
        %4708 = vmatprep.subr.mxu0 0.0
        %4709 = vmatpush1.msra.mxu0 0.0
        %4710 = vmatprep.subr.mxu0 0.0
        %4711 = vmatpush1.msra.mxu0 0.0
        %4712 = vmatprep.subr.mxu0 0.0
        %4713 = vmatpush1.msra.mxu0 %v4680
        %4714 = vmatprep.subr.mxu0 0.0
        %4715 = vmatpush2.msra.mxu0 0.0
        %4716 = vmatprep.subr.mxu0 0.0
        %4717 = vmatpush2.msra.mxu0 0.0
        %4718 = vmatprep.subr.mxu0 0.0
        %4719 = vmatpush2.msra.mxu0 0.0
        %4720 = vmatprep.subr.mxu0 0.0
        %4721 = vmatpush2.msra.mxu0 0.0
        %4722 = vmatprep.subr.mxu0 0.0
        %4723 = vmatpush2.msra.mxu0 0.0
        %4724 = vmatprep.subr.mxu0 0.0
        %4725 = vmatpush2.msra.mxu0 0.0
        %4726 = vmatprep.subr.mxu0 0.0
        %4727 = vmatpush2.msra.mxu0 0.0
        %4728 = vmatprep.subr.mxu0 0.0
        %4729 = vmatpush2.msra.mxu0 0.0
        %4730 = vmatprep.subr.mxu0 0.0
        %4731 = vmatpush2.msra.mxu0 0.0
        %4732 = vmatprep.subr.mxu0 0.0
        %4733 = vmatpush2.msra.mxu0 0.0
        %4734 = vmatprep.subr.mxu0 0.0
        %4735 = vmatpush2.msra.mxu0 0.0
        %4736 = vmatprep.subr.mxu0 0.0
        %4737 = vmatpush2.msra.mxu0 0.0
        %4738 = vmatprep.subr.mxu0 0.0
        %4739 = vmatpush2.msra.mxu0 0.0
        %4740 = vmatprep.subr.mxu0 0.0
        %4741 = vmatpush2.msra.mxu0 0.0
        %4742 = vmatprep.subr.mxu0 0.0
        %4743 = vmatpush2.msra.mxu0 0.0
        %4744 = vmatprep.subr.mxu0 0.0
        %4745 = vmatpush2.msra.mxu0 0.0
        %4746 = vmatprep.mubr.f32.mxu0 0.0
        %4747 = vmatmul.mubr.f32.gmra.mxu0 %v4678
        %v4748 = vpop.f32.mrf.mxu0
        %v4749 = vadd.f32 0.0, %v4748
        %v4750 = vpop.f32.mrf.mxu0
        %4751 = vdwg.mxu0
        %v4752 = vrcp.pop %v4673
        %v4753 = vmul.f32 %v4749, %v4752
        %v4754 = vpack.c.bf16 %v4753, %v4753
        %4755 = vrot.lane.b32.xlu0 %v4577, 120
        %v4756 = vpop.permute.xlu0 %4755
        %4757 = vrot.lane.b32.xlu0 %v4577, 88
        %v4758 = vpop.permute.xlu0 %4757
        %v4759 = vsel %vm1432, %v4756, 0
        %v4761 = vsel %vm1432, %v4758, 0
        %4763 = vmatprep.subr.mxu0 0.0
        %4764 = vmatpush1.xpose.msra.mxu0 0.0
        %4765 = vmatprep.subr.mxu0 0.0
        %4766 = vmatpush1.xpose.msra.mxu0 0.0
        %4767 = vmatprep.subr.mxu0 0.0
        %4768 = vmatpush1.xpose.msra.mxu0 0.0
        %4769 = vmatprep.subr.mxu0 0.0
        %4770 = vmatpush1.xpose.msra.mxu0 0.0
        %4771 = vmatprep.subr.mxu0 0.0
        %4772 = vmatpush1.xpose.msra.mxu0 0.0
        %4773 = vmatprep.subr.mxu0 0.0
        %4774 = vmatpush1.xpose.msra.mxu0 0.0
        %4775 = vmatprep.subr.mxu0 0.0
        %4776 = vmatpush1.xpose.msra.mxu0 0.0
        %4777 = vmatprep.subr.mxu0 0.0
        %4778 = vmatpush1.xpose.msra.mxu0 0.0
        %4779 = vmatprep.subr.mxu0 0.0
        %4780 = vmatpush1.xpose.msra.mxu0 0.0
        %4781 = vmatprep.subr.mxu0 0.0
        %4782 = vmatpush1.xpose.msra.mxu0 0.0
        %4783 = vmatprep.subr.mxu0 0.0
        %4784 = vmatpush1.xpose.msra.mxu0 0.0
        %4785 = vmatprep.subr.mxu0 0.0
        %4786 = vmatpush1.xpose.msra.mxu0 0.0
        %4787 = vmatprep.subr.mxu0 0.0
        %4788 = vmatpush1.xpose.msra.mxu0 0.0
        %4789 = vmatprep.subr.mxu0 0.0
        %4790 = vmatpush1.xpose.msra.mxu0 0.0
        %4791 = vmatprep.subr.mxu0 0.0
        %4792 = vmatpush1.xpose.msra.mxu0 0.0
        %4793 = vmatprep.subr.mxu0 0.0
        %4794 = vmatpush1.xpose.msra.mxu0 %v4761
        %4795 = vmatprep.subr.mxu0 0.0
        %4796 = vmatpush2.xpose.msra.mxu0 0.0
        %4797 = vmatprep.subr.mxu0 0.0
        %4798 = vmatpush2.xpose.msra.mxu0 0.0
        %4799 = vmatprep.subr.mxu0 0.0
        %4800 = vmatpush2.xpose.msra.mxu0 0.0
        %4801 = vmatprep.subr.mxu0 0.0
        %4802 = vmatpush2.xpose.msra.mxu0 0.0
        %4803 = vmatprep.subr.mxu0 0.0
        %4804 = vmatpush2.xpose.msra.mxu0 0.0
        %4805 = vmatprep.subr.mxu0 0.0
        %4806 = vmatpush2.xpose.msra.mxu0 0.0
        %4807 = vmatprep.subr.mxu0 0.0
        %4808 = vmatpush2.xpose.msra.mxu0 0.0
        %4809 = vmatprep.subr.mxu0 0.0
        %4810 = vmatpush2.xpose.msra.mxu0 0.0
        %4811 = vmatprep.subr.mxu0 0.0
        %4812 = vmatpush2.xpose.msra.mxu0 0.0
        %4813 = vmatprep.subr.mxu0 0.0
        %4814 = vmatpush2.xpose.msra.mxu0 0.0
        %4815 = vmatprep.subr.mxu0 0.0
        %4816 = vmatpush2.xpose.msra.mxu0 0.0
        %4817 = vmatprep.subr.mxu0 0.0
        %4818 = vmatpush2.xpose.msra.mxu0 0.0
        %4819 = vmatprep.subr.mxu0 0.0
        %4820 = vmatpush2.xpose.msra.mxu0 0.0
        %4821 = vmatprep.subr.mxu0 0.0
        %4822 = vmatpush2.xpose.msra.mxu0 0.0
        %4823 = vmatprep.subr.mxu0 0.0
        %4824 = vmatpush2.xpose.msra.mxu0 0.0
        %4825 = vmatprep.subr.mxu0 0.0
        %4826 = vmatpush2.xpose.msra.mxu0 0.0
        %4827 = vmatprep.mubr.f32.mxu0 0.0
        %4828 = vmatmul.mubr.f32.gmra.mxu0 %v4759
        %v4829 = vpop.f32.mrf.mxu0
        %v4830 = vadd.f32 0.0, %v4829
        %v4831 = vpop.f32.mrf.mxu0
        %4832 = vdwg.mxu0
        %v4833 = vmul.f32 %v4830, 0.35355338
        %v4834 = vsel %vm1508, %v4833, -inf
        %4835 = vmax.xlane.f32.xlu0 %v4834
        %v4836 = vpop.xlane.xlu0 %4835
        %v4837 = vsub.f32 %v4833, %v4836
        %v4838 = vmul.f32 %v4837, 1.442695
        %v4839 = vpow.pop %v4838
        %v4840 = vsel %vm1508, %v4839, 0.0
        %4841 = vadd.xlane.f32.xlu0 %v4840
        %v4842 = vpop.xlane.xlu0 %4841
        %4843 = vrot.lane.b32.xlu0 %v4586, 56
        %v4844 = vpop.permute.xlu0 %4843
        %v4846 = vsel %vm1520, %v4839, 0
        %v4848 = vsel %vm1524, %v4844, 0
        %4850 = vmatprep.subr.mxu0 0.0
        %4851 = vmatpush1.msra.mxu0 0.0
        %4852 = vmatprep.subr.mxu0 0.0
        %4853 = vmatpush1.msra.mxu0 0.0
        %4854 = vmatprep.subr.mxu0 0.0
        %4855 = vmatpush1.msra.mxu0 0.0
        %4856 = vmatprep.subr.mxu0 0.0
        %4857 = vmatpush1.msra.mxu0 0.0
        %4858 = vmatprep.subr.mxu0 0.0
        %4859 = vmatpush1.msra.mxu0 0.0
        %4860 = vmatprep.subr.mxu0 0.0
        %4861 = vmatpush1.msra.mxu0 0.0
        %4862 = vmatprep.subr.mxu0 0.0
        %4863 = vmatpush1.msra.mxu0 0.0
        %4864 = vmatprep.subr.mxu0 0.0
        %4865 = vmatpush1.msra.mxu0 0.0
        %4866 = vmatprep.subr.mxu0 0.0
        %4867 = vmatpush1.msra.mxu0 0.0
        %4868 = vmatprep.subr.mxu0 0.0
        %4869 = vmatpush1.msra.mxu0 0.0
        %4870 = vmatprep.subr.mxu0 0.0
        %4871 = vmatpush1.msra.mxu0 0.0
        %4872 = vmatprep.subr.mxu0 0.0
        %4873 = vmatpush1.msra.mxu0 0.0
        %4874 = vmatprep.subr.mxu0 0.0
        %4875 = vmatpush1.msra.mxu0 0.0
        %4876 = vmatprep.subr.mxu0 0.0
        %4877 = vmatpush1.msra.mxu0 0.0
        %4878 = vmatprep.subr.mxu0 0.0
        %4879 = vmatpush1.msra.mxu0 0.0
        %4880 = vmatprep.subr.mxu0 0.0
        %4881 = vmatpush1.msra.mxu0 %v4848
        %4882 = vmatprep.subr.mxu0 0.0
        %4883 = vmatpush2.msra.mxu0 0.0
        %4884 = vmatprep.subr.mxu0 0.0
        %4885 = vmatpush2.msra.mxu0 0.0
        %4886 = vmatprep.subr.mxu0 0.0
        %4887 = vmatpush2.msra.mxu0 0.0
        %4888 = vmatprep.subr.mxu0 0.0
        %4889 = vmatpush2.msra.mxu0 0.0
        %4890 = vmatprep.subr.mxu0 0.0
        %4891 = vmatpush2.msra.mxu0 0.0
        %4892 = vmatprep.subr.mxu0 0.0
        %4893 = vmatpush2.msra.mxu0 0.0
        %4894 = vmatprep.subr.mxu0 0.0
        %4895 = vmatpush2.msra.mxu0 0.0
        %4896 = vmatprep.subr.mxu0 0.0
        %4897 = vmatpush2.msra.mxu0 0.0
        %4898 = vmatprep.subr.mxu0 0.0
        %4899 = vmatpush2.msra.mxu0 0.0
        %4900 = vmatprep.subr.mxu0 0.0
        %4901 = vmatpush2.msra.mxu0 0.0
        %4902 = vmatprep.subr.mxu0 0.0
        %4903 = vmatpush2.msra.mxu0 0.0
        %4904 = vmatprep.subr.mxu0 0.0
        %4905 = vmatpush2.msra.mxu0 0.0
        %4906 = vmatprep.subr.mxu0 0.0
        %4907 = vmatpush2.msra.mxu0 0.0
        %4908 = vmatprep.subr.mxu0 0.0
        %4909 = vmatpush2.msra.mxu0 0.0
        %4910 = vmatprep.subr.mxu0 0.0
        %4911 = vmatpush2.msra.mxu0 0.0
        %4912 = vmatprep.subr.mxu0 0.0
        %4913 = vmatpush2.msra.mxu0 0.0
        %4914 = vmatprep.mubr.f32.mxu0 0.0
        %4915 = vmatmul.mubr.f32.gmra.mxu0 %v4846
        %v4916 = vpop.f32.mrf.mxu0
        %v4917 = vadd.f32 0.0, %v4916
        %v4918 = vpop.f32.mrf.mxu0
        %4919 = vdwg.mxu0
        %v4920 = vrcp.pop %v4842
        %v4921 = vmul.f32 %v4917, %v4920
        %v4922 = vpack.c.bf16 %v4921, %v4921
        %v4924 = vsel %vm1432, %v4922, 0
        %4926 = vmatprep.subr.bf16.mxu0 0
        %4927 = vmatpush1.bf16.msra.mxu0 0
        %4928 = vmatprep.subr.bf16.mxu0 0
        %4929 = vmatpush1.bf16.msra.mxu0 0
        %4930 = vmatprep.subr.bf16.mxu0 0
        %4931 = vmatpush1.bf16.msra.mxu0 0
        %4932 = vmatprep.subr.bf16.mxu0 0
        %4933 = vmatpush1.bf16.msra.mxu0 0
        %4934 = vmatprep.subr.bf16.mxu0 0
        %4935 = vmatpush1.bf16.msra.mxu0 0
        %4936 = vmatprep.subr.bf16.mxu0 0
        %4937 = vmatpush1.bf16.msra.mxu0 0
        %4938 = vmatprep.subr.bf16.mxu0 0
        %4939 = vmatpush1.bf16.msra.mxu0 0
        %4940 = vmatprep.subr.bf16.mxu0 0
        %4941 = vmatpush1.bf16.msra.mxu0 %v2963
        %4942 = vmatprep.subr.bf16.mxu0 0
        %4943 = vmatpush2.bf16.msra.mxu0 0
        %4944 = vmatprep.subr.bf16.mxu0 0
        %4945 = vmatpush2.bf16.msra.mxu0 0
        %4946 = vmatprep.subr.bf16.mxu0 0
        %4947 = vmatpush2.bf16.msra.mxu0 0
        %4948 = vmatprep.subr.bf16.mxu0 0
        %4949 = vmatpush2.bf16.msra.mxu0 0
        %4950 = vmatprep.subr.bf16.mxu0 0
        %4951 = vmatpush2.bf16.msra.mxu0 0
        %4952 = vmatprep.subr.bf16.mxu0 0
        %4953 = vmatpush2.bf16.msra.mxu0 0
        %4954 = vmatprep.subr.bf16.mxu0 0
        %4955 = vmatpush2.bf16.msra.mxu0 0
        %4956 = vmatprep.subr.bf16.mxu0 0
        %4957 = vmatpush2.bf16.msra.mxu0 0
        %4958 = vmatprep.mubr.bf16.mxu0 0
        %4959 = vmatmul.mubr.bf16.gmra.mxu0 %v4924
        %v4960 = vpop.f32.mrf.mxu0
        %v4961 = vadd.f32 0.0, %v4960
        %v4962 = vpop.f32.mrf.mxu0
        %v4963 = vpop.f32.mrf.mxu0
        %v4964 = vpop.f32.mrf.mxu0
        %4965 = vdwg.mxu0
        %v4967 = vsel %vm1432, %v4754, 0
        %4969 = vmatprep.subr.bf16.mxu0 0
        %4970 = vmatpush1.bf16.msra.mxu0 0
        %4971 = vmatprep.subr.bf16.mxu0 0
        %4972 = vmatpush1.bf16.msra.mxu0 0
        %4973 = vmatprep.subr.bf16.mxu0 0
        %4974 = vmatpush1.bf16.msra.mxu0 0
        %4975 = vmatprep.subr.bf16.mxu0 0
        %4976 = vmatpush1.bf16.msra.mxu0 0
        %4977 = vmatprep.subr.bf16.mxu0 0
        %4978 = vmatpush1.bf16.msra.mxu0 0
        %4979 = vmatprep.subr.bf16.mxu0 0
        %4980 = vmatpush1.bf16.msra.mxu0 0
        %4981 = vmatprep.subr.bf16.mxu0 0
        %4982 = vmatpush1.bf16.msra.mxu0 0
        %4983 = vmatprep.subr.bf16.mxu0 0
        %4984 = vmatpush1.bf16.msra.mxu0 %v3009
        %4985 = vmatprep.subr.bf16.mxu0 0
        %4986 = vmatpush2.bf16.msra.mxu0 0
        %4987 = vmatprep.subr.bf16.mxu0 0
        %4988 = vmatpush2.bf16.msra.mxu0 0
        %4989 = vmatprep.subr.bf16.mxu0 0
        %4990 = vmatpush2.bf16.msra.mxu0 0
        %4991 = vmatprep.subr.bf16.mxu0 0
        %4992 = vmatpush2.bf16.msra.mxu0 0
        %4993 = vmatprep.subr.bf16.mxu0 0
        %4994 = vmatpush2.bf16.msra.mxu0 0
        %4995 = vmatprep.subr.bf16.mxu0 0
        %4996 = vmatpush2.bf16.msra.mxu0 0
        %4997 = vmatprep.subr.bf16.mxu0 0
        %4998 = vmatpush2.bf16.msra.mxu0 0
        %4999 = vmatprep.subr.bf16.mxu0 0
        %5000 = vmatpush2.bf16.msra.mxu0 0
        %5001 = vmatprep.mubr.bf16.mxu0 0
        %5002 = vmatmul.mubr.bf16.gmra.mxu0 %v4967
        %v5003 = vpop.f32.mrf.mxu0
        %v5004 = vadd.f32 %v4961, %v5003
        %v5005 = vpop.f32.mrf.mxu0
        %v5006 = vpop.f32.mrf.mxu0
        %v5007 = vpop.f32.mrf.mxu0
        %5008 = vdwg.mxu0
        %5009 = vrot.lane.b32.xlu0 %v4577, 112
        %v5010 = vpop.permute.xlu0 %5009
        %5011 = vrot.lane.b32.xlu0 %v4577, 80
        %v5012 = vpop.permute.xlu0 %5011
        %v5013 = vsel %vm1432, %v5010, 0
        %v5015 = vsel %vm1432, %v5012, 0
        %5017 = vmatprep.subr.mxu0 0.0
        %5018 = vmatpush1.xpose.msra.mxu0 0.0
        %5019 = vmatprep.subr.mxu0 0.0
        %5020 = vmatpush1.xpose.msra.mxu0 0.0
        %5021 = vmatprep.subr.mxu0 0.0
        %5022 = vmatpush1.xpose.msra.mxu0 0.0
        %5023 = vmatprep.subr.mxu0 0.0
        %5024 = vmatpush1.xpose.msra.mxu0 0.0
        %5025 = vmatprep.subr.mxu0 0.0
        %5026 = vmatpush1.xpose.msra.mxu0 0.0
        %5027 = vmatprep.subr.mxu0 0.0
        %5028 = vmatpush1.xpose.msra.mxu0 0.0
        %5029 = vmatprep.subr.mxu0 0.0
        %5030 = vmatpush1.xpose.msra.mxu0 0.0
        %5031 = vmatprep.subr.mxu0 0.0
        %5032 = vmatpush1.xpose.msra.mxu0 0.0
        %5033 = vmatprep.subr.mxu0 0.0
        %5034 = vmatpush1.xpose.msra.mxu0 0.0
        %5035 = vmatprep.subr.mxu0 0.0
        %5036 = vmatpush1.xpose.msra.mxu0 0.0
        %5037 = vmatprep.subr.mxu0 0.0
        %5038 = vmatpush1.xpose.msra.mxu0 0.0
        %5039 = vmatprep.subr.mxu0 0.0
        %5040 = vmatpush1.xpose.msra.mxu0 0.0
        %5041 = vmatprep.subr.mxu0 0.0
        %5042 = vmatpush1.xpose.msra.mxu0 0.0
        %5043 = vmatprep.subr.mxu0 0.0
        %5044 = vmatpush1.xpose.msra.mxu0 0.0
        %5045 = vmatprep.subr.mxu0 0.0
        %5046 = vmatpush1.xpose.msra.mxu0 0.0
        %5047 = vmatprep.subr.mxu0 0.0
        %5048 = vmatpush1.xpose.msra.mxu0 %v5015
        %5049 = vmatprep.subr.mxu0 0.0
        %5050 = vmatpush2.xpose.msra.mxu0 0.0
        %5051 = vmatprep.subr.mxu0 0.0
        %5052 = vmatpush2.xpose.msra.mxu0 0.0
        %5053 = vmatprep.subr.mxu0 0.0
        %5054 = vmatpush2.xpose.msra.mxu0 0.0
        %5055 = vmatprep.subr.mxu0 0.0
        %5056 = vmatpush2.xpose.msra.mxu0 0.0
        %5057 = vmatprep.subr.mxu0 0.0
        %5058 = vmatpush2.xpose.msra.mxu0 0.0
        %5059 = vmatprep.subr.mxu0 0.0
        %5060 = vmatpush2.xpose.msra.mxu0 0.0
        %5061 = vmatprep.subr.mxu0 0.0
        %5062 = vmatpush2.xpose.msra.mxu0 0.0
        %5063 = vmatprep.subr.mxu0 0.0
        %5064 = vmatpush2.xpose.msra.mxu0 0.0
        %5065 = vmatprep.subr.mxu0 0.0
        %5066 = vmatpush2.xpose.msra.mxu0 0.0
        %5067 = vmatprep.subr.mxu0 0.0
        %5068 = vmatpush2.xpose.msra.mxu0 0.0
        %5069 = vmatprep.subr.mxu0 0.0
        %5070 = vmatpush2.xpose.msra.mxu0 0.0
        %5071 = vmatprep.subr.mxu0 0.0
        %5072 = vmatpush2.xpose.msra.mxu0 0.0
        %5073 = vmatprep.subr.mxu0 0.0
        %5074 = vmatpush2.xpose.msra.mxu0 0.0
        %5075 = vmatprep.subr.mxu0 0.0
        %5076 = vmatpush2.xpose.msra.mxu0 0.0
        %5077 = vmatprep.subr.mxu0 0.0
        %5078 = vmatpush2.xpose.msra.mxu0 0.0
        %5079 = vmatprep.subr.mxu0 0.0
        %5080 = vmatpush2.xpose.msra.mxu0 0.0
        %5081 = vmatprep.mubr.f32.mxu0 0.0
        %5082 = vmatmul.mubr.f32.gmra.mxu0 %v5013
        %v5083 = vpop.f32.mrf.mxu0
        %v5084 = vadd.f32 0.0, %v5083
        %v5085 = vpop.f32.mrf.mxu0
        %5086 = vdwg.mxu0
        %v5087 = vmul.f32 %v5084, 0.35355338
        %v5088 = vsel %vm1508, %v5087, -inf
        %5089 = vmax.xlane.f32.xlu0 %v5088
        %v5090 = vpop.xlane.xlu0 %5089
        %v5091 = vsub.f32 %v5087, %v5090
        %v5092 = vmul.f32 %v5091, 1.442695
        %v5093 = vpow.pop %v5092
        %v5094 = vsel %vm1508, %v5093, 0.0
        %5095 = vadd.xlane.f32.xlu0 %v5094
        %v5096 = vpop.xlane.xlu0 %5095
        %5097 = vrot.lane.b32.xlu0 %v4586, 48
        %v5098 = vpop.permute.xlu0 %5097
        %v5100 = vsel %vm1520, %v5093, 0
        %v5102 = vsel %vm1524, %v5098, 0
        %5104 = vmatprep.subr.mxu0 0.0
        %5105 = vmatpush1.msra.mxu0 0.0
        %5106 = vmatprep.subr.mxu0 0.0
        %5107 = vmatpush1.msra.mxu0 0.0
        %5108 = vmatprep.subr.mxu0 0.0
        %5109 = vmatpush1.msra.mxu0 0.0
        %5110 = vmatprep.subr.mxu0 0.0
        %5111 = vmatpush1.msra.mxu0 0.0
        %5112 = vmatprep.subr.mxu0 0.0
        %5113 = vmatpush1.msra.mxu0 0.0
        %5114 = vmatprep.subr.mxu0 0.0
        %5115 = vmatpush1.msra.mxu0 0.0
        %5116 = vmatprep.subr.mxu0 0.0
        %5117 = vmatpush1.msra.mxu0 0.0
        %5118 = vmatprep.subr.mxu0 0.0
        %5119 = vmatpush1.msra.mxu0 0.0
        %5120 = vmatprep.subr.mxu0 0.0
        %5121 = vmatpush1.msra.mxu0 0.0
        %5122 = vmatprep.subr.mxu0 0.0
        %5123 = vmatpush1.msra.mxu0 0.0
        %5124 = vmatprep.subr.mxu0 0.0
        %5125 = vmatpush1.msra.mxu0 0.0
        %5126 = vmatprep.subr.mxu0 0.0
        %5127 = vmatpush1.msra.mxu0 0.0
        %5128 = vmatprep.subr.mxu0 0.0
        %5129 = vmatpush1.msra.mxu0 0.0
        %5130 = vmatprep.subr.mxu0 0.0
        %5131 = vmatpush1.msra.mxu0 0.0
        %5132 = vmatprep.subr.mxu0 0.0
        %5133 = vmatpush1.msra.mxu0 0.0
        %5134 = vmatprep.subr.mxu0 0.0
        %5135 = vmatpush1.msra.mxu0 %v5102
        %5136 = vmatprep.subr.mxu0 0.0
        %5137 = vmatpush2.msra.mxu0 0.0
        %5138 = vmatprep.subr.mxu0 0.0
        %5139 = vmatpush2.msra.mxu0 0.0
        %5140 = vmatprep.subr.mxu0 0.0
        %5141 = vmatpush2.msra.mxu0 0.0
        %5142 = vmatprep.subr.mxu0 0.0
        %5143 = vmatpush2.msra.mxu0 0.0
        %5144 = vmatprep.subr.mxu0 0.0
        %5145 = vmatpush2.msra.mxu0 0.0
        %5146 = vmatprep.subr.mxu0 0.0
        %5147 = vmatpush2.msra.mxu0 0.0
        %5148 = vmatprep.subr.mxu0 0.0
        %5149 = vmatpush2.msra.mxu0 0.0
        %5150 = vmatprep.subr.mxu0 0.0
        %5151 = vmatpush2.msra.mxu0 0.0
        %5152 = vmatprep.subr.mxu0 0.0
        %5153 = vmatpush2.msra.mxu0 0.0
        %5154 = vmatprep.subr.mxu0 0.0
        %5155 = vmatpush2.msra.mxu0 0.0
        %5156 = vmatprep.subr.mxu0 0.0
        %5157 = vmatpush2.msra.mxu0 0.0
        %5158 = vmatprep.subr.mxu0 0.0
        %5159 = vmatpush2.msra.mxu0 0.0
        %5160 = vmatprep.subr.mxu0 0.0
        %5161 = vmatpush2.msra.mxu0 0.0
        %5162 = vmatprep.subr.mxu0 0.0
        %5163 = vmatpush2.msra.mxu0 0.0
        %5164 = vmatprep.subr.mxu0 0.0
        %5165 = vmatpush2.msra.mxu0 0.0
        %5166 = vmatprep.subr.mxu0 0.0
        %5167 = vmatpush2.msra.mxu0 0.0
        %5168 = vmatprep.mubr.f32.mxu0 0.0
        %5169 = vmatmul.mubr.f32.gmra.mxu0 %v5100
        %v5170 = vpop.f32.mrf.mxu0
        %v5171 = vadd.f32 0.0, %v5170
        %v5172 = vpop.f32.mrf.mxu0
        %5173 = vdwg.mxu0
        %v5174 = vrcp.pop %v5096
        %v5175 = vmul.f32 %v5171, %v5174
        %v5176 = vpack.c.bf16 %v5175, %v5175
        %v5178 = vsel %vm1432, %v5176, 0
        %5180 = vmatprep.subr.bf16.mxu0 0
        %5181 = vmatpush1.bf16.msra.mxu0 0
        %5182 = vmatprep.subr.bf16.mxu0 0
        %5183 = vmatpush1.bf16.msra.mxu0 0
        %5184 = vmatprep.subr.bf16.mxu0 0
        %5185 = vmatpush1.bf16.msra.mxu0 0
        %5186 = vmatprep.subr.bf16.mxu0 0
        %5187 = vmatpush1.bf16.msra.mxu0 0
        %5188 = vmatprep.subr.bf16.mxu0 0
        %5189 = vmatpush1.bf16.msra.mxu0 0
        %5190 = vmatprep.subr.bf16.mxu0 0
        %5191 = vmatpush1.bf16.msra.mxu0 0
        %5192 = vmatprep.subr.bf16.mxu0 0
        %5193 = vmatpush1.bf16.msra.mxu0 0
        %5194 = vmatprep.subr.bf16.mxu0 0
        %5195 = vmatpush1.bf16.msra.mxu0 %v3223
        %5196 = vmatprep.subr.bf16.mxu0 0
        %5197 = vmatpush2.bf16.msra.mxu0 0
        %5198 = vmatprep.subr.bf16.mxu0 0
        %5199 = vmatpush2.bf16.msra.mxu0 0
        %5200 = vmatprep.subr.bf16.mxu0 0
        %5201 = vmatpush2.bf16.msra.mxu0 0
        %5202 = vmatprep.subr.bf16.mxu0 0
        %5203 = vmatpush2.bf16.msra.mxu0 0
        %5204 = vmatprep.subr.bf16.mxu0 0
        %5205 = vmatpush2.bf16.msra.mxu0 0
        %5206 = vmatprep.subr.bf16.mxu0 0
        %5207 = vmatpush2.bf16.msra.mxu0 0
        %5208 = vmatprep.subr.bf16.mxu0 0
        %5209 = vmatpush2.bf16.msra.mxu0 0
        %5210 = vmatprep.subr.bf16.mxu0 0
        %5211 = vmatpush2.bf16.msra.mxu0 0
        %5212 = vmatprep.mubr.bf16.mxu0 0
        %5213 = vmatmul.mubr.bf16.gmra.mxu0 %v5178
        %v5214 = vpop.f32.mrf.mxu0
        %v5215 = vadd.f32 0.0, %v5214
        %v5216 = vpop.f32.mrf.mxu0
        %v5217 = vpop.f32.mrf.mxu0
        %v5218 = vpop.f32.mrf.mxu0
        %5219 = vdwg.mxu0
        %v5220 = vadd.f32 %v5004, %v5215
        %5221 = vrot.lane.b32.xlu0 %v4577, 104
        %v5222 = vpop.permute.xlu0 %5221
        %5223 = vrot.lane.b32.xlu0 %v4577, 72
        %v5224 = vpop.permute.xlu0 %5223
        %v5225 = vsel %vm1432, %v5222, 0
        %v5227 = vsel %vm1432, %v5224, 0
        %5229 = vmatprep.subr.mxu0 0.0
        %5230 = vmatpush1.xpose.msra.mxu0 0.0
        %5231 = vmatprep.subr.mxu0 0.0
        %5232 = vmatpush1.xpose.msra.mxu0 0.0
        %5233 = vmatprep.subr.mxu0 0.0
        %5234 = vmatpush1.xpose.msra.mxu0 0.0
        %5235 = vmatprep.subr.mxu0 0.0
        %5236 = vmatpush1.xpose.msra.mxu0 0.0
        %5237 = vmatprep.subr.mxu0 0.0
        %5238 = vmatpush1.xpose.msra.mxu0 0.0
        %5239 = vmatprep.subr.mxu0 0.0
        %5240 = vmatpush1.xpose.msra.mxu0 0.0
        %5241 = vmatprep.subr.mxu0 0.0
        %5242 = vmatpush1.xpose.msra.mxu0 0.0
        %5243 = vmatprep.subr.mxu0 0.0
        %5244 = vmatpush1.xpose.msra.mxu0 0.0
        %5245 = vmatprep.subr.mxu0 0.0
        %5246 = vmatpush1.xpose.msra.mxu0 0.0
        %5247 = vmatprep.subr.mxu0 0.0
        %5248 = vmatpush1.xpose.msra.mxu0 0.0
        %5249 = vmatprep.subr.mxu0 0.0
        %5250 = vmatpush1.xpose.msra.mxu0 0.0
        %5251 = vmatprep.subr.mxu0 0.0
        %5252 = vmatpush1.xpose.msra.mxu0 0.0
        %5253 = vmatprep.subr.mxu0 0.0
        %5254 = vmatpush1.xpose.msra.mxu0 0.0
        %5255 = vmatprep.subr.mxu0 0.0
        %5256 = vmatpush1.xpose.msra.mxu0 0.0
        %5257 = vmatprep.subr.mxu0 0.0
        %5258 = vmatpush1.xpose.msra.mxu0 0.0
        %5259 = vmatprep.subr.mxu0 0.0
        %5260 = vmatpush1.xpose.msra.mxu0 %v5227
        %5261 = vmatprep.subr.mxu0 0.0
        %5262 = vmatpush2.xpose.msra.mxu0 0.0
        %5263 = vmatprep.subr.mxu0 0.0
        %5264 = vmatpush2.xpose.msra.mxu0 0.0
        %5265 = vmatprep.subr.mxu0 0.0
        %5266 = vmatpush2.xpose.msra.mxu0 0.0
        %5267 = vmatprep.subr.mxu0 0.0
        %5268 = vmatpush2.xpose.msra.mxu0 0.0
        %5269 = vmatprep.subr.mxu0 0.0
        %5270 = vmatpush2.xpose.msra.mxu0 0.0
        %5271 = vmatprep.subr.mxu0 0.0
        %5272 = vmatpush2.xpose.msra.mxu0 0.0
        %5273 = vmatprep.subr.mxu0 0.0
        %5274 = vmatpush2.xpose.msra.mxu0 0.0
        %5275 = vmatprep.subr.mxu0 0.0
        %5276 = vmatpush2.xpose.msra.mxu0 0.0
        %5277 = vmatprep.subr.mxu0 0.0
        %5278 = vmatpush2.xpose.msra.mxu0 0.0
        %5279 = vmatprep.subr.mxu0 0.0
        %5280 = vmatpush2.xpose.msra.mxu0 0.0
        %5281 = vmatprep.subr.mxu0 0.0
        %5282 = vmatpush2.xpose.msra.mxu0 0.0
        %5283 = vmatprep.subr.mxu0 0.0
        %5284 = vmatpush2.xpose.msra.mxu0 0.0
        %5285 = vmatprep.subr.mxu0 0.0
        %5286 = vmatpush2.xpose.msra.mxu0 0.0
        %5287 = vmatprep.subr.mxu0 0.0
        %5288 = vmatpush2.xpose.msra.mxu0 0.0
        %5289 = vmatprep.subr.mxu0 0.0
        %5290 = vmatpush2.xpose.msra.mxu0 0.0
        %5291 = vmatprep.subr.mxu0 0.0
        %5292 = vmatpush2.xpose.msra.mxu0 0.0
        %5293 = vmatprep.mubr.f32.mxu0 0.0
        %5294 = vmatmul.mubr.f32.gmra.mxu0 %v5225
        %v5295 = vpop.f32.mrf.mxu0
        %v5296 = vadd.f32 0.0, %v5295
        %v5297 = vpop.f32.mrf.mxu0
        %5298 = vdwg.mxu0
        %v5299 = vmul.f32 %v5296, 0.35355338
        %v5300 = vsel %vm1508, %v5299, -inf
        %5301 = vmax.xlane.f32.xlu0 %v5300
        %v5302 = vpop.xlane.xlu0 %5301
        %v5303 = vsub.f32 %v5299, %v5302
        %v5304 = vmul.f32 %v5303, 1.442695
        %v5305 = vpow.pop %v5304
        %v5306 = vsel %vm1508, %v5305, 0.0
        %5307 = vadd.xlane.f32.xlu0 %v5306
        %v5308 = vpop.xlane.xlu0 %5307
        %5309 = vrot.lane.b32.xlu0 %v4586, 40
        %v5310 = vpop.permute.xlu0 %5309
        %v5312 = vsel %vm1520, %v5305, 0
        %v5314 = vsel %vm1524, %v5310, 0
        %5316 = vmatprep.subr.mxu0 0.0
        %5317 = vmatpush1.msra.mxu0 0.0
        %5318 = vmatprep.subr.mxu0 0.0
        %5319 = vmatpush1.msra.mxu0 0.0
        %5320 = vmatprep.subr.mxu0 0.0
        %5321 = vmatpush1.msra.mxu0 0.0
        %5322 = vmatprep.subr.mxu0 0.0
        %5323 = vmatpush1.msra.mxu0 0.0
        %5324 = vmatprep.subr.mxu0 0.0
        %5325 = vmatpush1.msra.mxu0 0.0
        %5326 = vmatprep.subr.mxu0 0.0
        %5327 = vmatpush1.msra.mxu0 0.0
        %5328 = vmatprep.subr.mxu0 0.0
        %5329 = vmatpush1.msra.mxu0 0.0
        %5330 = vmatprep.subr.mxu0 0.0
        %5331 = vmatpush1.msra.mxu0 0.0
        %5332 = vmatprep.subr.mxu0 0.0
        %5333 = vmatpush1.msra.mxu0 0.0
        %5334 = vmatprep.subr.mxu0 0.0
        %5335 = vmatpush1.msra.mxu0 0.0
        %5336 = vmatprep.subr.mxu0 0.0
        %5337 = vmatpush1.msra.mxu0 0.0
        %5338 = vmatprep.subr.mxu0 0.0
        %5339 = vmatpush1.msra.mxu0 0.0
        %5340 = vmatprep.subr.mxu0 0.0
        %5341 = vmatpush1.msra.mxu0 0.0
        %5342 = vmatprep.subr.mxu0 0.0
        %5343 = vmatpush1.msra.mxu0 0.0
        %5344 = vmatprep.subr.mxu0 0.0
        %5345 = vmatpush1.msra.mxu0 0.0
        %5346 = vmatprep.subr.mxu0 0.0
        %5347 = vmatpush1.msra.mxu0 %v5314
        %5348 = vmatprep.subr.mxu0 0.0
        %5349 = vmatpush2.msra.mxu0 0.0
        %5350 = vmatprep.subr.mxu0 0.0
        %5351 = vmatpush2.msra.mxu0 0.0
        %5352 = vmatprep.subr.mxu0 0.0
        %5353 = vmatpush2.msra.mxu0 0.0
        %5354 = vmatprep.subr.mxu0 0.0
        %5355 = vmatpush2.msra.mxu0 0.0
        %5356 = vmatprep.subr.mxu0 0.0
        %5357 = vmatpush2.msra.mxu0 0.0
        %5358 = vmatprep.subr.mxu0 0.0
        %5359 = vmatpush2.msra.mxu0 0.0
        %5360 = vmatprep.subr.mxu0 0.0
        %5361 = vmatpush2.msra.mxu0 0.0
        %5362 = vmatprep.subr.mxu0 0.0
        %5363 = vmatpush2.msra.mxu0 0.0
        %5364 = vmatprep.subr.mxu0 0.0
        %5365 = vmatpush2.msra.mxu0 0.0
        %5366 = vmatprep.subr.mxu0 0.0
        %5367 = vmatpush2.msra.mxu0 0.0
        %5368 = vmatprep.subr.mxu0 0.0
        %5369 = vmatpush2.msra.mxu0 0.0
        %5370 = vmatprep.subr.mxu0 0.0
        %5371 = vmatpush2.msra.mxu0 0.0
        %5372 = vmatprep.subr.mxu0 0.0
        %5373 = vmatpush2.msra.mxu0 0.0
        %5374 = vmatprep.subr.mxu0 0.0
        %5375 = vmatpush2.msra.mxu0 0.0
        %5376 = vmatprep.subr.mxu0 0.0
        %5377 = vmatpush2.msra.mxu0 0.0
        %5378 = vmatprep.subr.mxu0 0.0
        %5379 = vmatpush2.msra.mxu0 0.0
        %5380 = vmatprep.mubr.f32.mxu0 0.0
        %5381 = vmatmul.mubr.f32.gmra.mxu0 %v5312
        %v5382 = vpop.f32.mrf.mxu0
        %v5383 = vadd.f32 0.0, %v5382
        %v5384 = vpop.f32.mrf.mxu0
        %5385 = vdwg.mxu0
        %v5386 = vrcp.pop %v5308
        %v5387 = vmul.f32 %v5383, %v5386
        %v5388 = vpack.c.bf16 %v5387, %v5387
        %v5390 = vsel %vm1432, %v5388, 0
        %5392 = vmatprep.subr.bf16.mxu0 0
        %5393 = vmatpush1.bf16.msra.mxu0 0
        %5394 = vmatprep.subr.bf16.mxu0 0
        %5395 = vmatpush1.bf16.msra.mxu0 0
        %5396 = vmatprep.subr.bf16.mxu0 0
        %5397 = vmatpush1.bf16.msra.mxu0 0
        %5398 = vmatprep.subr.bf16.mxu0 0
        %5399 = vmatpush1.bf16.msra.mxu0 0
        %5400 = vmatprep.subr.bf16.mxu0 0
        %5401 = vmatpush1.bf16.msra.mxu0 0
        %5402 = vmatprep.subr.bf16.mxu0 0
        %5403 = vmatpush1.bf16.msra.mxu0 0
        %5404 = vmatprep.subr.bf16.mxu0 0
        %5405 = vmatpush1.bf16.msra.mxu0 0
        %5406 = vmatprep.subr.bf16.mxu0 0
        %5407 = vmatpush1.bf16.msra.mxu0 %v3438
        %5408 = vmatprep.subr.bf16.mxu0 0
        %5409 = vmatpush2.bf16.msra.mxu0 0
        %5410 = vmatprep.subr.bf16.mxu0 0
        %5411 = vmatpush2.bf16.msra.mxu0 0
        %5412 = vmatprep.subr.bf16.mxu0 0
        %5413 = vmatpush2.bf16.msra.mxu0 0
        %5414 = vmatprep.subr.bf16.mxu0 0
        %5415 = vmatpush2.bf16.msra.mxu0 0
        %5416 = vmatprep.subr.bf16.mxu0 0
        %5417 = vmatpush2.bf16.msra.mxu0 0
        %5418 = vmatprep.subr.bf16.mxu0 0
        %5419 = vmatpush2.bf16.msra.mxu0 0
        %5420 = vmatprep.subr.bf16.mxu0 0
        %5421 = vmatpush2.bf16.msra.mxu0 0
        %5422 = vmatprep.subr.bf16.mxu0 0
        %5423 = vmatpush2.bf16.msra.mxu0 0
        %5424 = vmatprep.mubr.bf16.mxu0 0
        %5425 = vmatmul.mubr.bf16.gmra.mxu0 %v5390
        %v5426 = vpop.f32.mrf.mxu0
        %v5427 = vadd.f32 0.0, %v5426
        %v5428 = vpop.f32.mrf.mxu0
        %v5429 = vpop.f32.mrf.mxu0
        %v5430 = vpop.f32.mrf.mxu0
        %5431 = vdwg.mxu0
        %v5432 = vadd.f32 %v5220, %v5427
        %v5433 = vadd.f32 %v5432, %v3487
        %v5434 = vadd.f32 %v4522, %v5433
        %v5435 = vsel %vm1328, %v5434, 0.0
        %5436 = vadd.xlane.f32.xlu0 %v5435
        %v5437 = vpop.xlane.xlu0 %5436
        %v5438 = vmul.f32 %v5437, %v1332
        %v5439 = vsub.f32 %v5434, %v5438
        %v5440 = vmul.f32 %v5439, %v5439
        %v5441 = vsel %vm1328, %v5440, 0.0
        %5442 = vadd.xlane.f32.xlu0 %v5441
        %v5443 = vpop.xlane.xlu0 %5442
        %v5444 = vmul.f32 %v5443, %v1332
        %v5445 = vadd.f32 %v5444, 1e-06
        %v5446 = vrsqrt.pop %v5445
        %v5447 = vmul.f32 %v5439, %v5446
        %v5448 = vmul.f32 %v5447, %v3512
        %v5449 = vadd.f32 %v5448, %v3519
        %v5450 = vpack.c.bf16 %v5449, %v5449
        %v5452 = vsel %vm1381, %v5450, 0
        %5454 = vmatprep.subr.bf16.mxu0 0
        %5455 = vmatpush1.bf16.msra.mxu0 0
        %5456 = vmatprep.subr.bf16.mxu0 0
        %5457 = vmatpush1.bf16.msra.mxu0 0
        %5458 = vmatprep.subr.bf16.mxu0 0
        %5459 = vmatpush1.bf16.msra.mxu0 0
        %5460 = vmatprep.subr.bf16.mxu0 0
        %5461 = vmatpush1.bf16.msra.mxu0 0
        %5462 = vmatprep.subr.bf16.mxu0 0
        %5463 = vmatpush1.bf16.msra.mxu0 0
        %5464 = vmatprep.subr.bf16.mxu0 0
        %5465 = vmatpush1.bf16.msra.mxu0 0
        %5466 = vmatprep.subr.bf16.mxu0 0
        %5467 = vmatpush1.bf16.msra.mxu0 %v3545
        %5468 = vmatprep.subr.bf16.mxu0 0
        %5469 = vmatpush1.bf16.msra.mxu0 %v3544
        %5470 = vmatprep.subr.bf16.mxu0 0
        %5471 = vmatpush2.bf16.msra.mxu0 0
        %5472 = vmatprep.subr.bf16.mxu0 0
        %5473 = vmatpush2.bf16.msra.mxu0 0
        %5474 = vmatprep.subr.bf16.mxu0 0
        %5475 = vmatpush2.bf16.msra.mxu0 0
        %5476 = vmatprep.subr.bf16.mxu0 0
        %5477 = vmatpush2.bf16.msra.mxu0 0
        %5478 = vmatprep.subr.bf16.mxu0 0
        %5479 = vmatpush2.bf16.msra.mxu0 0
        %5480 = vmatprep.subr.bf16.mxu0 0
        %5481 = vmatpush2.bf16.msra.mxu0 0
        %5482 = vmatprep.subr.bf16.mxu0 0
        %5483 = vmatpush2.bf16.msra.mxu0 0
        %5484 = vmatprep.subr.bf16.mxu0 0
        %5485 = vmatpush2.bf16.msra.mxu0 0
        %5486 = vmatprep.mubr.bf16.mxu0 0
        %5487 = vmatmul.mubr.bf16.gmra.mxu0 %v5452
        %v5488 = vpop.f32.mrf.mxu0
        %v5489 = vadd.f32 %v3534, %v5488
        %v5490 = vpop.f32.mrf.mxu0
        %v5491 = vpop.f32.mrf.mxu0
        %v5492 = vpop.f32.mrf.mxu0
        %5493 = vdwg.mxu0
        %v5494 = vmul.f32 %v5489, %v5489
        %v5495 = vmul.f32 %v5489, %v5494
        %v5496 = vmul.f32 %v5495, 0.044715
        %v5497 = vadd.f32 %v5489, %v5496
        %v5498 = vmul.f32 %v5497, 0.7978846
        %v5499 = vtanh.pop %v5498
        %v5500 = vadd.f32 %v5499, 1.0
        %v5501 = vmul.f32 %v5500, 0.5
        %v5502 = vmul.f32 %v5489, %v5501
        %v5503 = vpack.c.bf16 %v5502, %v5502
        %5504 = vmatprep.subr.bf16.mxu0 0
        %5505 = vmatpush1.bf16.msra.mxu0 %v3657
        %5506 = vmatprep.subr.bf16.mxu0 0
        %5507 = vmatpush1.bf16.msra.mxu0 %v3656
        %5508 = vmatprep.subr.bf16.mxu0 0
        %5509 = vmatpush1.bf16.msra.mxu0 %v3655
        %5510 = vmatprep.subr.bf16.mxu0 0
        %5511 = vmatpush1.bf16.msra.mxu0 %v3654
        %5512 = vmatprep.subr.bf16.mxu0 0
        %5513 = vmatpush1.bf16.msra.mxu0 %v3653
        %5514 = vmatprep.subr.bf16.mxu0 0
        %5515 = vmatpush1.bf16.msra.mxu0 %v3652
        %5516 = vmatprep.subr.bf16.mxu0 0
        %5517 = vmatpush1.bf16.msra.mxu0 %v3651
        %5518 = vmatprep.subr.bf16.mxu0 0
        %5519 = vmatpush1.bf16.msra.mxu0 %v3650
        %5520 = vmatprep.subr.bf16.mxu0 0
        %5521 = vmatpush2.bf16.msra.mxu0 0
        %5522 = vmatprep.subr.bf16.mxu0 0
        %5523 = vmatpush2.bf16.msra.mxu0 0
        %5524 = vmatprep.subr.bf16.mxu0 0
        %5525 = vmatpush2.bf16.msra.mxu0 0
        %5526 = vmatprep.subr.bf16.mxu0 0
        %5527 = vmatpush2.bf16.msra.mxu0 0
        %5528 = vmatprep.subr.bf16.mxu0 0
        %5529 = vmatpush2.bf16.msra.mxu0 0
        %5530 = vmatprep.subr.bf16.mxu0 0
        %5531 = vmatpush2.bf16.msra.mxu0 0
        %5532 = vmatprep.subr.bf16.mxu0 0
        %5533 = vmatpush2.bf16.msra.mxu0 0
        %5534 = vmatprep.subr.bf16.mxu0 0
        %5535 = vmatpush2.bf16.msra.mxu0 0
        %5536 = vmatprep.mubr.bf16.mxu0 0
        %5537 = vmatmul.mubr.bf16.gmra.mxu0 %v5503
        %v5538 = vpop.f32.mrf.mxu0
        %v5539 = vadd.f32 0.0, %v5538
        %v5540 = vpop.f32.mrf.mxu0
        %v5541 = vpop.f32.mrf.mxu0
        %v5542 = vpop.f32.mrf.mxu0
        %5543 = vdwg.mxu0
        %v5544 = vadd.f32 %v5434, %v5539
        %v5545 = vadd.f32 %v5544, %v3713
        %v5546 = vld [vmem:[%s20] sm:$0x1]
        %v5547 = vld [vmem:[%s21] sm:$0x1]
        %v5548 = vsel %vm1328, %v5545, 0.0
        %5549 = vadd.xlane.f32.xlu0 %v5548
        %v5550 = vpop.xlane.xlu0 %5549
        %v5551 = vmul.f32 %v5550, %v1332
        %v5552 = vsub.f32 %v5545, %v5551
        %v5553 = vmul.f32 %v5552, %v5552
        %v5554 = vsel %vm1328, %v5553, 0.0
        %5555 = vadd.xlane.f32.xlu0 %v5554
        %v5556 = vpop.xlane.xlu0 %5555
        %v5557 = vmul.f32 %v5556, %v1332
        %v5558 = vadd.f32 %v5557, 1e-06
        %v5559 = vrsqrt.pop %v5558
        %v5560 = vmul.f32 %v5552, %v5559
        %v5562 = vlaneseq
        %v5563 = vshrl.u32 %v5562, 7
        %v5564 = vsub.s32 0, %v5563
        %v5565 = vrot.slane %v5546, %v5564
        %v5567 = vmul.f32 %v5560, %v5565
        %v5569 = vlaneseq
        %v5570 = vshrl.u32 %v5569, 7
        %v5571 = vsub.s32 0, %v5570
        %v5572 = vrot.slane %v5547, %v5571
        %v5574 = vadd.f32 %v5567, %v5572
        %v5575 = vld [vmem:[%s22] sm:$0xf]
        %v5576 = vld [vmem:[%s22 + $0x4] sm:$0xf]
        %v5577 = vld [vmem:[%s22 + $0x8] sm:$0xf]
        %v5578 = vld [vmem:[%s22 + $0xc] sm:$0xf]
        %v5579 = vpack.c.bf16 %v5574, %v5574
        %v5580 = vld [vmem:[%s23] sm:$0x1]
        %v5585 = vunpack.c.l.b16 %v5575
        %v5586 = vunpack.c.l.b16 %v5576
        %v5587 = vunpack.c.l.b16 %v5577
        %v5588 = vunpack.c.l.b16 %v5578
        %v5589 = vpack.c.b16 %v5586, %v5585
        %v5590 = vpack.c.b16 %v5588, %v5587
        %v5594 = vsel %vm1381, %v5579, 0
        %5596 = vmatprep.subr.bf16.mxu0 0
        %5597 = vmatpush1.bf16.msra.mxu0 0
        %5598 = vmatprep.subr.bf16.mxu0 0
        %5599 = vmatpush1.bf16.msra.mxu0 0
        %5600 = vmatprep.subr.bf16.mxu0 0
        %5601 = vmatpush1.bf16.msra.mxu0 0
        %5602 = vmatprep.subr.bf16.mxu0 0
        %5603 = vmatpush1.bf16.msra.mxu0 0
        %5604 = vmatprep.subr.bf16.mxu0 0
        %5605 = vmatpush1.bf16.msra.mxu0 0
        %5606 = vmatprep.subr.bf16.mxu0 0
        %5607 = vmatpush1.bf16.msra.mxu0 0
        %5608 = vmatprep.subr.bf16.mxu0 0
        %5609 = vmatpush1.bf16.msra.mxu0 %v5590
        %5610 = vmatprep.subr.bf16.mxu0 0
        %5611 = vmatpush1.bf16.msra.mxu0 %v5589
        %5612 = vmatprep.subr.bf16.mxu0 0
        %5613 = vmatpush2.bf16.msra.mxu0 0
        %5614 = vmatprep.subr.bf16.mxu0 0
        %5615 = vmatpush2.bf16.msra.mxu0 0
        %5616 = vmatprep.subr.bf16.mxu0 0
        %5617 = vmatpush2.bf16.msra.mxu0 0
        %5618 = vmatprep.subr.bf16.mxu0 0
        %5619 = vmatpush2.bf16.msra.mxu0 0
        %5620 = vmatprep.subr.bf16.mxu0 0
        %5621 = vmatpush2.bf16.msra.mxu0 0
        %5622 = vmatprep.subr.bf16.mxu0 0
        %5623 = vmatpush2.bf16.msra.mxu0 0
        %5624 = vmatprep.subr.bf16.mxu0 0
        %5625 = vmatpush2.bf16.msra.mxu0 0
        %5626 = vmatprep.subr.bf16.mxu0 0
        %5627 = vmatpush2.bf16.msra.mxu0 0
        %5628 = vmatprep.mubr.bf16.mxu0 0
        %5629 = vmatmul.mubr.bf16.gmra.mxu0 %v5594
        %v5630 = vpop.f32.mrf.mxu0
        %v5631 = vadd.f32 %v5580, %v5630
        %v5632 = vpop.f32.mrf.mxu0
        %v5633 = vpop.f32.mrf.mxu0
        %v5634 = vpop.f32.mrf.mxu0
        %5635 = vdwg.mxu0
        %v5636 = vmax.f32 %v5631, 0.0
        %v5637 = vld [vmem:[%s24] sm:$0xf]
        %v5638 = vld [vmem:[%s24 + $0x4] sm:$0xf]
        %v5639 = vld [vmem:[%s24 + $0x8] sm:$0xf]
        %v5640 = vld [vmem:[%s24 + $0xc] sm:$0xf]
        %v5641 = vpack.c.bf16 %v5636, %v5636
        %v5642 = vld [vmem:[%s25] sm:$0x1]
        %v5647 = vunpack.c.l.b16 %v5637
        %v5648 = vunpack.c.l.b16 %v5638
        %v5649 = vunpack.c.l.b16 %v5639
        %v5650 = vunpack.c.l.b16 %v5640
        %v5651 = vpack.c.b16 %v5648, %v5647
        %v5652 = vpack.c.b16 %v5650, %v5649
        %v5656 = vsel %vm1381, %v5641, 0
        %5658 = vmatprep.subr.bf16.mxu0 0
        %5659 = vmatpush1.bf16.msra.mxu0 0
        %5660 = vmatprep.subr.bf16.mxu0 0
        %5661 = vmatpush1.bf16.msra.mxu0 0
        %5662 = vmatprep.subr.bf16.mxu0 0
        %5663 = vmatpush1.bf16.msra.mxu0 0
        %5664 = vmatprep.subr.bf16.mxu0 0
        %5665 = vmatpush1.bf16.msra.mxu0 0
        %5666 = vmatprep.subr.bf16.mxu0 0
        %5667 = vmatpush1.bf16.msra.mxu0 0
        %5668 = vmatprep.subr.bf16.mxu0 0
        %5669 = vmatpush1.bf16.msra.mxu0 0
        %5670 = vmatprep.subr.bf16.mxu0 0
        %5671 = vmatpush1.bf16.msra.mxu0 %v5652
        %5672 = vmatprep.subr.bf16.mxu0 0
        %5673 = vmatpush1.bf16.msra.mxu0 %v5651
        %5674 = vmatprep.subr.bf16.mxu0 0
        %5675 = vmatpush2.bf16.msra.mxu0 0
        %5676 = vmatprep.subr.bf16.mxu0 0
        %5677 = vmatpush2.bf16.msra.mxu0 0
        %5678 = vmatprep.subr.bf16.mxu0 0
        %5679 = vmatpush2.bf16.msra.mxu0 0
        %5680 = vmatprep.subr.bf16.mxu0 0
        %5681 = vmatpush2.bf16.msra.mxu0 0
        %5682 = vmatprep.subr.bf16.mxu0 0
        %5683 = vmatpush2.bf16.msra.mxu0 0
        %5684 = vmatprep.subr.bf16.mxu0 0
        %5685 = vmatpush2.bf16.msra.mxu0 0
        %5686 = vmatprep.subr.bf16.mxu0 0
        %5687 = vmatpush2.bf16.msra.mxu0 0
        %5688 = vmatprep.subr.bf16.mxu0 0
        %5689 = vmatpush2.bf16.msra.mxu0 0
        %5690 = vmatprep.mubr.bf16.mxu0 0
        %5691 = vmatmul.mubr.bf16.gmra.mxu0 %v5656
        %v5692 = vpop.f32.mrf.mxu0
        %v5693 = vadd.f32 %v5642, %v5692
        %v5694 = vpop.f32.mrf.mxu0
        %v5695 = vpop.f32.mrf.mxu0
        %v5696 = vpop.f32.mrf.mxu0
        %5697 = vdwg.mxu0
        %5698 = vst [vmem:[%s783] sm:$0x1] %v5693
        %s5699 = sand.u32 %s599, 1
        %s5700 = scalar_lea.sflag [#allocation3], %s5699
        %s5701 = sand.u32 %s599, 1
        %s5702 = scalar_lea.vmem [#allocation2], %s5701
        // Predicated region
        $region125: #{topdown_vit_forward.1} parent=123 // pred_check
          %p5703 = pneg %p609
        $region126: #{topdown_vit_forward.1} parent=123 // pred_check_branch
          %5705 = sbr.rel (%p5703) target = $region128
        $region127: #{topdown_vit_forward.1} parent=123 // pred_region
          %s5707 = ssub.s32 16, 16
          %5708 = vsyncadd %s5700, %s5707
          %s5709 = smul.addr %s40, 16
          %s5710 = scalar_lea.hbm %s26, %s5709
          %s5712 = sshll.u32 %s5702, 4
          %s5713 = int_to_ptr.vmem [resolvable:$true] %s5712
          %5715 = dma.vmem_to_hbm [thread:$0]  %s5713, 16, %s5710, %s5700
        $region128: #{topdown_vit_forward.1} parent=123 // pred_fallthru
          _
      $region124: #{topdown_vit_forward.1} parent=5 // pred_fallthru
        _
      %p5716 = scmp.le.s32.totalorder 2, %s35
      // Predicated region
      $region129: #{topdown_vit_forward.1} parent=5 // pred_check
        %p5717 = pneg %p5716
      $region130: #{topdown_vit_forward.1} parent=5 // pred_check_branch
        %5719 = sbr.rel (%p5717) target = $region132
      $region131: #{topdown_vit_forward.1} parent=5 // pred_region
        %s5720 = ssub.s32 %s35, 2
        // Predicated region
        $region133: #{topdown_vit_forward.1} parent=131 // pred_check
          %p5721 = pneg %p615
        $region134: #{topdown_vit_forward.1} parent=131 // pred_check_branch
          %5723 = sbr.rel (%p5721) target = $region136
        $region135: #{topdown_vit_forward.1} parent=131 // pred_region
          %s5724 = sand.u32 %s600, 1
          %s5725 = scalar_lea.sflag [#allocation3], %s5724
          %s5726 = sand.u32 %s600, 1
          %s5727 = scalar_lea.vmem [#allocation2], %s5726
          %5728 = dma.done %s5725, 16
        $region136: #{topdown_vit_forward.1} parent=131 // pred_fallthru
          _
      $region132: #{topdown_vit_forward.1} parent=5 // pred_fallthru
        _
    $region6: #{topdown_vit_forward.1} parent=1 // loop_footer
      %s39 = sadd.s32 1, %s35
    $region7: #{topdown_vit_forward.1} parent=1 // loop_footer_branch
      %34 = sbr.rel target = $region3
    $region8: #{topdown_vit_forward.1} parent=1 // loop_exit
      _
    %5729 = vsyncpa [#allocation3], 1
    %s5730 = scalar_lea.sflag [#allocation3], 1
    %5731 = vsyncpa %s5730, 1

</llo_original>
